<compile_context>
chip_gen: v6e
topology: v6e:2x2x1
jax: 0.10.0
libtpu: 0.0.40
codegen_flags: <defaults>
</compile_context>

<pallas_src>
import functools

import numpy as np
import jax
import jax.numpy as jnp
from jax.experimental import pallas as pl
from jax.experimental.pallas import tpu as pltpu

EPS = 1e-3  # BatchNorm3d eps in BasicConv3d / SepConv3d


def _shift(x, off):
    """result[:, p] = x[:, p + off] (static off); out-of-range filled with 0.

    Out-of-range positions are always masked by the caller, so the fill value
    never reaches the result.
    """
    if off == 0:
        return x
    c, p = x.shape
    pad = jnp.zeros((c, abs(off)), x.dtype)
    if off > 0:
        return jnp.concatenate([x[:, off:], pad], axis=1)
    return jnp.concatenate([pad, x[:, :p + off]], axis=1)


# -----------------------------------------------------------------------------
# Fused kernel: one grid step = one full sample (480, T*H*W) -> (512, T*H*W)
# -----------------------------------------------------------------------------
def _mixed4b_kernel(x_ref, m_ref,
                    w_stem_ref, s_stem_ref, b_stem_ref,
                    w_sp_ref, s_sp_ref, b_sp_ref,
                    w_t_ref, s_t_ref, b_t_ref,
                    w_b3_ref, s_b3_ref, b_b3_ref,
                    out_ref, *, T, H, W):
    HW = H * W
    THW = T * HW

    x = x_ref[0]                                  # (480, THW) f32, chan-first
    xb = x.astype(jnp.bfloat16)

    masks = m_ref[...]                            # (8, THW) 0/1 f32
    w_lo, w_hi = masks[0:1], masks[1:2]           # (w-1) valid / (w+1) valid
    h_lo, h_hi = masks[2:3], masks[3:4]
    t_lo, t_hi = masks[4:5], masks[5:6]
    all_one = masks[6:7]

    def axis_mask(d, lo, hi):                     # d is a static python int
        if d < 0:
            return lo
        if d > 0:
            return hi
        return all_one

    # ---- fused 1x1x1 stems: 480 -> [b0 192 | b1a 96 | b2a 16] ---------------
    stem = jnp.dot(w_stem_ref[...], xb, preferred_element_type=jnp.float32)
    stem = jnp.maximum(stem * s_stem_ref[...] + b_stem_ref[...], 0.0)
    out_ref[0, 0:192, :] = stem[0:192]                       # branch0 (f32)
    x12 = stem[192:304].astype(jnp.bfloat16)                 # (112, THW)

    # ---- branch1 + branch2 spatial (1,3,3) conv, block-diag fused -----------
    acc = jnp.zeros((256, THW), jnp.float32)
    k = 0
    for dy in (-1, 0, 1):
        mh = axis_mask(dy, h_lo, h_hi)
        for dx in (-1, 0, 1):
            m = (mh * axis_mask(dx, w_lo, w_hi)).astype(jnp.bfloat16)
            tap = _shift(x12, dy * W + dx) * m               # zero padding
            acc = acc + jnp.dot(w_sp_ref[k], tap,
                                preferred_element_type=jnp.float32)
            k += 1
    ysp = jnp.maximum(acc * s_sp_ref[...] + b_sp_ref[...], 0.0)
    ysp = ysp.astype(jnp.bfloat16)                           # (256, THW)

    # ---- branch1 + branch2 temporal (3,1,1) conv, block-diag fused ----------
    acc = jnp.zeros((256, THW), jnp.float32)
    for j, dt in enumerate((-1, 0, 1)):
        m = axis_mask(dt, t_lo, t_hi).astype(jnp.bfloat16)
        tap = _shift(ysp, dt * HW) * m                       # zero padding
        acc = acc + jnp.dot(w_t_ref[j], tap,
                            preferred_element_type=jnp.float32)
    y12 = jnp.maximum(acc * s_t_ref[...] + b_t_ref[...], 0.0)
    out_ref[0, 192:448, :] = y12                             # branch1|branch2

    # ---- branch3: separable 3x3x3 max pool + 480 -> 64 pointwise ------------
    neg = jnp.asarray(-jnp.inf, jnp.bfloat16)

    def pool_dir(v, off, lo, hi):
        a = jnp.where(lo > 0.5, _shift(v, -off), neg)        # neighbor at -1
        b = jnp.where(hi > 0.5, _shift(v, +off), neg)        # neighbor at +1
        return jnp.maximum(v, jnp.maximum(a, b))

    p = pool_dir(xb, 1, w_lo, w_hi)
    p = pool_dir(p, W, h_lo, h_hi)
    p = pool_dir(p, HW, t_lo, t_hi)
    y3 = jnp.dot(w_b3_ref[...], p, preferred_element_type=jnp.float32)
    y3 = jnp.maximum(y3 * s_b3_ref[...] + b_b3_ref[...], 0.0)
    out_ref[0, 448:512, :] = y3                              # branch3


# -----------------------------------------------------------------------------
# pallas_call wrapper
# -----------------------------------------------------------------------------
def _build_masks(T, H, W):
    t, h, w = np.meshgrid(np.arange(T), np.arange(H), np.arange(W),
                          indexing="ij")
    t, h, w = (a.reshape(-1) for a in (t, h, w))
    rows = np.stack([
        w >= 1, w <= W - 2,
        h >= 1, h <= H - 2,
        t >= 1, t <= T - 2,
        np.ones_like(w, dtype=bool), np.ones_like(w, dtype=bool),
    ]).astype(np.float32)
    return jnp.asarray(rows)                                  # (8, T*H*W)


def _const_spec(a):
    zeros = (0,) * a.ndim
    return pl.BlockSpec(a.shape, lambda n, _z=zeros: _z)


def mixed_4b_forward(x_ncdhw, params):
    N, C, T, H, W = x_ncdhw.shape
    assert C == 480
    THW = T * H * W

    x = x_ncdhw.reshape(N, C, THW)            # free: trailing-dims merge
    masks = _build_masks(T, H, W)

    names = ("w_stem", "s_stem", "b_stem", "w_sp", "s_sp", "b_sp",
             "w_t", "s_t", "b_t", "w_b3", "s_b3", "b_b3")
    weights = [params[n] for n in names]

    in_specs = [pl.BlockSpec((1, C, THW), lambda n: (n, 0, 0)),
                _const_spec(masks)]
    in_specs += [_const_spec(w) for w in weights]

    out = pl.pallas_call(
        functools.partial(_mixed4b_kernel, T=T, H=H, W=W),
        grid=(N,),
        in_specs=in_specs,
        out_specs=pl.BlockSpec((1, 512, THW), lambda n: (n, 0, 0)),
        out_shape=jax.ShapeDtypeStruct((N, 512, THW), jnp.float32),
        compiler_params=pltpu.CompilerParams(
            dimension_semantics=("parallel",),
            vmem_limit_bytes=48 * 1024 * 1024),
    )(x, masks, *weights)

    return out.reshape(N, 512, T, H, W)       # free: trailing-dim split


# -----------------------------------------------------------------------------
# Deterministic synthetic params + eval-mode BN folding + fused packing
# -----------------------------------------------------------------------------
def init_params(key):
    ks = iter(jax.random.split(key, 20))

    def conv_w(shape, fan_in):
        return jax.random.normal(next(ks), shape, jnp.float32) / np.sqrt(fan_in)

    def bn(c):
        k1, k2, k3, k4 = jax.random.split(next(ks), 4)
        gamma = 1.0 + 0.1 * jax.random.normal(k1, (c,), jnp.float32)
        beta = 0.1 * jax.random.normal(k2, (c,), jnp.float32)
        mean = 0.1 * jax.random.normal(k3, (c,), jnp.float32)
        var = 0.5 + jax.random.uniform(k4, (c,), jnp.float32)
        scale = gamma / jnp.sqrt(var + EPS)
        bias = beta - mean * scale
        return scale, bias

    # weights in channels-first (Cout, Cin) layout, one matrix per conv tap
    b0_w = conv_w((192, 480), 480);          b0_s, b0_b = bn(192)
    b1a_w = conv_w((96, 480), 480);          b1a_s, b1a_b = bn(96)
    b1s_w = conv_w((9, 208, 96), 96 * 9);    b1s_s, b1s_b = bn(208)
    b1t_w = conv_w((3, 208, 208), 208 * 3);  b1t_s, b1t_b = bn(208)
    b2a_w = conv_w((16, 480), 480);          b2a_s, b2a_b = bn(16)
    b2s_w = conv_w((9, 48, 16), 16 * 9);     b2s_s, b2s_b = bn(48)
    b2t_w = conv_w((3, 48, 48), 48 * 3);     b2t_s, b2t_b = bn(48)
    b3_w = conv_w((64, 480), 480);           b3_s, b3_b = bn(64)

    def col(*vs):                      # per-channel scale/bias column, f32
        return jnp.concatenate(vs).reshape(-1, 1)

    p = {}
    # fused 1x1x1 stem: [branch0 | branch1a | branch2a] along Cout (rows)
    p["w_stem"] = jnp.concatenate([b0_w, b1a_w, b2a_w], 0).astype(jnp.bfloat16)
    p["s_stem"] = col(b0_s, b1a_s, b2a_s)
    p["b_stem"] = col(b0_b, b1a_b, b2a_b)

    # block-diagonal fused branch1+branch2 spatial (1,3,3) conv, per tap
    w_sp = jnp.zeros((9, 256, 112), jnp.float32)
    w_sp = w_sp.at[:, 0:208, 0:96].set(b1s_w)
    w_sp = w_sp.at[:, 208:256, 96:112].set(b2s_w)
    p["w_sp"] = w_sp.astype(jnp.bfloat16)
    p["s_sp"] = col(b1s_s, b2s_s)
    p["b_sp"] = col(b1s_b, b2s_b)

    # block-diagonal fused branch1+branch2 temporal (3,1,1) conv, per tap
    w_t = jnp.zeros((3, 256, 256), jnp.float32)
    w_t = w_t.at[:, 0:208, 0:208].set(b1t_w)
    w_t = w_t.at[:, 208:256, 208:256].set(b2t_w)
    p["w_t"] = w_t.astype(jnp.bfloat16)
    p["s_t"] = col(b1t_s, b2t_s)
    p["b_t"] = col(b1t_b, b2t_b)

    # branch3 pointwise 480 -> 64 (after the max pool)
    p["w_b3"] = b3_w.astype(jnp.bfloat16)
    p["s_b3"] = col(b3_s)
    p["b_b3"] = col(b3_b)
    return p


if __name__ == "__main__":
    key = jax.random.PRNGKey(0)
    kx, kp = jax.random.split(key)
    N, C, T, H, W = 2, 480, 4, 8, 8
    x = jax.random.normal(kx, (N, C, T, H, W), jnp.float32)
    params = init_params(kp)

    out = jax.jit(mixed_4b_forward)(x, params)
    out = jax.block_until_ready(out)
    assert out.shape == (N, 512, T, H, W), out.shape
    assert out.dtype == jnp.float32
    assert bool(jnp.all(jnp.isfinite(out)))
    print("KERNEL_OK")
</pallas_src>

<mosaic_0001>
module attributes {stable_mosaic.version = 11 : i64} {
  func.func @_mixed4b_kernel(%arg0: i32, %arg1: memref<1x480x256xf32, #tpu.memory_space<vmem>>, %arg2: memref<8x256xf32, #tpu.memory_space<vmem>>, %arg3: memref<304x480xbf16, #tpu.memory_space<vmem>>, %arg4: memref<304x1xf32, #tpu.memory_space<vmem>>, %arg5: memref<304x1xf32, #tpu.memory_space<vmem>>, %arg6: memref<9x256x112xbf16, #tpu.memory_space<vmem>>, %arg7: memref<256x1xf32, #tpu.memory_space<vmem>>, %arg8: memref<256x1xf32, #tpu.memory_space<vmem>>, %arg9: memref<3x256x256xbf16, #tpu.memory_space<vmem>>, %arg10: memref<256x1xf32, #tpu.memory_space<vmem>>, %arg11: memref<256x1xf32, #tpu.memory_space<vmem>>, %arg12: memref<64x480xbf16, #tpu.memory_space<vmem>>, %arg13: memref<64x1xf32, #tpu.memory_space<vmem>>, %arg14: memref<64x1xf32, #tpu.memory_space<vmem>>, %arg15: memref<1x512x256xf32, #tpu.memory_space<vmem>>) attributes {dimension_semantics = [#tpu.dimension_semantics<parallel>], iteration_bounds = array<i64: 2>, scalar_prefetch = 0 : i64, scratch_operands = 0 : i64, tpu.core_type = #tpu.core_type<tc>, window_params = [{transform_indices = @transform_0, window_bounds = array<i64: 1, 480, 256>}, {pipeline_mode = #tpu.pipeline_mode<synchronous>, transform_indices = @transform_1, window_bounds = array<i64: 8, 256>}, {pipeline_mode = #tpu.pipeline_mode<synchronous>, transform_indices = @transform_2, window_bounds = array<i64: 304, 480>}, {pipeline_mode = #tpu.pipeline_mode<synchronous>, transform_indices = @transform_3, window_bounds = array<i64: 304, 1>}, {pipeline_mode = #tpu.pipeline_mode<synchronous>, transform_indices = @transform_4, window_bounds = array<i64: 304, 1>}, {pipeline_mode = #tpu.pipeline_mode<synchronous>, transform_indices = @transform_5, window_bounds = array<i64: 9, 256, 112>}, {pipeline_mode = #tpu.pipeline_mode<synchronous>, transform_indices = @transform_6, window_bounds = array<i64: 256, 1>}, {pipeline_mode = #tpu.pipeline_mode<synchronous>, transform_indices = @transform_7, window_bounds = array<i64: 256, 1>}, {pipeline_mode = #tpu.pipeline_mode<synchronous>, transform_indices = @transform_8, window_bounds = array<i64: 3, 256, 256>}, {pipeline_mode = #tpu.pipeline_mode<synchronous>, transform_indices = @transform_9, window_bounds = array<i64: 256, 1>}, {pipeline_mode = #tpu.pipeline_mode<synchronous>, transform_indices = @transform_10, window_bounds = array<i64: 256, 1>}, {pipeline_mode = #tpu.pipeline_mode<synchronous>, transform_indices = @transform_11, window_bounds = array<i64: 64, 480>}, {pipeline_mode = #tpu.pipeline_mode<synchronous>, transform_indices = @transform_12, window_bounds = array<i64: 64, 1>}, {pipeline_mode = #tpu.pipeline_mode<synchronous>, transform_indices = @transform_13, window_bounds = array<i64: 64, 1>}, {transform_indices = @transform_14, window_bounds = array<i64: 1, 512, 256>}]} {
    %c0 = arith.constant 0 : index
    %c0_0 = arith.constant 0 : index
    %c0_1 = arith.constant 0 : index
    %0 = vector.load %arg1[%c0, %c0_0, %c0_1] : memref<1x480x256xf32, #tpu.memory_space<vmem>>, vector<1x480x256xf32>
    %1 = vector.shape_cast %0 : vector<1x480x256xf32> to vector<480x256xf32>
    %2 = arith.truncf %1 : vector<480x256xf32> to vector<480x256xbf16>
    %c0_2 = arith.constant 0 : index
    %c0_3 = arith.constant 0 : index
    %3 = vector.load %arg2[%c0_2, %c0_3] : memref<8x256xf32, #tpu.memory_space<vmem>>, vector<8x256xf32>
    %4 = vector.extract_strided_slice %3 {offsets = [0, 0], sizes = [1, 256], strides = [1, 1]} : vector<8x256xf32> to vector<1x256xf32>
    %5 = vector.extract_strided_slice %3 {offsets = [1, 0], sizes = [1, 256], strides = [1, 1]} : vector<8x256xf32> to vector<1x256xf32>
    %6 = vector.extract_strided_slice %3 {offsets = [2, 0], sizes = [1, 256], strides = [1, 1]} : vector<8x256xf32> to vector<1x256xf32>
    %7 = vector.extract_strided_slice %3 {offsets = [3, 0], sizes = [1, 256], strides = [1, 1]} : vector<8x256xf32> to vector<1x256xf32>
    %8 = vector.extract_strided_slice %3 {offsets = [4, 0], sizes = [1, 256], strides = [1, 1]} : vector<8x256xf32> to vector<1x256xf32>
    %9 = vector.extract_strided_slice %3 {offsets = [5, 0], sizes = [1, 256], strides = [1, 1]} : vector<8x256xf32> to vector<1x256xf32>
    %10 = vector.extract_strided_slice %3 {offsets = [6, 0], sizes = [1, 256], strides = [1, 1]} : vector<8x256xf32> to vector<1x256xf32>
    %c0_4 = arith.constant 0 : index
    %c0_5 = arith.constant 0 : index
    %11 = vector.load %arg3[%c0_4, %c0_5] : memref<304x480xbf16, #tpu.memory_space<vmem>>, vector<304x480xbf16>
    %cst = arith.constant dense<0.000000e+00> : vector<304x256xf32>
    %12 = tpu.matmul %11, %2, %cst {dimension_numbers = #tpu.dot_dimension_numbers<[1], [0], [0], [1], [0, 0, 1, 1], [], []>} : vector<304x480xbf16>, vector<480x256xbf16>, vector<304x256xf32> -> vector<304x256xf32>
    %c0_6 = arith.constant 0 : index
    %c0_7 = arith.constant 0 : index
    %13 = vector.load %arg4[%c0_6, %c0_7] : memref<304x1xf32, #tpu.memory_space<vmem>>, vector<304x1xf32>
    %14 = vector.broadcast %13 : vector<304x1xf32> to vector<304x256xf32>
    %15 = arith.mulf %12, %14 : vector<304x256xf32>
    %c0_8 = arith.constant 0 : index
    %c0_9 = arith.constant 0 : index
    %16 = vector.load %arg5[%c0_8, %c0_9] : memref<304x1xf32, #tpu.memory_space<vmem>>, vector<304x1xf32>
    %17 = vector.broadcast %16 : vector<304x1xf32> to vector<304x256xf32>
    %18 = arith.addf %15, %17 : vector<304x256xf32>
    %cst_10 = arith.constant 0.000000e+00 : f32
    %19 = vector.broadcast %cst_10 : f32 to vector<304x256xf32>
    %20 = arith.maximumf %18, %19 : vector<304x256xf32>
    %21 = vector.extract_strided_slice %20 {offsets = [0, 0], sizes = [192, 256], strides = [1, 1]} : vector<304x256xf32> to vector<192x256xf32>
    %c0_11 = arith.constant 0 : index
    %c0_12 = arith.constant 0 : index
    %c0_13 = arith.constant 0 : index
    %22 = vector.load %arg15[%c0_11, %c0_12, %c0_13] : memref<1x512x256xf32, #tpu.memory_space<vmem>>, vector<1x192x256xf32>
    %23 = vector.shape_cast %22 : vector<1x192x256xf32> to vector<192x256xf32>
    %24 = vector.shape_cast %21 : vector<192x256xf32> to vector<1x192x256xf32>
    tpu.vector_store %arg15[%c0_11, %c0_12, %c0_13], %24 {strides = array<i32>} : memref<1x512x256xf32, #tpu.memory_space<vmem>>, vector<1x192x256xf32>,
    %25 = vector.extract_strided_slice %20 {offsets = [192, 0], sizes = [112, 256], strides = [1, 1]} : vector<304x256xf32> to vector<112x256xf32>
    %26 = arith.truncf %25 : vector<112x256xf32> to vector<112x256xbf16>
    %cst_14 = arith.constant 0.000000e+00 : f32
    %27 = vector.broadcast %cst_14 : f32 to vector<256x256xf32>
    %28 = arith.mulf %6, %4 : vector<1x256xf32>
    %29 = arith.truncf %28 : vector<1x256xf32> to vector<1x256xbf16>
    %cst_15 = arith.constant 0.000000e+00 : bf16
    %30 = vector.broadcast %cst_15 : bf16 to vector<112x9xbf16>
    %31 = vector.extract_strided_slice %26 {offsets = [0, 0], sizes = [112, 247], strides = [1, 1]} : vector<112x256xbf16> to vector<112x247xbf16>
    %32 = tpu.concatenate %30, %31 in 1 : vector<112x9xbf16>, vector<112x247xbf16> -> vector<112x256xbf16>
    %33 = vector.broadcast %29 : vector<1x256xbf16> to vector<112x256xbf16>
    %34 = arith.mulf %32, %33 : vector<112x256xbf16>
    %c0_16 = arith.constant 0 : index
    %c0_17 = arith.constant 0 : index
    %c0_18 = arith.constant 0 : index
    %35 = vector.load %arg6[%c0_16, %c0_17, %c0_18] : memref<9x256x112xbf16, #tpu.memory_space<vmem>>, vector<1x256x112xbf16>
    %36 = vector.shape_cast %35 : vector<1x256x112xbf16> to vector<256x112xbf16>
    %cst_19 = arith.constant dense<0.000000e+00> : vector<256x256xf32>
    %37 = tpu.matmul %36, %34, %cst_19 {dimension_numbers = #tpu.dot_dimension_numbers<[1], [0], [0], [1], [0, 0, 1, 1], [], []>} : vector<256x112xbf16>, vector<112x256xbf16>, vector<256x256xf32> -> vector<256x256xf32>
    %38 = arith.addf %27, %37 : vector<256x256xf32>
    %39 = arith.mulf %6, %10 : vector<1x256xf32>
    %40 = arith.truncf %39 : vector<1x256xf32> to vector<1x256xbf16>
    %cst_20 = arith.constant 0.000000e+00 : bf16
    %41 = vector.broadcast %cst_20 : bf16 to vector<112x8xbf16>
    %42 = vector.extract_strided_slice %26 {offsets = [0, 0], sizes = [112, 248], strides = [1, 1]} : vector<112x256xbf16> to vector<112x248xbf16>
    %43 = tpu.concatenate %41, %42 in 1 : vector<112x8xbf16>, vector<112x248xbf16> -> vector<112x256xbf16>
    %44 = vector.broadcast %40 : vector<1x256xbf16> to vector<112x256xbf16>
    %45 = arith.mulf %43, %44 : vector<112x256xbf16>
    %c1 = arith.constant 1 : index
    %c0_21 = arith.constant 0 : index
    %c0_22 = arith.constant 0 : index
    %46 = vector.load %arg6[%c1, %c0_21, %c0_22] : memref<9x256x112xbf16, #tpu.memory_space<vmem>>, vector<1x256x112xbf16>
    %47 = vector.shape_cast %46 : vector<1x256x112xbf16> to vector<256x112xbf16>
    %cst_23 = arith.constant dense<0.000000e+00> : vector<256x256xf32>
    %48 = tpu.matmul %47, %45, %cst_23 {dimension_numbers = #tpu.dot_dimension_numbers<[1], [0], [0], [1], [0, 0, 1, 1], [], []>} : vector<256x112xbf16>, vector<112x256xbf16>, vector<256x256xf32> -> vector<256x256xf32>
    %49 = arith.addf %38, %48 : vector<256x256xf32>
    %50 = arith.mulf %6, %5 : vector<1x256xf32>
    %51 = arith.truncf %50 : vector<1x256xf32> to vector<1x256xbf16>
    %cst_24 = arith.constant 0.000000e+00 : bf16
    %52 = vector.broadcast %cst_24 : bf16 to vector<112x7xbf16>
    %53 = vector.extract_strided_slice %26 {offsets = [0, 0], sizes = [112, 249], strides = [1, 1]} : vector<112x256xbf16> to vector<112x249xbf16>
    %54 = tpu.concatenate %52, %53 in 1 : vector<112x7xbf16>, vector<112x249xbf16> -> vector<112x256xbf16>
    %55 = vector.broadcast %51 : vector<1x256xbf16> to vector<112x256xbf16>
    %56 = arith.mulf %54, %55 : vector<112x256xbf16>
    %c2 = arith.constant 2 : index
    %c0_25 = arith.constant 0 : index
    %c0_26 = arith.constant 0 : index
    %57 = vector.load %arg6[%c2, %c0_25, %c0_26] : memref<9x256x112xbf16, #tpu.memory_space<vmem>>, vector<1x256x112xbf16>
    %58 = vector.shape_cast %57 : vector<1x256x112xbf16> to vector<256x112xbf16>
    %cst_27 = arith.constant dense<0.000000e+00> : vector<256x256xf32>
    %59 = tpu.matmul %58, %56, %cst_27 {dimension_numbers = #tpu.dot_dimension_numbers<[1], [0], [0], [1], [0, 0, 1, 1], [], []>} : vector<256x112xbf16>, vector<112x256xbf16>, vector<256x256xf32> -> vector<256x256xf32>
    %60 = arith.addf %49, %59 : vector<256x256xf32>
    %61 = arith.mulf %10, %4 : vector<1x256xf32>
    %62 = arith.truncf %61 : vector<1x256xf32> to vector<1x256xbf16>
    %cst_28 = arith.constant 0.000000e+00 : bf16
    %63 = vector.broadcast %cst_28 : bf16 to vector<112x1xbf16>
    %64 = vector.extract_strided_slice %26 {offsets = [0, 0], sizes = [112, 255], strides = [1, 1]} : vector<112x256xbf16> to vector<112x255xbf16>
    %65 = tpu.concatenate %63, %64 in 1 : vector<112x1xbf16>, vector<112x255xbf16> -> vector<112x256xbf16>
    %66 = vector.broadcast %62 : vector<1x256xbf16> to vector<112x256xbf16>
    %67 = arith.mulf %65, %66 : vector<112x256xbf16>
    %c3 = arith.constant 3 : index
    %c0_29 = arith.constant 0 : index
    %c0_30 = arith.constant 0 : index
    %68 = vector.load %arg6[%c3, %c0_29, %c0_30] : memref<9x256x112xbf16, #tpu.memory_space<vmem>>, vector<1x256x112xbf16>
    %69 = vector.shape_cast %68 : vector<1x256x112xbf16> to vector<256x112xbf16>
    %cst_31 = arith.constant dense<0.000000e+00> : vector<256x256xf32>
    %70 = tpu.matmul %69, %67, %cst_31 {dimension_numbers = #tpu.dot_dimension_numbers<[1], [0], [0], [1], [0, 0, 1, 1], [], []>} : vector<256x112xbf16>, vector<112x256xbf16>, vector<256x256xf32> -> vector<256x256xf32>
    %71 = arith.addf %60, %70 : vector<256x256xf32>
    %72 = arith.mulf %10, %10 : vector<1x256xf32>
    %73 = arith.truncf %72 : vector<1x256xf32> to vector<1x256xbf16>
    %74 = vector.broadcast %73 : vector<1x256xbf16> to vector<112x256xbf16>
    %75 = arith.mulf %26, %74 : vector<112x256xbf16>
    %c4 = arith.constant 4 : index
    %c0_32 = arith.constant 0 : index
    %c0_33 = arith.constant 0 : index
    %76 = vector.load %arg6[%c4, %c0_32, %c0_33] : memref<9x256x112xbf16, #tpu.memory_space<vmem>>, vector<1x256x112xbf16>
    %77 = vector.shape_cast %76 : vector<1x256x112xbf16> to vector<256x112xbf16>
    %cst_34 = arith.constant dense<0.000000e+00> : vector<256x256xf32>
    %78 = tpu.matmul %77, %75, %cst_34 {dimension_numbers = #tpu.dot_dimension_numbers<[1], [0], [0], [1], [0, 0, 1, 1], [], []>} : vector<256x112xbf16>, vector<112x256xbf16>, vector<256x256xf32> -> vector<256x256xf32>
    %79 = arith.addf %71, %78 : vector<256x256xf32>
    %80 = arith.mulf %10, %5 : vector<1x256xf32>
    %81 = arith.truncf %80 : vector<1x256xf32> to vector<1x256xbf16>
    %cst_35 = arith.constant 0.000000e+00 : bf16
    %82 = vector.broadcast %cst_35 : bf16 to vector<112x1xbf16>
    %83 = vector.extract_strided_slice %26 {offsets = [0, 1], sizes = [112, 255], strides = [1, 1]} : vector<112x256xbf16> to vector<112x255xbf16>
    %84 = tpu.concatenate %83, %82 in 1 : vector<112x255xbf16>, vector<112x1xbf16> -> vector<112x256xbf16>
    %85 = vector.broadcast %81 : vector<1x256xbf16> to vector<112x256xbf16>
    %86 = arith.mulf %84, %85 : vector<112x256xbf16>
    %c5 = arith.constant 5 : index
    %c0_36 = arith.constant 0 : index
    %c0_37 = arith.constant 0 : index
    %87 = vector.load %arg6[%c5, %c0_36, %c0_37] : memref<9x256x112xbf16, #tpu.memory_space<vmem>>, vector<1x256x112xbf16>
    %88 = vector.shape_cast %87 : vector<1x256x112xbf16> to vector<256x112xbf16>
    %cst_38 = arith.constant dense<0.000000e+00> : vector<256x256xf32>
    %89 = tpu.matmul %88, %86, %cst_38 {dimension_numbers = #tpu.dot_dimension_numbers<[1], [0], [0], [1], [0, 0, 1, 1], [], []>} : vector<256x112xbf16>, vector<112x256xbf16>, vector<256x256xf32> -> vector<256x256xf32>
    %90 = arith.addf %79, %89 : vector<256x256xf32>
    %91 = arith.mulf %7, %4 : vector<1x256xf32>
    %92 = arith.truncf %91 : vector<1x256xf32> to vector<1x256xbf16>
    %cst_39 = arith.constant 0.000000e+00 : bf16
    %93 = vector.broadcast %cst_39 : bf16 to vector<112x7xbf16>
    %94 = vector.extract_strided_slice %26 {offsets = [0, 7], sizes = [112, 249], strides = [1, 1]} : vector<112x256xbf16> to vector<112x249xbf16>
    %95 = tpu.concatenate %94, %93 in 1 : vector<112x249xbf16>, vector<112x7xbf16> -> vector<112x256xbf16>
    %96 = vector.broadcast %92 : vector<1x256xbf16> to vector<112x256xbf16>
    %97 = arith.mulf %95, %96 : vector<112x256xbf16>
    %c6 = arith.constant 6 : index
    %c0_40 = arith.constant 0 : index
    %c0_41 = arith.constant 0 : index
    %98 = vector.load %arg6[%c6, %c0_40, %c0_41] : memref<9x256x112xbf16, #tpu.memory_space<vmem>>, vector<1x256x112xbf16>
    %99 = vector.shape_cast %98 : vector<1x256x112xbf16> to vector<256x112xbf16>
    %cst_42 = arith.constant dense<0.000000e+00> : vector<256x256xf32>
    %100 = tpu.matmul %99, %97, %cst_42 {dimension_numbers = #tpu.dot_dimension_numbers<[1], [0], [0], [1], [0, 0, 1, 1], [], []>} : vector<256x112xbf16>, vector<112x256xbf16>, vector<256x256xf32> -> vector<256x256xf32>
    %101 = arith.addf %90, %100 : vector<256x256xf32>
    %102 = arith.mulf %7, %10 : vector<1x256xf32>
    %103 = arith.truncf %102 : vector<1x256xf32> to vector<1x256xbf16>
    %cst_43 = arith.constant 0.000000e+00 : bf16
    %104 = vector.broadcast %cst_43 : bf16 to vector<112x8xbf16>
    %105 = vector.extract_strided_slice %26 {offsets = [0, 8], sizes = [112, 248], strides = [1, 1]} : vector<112x256xbf16> to vector<112x248xbf16>
    %106 = tpu.concatenate %105, %104 in 1 : vector<112x248xbf16>, vector<112x8xbf16> -> vector<112x256xbf16>
    %107 = vector.broadcast %103 : vector<1x256xbf16> to vector<112x256xbf16>
    %108 = arith.mulf %106, %107 : vector<112x256xbf16>
    %c7 = arith.constant 7 : index
    %c0_44 = arith.constant 0 : index
    %c0_45 = arith.constant 0 : index
    %109 = vector.load %arg6[%c7, %c0_44, %c0_45] : memref<9x256x112xbf16, #tpu.memory_space<vmem>>, vector<1x256x112xbf16>
    %110 = vector.shape_cast %109 : vector<1x256x112xbf16> to vector<256x112xbf16>
    %cst_46 = arith.constant dense<0.000000e+00> : vector<256x256xf32>
    %111 = tpu.matmul %110, %108, %cst_46 {dimension_numbers = #tpu.dot_dimension_numbers<[1], [0], [0], [1], [0, 0, 1, 1], [], []>} : vector<256x112xbf16>, vector<112x256xbf16>, vector<256x256xf32> -> vector<256x256xf32>
    %112 = arith.addf %101, %111 : vector<256x256xf32>
    %113 = arith.mulf %7, %5 : vector<1x256xf32>
    %114 = arith.truncf %113 : vector<1x256xf32> to vector<1x256xbf16>
    %cst_47 = arith.constant 0.000000e+00 : bf16
    %115 = vector.broadcast %cst_47 : bf16 to vector<112x9xbf16>
    %116 = vector.extract_strided_slice %26 {offsets = [0, 9], sizes = [112, 247], strides = [1, 1]} : vector<112x256xbf16> to vector<112x247xbf16>
    %117 = tpu.concatenate %116, %115 in 1 : vector<112x247xbf16>, vector<112x9xbf16> -> vector<112x256xbf16>
    %118 = vector.broadcast %114 : vector<1x256xbf16> to vector<112x256xbf16>
    %119 = arith.mulf %117, %118 : vector<112x256xbf16>
    %c8 = arith.constant 8 : index
    %c0_48 = arith.constant 0 : index
    %c0_49 = arith.constant 0 : index
    %120 = vector.load %arg6[%c8, %c0_48, %c0_49] : memref<9x256x112xbf16, #tpu.memory_space<vmem>>, vector<1x256x112xbf16>
    %121 = vector.shape_cast %120 : vector<1x256x112xbf16> to vector<256x112xbf16>
    %cst_50 = arith.constant dense<0.000000e+00> : vector<256x256xf32>
    %122 = tpu.matmul %121, %119, %cst_50 {dimension_numbers = #tpu.dot_dimension_numbers<[1], [0], [0], [1], [0, 0, 1, 1], [], []>} : vector<256x112xbf16>, vector<112x256xbf16>, vector<256x256xf32> -> vector<256x256xf32>
    %123 = arith.addf %112, %122 : vector<256x256xf32>
    %c0_51 = arith.constant 0 : index
    %c0_52 = arith.constant 0 : index
    %124 = vector.load %arg7[%c0_51, %c0_52] : memref<256x1xf32, #tpu.memory_space<vmem>>, vector<256x1xf32>
    %125 = vector.broadcast %124 : vector<256x1xf32> to vector<256x256xf32>
    %126 = arith.mulf %123, %125 : vector<256x256xf32>
    %c0_53 = arith.constant 0 : index
    %c0_54 = arith.constant 0 : index
    %127 = vector.load %arg8[%c0_53, %c0_54] : memref<256x1xf32, #tpu.memory_space<vmem>>, vector<256x1xf32>
    %128 = vector.broadcast %127 : vector<256x1xf32> to vector<256x256xf32>
    %129 = arith.addf %126, %128 : vector<256x256xf32>
    %cst_55 = arith.constant 0.000000e+00 : f32
    %130 = vector.broadcast %cst_55 : f32 to vector<256x256xf32>
    %131 = arith.maximumf %129, %130 : vector<256x256xf32>
    %132 = arith.truncf %131 : vector<256x256xf32> to vector<256x256xbf16>
    %cst_56 = arith.constant 0.000000e+00 : f32
    %133 = vector.broadcast %cst_56 : f32 to vector<256x256xf32>
    %134 = arith.truncf %8 : vector<1x256xf32> to vector<1x256xbf16>
    %cst_57 = arith.constant 0.000000e+00 : bf16
    %135 = vector.broadcast %cst_57 : bf16 to vector<256x64xbf16>
    %136 = vector.extract_strided_slice %132 {offsets = [0, 0], sizes = [256, 192], strides = [1, 1]} : vector<256x256xbf16> to vector<256x192xbf16>
    %137 = tpu.concatenate %135, %136 in 1 : vector<256x64xbf16>, vector<256x192xbf16> -> vector<256x256xbf16>
    %138 = vector.broadcast %134 : vector<1x256xbf16> to vector<256x256xbf16>
    %139 = arith.mulf %137, %138 : vector<256x256xbf16>
    %c0_58 = arith.constant 0 : index
    %c0_59 = arith.constant 0 : index
    %c0_60 = arith.constant 0 : index
    %140 = vector.load %arg9[%c0_58, %c0_59, %c0_60] : memref<3x256x256xbf16, #tpu.memory_space<vmem>>, vector<1x256x256xbf16>
    %141 = vector.shape_cast %140 : vector<1x256x256xbf16> to vector<256x256xbf16>
    %cst_61 = arith.constant dense<0.000000e+00> : vector<256x256xf32>
    %142 = tpu.matmul %141, %139, %cst_61 {dimension_numbers = #tpu.dot_dimension_numbers<[1], [0], [0], [1], [0, 0, 1, 1], [], []>} : vector<256x256xbf16>, vector<256x256xbf16>, vector<256x256xf32> -> vector<256x256xf32>
    %143 = arith.addf %133, %142 : vector<256x256xf32>
    %144 = arith.truncf %10 : vector<1x256xf32> to vector<1x256xbf16>
    %145 = vector.broadcast %144 : vector<1x256xbf16> to vector<256x256xbf16>
    %146 = arith.mulf %132, %145 : vector<256x256xbf16>
    %c1_62 = arith.constant 1 : index
    %c0_63 = arith.constant 0 : index
    %c0_64 = arith.constant 0 : index
    %147 = vector.load %arg9[%c1_62, %c0_63, %c0_64] : memref<3x256x256xbf16, #tpu.memory_space<vmem>>, vector<1x256x256xbf16>
    %148 = vector.shape_cast %147 : vector<1x256x256xbf16> to vector<256x256xbf16>
    %cst_65 = arith.constant dense<0.000000e+00> : vector<256x256xf32>
    %149 = tpu.matmul %148, %146, %cst_65 {dimension_numbers = #tpu.dot_dimension_numbers<[1], [0], [0], [1], [0, 0, 1, 1], [], []>} : vector<256x256xbf16>, vector<256x256xbf16>, vector<256x256xf32> -> vector<256x256xf32>
    %150 = arith.addf %143, %149 : vector<256x256xf32>
    %151 = arith.truncf %9 : vector<1x256xf32> to vector<1x256xbf16>
    %cst_66 = arith.constant 0.000000e+00 : bf16
    %152 = vector.broadcast %cst_66 : bf16 to vector<256x64xbf16>
    %153 = vector.extract_strided_slice %132 {offsets = [0, 64], sizes = [256, 192], strides = [1, 1]} : vector<256x256xbf16> to vector<256x192xbf16>
    %154 = tpu.concatenate %153, %152 in 1 : vector<256x192xbf16>, vector<256x64xbf16> -> vector<256x256xbf16>
    %155 = vector.broadcast %151 : vector<1x256xbf16> to vector<256x256xbf16>
    %156 = arith.mulf %154, %155 : vector<256x256xbf16>
    %c2_67 = arith.constant 2 : index
    %c0_68 = arith.constant 0 : index
    %c0_69 = arith.constant 0 : index
    %157 = vector.load %arg9[%c2_67, %c0_68, %c0_69] : memref<3x256x256xbf16, #tpu.memory_space<vmem>>, vector<1x256x256xbf16>
    %158 = vector.shape_cast %157 : vector<1x256x256xbf16> to vector<256x256xbf16>
    %cst_70 = arith.constant dense<0.000000e+00> : vector<256x256xf32>
    %159 = tpu.matmul %158, %156, %cst_70 {dimension_numbers = #tpu.dot_dimension_numbers<[1], [0], [0], [1], [0, 0, 1, 1], [], []>} : vector<256x256xbf16>, vector<256x256xbf16>, vector<256x256xf32> -> vector<256x256xf32>
    %160 = arith.addf %150, %159 : vector<256x256xf32>
    %c0_71 = arith.constant 0 : index
    %c0_72 = arith.constant 0 : index
    %161 = vector.load %arg10[%c0_71, %c0_72] : memref<256x1xf32, #tpu.memory_space<vmem>>, vector<256x1xf32>
    %162 = vector.broadcast %161 : vector<256x1xf32> to vector<256x256xf32>
    %163 = arith.mulf %160, %162 : vector<256x256xf32>
    %c0_73 = arith.constant 0 : index
    %c0_74 = arith.constant 0 : index
    %164 = vector.load %arg11[%c0_73, %c0_74] : memref<256x1xf32, #tpu.memory_space<vmem>>, vector<256x1xf32>
    %165 = vector.broadcast %164 : vector<256x1xf32> to vector<256x256xf32>
    %166 = arith.addf %163, %165 : vector<256x256xf32>
    %cst_75 = arith.constant 0.000000e+00 : f32
    %167 = vector.broadcast %cst_75 : f32 to vector<256x256xf32>
    %168 = arith.maximumf %166, %167 : vector<256x256xf32>
    %c0_76 = arith.constant 0 : index
    %c192 = arith.constant 192 : index
    %c0_77 = arith.constant 0 : index
    %169 = vector.load %arg15[%c0_76, %c192, %c0_77] : memref<1x512x256xf32, #tpu.memory_space<vmem>>, vector<1x256x256xf32>
    %170 = vector.shape_cast %169 : vector<1x256x256xf32> to vector<256x256xf32>
    %171 = vector.shape_cast %168 : vector<256x256xf32> to vector<1x256x256xf32>
    tpu.vector_store %arg15[%c0_76, %c192, %c0_77], %171 {strides = array<i32>} : memref<1x512x256xf32, #tpu.memory_space<vmem>>, vector<1x256x256xf32>,
    %cst_78 = arith.constant 5.000000e-01 : f32
    %172 = vector.broadcast %cst_78 : f32 to vector<1x256xf32>
    %173 = arith.cmpf ogt, %4, %172 : vector<1x256xf32>
    %cst_79 = arith.constant 0.000000e+00 : bf16
    %174 = vector.broadcast %cst_79 : bf16 to vector<480x1xbf16>
    %175 = vector.extract_strided_slice %2 {offsets = [0, 0], sizes = [480, 255], strides = [1, 1]} : vector<480x256xbf16> to vector<480x255xbf16>
    %176 = tpu.concatenate %174, %175 in 1 : vector<480x1xbf16>, vector<480x255xbf16> -> vector<480x256xbf16>
    %cst_80 = arith.constant 0xFF80 : bf16
    %177 = vector.shape_cast %173 : vector<1x256xi1> to vector<1x256xi1>
    %178 = vector.broadcast %177 : vector<1x256xi1> to vector<480x256xi1>
    %179 = vector.broadcast %cst_80 : bf16 to vector<480x256xbf16>
    %180 = arith.select %178, %176, %179 : vector<480x256xi1>, vector<480x256xbf16>
    %cst_81 = arith.constant 5.000000e-01 : f32
    %181 = vector.broadcast %cst_81 : f32 to vector<1x256xf32>
    %182 = arith.cmpf ogt, %5, %181 : vector<1x256xf32>
    %cst_82 = arith.constant 0.000000e+00 : bf16
    %183 = vector.broadcast %cst_82 : bf16 to vector<480x1xbf16>
    %184 = vector.extract_strided_slice %2 {offsets = [0, 1], sizes = [480, 255], strides = [1, 1]} : vector<480x256xbf16> to vector<480x255xbf16>
    %185 = tpu.concatenate %184, %183 in 1 : vector<480x255xbf16>, vector<480x1xbf16> -> vector<480x256xbf16>
    %cst_83 = arith.constant 0xFF80 : bf16
    %186 = vector.shape_cast %182 : vector<1x256xi1> to vector<1x256xi1>
    %187 = vector.broadcast %186 : vector<1x256xi1> to vector<480x256xi1>
    %188 = vector.broadcast %cst_83 : bf16 to vector<480x256xbf16>
    %189 = arith.select %187, %185, %188 : vector<480x256xi1>, vector<480x256xbf16>
    %190 = arith.maximumf %180, %189 : vector<480x256xbf16>
    %191 = arith.maximumf %2, %190 : vector<480x256xbf16>
    %cst_84 = arith.constant 5.000000e-01 : f32
    %192 = vector.broadcast %cst_84 : f32 to vector<1x256xf32>
    %193 = arith.cmpf ogt, %6, %192 : vector<1x256xf32>
    %cst_85 = arith.constant 0.000000e+00 : bf16
    %194 = vector.broadcast %cst_85 : bf16 to vector<480x8xbf16>
    %195 = vector.extract_strided_slice %191 {offsets = [0, 0], sizes = [480, 248], strides = [1, 1]} : vector<480x256xbf16> to vector<480x248xbf16>
    %196 = tpu.concatenate %194, %195 in 1 : vector<480x8xbf16>, vector<480x248xbf16> -> vector<480x256xbf16>
    %cst_86 = arith.constant 0xFF80 : bf16
    %197 = vector.shape_cast %193 : vector<1x256xi1> to vector<1x256xi1>
    %198 = vector.broadcast %197 : vector<1x256xi1> to vector<480x256xi1>
    %199 = vector.broadcast %cst_86 : bf16 to vector<480x256xbf16>
    %200 = arith.select %198, %196, %199 : vector<480x256xi1>, vector<480x256xbf16>
    %cst_87 = arith.constant 5.000000e-01 : f32
    %201 = vector.broadcast %cst_87 : f32 to vector<1x256xf32>
    %202 = arith.cmpf ogt, %7, %201 : vector<1x256xf32>
    %cst_88 = arith.constant 0.000000e+00 : bf16
    %203 = vector.broadcast %cst_88 : bf16 to vector<480x8xbf16>
    %204 = vector.extract_strided_slice %191 {offsets = [0, 8], sizes = [480, 248], strides = [1, 1]} : vector<480x256xbf16> to vector<480x248xbf16>
    %205 = tpu.concatenate %204, %203 in 1 : vector<480x248xbf16>, vector<480x8xbf16> -> vector<480x256xbf16>
    %cst_89 = arith.constant 0xFF80 : bf16
    %206 = vector.shape_cast %202 : vector<1x256xi1> to vector<1x256xi1>
    %207 = vector.broadcast %206 : vector<1x256xi1> to vector<480x256xi1>
    %208 = vector.broadcast %cst_89 : bf16 to vector<480x256xbf16>
    %209 = arith.select %207, %205, %208 : vector<480x256xi1>, vector<480x256xbf16>
    %210 = arith.maximumf %200, %209 : vector<480x256xbf16>
    %211 = arith.maximumf %191, %210 : vector<480x256xbf16>
    %cst_90 = arith.constant 5.000000e-01 : f32
    %212 = vector.broadcast %cst_90 : f32 to vector<1x256xf32>
    %213 = arith.cmpf ogt, %8, %212 : vector<1x256xf32>
    %cst_91 = arith.constant 0.000000e+00 : bf16
    %214 = vector.broadcast %cst_91 : bf16 to vector<480x64xbf16>
    %215 = vector.extract_strided_slice %211 {offsets = [0, 0], sizes = [480, 192], strides = [1, 1]} : vector<480x256xbf16> to vector<480x192xbf16>
    %216 = tpu.concatenate %214, %215 in 1 : vector<480x64xbf16>, vector<480x192xbf16> -> vector<480x256xbf16>
    %cst_92 = arith.constant 0xFF80 : bf16
    %217 = vector.shape_cast %213 : vector<1x256xi1> to vector<1x256xi1>
    %218 = vector.broadcast %217 : vector<1x256xi1> to vector<480x256xi1>
    %219 = vector.broadcast %cst_92 : bf16 to vector<480x256xbf16>
    %220 = arith.select %218, %216, %219 : vector<480x256xi1>, vector<480x256xbf16>
    %cst_93 = arith.constant 5.000000e-01 : f32
    %221 = vector.broadcast %cst_93 : f32 to vector<1x256xf32>
    %222 = arith.cmpf ogt, %9, %221 : vector<1x256xf32>
    %cst_94 = arith.constant 0.000000e+00 : bf16
    %223 = vector.broadcast %cst_94 : bf16 to vector<480x64xbf16>
    %224 = vector.extract_strided_slice %211 {offsets = [0, 64], sizes = [480, 192], strides = [1, 1]} : vector<480x256xbf16> to vector<480x192xbf16>
    %225 = tpu.concatenate %224, %223 in 1 : vector<480x192xbf16>, vector<480x64xbf16> -> vector<480x256xbf16>
    %cst_95 = arith.constant 0xFF80 : bf16
    %226 = vector.shape_cast %222 : vector<1x256xi1> to vector<1x256xi1>
    %227 = vector.broadcast %226 : vector<1x256xi1> to vector<480x256xi1>
    %228 = vector.broadcast %cst_95 : bf16 to vector<480x256xbf16>
    %229 = arith.select %227, %225, %228 : vector<480x256xi1>, vector<480x256xbf16>
    %230 = arith.maximumf %220, %229 : vector<480x256xbf16>
    %231 = arith.maximumf %211, %230 : vector<480x256xbf16>
    %c0_96 = arith.constant 0 : index
    %c0_97 = arith.constant 0 : index
    %232 = vector.load %arg12[%c0_96, %c0_97] : memref<64x480xbf16, #tpu.memory_space<vmem>>, vector<64x480xbf16>
    %cst_98 = arith.constant dense<0.000000e+00> : vector<64x256xf32>
    %233 = tpu.matmul %232, %231, %cst_98 {dimension_numbers = #tpu.dot_dimension_numbers<[1], [0], [0], [1], [0, 0, 1, 1], [], []>} : vector<64x480xbf16>, vector<480x256xbf16>, vector<64x256xf32> -> vector<64x256xf32>
    %c0_99 = arith.constant 0 : index
    %c0_100 = arith.constant 0 : index
    %234 = vector.load %arg13[%c0_99, %c0_100] : memref<64x1xf32, #tpu.memory_space<vmem>>, vector<64x1xf32>
    %235 = vector.broadcast %234 : vector<64x1xf32> to vector<64x256xf32>
    %236 = arith.mulf %233, %235 : vector<64x256xf32>
    %c0_101 = arith.constant 0 : index
    %c0_102 = arith.constant 0 : index
    %237 = vector.load %arg14[%c0_101, %c0_102] : memref<64x1xf32, #tpu.memory_space<vmem>>, vector<64x1xf32>
    %238 = vector.broadcast %237 : vector<64x1xf32> to vector<64x256xf32>
    %239 = arith.addf %236, %238 : vector<64x256xf32>
    %cst_103 = arith.constant 0.000000e+00 : f32
    %240 = vector.broadcast %cst_103 : f32 to vector<64x256xf32>
    %241 = arith.maximumf %239, %240 : vector<64x256xf32>
    %c0_104 = arith.constant 0 : index
    %c448 = arith.constant 448 : index
    %c0_105 = arith.constant 0 : index
    %242 = vector.load %arg15[%c0_104, %c448, %c0_105] : memref<1x512x256xf32, #tpu.memory_space<vmem>>, vector<1x64x256xf32>
    %243 = vector.shape_cast %242 : vector<1x64x256xf32> to vector<64x256xf32>
    %244 = vector.shape_cast %241 : vector<64x256xf32> to vector<1x64x256xf32>
    tpu.vector_store %arg15[%c0_104, %c448, %c0_105], %244 {strides = array<i32>} : memref<1x512x256xf32, #tpu.memory_space<vmem>>, vector<1x64x256xf32>,
    return
  }
  func.func @transform_0(%arg0: i32) -> (i32, i32, i32) {
    %c0_i32 = arith.constant 0 : i32
    %c0_i32_0 = arith.constant 0 : i32
    %c0_i32_1 = arith.constant 0 : i32
    return %arg0, %c0_i32, %c0_i32_0 : i32, i32, i32
  }
  func.func @transform_1(%arg0: i32) -> (i32, i32) {
    %c0_i32 = arith.constant 0 : i32
    %c0_i32_0 = arith.constant 0 : i32
    %c0_i32_1 = arith.constant 0 : i32
    return %c0_i32, %c0_i32_0 : i32, i32
  }
  func.func @transform_2(%arg0: i32) -> (i32, i32) {
    %c0_i32 = arith.constant 0 : i32
    %c0_i32_0 = arith.constant 0 : i32
    %c0_i32_1 = arith.constant 0 : i32
    return %c0_i32, %c0_i32_0 : i32, i32
  }
  func.func @transform_3(%arg0: i32) -> (i32, i32) {
    %c0_i32 = arith.constant 0 : i32
    %c0_i32_0 = arith.constant 0 : i32
    %c0_i32_1 = arith.constant 0 : i32
    return %c0_i32, %c0_i32_0 : i32, i32
  }
  func.func @transform_4(%arg0: i32) -> (i32, i32) {
    %c0_i32 = arith.constant 0 : i32
    %c0_i32_0 = arith.constant 0 : i32
    %c0_i32_1 = arith.constant 0 : i32
    return %c0_i32, %c0_i32_0 : i32, i32
  }
  func.func @transform_5(%arg0: i32) -> (i32, i32, i32) {
    %c0_i32 = arith.constant 0 : i32
    %c0_i32_0 = arith.constant 0 : i32
    %c0_i32_1 = arith.constant 0 : i32
    %c0_i32_2 = arith.constant 0 : i32
    return %c0_i32, %c0_i32_0, %c0_i32_1 : i32, i32, i32
  }
  func.func @transform_6(%arg0: i32) -> (i32, i32) {
    %c0_i32 = arith.constant 0 : i32
    %c0_i32_0 = arith.constant 0 : i32
    %c0_i32_1 = arith.constant 0 : i32
    return %c0_i32, %c0_i32_0 : i32, i32
  }
  func.func @transform_7(%arg0: i32) -> (i32, i32) {
    %c0_i32 = arith.constant 0 : i32
    %c0_i32_0 = arith.constant 0 : i32
    %c0_i32_1 = arith.constant 0 : i32
    return %c0_i32, %c0_i32_0 : i32, i32
  }
  func.func @transform_8(%arg0: i32) -> (i32, i32, i32) {
    %c0_i32 = arith.constant 0 : i32
    %c0_i32_0 = arith.constant 0 : i32
    %c0_i32_1 = arith.constant 0 : i32
    %c0_i32_2 = arith.constant 0 : i32
    return %c0_i32, %c0_i32_0, %c0_i32_1 : i32, i32, i32
  }
  func.func @transform_9(%arg0: i32) -> (i32, i32) {
    %c0_i32 = arith.constant 0 : i32
    %c0_i32_0 = arith.constant 0 : i32
    %c0_i32_1 = arith.constant 0 : i32
    return %c0_i32, %c0_i32_0 : i32, i32
  }
  func.func @transform_10(%arg0: i32) -> (i32, i32) {
    %c0_i32 = arith.constant 0 : i32
    %c0_i32_0 = arith.constant 0 : i32
    %c0_i32_1 = arith.constant 0 : i32
    return %c0_i32, %c0_i32_0 : i32, i32
  }
  func.func @transform_11(%arg0: i32) -> (i32, i32) {
    %c0_i32 = arith.constant 0 : i32
    %c0_i32_0 = arith.constant 0 : i32
    %c0_i32_1 = arith.constant 0 : i32
    return %c0_i32, %c0_i32_0 : i32, i32
  }
  func.func @transform_12(%arg0: i32) -> (i32, i32) {
    %c0_i32 = arith.constant 0 : i32
    %c0_i32_0 = arith.constant 0 : i32
    %c0_i32_1 = arith.constant 0 : i32
    return %c0_i32, %c0_i32_0 : i32, i32
  }
  func.func @transform_13(%arg0: i32) -> (i32, i32) {
    %c0_i32 = arith.constant 0 : i32
    %c0_i32_0 = arith.constant 0 : i32
    %c0_i32_1 = arith.constant 0 : i32
    return %c0_i32, %c0_i32_0 : i32, i32
  }
  func.func @transform_14(%arg0: i32) -> (i32, i32, i32) {
    %c0_i32 = arith.constant 0 : i32
    %c0_i32_0 = arith.constant 0 : i32
    %c0_i32_1 = arith.constant 0 : i32
    return %arg0, %c0_i32, %c0_i32_0 : i32, i32, i32
  }
}

</mosaic_0001>

<llo_original>
// kernel: mixed_4b_forward.1
$region0: #{mixed_4b_forward.1}
  #allocation0 [shape = 'u32[]', space=smem, size = 0x4, offset = 0x4, fixed_abs, tag = 'smem constant byte address 0x4 - core index']
  #allocation1 [shape = 'u32[144,128]{1,0:T(1,128)}', space=vmem, size = 0x12000, scoped, tag = 'internal scratch']
  %s0 = inlined_call_operand.vmem [shape: f32[2,480,256], index: 0, kind: input, shape index: {}]
  %s1 = inlined_call_operand.vmem [shape: f32[8,256], index: 1, kind: input, shape index: {}]
  %s2 = inlined_call_operand.vmem [shape: bf16[304,480], index: 2, kind: input, shape index: {}]
  %s3 = inlined_call_operand.vmem [shape: f32[304,1], index: 3, kind: input, shape index: {}]
  %s4 = inlined_call_operand.vmem [shape: f32[304,1], index: 4, kind: input, shape index: {}]
  %s5 = inlined_call_operand.vmem [shape: bf16[9,256,112], index: 5, kind: input, shape index: {}]
  %s6 = inlined_call_operand.vmem [shape: f32[256,1], index: 6, kind: input, shape index: {}]
  %s7 = inlined_call_operand.vmem [shape: f32[256,1], index: 7, kind: input, shape index: {}]
  %s8 = inlined_call_operand.vmem [shape: bf16[3,256,256], index: 8, kind: input, shape index: {}]
  %s9 = inlined_call_operand.vmem [shape: f32[256,1], index: 9, kind: input, shape index: {}]
  %s10 = inlined_call_operand.vmem [shape: f32[256,1], index: 10, kind: input, shape index: {}]
  %s11 = inlined_call_operand.vmem [shape: bf16[64,480], index: 11, kind: input, shape index: {}]
  %s12 = inlined_call_operand.vmem [shape: f32[64,1], index: 12, kind: input, shape index: {}]
  %s13 = inlined_call_operand.vmem [shape: f32[64,1], index: 13, kind: input, shape index: {}]
  %s14 = inlined_call_operand.vmem [shape: f32[2,512,256], index: 14, kind: output, shape index: {}]
  %s15 = sld [smem:[#allocation0]]
  $region89: #{mixed_4b_forward.1} parent=0
    _
  %s17 = ssub.s32 1, %s15
  %s18 = scalar_select 0, %s17, %s15
  loop: start=0, step=1, limit=4
  $region2: #{mixed_4b_forward.1} parent=0 // loop_pre_header
    _
  $region3: #{mixed_4b_forward.1} parent=0 // loop_header
    %s20 = sphi 0, %s24
    %p21 = scmp.ge.s32.totalorder %s20, 4
    %s30 = sphi 0, %s32
    %s33 = sphi 0, %s30
    %s34 = sphi 0, %s33
    %s50 = sphi 0, %s34
    %s54 = sphi 0, %s54
    %s56 = sphi 0, %s54
    %s57 = sphi 0, %s56
    %s71 = sphi 0, %s57
    %s75 = sphi 0, %s75
    %s77 = sphi 0, %s75
    %s78 = sphi 0, %s77
    %s92 = sphi 0, %s78
    %s96 = sphi 0, %s96
    %s98 = sphi 0, %s96
    %s99 = sphi 0, %s98
    %s113 = sphi 0, %s99
    %s117 = sphi 0, %s117
    %s119 = sphi 0, %s117
    %s120 = sphi 0, %s119
    %s134 = sphi 0, %s120
    %s138 = sphi 0, %s138
    %s140 = sphi 0, %s138
    %s141 = sphi 0, %s140
    %s155 = sphi 0, %s141
    %s159 = sphi 0, %s159
    %s161 = sphi 0, %s159
    %s162 = sphi 0, %s161
    %s176 = sphi 0, %s162
    %s180 = sphi 0, %s180
    %s182 = sphi 0, %s180
    %s183 = sphi 0, %s182
    %s197 = sphi 0, %s183
    %s201 = sphi 0, %s201
    %s203 = sphi 0, %s201
    %s204 = sphi 0, %s203
    %s218 = sphi 0, %s204
    %s222 = sphi 0, %s222
    %s224 = sphi 0, %s222
    %s225 = sphi 0, %s224
    %s239 = sphi 0, %s225
    %s243 = sphi 0, %s243
    %s245 = sphi 0, %s243
    %s246 = sphi 0, %s245
    %s260 = sphi 0, %s246
    %s264 = sphi 0, %s264
    %s266 = sphi 0, %s264
    %s267 = sphi 0, %s266
    %s281 = sphi 0, %s267
    %s285 = sphi 0, %s285
    %s287 = sphi 0, %s285
    %s288 = sphi 0, %s287
    %s302 = sphi 0, %s288
    %s306 = sphi 0, %s306
    %s308 = sphi 0, %s306
    %s309 = sphi 0, %s308
    %s323 = sphi 0, %s309
    %s329 = sphi 0, %s331
    %s332 = sphi 0, %s329
    %s333 = sphi 0, %s332
    %s349 = sphi 0, %s333
  $region4: #{mixed_4b_forward.1} parent=0 // loop_header_branch
    %23 = sbr.rel (%p21) target = $region8
  $region5: #{mixed_4b_forward.1} parent=0 // loop_body
    %s25 = ssub.s32 %s20, 1
    %s26 = ssub.s32 %s20, 2
    %s27 = sadd.s32 %s20, 1
    %s28 = ssub.s32 %s20, %s27
    %p29 = scmp.eq.s32.totalorder %s28, 0
    %s31 = sadd.s32 %s30, 1
    %s32 = scalar_select %p29, %s30, %s31
    %p35 = pneg %p29
    %p36 = scmp.eq.s32.totalorder %s20, 1
    %p37 = por %p35, %p36
    %p38 = scmp.ne.s32.totalorder %s30, %s33
    %p39 = scmp.eq.s32.totalorder %s20, 0
    %p40 = por %p38, %p39
    %p41 = scmp.ne.s32.totalorder %s30, %s33
    %p42 = scmp.eq.s32.totalorder %s25, 1
    %p43 = por %p41, %p42
    %p44 = scmp.ne.s32.totalorder %s33, %s34
    %p45 = scmp.eq.s32.totalorder %s25, 0
    %p46 = por %p44, %p45
    %p47 = scmp.ne.s32.totalorder %s33, %s34
    %p48 = scmp.eq.s32.totalorder %s26, 1
    %p49 = por %p47, %p48
    %p51 = scmp.ne.s32.totalorder %s34, %s50
    %p52 = scmp.eq.s32.totalorder %s26, 0
    %p53 = por %p51, %p52
    %s55 = sadd.s32 %s54, 1
    %p58 = scmp.eq.s32.totalorder %s20, 1
    %p59 = scmp.ne.s32.totalorder %s54, %s56
    %p60 = scmp.eq.s32.totalorder %s20, 0
    %p61 = por %p59, %p60
    %p62 = scmp.ne.s32.totalorder %s54, %s56
    %p63 = scmp.eq.s32.totalorder %s25, 1
    %p64 = por %p62, %p63
    %p65 = scmp.ne.s32.totalorder %s56, %s57
    %p66 = scmp.eq.s32.totalorder %s25, 0
    %p67 = por %p65, %p66
    %p68 = scmp.ne.s32.totalorder %s56, %s57
    %p69 = scmp.eq.s32.totalorder %s26, 1
    %p70 = por %p68, %p69
    %p72 = scmp.ne.s32.totalorder %s57, %s71
    %p73 = scmp.eq.s32.totalorder %s26, 0
    %p74 = por %p72, %p73
    %s76 = sadd.s32 %s75, 1
    %p79 = scmp.eq.s32.totalorder %s20, 1
    %p80 = scmp.ne.s32.totalorder %s75, %s77
    %p81 = scmp.eq.s32.totalorder %s20, 0
    %p82 = por %p80, %p81
    %p83 = scmp.ne.s32.totalorder %s75, %s77
    %p84 = scmp.eq.s32.totalorder %s25, 1
    %p85 = por %p83, %p84
    %p86 = scmp.ne.s32.totalorder %s77, %s78
    %p87 = scmp.eq.s32.totalorder %s25, 0
    %p88 = por %p86, %p87
    %p89 = scmp.ne.s32.totalorder %s77, %s78
    %p90 = scmp.eq.s32.totalorder %s26, 1
    %p91 = por %p89, %p90
    %p93 = scmp.ne.s32.totalorder %s78, %s92
    %p94 = scmp.eq.s32.totalorder %s26, 0
    %p95 = por %p93, %p94
    %s97 = sadd.s32 %s96, 1
    %p100 = scmp.eq.s32.totalorder %s20, 1
    %p101 = scmp.ne.s32.totalorder %s96, %s98
    %p102 = scmp.eq.s32.totalorder %s20, 0
    %p103 = por %p101, %p102
    %p104 = scmp.ne.s32.totalorder %s96, %s98
    %p105 = scmp.eq.s32.totalorder %s25, 1
    %p106 = por %p104, %p105
    %p107 = scmp.ne.s32.totalorder %s98, %s99
    %p108 = scmp.eq.s32.totalorder %s25, 0
    %p109 = por %p107, %p108
    %p110 = scmp.ne.s32.totalorder %s98, %s99
    %p111 = scmp.eq.s32.totalorder %s26, 1
    %p112 = por %p110, %p111
    %p114 = scmp.ne.s32.totalorder %s99, %s113
    %p115 = scmp.eq.s32.totalorder %s26, 0
    %p116 = por %p114, %p115
    %s118 = sadd.s32 %s117, 1
    %p121 = scmp.eq.s32.totalorder %s20, 1
    %p122 = scmp.ne.s32.totalorder %s117, %s119
    %p123 = scmp.eq.s32.totalorder %s20, 0
    %p124 = por %p122, %p123
    %p125 = scmp.ne.s32.totalorder %s117, %s119
    %p126 = scmp.eq.s32.totalorder %s25, 1
    %p127 = por %p125, %p126
    %p128 = scmp.ne.s32.totalorder %s119, %s120
    %p129 = scmp.eq.s32.totalorder %s25, 0
    %p130 = por %p128, %p129
    %p131 = scmp.ne.s32.totalorder %s119, %s120
    %p132 = scmp.eq.s32.totalorder %s26, 1
    %p133 = por %p131, %p132
    %p135 = scmp.ne.s32.totalorder %s120, %s134
    %p136 = scmp.eq.s32.totalorder %s26, 0
    %p137 = por %p135, %p136
    %s139 = sadd.s32 %s138, 1
    %p142 = scmp.eq.s32.totalorder %s20, 1
    %p143 = scmp.ne.s32.totalorder %s138, %s140
    %p144 = scmp.eq.s32.totalorder %s20, 0
    %p145 = por %p143, %p144
    %p146 = scmp.ne.s32.totalorder %s138, %s140
    %p147 = scmp.eq.s32.totalorder %s25, 1
    %p148 = por %p146, %p147
    %p149 = scmp.ne.s32.totalorder %s140, %s141
    %p150 = scmp.eq.s32.totalorder %s25, 0
    %p151 = por %p149, %p150
    %p152 = scmp.ne.s32.totalorder %s140, %s141
    %p153 = scmp.eq.s32.totalorder %s26, 1
    %p154 = por %p152, %p153
    %p156 = scmp.ne.s32.totalorder %s141, %s155
    %p157 = scmp.eq.s32.totalorder %s26, 0
    %p158 = por %p156, %p157
    %s160 = sadd.s32 %s159, 1
    %p163 = scmp.eq.s32.totalorder %s20, 1
    %p164 = scmp.ne.s32.totalorder %s159, %s161
    %p165 = scmp.eq.s32.totalorder %s20, 0
    %p166 = por %p164, %p165
    %p167 = scmp.ne.s32.totalorder %s159, %s161
    %p168 = scmp.eq.s32.totalorder %s25, 1
    %p169 = por %p167, %p168
    %p170 = scmp.ne.s32.totalorder %s161, %s162
    %p171 = scmp.eq.s32.totalorder %s25, 0
    %p172 = por %p170, %p171
    %p173 = scmp.ne.s32.totalorder %s161, %s162
    %p174 = scmp.eq.s32.totalorder %s26, 1
    %p175 = por %p173, %p174
    %p177 = scmp.ne.s32.totalorder %s162, %s176
    %p178 = scmp.eq.s32.totalorder %s26, 0
    %p179 = por %p177, %p178
    %s181 = sadd.s32 %s180, 1
    %p184 = scmp.eq.s32.totalorder %s20, 1
    %p185 = scmp.ne.s32.totalorder %s180, %s182
    %p186 = scmp.eq.s32.totalorder %s20, 0
    %p187 = por %p185, %p186
    %p188 = scmp.ne.s32.totalorder %s180, %s182
    %p189 = scmp.eq.s32.totalorder %s25, 1
    %p190 = por %p188, %p189
    %p191 = scmp.ne.s32.totalorder %s182, %s183
    %p192 = scmp.eq.s32.totalorder %s25, 0
    %p193 = por %p191, %p192
    %p194 = scmp.ne.s32.totalorder %s182, %s183
    %p195 = scmp.eq.s32.totalorder %s26, 1
    %p196 = por %p194, %p195
    %p198 = scmp.ne.s32.totalorder %s183, %s197
    %p199 = scmp.eq.s32.totalorder %s26, 0
    %p200 = por %p198, %p199
    %s202 = sadd.s32 %s201, 1
    %p205 = scmp.eq.s32.totalorder %s20, 1
    %p206 = scmp.ne.s32.totalorder %s201, %s203
    %p207 = scmp.eq.s32.totalorder %s20, 0
    %p208 = por %p206, %p207
    %p209 = scmp.ne.s32.totalorder %s201, %s203
    %p210 = scmp.eq.s32.totalorder %s25, 1
    %p211 = por %p209, %p210
    %p212 = scmp.ne.s32.totalorder %s203, %s204
    %p213 = scmp.eq.s32.totalorder %s25, 0
    %p214 = por %p212, %p213
    %p215 = scmp.ne.s32.totalorder %s203, %s204
    %p216 = scmp.eq.s32.totalorder %s26, 1
    %p217 = por %p215, %p216
    %p219 = scmp.ne.s32.totalorder %s204, %s218
    %p220 = scmp.eq.s32.totalorder %s26, 0
    %p221 = por %p219, %p220
    %s223 = sadd.s32 %s222, 1
    %p226 = scmp.eq.s32.totalorder %s20, 1
    %p227 = scmp.ne.s32.totalorder %s222, %s224
    %p228 = scmp.eq.s32.totalorder %s20, 0
    %p229 = por %p227, %p228
    %p230 = scmp.ne.s32.totalorder %s222, %s224
    %p231 = scmp.eq.s32.totalorder %s25, 1
    %p232 = por %p230, %p231
    %p233 = scmp.ne.s32.totalorder %s224, %s225
    %p234 = scmp.eq.s32.totalorder %s25, 0
    %p235 = por %p233, %p234
    %p236 = scmp.ne.s32.totalorder %s224, %s225
    %p237 = scmp.eq.s32.totalorder %s26, 1
    %p238 = por %p236, %p237
    %p240 = scmp.ne.s32.totalorder %s225, %s239
    %p241 = scmp.eq.s32.totalorder %s26, 0
    %p242 = por %p240, %p241
    %s244 = sadd.s32 %s243, 1
    %p247 = scmp.eq.s32.totalorder %s20, 1
    %p248 = scmp.ne.s32.totalorder %s243, %s245
    %p249 = scmp.eq.s32.totalorder %s20, 0
    %p250 = por %p248, %p249
    %p251 = scmp.ne.s32.totalorder %s243, %s245
    %p252 = scmp.eq.s32.totalorder %s25, 1
    %p253 = por %p251, %p252
    %p254 = scmp.ne.s32.totalorder %s245, %s246
    %p255 = scmp.eq.s32.totalorder %s25, 0
    %p256 = por %p254, %p255
    %p257 = scmp.ne.s32.totalorder %s245, %s246
    %p258 = scmp.eq.s32.totalorder %s26, 1
    %p259 = por %p257, %p258
    %p261 = scmp.ne.s32.totalorder %s246, %s260
    %p262 = scmp.eq.s32.totalorder %s26, 0
    %p263 = por %p261, %p262
    %s265 = sadd.s32 %s264, 1
    %p268 = scmp.eq.s32.totalorder %s20, 1
    %p269 = scmp.ne.s32.totalorder %s264, %s266
    %p270 = scmp.eq.s32.totalorder %s20, 0
    %p271 = por %p269, %p270
    %p272 = scmp.ne.s32.totalorder %s264, %s266
    %p273 = scmp.eq.s32.totalorder %s25, 1
    %p274 = por %p272, %p273
    %p275 = scmp.ne.s32.totalorder %s266, %s267
    %p276 = scmp.eq.s32.totalorder %s25, 0
    %p277 = por %p275, %p276
    %p278 = scmp.ne.s32.totalorder %s266, %s267
    %p279 = scmp.eq.s32.totalorder %s26, 1
    %p280 = por %p278, %p279
    %p282 = scmp.ne.s32.totalorder %s267, %s281
    %p283 = scmp.eq.s32.totalorder %s26, 0
    %p284 = por %p282, %p283
    %s286 = sadd.s32 %s285, 1
    %p289 = scmp.eq.s32.totalorder %s20, 1
    %p290 = scmp.ne.s32.totalorder %s285, %s287
    %p291 = scmp.eq.s32.totalorder %s20, 0
    %p292 = por %p290, %p291
    %p293 = scmp.ne.s32.totalorder %s285, %s287
    %p294 = scmp.eq.s32.totalorder %s25, 1
    %p295 = por %p293, %p294
    %p296 = scmp.ne.s32.totalorder %s287, %s288
    %p297 = scmp.eq.s32.totalorder %s25, 0
    %p298 = por %p296, %p297
    %p299 = scmp.ne.s32.totalorder %s287, %s288
    %p300 = scmp.eq.s32.totalorder %s26, 1
    %p301 = por %p299, %p300
    %p303 = scmp.ne.s32.totalorder %s288, %s302
    %p304 = scmp.eq.s32.totalorder %s26, 0
    %p305 = por %p303, %p304
    %s307 = sadd.s32 %s306, 1
    %p310 = scmp.eq.s32.totalorder %s20, 1
    %p311 = scmp.ne.s32.totalorder %s306, %s308
    %p312 = scmp.eq.s32.totalorder %s20, 0
    %p313 = por %p311, %p312
    %p314 = scmp.ne.s32.totalorder %s306, %s308
    %p315 = scmp.eq.s32.totalorder %s25, 1
    %p316 = por %p314, %p315
    %p317 = scmp.ne.s32.totalorder %s308, %s309
    %p318 = scmp.eq.s32.totalorder %s25, 0
    %p319 = por %p317, %p318
    %p320 = scmp.ne.s32.totalorder %s308, %s309
    %p321 = scmp.eq.s32.totalorder %s26, 1
    %p322 = por %p320, %p321
    %p324 = scmp.ne.s32.totalorder %s309, %s323
    %p325 = scmp.eq.s32.totalorder %s26, 0
    %p326 = por %p324, %p325
    %s327 = ssub.s32 %s20, %s27
    %p328 = scmp.eq.s32.totalorder %s327, 0
    %s330 = sadd.s32 %s329, 1
    %s331 = scalar_select %p328, %s329, %s330
    %p334 = pneg %p328
    %p335 = scmp.eq.s32.totalorder %s20, 1
    %p336 = por %p334, %p335
    %p337 = scmp.ne.s32.totalorder %s329, %s332
    %p338 = scmp.eq.s32.totalorder %s20, 0
    %p339 = por %p337, %p338
    %p340 = scmp.ne.s32.totalorder %s329, %s332
    %p341 = scmp.eq.s32.totalorder %s25, 1
    %p342 = por %p340, %p341
    %p343 = scmp.ne.s32.totalorder %s332, %s333
    %p344 = scmp.eq.s32.totalorder %s25, 0
    %p345 = por %p343, %p344
    %p346 = scmp.ne.s32.totalorder %s332, %s333
    %p347 = scmp.eq.s32.totalorder %s26, 1
    %p348 = por %p346, %p347
    %p350 = scmp.ne.s32.totalorder %s333, %s349
    %p351 = scmp.eq.s32.totalorder %s26, 0
    %p352 = por %p350, %p351
    %p353 = scmp.le.s32.totalorder 1, %s20
    %p354 = scmp.lt.s32.totalorder %s20, 3
    %p355 = pnand %p353, %p354
    %p356 = pneg %p355
    // Predicated region
    $region9: #{mixed_4b_forward.1} parent=5 // pred_check
      _
    $region10: #{mixed_4b_forward.1} parent=5 // pred_check_branch
      %358 = sbr.rel (%p355) target = $region12
    $region11: #{mixed_4b_forward.1} parent=5 // pred_region
      %s359 = ssub.s32 %s20, 1
      // Predicated region
      $region13: #{mixed_4b_forward.1} parent=11 // pred_check
        %p360 = pneg %p67
      $region14: #{mixed_4b_forward.1} parent=11 // pred_check_branch
        %362 = sbr.rel (%p360) target = $region16
      $region15: #{mixed_4b_forward.1} parent=11 // pred_region
        _
      $region16: #{mixed_4b_forward.1} parent=11 // pred_fallthru
        _
      // Predicated region
      $region17: #{mixed_4b_forward.1} parent=11 // pred_check
        %p363 = pneg %p88
      $region18: #{mixed_4b_forward.1} parent=11 // pred_check_branch
        %365 = sbr.rel (%p363) target = $region20
      $region19: #{mixed_4b_forward.1} parent=11 // pred_region
        _
      $region20: #{mixed_4b_forward.1} parent=11 // pred_fallthru
        _
      // Predicated region
      $region21: #{mixed_4b_forward.1} parent=11 // pred_check
        %p366 = pneg %p109
      $region22: #{mixed_4b_forward.1} parent=11 // pred_check_branch
        %368 = sbr.rel (%p366) target = $region24
      $region23: #{mixed_4b_forward.1} parent=11 // pred_region
        _
      $region24: #{mixed_4b_forward.1} parent=11 // pred_fallthru
        _
      // Predicated region
      $region25: #{mixed_4b_forward.1} parent=11 // pred_check
        %p369 = pneg %p130
      $region26: #{mixed_4b_forward.1} parent=11 // pred_check_branch
        %371 = sbr.rel (%p369) target = $region28
      $region27: #{mixed_4b_forward.1} parent=11 // pred_region
        _
      $region28: #{mixed_4b_forward.1} parent=11 // pred_fallthru
        _
      // Predicated region
      $region29: #{mixed_4b_forward.1} parent=11 // pred_check
        %p372 = pneg %p151
      $region30: #{mixed_4b_forward.1} parent=11 // pred_check_branch
        %374 = sbr.rel (%p372) target = $region32
      $region31: #{mixed_4b_forward.1} parent=11 // pred_region
        _
      $region32: #{mixed_4b_forward.1} parent=11 // pred_fallthru
        _
      // Predicated region
      $region33: #{mixed_4b_forward.1} parent=11 // pred_check
        %p375 = pneg %p172
      $region34: #{mixed_4b_forward.1} parent=11 // pred_check_branch
        %377 = sbr.rel (%p375) target = $region36
      $region35: #{mixed_4b_forward.1} parent=11 // pred_region
        _
      $region36: #{mixed_4b_forward.1} parent=11 // pred_fallthru
        _
      // Predicated region
      $region37: #{mixed_4b_forward.1} parent=11 // pred_check
        %p378 = pneg %p193
      $region38: #{mixed_4b_forward.1} parent=11 // pred_check_branch
        %380 = sbr.rel (%p378) target = $region40
      $region39: #{mixed_4b_forward.1} parent=11 // pred_region
        _
      $region40: #{mixed_4b_forward.1} parent=11 // pred_fallthru
        _
      // Predicated region
      $region41: #{mixed_4b_forward.1} parent=11 // pred_check
        %p381 = pneg %p214
      $region42: #{mixed_4b_forward.1} parent=11 // pred_check_branch
        %383 = sbr.rel (%p381) target = $region44
      $region43: #{mixed_4b_forward.1} parent=11 // pred_region
        _
      $region44: #{mixed_4b_forward.1} parent=11 // pred_fallthru
        _
      // Predicated region
      $region45: #{mixed_4b_forward.1} parent=11 // pred_check
        %p384 = pneg %p235
      $region46: #{mixed_4b_forward.1} parent=11 // pred_check_branch
        %386 = sbr.rel (%p384) target = $region48
      $region47: #{mixed_4b_forward.1} parent=11 // pred_region
        _
      $region48: #{mixed_4b_forward.1} parent=11 // pred_fallthru
        _
      // Predicated region
      $region49: #{mixed_4b_forward.1} parent=11 // pred_check
        %p387 = pneg %p256
      $region50: #{mixed_4b_forward.1} parent=11 // pred_check_branch
        %389 = sbr.rel (%p387) target = $region52
      $region51: #{mixed_4b_forward.1} parent=11 // pred_region
        _
      $region52: #{mixed_4b_forward.1} parent=11 // pred_fallthru
        _
      // Predicated region
      $region53: #{mixed_4b_forward.1} parent=11 // pred_check
        %p390 = pneg %p277
      $region54: #{mixed_4b_forward.1} parent=11 // pred_check_branch
        %392 = sbr.rel (%p390) target = $region56
      $region55: #{mixed_4b_forward.1} parent=11 // pred_region
        _
      $region56: #{mixed_4b_forward.1} parent=11 // pred_fallthru
        _
      // Predicated region
      $region57: #{mixed_4b_forward.1} parent=11 // pred_check
        %p393 = pneg %p298
      $region58: #{mixed_4b_forward.1} parent=11 // pred_check_branch
        %395 = sbr.rel (%p393) target = $region60
      $region59: #{mixed_4b_forward.1} parent=11 // pred_region
        _
      $region60: #{mixed_4b_forward.1} parent=11 // pred_fallthru
        _
      // Predicated region
      $region61: #{mixed_4b_forward.1} parent=11 // pred_check
        %p396 = pneg %p319
      $region62: #{mixed_4b_forward.1} parent=11 // pred_check_branch
        %398 = sbr.rel (%p396) target = $region64
      $region63: #{mixed_4b_forward.1} parent=11 // pred_region
        _
      $region64: #{mixed_4b_forward.1} parent=11 // pred_fallthru
        _
    $region12: #{mixed_4b_forward.1} parent=5 // pred_fallthru
      _
    %p399 = scmp.lt.s32.totalorder %s20, 2
    // Predicated region
    $region65: #{mixed_4b_forward.1} parent=5 // pred_check
      %p400 = pneg %p399
    $region66: #{mixed_4b_forward.1} parent=5 // pred_check_branch
      %402 = sbr.rel (%p400) target = $region68
    $region67: #{mixed_4b_forward.1} parent=5 // pred_region
      // Predicated region
      $region69: #{mixed_4b_forward.1} parent=67 // pred_check
        %p403 = pneg %p40
      $region70: #{mixed_4b_forward.1} parent=67 // pred_check_branch
        %405 = sbr.rel (%p403) target = $region72
      $region71: #{mixed_4b_forward.1} parent=67 // pred_region
        %p406 = scmp.lt.s32.totalorder %s20, 1
        %s407 = scalar_select %p406, %s20, 1
        %s408 = smul.addr %s407, 120
        %s409 = smul.addr %s408, 8
        %s410 = scalar_lea.vmem %s0, %s409
      $region72: #{mixed_4b_forward.1} parent=67 // pred_fallthru
        _
    $region68: #{mixed_4b_forward.1} parent=5 // pred_fallthru
      _
    %p411 = scmp.le.s32.totalorder 1, %s20
    %p412 = scmp.lt.s32.totalorder %s20, 3
    %p413 = pnand %p411, %p412
    %p414 = pneg %p413
    // Predicated region
    $region73: #{mixed_4b_forward.1} parent=5 // pred_check
      _
    $region74: #{mixed_4b_forward.1} parent=5 // pred_check_branch
      %416 = sbr.rel (%p413) target = $region76
    $region75: #{mixed_4b_forward.1} parent=5 // pred_region
      %s417 = ssub.s32 %s20, 1
      %p418 = scmp.lt.s32.totalorder %s25, 1
      %s419 = scalar_select %p418, %s25, 1
      %s420 = smul.addr %s419, 120
      %s421 = smul.addr %s420, 8
      %s422 = scalar_lea.vmem %s0, %s421
      %p423 = pneg %p46
      %p424 = pneg %p43
      %p425 = pneg %p67
      %p426 = pneg %p64
      %p427 = pneg %p88
      %p428 = pneg %p85
      %p429 = pneg %p109
      %p430 = pneg %p106
      %p431 = pneg %p130
      %p432 = pneg %p127
      %p433 = pneg %p151
      %p434 = pneg %p148
      %p435 = pneg %p172
      %p436 = pneg %p169
      %p437 = pneg %p193
      %p438 = pneg %p190
      %p439 = pneg %p214
      %p440 = pneg %p211
      %p441 = pneg %p235
      %p442 = pneg %p232
      %p443 = pneg %p256
      %p444 = pneg %p253
      %p445 = pneg %p277
      %p446 = pneg %p274
      %p447 = pneg %p298
      %p448 = pneg %p295
      %p449 = pneg %p319
      %p450 = pneg %p316
      %p451 = pneg %p345
      %p452 = pneg %p342
      %p453 = scmp.lt.s32.totalorder %s25, 1
      %s454 = scalar_select %p453, %s25, 1
      %s455 = smul.addr %s454, 128
      %s456 = smul.addr %s455, 8
      %s457 = scalar_lea.vmem %s14, %s456
      %p458 = scmp.lt.s32.totalorder %s25, 1
      %s459 = scalar_select %p458, %s25, 1
      %s460 = smul.addr %s459, 120
      %s461 = smul.addr %s460, 8
      %s462 = scalar_lea.vmem %s0, %s461
      %p463 = scmp.lt.s32.totalorder %s25, 1
      %s464 = scalar_select %p463, %s25, 1
      %s465 = smul.addr %s464, 128
      %s466 = smul.addr %s465, 8
      %s467 = scalar_lea.vmem %s14, %s466
      %v472 = vld [vmem:[%s462] sm:$0xff]
      %v473 = vld [vmem:[%s462 + $0x8] sm:$0xff]
      %v474 = vld [vmem:[%s462 + $0x10] sm:$0xff]
      %v475 = vld [vmem:[%s462 + $0x18] sm:$0xff]
      %v476 = vld [vmem:[%s462 + $0x20] sm:$0xff]
      %v477 = vld [vmem:[%s462 + $0x28] sm:$0xff]
      %v478 = vld [vmem:[%s462 + $0x30] sm:$0xff]
      %v479 = vld [vmem:[%s462 + $0x38] sm:$0xff]
      %v480 = vld [vmem:[%s462 + $0x40] sm:$0xff]
      %v481 = vld [vmem:[%s462 + $0x48] sm:$0xff]
      %v482 = vld [vmem:[%s462 + $0x50] sm:$0xff]
      %v483 = vld [vmem:[%s462 + $0x58] sm:$0xff]
      %v484 = vld [vmem:[%s462 + $0x60] sm:$0xff]
      %v485 = vld [vmem:[%s462 + $0x68] sm:$0xff]
      %v486 = vld [vmem:[%s462 + $0x70] sm:$0xff]
      %v487 = vld [vmem:[%s462 + $0x78] sm:$0xff]
      %v488 = vld [vmem:[%s462 + $0x80] sm:$0xff]
      %v489 = vld [vmem:[%s462 + $0x88] sm:$0xff]
      %v490 = vld [vmem:[%s462 + $0x90] sm:$0xff]
      %v491 = vld [vmem:[%s462 + $0x98] sm:$0xff]
      %v492 = vld [vmem:[%s462 + $0xa0] sm:$0xff]
      %v493 = vld [vmem:[%s462 + $0xa8] sm:$0xff]
      %v494 = vld [vmem:[%s462 + $0xb0] sm:$0xff]
      %v495 = vld [vmem:[%s462 + $0xb8] sm:$0xff]
      %v496 = vld [vmem:[%s462 + $0xc0] sm:$0xff]
      %v497 = vld [vmem:[%s462 + $0xc8] sm:$0xff]
      %v498 = vld [vmem:[%s462 + $0xd0] sm:$0xff]
      %v499 = vld [vmem:[%s462 + $0xd8] sm:$0xff]
      %v500 = vld [vmem:[%s462 + $0xe0] sm:$0xff]
      %v501 = vld [vmem:[%s462 + $0xe8] sm:$0xff]
      %v502 = vld [vmem:[%s462 + $0xf0] sm:$0xff]
      %v503 = vld [vmem:[%s462 + $0xf8] sm:$0xff]
      %v504 = vld [vmem:[%s462 + $0x100] sm:$0xff]
      %v505 = vld [vmem:[%s462 + $0x108] sm:$0xff]
      %v506 = vld [vmem:[%s462 + $0x110] sm:$0xff]
      %v507 = vld [vmem:[%s462 + $0x118] sm:$0xff]
      %v508 = vld [vmem:[%s462 + $0x120] sm:$0xff]
      %v509 = vld [vmem:[%s462 + $0x128] sm:$0xff]
      %v510 = vld [vmem:[%s462 + $0x130] sm:$0xff]
      %v511 = vld [vmem:[%s462 + $0x138] sm:$0xff]
      %v512 = vld [vmem:[%s462 + $0x140] sm:$0xff]
      %v513 = vld [vmem:[%s462 + $0x148] sm:$0xff]
      %v514 = vld [vmem:[%s462 + $0x150] sm:$0xff]
      %v515 = vld [vmem:[%s462 + $0x158] sm:$0xff]
      %v516 = vld [vmem:[%s462 + $0x160] sm:$0xff]
      %v517 = vld [vmem:[%s462 + $0x168] sm:$0xff]
      %v518 = vld [vmem:[%s462 + $0x170] sm:$0xff]
      %v519 = vld [vmem:[%s462 + $0x178] sm:$0xff]
      %v520 = vld [vmem:[%s462 + $0x180] sm:$0xff]
      %v521 = vld [vmem:[%s462 + $0x188] sm:$0xff]
      %v522 = vld [vmem:[%s462 + $0x190] sm:$0xff]
      %v523 = vld [vmem:[%s462 + $0x198] sm:$0xff]
      %v524 = vld [vmem:[%s462 + $0x1a0] sm:$0xff]
      %v525 = vld [vmem:[%s462 + $0x1a8] sm:$0xff]
      %v526 = vld [vmem:[%s462 + $0x1b0] sm:$0xff]
      %v527 = vld [vmem:[%s462 + $0x1b8] sm:$0xff]
      %v528 = vld [vmem:[%s462 + $0x1c0] sm:$0xff]
      %v529 = vld [vmem:[%s462 + $0x1c8] sm:$0xff]
      %v530 = vld [vmem:[%s462 + $0x1d0] sm:$0xff]
      %v531 = vld [vmem:[%s462 + $0x1d8] sm:$0xff]
      %v532 = vld [vmem:[%s462 + $0x1e0] sm:$0xff]
      %v533 = vld [vmem:[%s462 + $0x1e8] sm:$0xff]
      %v534 = vld [vmem:[%s462 + $0x1f0] sm:$0xff]
      %v535 = vld [vmem:[%s462 + $0x1f8] sm:$0xff]
      %v536 = vld [vmem:[%s462 + $0x200] sm:$0xff]
      %v537 = vld [vmem:[%s462 + $0x208] sm:$0xff]
      %v538 = vld [vmem:[%s462 + $0x210] sm:$0xff]
      %v539 = vld [vmem:[%s462 + $0x218] sm:$0xff]
      %v540 = vld [vmem:[%s462 + $0x220] sm:$0xff]
      %v541 = vld [vmem:[%s462 + $0x228] sm:$0xff]
      %v542 = vld [vmem:[%s462 + $0x230] sm:$0xff]
      %v543 = vld [vmem:[%s462 + $0x238] sm:$0xff]
      %v544 = vld [vmem:[%s462 + $0x240] sm:$0xff]
      %v545 = vld [vmem:[%s462 + $0x248] sm:$0xff]
      %v546 = vld [vmem:[%s462 + $0x250] sm:$0xff]
      %v547 = vld [vmem:[%s462 + $0x258] sm:$0xff]
      %v548 = vld [vmem:[%s462 + $0x260] sm:$0xff]
      %v549 = vld [vmem:[%s462 + $0x268] sm:$0xff]
      %v550 = vld [vmem:[%s462 + $0x270] sm:$0xff]
      %v551 = vld [vmem:[%s462 + $0x278] sm:$0xff]
      %v552 = vld [vmem:[%s462 + $0x280] sm:$0xff]
      %v553 = vld [vmem:[%s462 + $0x288] sm:$0xff]
      %v554 = vld [vmem:[%s462 + $0x290] sm:$0xff]
      %v555 = vld [vmem:[%s462 + $0x298] sm:$0xff]
      %v556 = vld [vmem:[%s462 + $0x2a0] sm:$0xff]
      %v557 = vld [vmem:[%s462 + $0x2a8] sm:$0xff]
      %v558 = vld [vmem:[%s462 + $0x2b0] sm:$0xff]
      %v559 = vld [vmem:[%s462 + $0x2b8] sm:$0xff]
      %v560 = vld [vmem:[%s462 + $0x2c0] sm:$0xff]
      %v561 = vld [vmem:[%s462 + $0x2c8] sm:$0xff]
      %v562 = vld [vmem:[%s462 + $0x2d0] sm:$0xff]
      %v563 = vld [vmem:[%s462 + $0x2d8] sm:$0xff]
      %v564 = vld [vmem:[%s462 + $0x2e0] sm:$0xff]
      %v565 = vld [vmem:[%s462 + $0x2e8] sm:$0xff]
      %v566 = vld [vmem:[%s462 + $0x2f0] sm:$0xff]
      %v567 = vld [vmem:[%s462 + $0x2f8] sm:$0xff]
      %v568 = vld [vmem:[%s462 + $0x300] sm:$0xff]
      %v569 = vld [vmem:[%s462 + $0x308] sm:$0xff]
      %v570 = vld [vmem:[%s462 + $0x310] sm:$0xff]
      %v571 = vld [vmem:[%s462 + $0x318] sm:$0xff]
      %v572 = vld [vmem:[%s462 + $0x320] sm:$0xff]
      %v573 = vld [vmem:[%s462 + $0x328] sm:$0xff]
      %v574 = vld [vmem:[%s462 + $0x330] sm:$0xff]
      %v575 = vld [vmem:[%s462 + $0x338] sm:$0xff]
      %v576 = vld [vmem:[%s462 + $0x340] sm:$0xff]
      %v577 = vld [vmem:[%s462 + $0x348] sm:$0xff]
      %v578 = vld [vmem:[%s462 + $0x350] sm:$0xff]
      %v579 = vld [vmem:[%s462 + $0x358] sm:$0xff]
      %v580 = vld [vmem:[%s462 + $0x360] sm:$0xff]
      %v581 = vld [vmem:[%s462 + $0x368] sm:$0xff]
      %v582 = vld [vmem:[%s462 + $0x370] sm:$0xff]
      %v583 = vld [vmem:[%s462 + $0x378] sm:$0xff]
      %v584 = vld [vmem:[%s462 + $0x380] sm:$0xff]
      %v585 = vld [vmem:[%s462 + $0x388] sm:$0xff]
      %v586 = vld [vmem:[%s462 + $0x390] sm:$0xff]
      %v587 = vld [vmem:[%s462 + $0x398] sm:$0xff]
      %v588 = vld [vmem:[%s462 + $0x3a0] sm:$0xff]
      %v589 = vld [vmem:[%s462 + $0x3a8] sm:$0xff]
      %v590 = vld [vmem:[%s462 + $0x3b0] sm:$0xff]
      %v591 = vld [vmem:[%s462 + $0x3b8] sm:$0xff]
      %v592 = vpack.c.bf16 %v474, %v472
      %v593 = vpack.c.bf16 %v475, %v473
      %v594 = vpack.c.bf16 %v478, %v476
      %v595 = vpack.c.bf16 %v479, %v477
      %v596 = vpack.c.bf16 %v482, %v480
      %v597 = vpack.c.bf16 %v483, %v481
      %v598 = vpack.c.bf16 %v486, %v484
      %v599 = vpack.c.bf16 %v487, %v485
      %v600 = vpack.c.bf16 %v490, %v488
      %v601 = vpack.c.bf16 %v491, %v489
      %v602 = vpack.c.bf16 %v494, %v492
      %v603 = vpack.c.bf16 %v495, %v493
      %v604 = vpack.c.bf16 %v498, %v496
      %v605 = vpack.c.bf16 %v499, %v497
      %v606 = vpack.c.bf16 %v502, %v500
      %v607 = vpack.c.bf16 %v503, %v501
      %v608 = vpack.c.bf16 %v506, %v504
      %v609 = vpack.c.bf16 %v507, %v505
      %v610 = vpack.c.bf16 %v510, %v508
      %v611 = vpack.c.bf16 %v511, %v509
      %v612 = vpack.c.bf16 %v514, %v512
      %v613 = vpack.c.bf16 %v515, %v513
      %v614 = vpack.c.bf16 %v518, %v516
      %v615 = vpack.c.bf16 %v519, %v517
      %v616 = vpack.c.bf16 %v522, %v520
      %v617 = vpack.c.bf16 %v523, %v521
      %v618 = vpack.c.bf16 %v526, %v524
      %v619 = vpack.c.bf16 %v527, %v525
      %v620 = vpack.c.bf16 %v530, %v528
      %v621 = vpack.c.bf16 %v531, %v529
      %v622 = vpack.c.bf16 %v534, %v532
      %v623 = vpack.c.bf16 %v535, %v533
      %v624 = vpack.c.bf16 %v538, %v536
      %v625 = vpack.c.bf16 %v539, %v537
      %v626 = vpack.c.bf16 %v542, %v540
      %v627 = vpack.c.bf16 %v543, %v541
      %v628 = vpack.c.bf16 %v546, %v544
      %v629 = vpack.c.bf16 %v547, %v545
      %v630 = vpack.c.bf16 %v550, %v548
      %v631 = vpack.c.bf16 %v551, %v549
      %v632 = vpack.c.bf16 %v554, %v552
      %v633 = vpack.c.bf16 %v555, %v553
      %v634 = vpack.c.bf16 %v558, %v556
      %v635 = vpack.c.bf16 %v559, %v557
      %v636 = vpack.c.bf16 %v562, %v560
      %v637 = vpack.c.bf16 %v563, %v561
      %v638 = vpack.c.bf16 %v566, %v564
      %v639 = vpack.c.bf16 %v567, %v565
      %v640 = vpack.c.bf16 %v570, %v568
      %v641 = vpack.c.bf16 %v571, %v569
      %v642 = vpack.c.bf16 %v574, %v572
      %v643 = vpack.c.bf16 %v575, %v573
      %v644 = vpack.c.bf16 %v578, %v576
      %v645 = vpack.c.bf16 %v579, %v577
      %v646 = vpack.c.bf16 %v582, %v580
      %v647 = vpack.c.bf16 %v583, %v581
      %v648 = vpack.c.bf16 %v586, %v584
      %v649 = vpack.c.bf16 %v587, %v585
      %v650 = vpack.c.bf16 %v590, %v588
      %v651 = vpack.c.bf16 %v591, %v589
      %v652 = vld [vmem:[%s1] sm:$0xff]
      %v653 = vld [vmem:[%s1 + $0x8] sm:$0xff]
      %v654 = vld [vmem:[%s2] sm:$0xff]
      %v655 = vld [vmem:[%s2 + $0x8] sm:$0xff]
      %v656 = vld [vmem:[%s2 + $0x10] sm:$0xff]
      %v657 = vld [vmem:[%s2 + $0x18] sm:$0xff]
      %v658 = vld [vmem:[%s2 + $0x20] sm:$0xff]
      %v659 = vld [vmem:[%s2 + $0x28] sm:$0xff]
      %v660 = vld [vmem:[%s2 + $0x30] sm:$0xff]
      %v661 = vld [vmem:[%s2 + $0x38] sm:$0xff]
      %v662 = vld [vmem:[%s2 + $0x40] sm:$0xff]
      %v663 = vld [vmem:[%s2 + $0x48] sm:$0xff]
      %v664 = vld [vmem:[%s2 + $0x50] sm:$0xff]
      %v665 = vld [vmem:[%s2 + $0x58] sm:$0xff]
      %v666 = vld [vmem:[%s2 + $0x60] sm:$0xff]
      %v667 = vld [vmem:[%s2 + $0x68] sm:$0xff]
      %v668 = vld [vmem:[%s2 + $0x70] sm:$0xff]
      %v669 = vld [vmem:[%s2 + $0x78] sm:$0xff]
      %v670 = vld [vmem:[%s2 + $0x80] sm:$0xff]
      %v671 = vld [vmem:[%s2 + $0x88] sm:$0xff]
      %v672 = vld [vmem:[%s2 + $0x90] sm:$0xff]
      %v673 = vld [vmem:[%s2 + $0x98] sm:$0xff]
      %v674 = vld [vmem:[%s2 + $0xa0] sm:$0xff]
      %v675 = vld [vmem:[%s2 + $0xa8] sm:$0xff]
      %v676 = vld [vmem:[%s2 + $0xb0] sm:$0xff]
      %v677 = vld [vmem:[%s2 + $0xb8] sm:$0xff]
      %v678 = vld [vmem:[%s2 + $0xc0] sm:$0xff]
      %v679 = vld [vmem:[%s2 + $0xc8] sm:$0xff]
      %v680 = vld [vmem:[%s2 + $0xd0] sm:$0xff]
      %v681 = vld [vmem:[%s2 + $0xd8] sm:$0xff]
      %v682 = vld [vmem:[%s2 + $0xe0] sm:$0xff]
      %v683 = vld [vmem:[%s2 + $0xe8] sm:$0xff]
      %v684 = vld [vmem:[%s2 + $0xf0] sm:$0xff]
      %v685 = vld [vmem:[%s2 + $0xf8] sm:$0xff]
      %v686 = vld [vmem:[%s2 + $0x100] sm:$0xff]
      %v687 = vld [vmem:[%s2 + $0x108] sm:$0xff]
      %v688 = vld [vmem:[%s2 + $0x110] sm:$0xff]
      %v689 = vld [vmem:[%s2 + $0x118] sm:$0xff]
      %v690 = vld [vmem:[%s2 + $0x120] sm:$0xff]
      %v691 = vld [vmem:[%s2 + $0x128] sm:$0xff]
      %v692 = vld [vmem:[%s2 + $0x130] sm:$0xff]
      %v693 = vld [vmem:[%s2 + $0x138] sm:$0xff]
      %v694 = vld [vmem:[%s2 + $0x140] sm:$0xff]
      %v695 = vld [vmem:[%s2 + $0x148] sm:$0xff]
      %v696 = vld [vmem:[%s2 + $0x150] sm:$0xff]
      %v697 = vld [vmem:[%s2 + $0x158] sm:$0xff]
      %v698 = vld [vmem:[%s2 + $0x160] sm:$0xff]
      %v699 = vld [vmem:[%s2 + $0x168] sm:$0xff]
      %v700 = vld [vmem:[%s2 + $0x170] sm:$0xff]
      %v701 = vld [vmem:[%s2 + $0x178] sm:$0xff]
      %v702 = vld [vmem:[%s2 + $0x180] sm:$0xff]
      %v703 = vld [vmem:[%s2 + $0x188] sm:$0xff]
      %v704 = vld [vmem:[%s2 + $0x190] sm:$0xff]
      %v705 = vld [vmem:[%s2 + $0x198] sm:$0xff]
      %v706 = vld [vmem:[%s2 + $0x1a0] sm:$0xff]
      %v707 = vld [vmem:[%s2 + $0x1a8] sm:$0xff]
      %v708 = vld [vmem:[%s2 + $0x1b0] sm:$0xff]
      %v709 = vld [vmem:[%s2 + $0x1b8] sm:$0xff]
      %v710 = vld [vmem:[%s2 + $0x1c0] sm:$0xff]
      %v711 = vld [vmem:[%s2 + $0x1c8] sm:$0xff]
      %v712 = vld [vmem:[%s2 + $0x1d0] sm:$0xff]
      %v713 = vld [vmem:[%s2 + $0x1d8] sm:$0xff]
      %v714 = vld [vmem:[%s2 + $0x1e0] sm:$0xff]
      %v715 = vld [vmem:[%s2 + $0x1e8] sm:$0xff]
      %v716 = vld [vmem:[%s2 + $0x1f0] sm:$0xff]
      %v717 = vld [vmem:[%s2 + $0x1f8] sm:$0xff]
      %v718 = vld [vmem:[%s2 + $0x200] sm:$0xff]
      %v719 = vld [vmem:[%s2 + $0x208] sm:$0xff]
      %v720 = vld [vmem:[%s2 + $0x210] sm:$0xff]
      %v721 = vld [vmem:[%s2 + $0x218] sm:$0xff]
      %v722 = vld [vmem:[%s2 + $0x220] sm:$0xff]
      %v723 = vld [vmem:[%s2 + $0x228] sm:$0xff]
      %v724 = vld [vmem:[%s2 + $0x230] sm:$0xff]
      %v725 = vld [vmem:[%s2 + $0x238] sm:$0xff]
      %v726 = vld [vmem:[%s2 + $0x240] sm:$0xff]
      %v727 = vld [vmem:[%s2 + $0x248] sm:$0xff]
      %v728 = vld [vmem:[%s2 + $0x250] sm:$0xff]
      %v729 = vld [vmem:[%s2 + $0x258] sm:$0xff]
      %v806 = vunpack.c.l.b16 %v654
      %v807 = vunpack.c.h.b16 %v654
      %v808 = vunpack.c.l.b16 %v655
      %v809 = vunpack.c.h.b16 %v655
      %v810 = vunpack.c.l.b16 %v656
      %v811 = vunpack.c.h.b16 %v656
      %v812 = vunpack.c.l.b16 %v657
      %v813 = vunpack.c.h.b16 %v657
      %v814 = vunpack.c.l.b16 %v658
      %v815 = vunpack.c.h.b16 %v658
      %v816 = vunpack.c.l.b16 %v659
      %v817 = vunpack.c.h.b16 %v659
      %v818 = vunpack.c.l.b16 %v660
      %v819 = vunpack.c.h.b16 %v660
      %v820 = vunpack.c.l.b16 %v661
      %v821 = vunpack.c.h.b16 %v661
      %v822 = vunpack.c.l.b16 %v662
      %v823 = vunpack.c.h.b16 %v662
      %v824 = vunpack.c.l.b16 %v663
      %v825 = vunpack.c.h.b16 %v663
      %v826 = vunpack.c.l.b16 %v664
      %v827 = vunpack.c.h.b16 %v664
      %v828 = vunpack.c.l.b16 %v665
      %v829 = vunpack.c.h.b16 %v665
      %v830 = vunpack.c.l.b16 %v666
      %v831 = vunpack.c.h.b16 %v666
      %v832 = vunpack.c.l.b16 %v667
      %v833 = vunpack.c.h.b16 %v667
      %v834 = vunpack.c.l.b16 %v668
      %v835 = vunpack.c.h.b16 %v668
      %v836 = vunpack.c.l.b16 %v669
      %v837 = vunpack.c.h.b16 %v669
      %v838 = vunpack.c.l.b16 %v670
      %v839 = vunpack.c.h.b16 %v670
      %v840 = vunpack.c.l.b16 %v671
      %v841 = vunpack.c.h.b16 %v671
      %v842 = vunpack.c.l.b16 %v672
      %v843 = vunpack.c.h.b16 %v672
      %v844 = vunpack.c.l.b16 %v673
      %v845 = vunpack.c.h.b16 %v673
      %v846 = vunpack.c.l.b16 %v674
      %v847 = vunpack.c.h.b16 %v674
      %v848 = vunpack.c.l.b16 %v675
      %v849 = vunpack.c.h.b16 %v675
      %v850 = vunpack.c.l.b16 %v676
      %v851 = vunpack.c.h.b16 %v676
      %v852 = vunpack.c.l.b16 %v677
      %v853 = vunpack.c.h.b16 %v677
      %v854 = vunpack.c.l.b16 %v678
      %v855 = vunpack.c.h.b16 %v678
      %v856 = vunpack.c.l.b16 %v679
      %v857 = vunpack.c.h.b16 %v679
      %v858 = vunpack.c.l.b16 %v680
      %v859 = vunpack.c.h.b16 %v680
      %v860 = vunpack.c.l.b16 %v681
      %v861 = vunpack.c.h.b16 %v681
      %v862 = vunpack.c.l.b16 %v682
      %v863 = vunpack.c.h.b16 %v682
      %v864 = vunpack.c.l.b16 %v683
      %v865 = vunpack.c.h.b16 %v683
      %v866 = vunpack.c.l.b16 %v684
      %v867 = vunpack.c.h.b16 %v684
      %v868 = vunpack.c.l.b16 %v685
      %v869 = vunpack.c.h.b16 %v685
      %v870 = vunpack.c.l.b16 %v686
      %v871 = vunpack.c.h.b16 %v686
      %v872 = vunpack.c.l.b16 %v687
      %v873 = vunpack.c.h.b16 %v687
      %v874 = vunpack.c.l.b16 %v688
      %v875 = vunpack.c.h.b16 %v688
      %v876 = vunpack.c.l.b16 %v689
      %v877 = vunpack.c.h.b16 %v689
      %v878 = vunpack.c.l.b16 %v690
      %v879 = vunpack.c.h.b16 %v690
      %v880 = vunpack.c.l.b16 %v691
      %v881 = vunpack.c.h.b16 %v691
      %v882 = vunpack.c.l.b16 %v692
      %v883 = vunpack.c.h.b16 %v692
      %v884 = vunpack.c.l.b16 %v693
      %v885 = vunpack.c.h.b16 %v693
      %v886 = vunpack.c.l.b16 %v694
      %v887 = vunpack.c.h.b16 %v694
      %v888 = vunpack.c.l.b16 %v695
      %v889 = vunpack.c.h.b16 %v695
      %v890 = vunpack.c.l.b16 %v696
      %v891 = vunpack.c.h.b16 %v696
      %v892 = vunpack.c.l.b16 %v697
      %v893 = vunpack.c.h.b16 %v697
      %v894 = vunpack.c.l.b16 %v698
      %v895 = vunpack.c.h.b16 %v698
      %v896 = vunpack.c.l.b16 %v699
      %v897 = vunpack.c.h.b16 %v699
      %v898 = vunpack.c.l.b16 %v700
      %v899 = vunpack.c.h.b16 %v700
      %v900 = vunpack.c.l.b16 %v701
      %v901 = vunpack.c.h.b16 %v701
      %v902 = vunpack.c.l.b16 %v702
      %v903 = vunpack.c.h.b16 %v702
      %v904 = vunpack.c.l.b16 %v703
      %v905 = vunpack.c.h.b16 %v703
      %v906 = vunpack.c.l.b16 %v704
      %v907 = vunpack.c.h.b16 %v704
      %v908 = vunpack.c.l.b16 %v705
      %v909 = vunpack.c.h.b16 %v705
      %v910 = vunpack.c.l.b16 %v706
      %v911 = vunpack.c.h.b16 %v706
      %v912 = vunpack.c.l.b16 %v707
      %v913 = vunpack.c.h.b16 %v707
      %v914 = vunpack.c.l.b16 %v708
      %v915 = vunpack.c.h.b16 %v708
      %v916 = vunpack.c.l.b16 %v709
      %v917 = vunpack.c.h.b16 %v709
      %v918 = vunpack.c.l.b16 %v710
      %v919 = vunpack.c.h.b16 %v710
      %v920 = vunpack.c.l.b16 %v711
      %v921 = vunpack.c.h.b16 %v711
      %v922 = vunpack.c.l.b16 %v712
      %v923 = vunpack.c.h.b16 %v712
      %v924 = vunpack.c.l.b16 %v713
      %v925 = vunpack.c.h.b16 %v713
      %v926 = vunpack.c.l.b16 %v714
      %v927 = vunpack.c.h.b16 %v714
      %v928 = vunpack.c.l.b16 %v715
      %v929 = vunpack.c.h.b16 %v715
      %v930 = vunpack.c.l.b16 %v716
      %v931 = vunpack.c.h.b16 %v716
      %v932 = vunpack.c.l.b16 %v717
      %v933 = vunpack.c.h.b16 %v717
      %v934 = vunpack.c.l.b16 %v718
      %v935 = vunpack.c.h.b16 %v718
      %v936 = vunpack.c.l.b16 %v719
      %v937 = vunpack.c.h.b16 %v719
      %v938 = vunpack.c.l.b16 %v720
      %v939 = vunpack.c.h.b16 %v720
      %v940 = vunpack.c.l.b16 %v721
      %v941 = vunpack.c.h.b16 %v721
      %v942 = vunpack.c.l.b16 %v722
      %v943 = vunpack.c.h.b16 %v722
      %v944 = vunpack.c.l.b16 %v723
      %v945 = vunpack.c.h.b16 %v723
      %v946 = vunpack.c.l.b16 %v724
      %v947 = vunpack.c.h.b16 %v724
      %v948 = vunpack.c.l.b16 %v725
      %v949 = vunpack.c.h.b16 %v725
      %v950 = vunpack.c.l.b16 %v726
      %v951 = vunpack.c.h.b16 %v726
      %v952 = vunpack.c.l.b16 %v727
      %v953 = vunpack.c.h.b16 %v727
      %v954 = vunpack.c.l.b16 %v728
      %v955 = vunpack.c.h.b16 %v728
      %v956 = vunpack.c.l.b16 %v729
      %v957 = vunpack.c.h.b16 %v729
      %v958 = vpack.c.b16 %v810, %v806
      %v959 = vpack.c.b16 %v811, %v807
      %v960 = vpack.c.b16 %v812, %v808
      %v961 = vpack.c.b16 %v813, %v809
      %v962 = vpack.c.b16 %v818, %v814
      %v963 = vpack.c.b16 %v819, %v815
      %v964 = vpack.c.b16 %v820, %v816
      %v965 = vpack.c.b16 %v821, %v817
      %v966 = vpack.c.b16 %v826, %v822
      %v967 = vpack.c.b16 %v827, %v823
      %v968 = vpack.c.b16 %v828, %v824
      %v969 = vpack.c.b16 %v829, %v825
      %v970 = vpack.c.b16 %v834, %v830
      %v971 = vpack.c.b16 %v835, %v831
      %v972 = vpack.c.b16 %v836, %v832
      %v973 = vpack.c.b16 %v837, %v833
      %v974 = vpack.c.b16 %v842, %v838
      %v975 = vpack.c.b16 %v843, %v839
      %v976 = vpack.c.b16 %v844, %v840
      %v977 = vpack.c.b16 %v845, %v841
      %v978 = vpack.c.b16 %v850, %v846
      %v979 = vpack.c.b16 %v851, %v847
      %v980 = vpack.c.b16 %v852, %v848
      %v981 = vpack.c.b16 %v853, %v849
      %v982 = vpack.c.b16 %v858, %v854
      %v983 = vpack.c.b16 %v859, %v855
      %v984 = vpack.c.b16 %v860, %v856
      %v985 = vpack.c.b16 %v861, %v857
      %v986 = vpack.c.b16 %v866, %v862
      %v987 = vpack.c.b16 %v867, %v863
      %v988 = vpack.c.b16 %v868, %v864
      %v989 = vpack.c.b16 %v869, %v865
      %v990 = vpack.c.b16 %v874, %v870
      %v991 = vpack.c.b16 %v875, %v871
      %v992 = vpack.c.b16 %v876, %v872
      %v993 = vpack.c.b16 %v877, %v873
      %v994 = vpack.c.b16 %v882, %v878
      %v995 = vpack.c.b16 %v883, %v879
      %v996 = vpack.c.b16 %v884, %v880
      %v997 = vpack.c.b16 %v885, %v881
      %v998 = vpack.c.b16 %v890, %v886
      %v999 = vpack.c.b16 %v891, %v887
      %v1000 = vpack.c.b16 %v892, %v888
      %v1001 = vpack.c.b16 %v893, %v889
      %v1002 = vpack.c.b16 %v898, %v894
      %v1003 = vpack.c.b16 %v899, %v895
      %v1004 = vpack.c.b16 %v900, %v896
      %v1005 = vpack.c.b16 %v901, %v897
      %v1006 = vpack.c.b16 %v906, %v902
      %v1007 = vpack.c.b16 %v907, %v903
      %v1008 = vpack.c.b16 %v908, %v904
      %v1009 = vpack.c.b16 %v909, %v905
      %v1010 = vpack.c.b16 %v914, %v910
      %v1011 = vpack.c.b16 %v915, %v911
      %v1012 = vpack.c.b16 %v916, %v912
      %v1013 = vpack.c.b16 %v917, %v913
      %v1014 = vpack.c.b16 %v922, %v918
      %v1015 = vpack.c.b16 %v923, %v919
      %v1016 = vpack.c.b16 %v924, %v920
      %v1017 = vpack.c.b16 %v925, %v921
      %v1018 = vpack.c.b16 %v930, %v926
      %v1019 = vpack.c.b16 %v931, %v927
      %v1020 = vpack.c.b16 %v932, %v928
      %v1021 = vpack.c.b16 %v933, %v929
      %v1022 = vpack.c.b16 %v938, %v934
      %v1023 = vpack.c.b16 %v939, %v935
      %v1024 = vpack.c.b16 %v940, %v936
      %v1025 = vpack.c.b16 %v941, %v937
      %v1026 = vpack.c.b16 %v946, %v942
      %v1027 = vpack.c.b16 %v947, %v943
      %v1028 = vpack.c.b16 %v948, %v944
      %v1029 = vpack.c.b16 %v949, %v945
      %v1030 = vpack.c.b16 %v954, %v950
      %v1031 = vpack.c.b16 %v955, %v951
      %v1032 = vpack.c.b16 %v956, %v952
      %v1033 = vpack.c.b16 %v957, %v953
      %vm1091 = vcmask 785408
      %v1093 = vsel %vm1091, %v961, 0
      %v1096 = vsel %vm1091, %v965, 0
      %v1099 = vsel %vm1091, %v969, 0
      %v1102 = vsel %vm1091, %v973, 0
      %v1105 = vsel %vm1091, %v977, 0
      %v1108 = vsel %vm1091, %v981, 0
      %v1111 = vsel %vm1091, %v985, 0
      %v1114 = vsel %vm1091, %v989, 0
      %v1117 = vsel %vm1091, %v993, 0
      %v1120 = vsel %vm1091, %v997, 0
      %v1123 = vsel %vm1091, %v1001, 0
      %v1126 = vsel %vm1091, %v1005, 0
      %v1129 = vsel %vm1091, %v1009, 0
      %v1132 = vsel %vm1091, %v1013, 0
      %v1135 = vsel %vm1091, %v1017, 0
      %v1138 = vsel %vm1091, %v1021, 0
      %v1141 = vsel %vm1091, %v1025, 0
      %v1144 = vsel %vm1091, %v1029, 0
      %v1147 = vsel %vm1091, %v1033, 0
      %1149 = vmatprep.subr.bf16.mxu0 %v607
      %1150 = vmatpush1.bf16.msra.mxu0 %v606
      %1151 = vmatprep.subr.bf16.mxu0 %v605
      %1152 = vmatpush1.bf16.msra.mxu0 %v604
      %1153 = vmatprep.subr.bf16.mxu0 %v603
      %1154 = vmatpush1.bf16.msra.mxu0 %v602
      %1155 = vmatprep.subr.bf16.mxu0 %v601
      %1156 = vmatpush1.bf16.msra.mxu0 %v600
      %1157 = vmatprep.subr.bf16.mxu0 %v599
      %1158 = vmatpush1.bf16.msra.mxu0 %v598
      %1159 = vmatprep.subr.bf16.mxu0 %v597
      %1160 = vmatpush1.bf16.msra.mxu0 %v596
      %1161 = vmatprep.subr.bf16.mxu0 %v595
      %1162 = vmatpush1.bf16.msra.mxu0 %v594
      %1163 = vmatprep.subr.bf16.mxu0 %v593
      %1164 = vmatpush1.bf16.msra.mxu0 %v592
      %1165 = vmatprep.subr.bf16.mxu0 %v623
      %1166 = vmatpush2.bf16.msra.mxu0 %v622
      %1167 = vmatprep.subr.bf16.mxu0 %v621
      %1168 = vmatpush2.bf16.msra.mxu0 %v620
      %1169 = vmatprep.subr.bf16.mxu0 %v619
      %1170 = vmatpush2.bf16.msra.mxu0 %v618
      %1171 = vmatprep.subr.bf16.mxu0 %v617
      %1172 = vmatpush2.bf16.msra.mxu0 %v616
      %1173 = vmatprep.subr.bf16.mxu0 %v615
      %1174 = vmatpush2.bf16.msra.mxu0 %v614
      %1175 = vmatprep.subr.bf16.mxu0 %v613
      %1176 = vmatpush2.bf16.msra.mxu0 %v612
      %1177 = vmatprep.subr.bf16.mxu0 %v611
      %1178 = vmatpush2.bf16.msra.mxu0 %v610
      %1179 = vmatprep.subr.bf16.mxu0 %v609
      %1180 = vmatpush2.bf16.msra.mxu0 %v608
      %1181 = vmatprep.mubr.bf16.mxu0 %v959
      %1182 = vmatmul.mubr.bf16.gmra.mxu0 %v958
      %v1183 = vpop.f32.mrf.mxu0
      %v1184 = vadd.f32 0.0, %v1183
      %v1185 = vpop.f32.mrf.mxu0
      %v1186 = vadd.f32 0.0, %v1185
      %v1187 = vpop.f32.mrf.mxu0
      %v1188 = vadd.f32 0.0, %v1187
      %v1189 = vpop.f32.mrf.mxu0
      %v1190 = vadd.f32 0.0, %v1189
      %1191 = vmatprep.mubr.bf16.mxu0 %v963
      %1192 = vmatmul.mubr.bf16.gmra.mxu0 %v962
      %v1193 = vpop.f32.mrf.mxu0
      %v1194 = vadd.f32 0.0, %v1193
      %v1195 = vpop.f32.mrf.mxu0
      %v1196 = vadd.f32 0.0, %v1195
      %v1197 = vpop.f32.mrf.mxu0
      %v1198 = vadd.f32 0.0, %v1197
      %v1199 = vpop.f32.mrf.mxu0
      %v1200 = vadd.f32 0.0, %v1199
      %1201 = vmatprep.mubr.bf16.mxu0 %v967
      %1202 = vmatmul.mubr.bf16.gmra.mxu0 %v966
      %v1203 = vpop.f32.mrf.mxu0
      %v1204 = vadd.f32 0.0, %v1203
      %v1205 = vpop.f32.mrf.mxu0
      %v1206 = vadd.f32 0.0, %v1205
      %v1207 = vpop.f32.mrf.mxu0
      %v1208 = vadd.f32 0.0, %v1207
      %v1209 = vpop.f32.mrf.mxu0
      %v1210 = vadd.f32 0.0, %v1209
      %1211 = vmatprep.mubr.bf16.mxu0 %v971
      %1212 = vmatmul.mubr.bf16.gmra.mxu0 %v970
      %v1213 = vpop.f32.mrf.mxu0
      %v1214 = vadd.f32 0.0, %v1213
      %v1215 = vpop.f32.mrf.mxu0
      %v1216 = vadd.f32 0.0, %v1215
      %v1217 = vpop.f32.mrf.mxu0
      %v1218 = vadd.f32 0.0, %v1217
      %v1219 = vpop.f32.mrf.mxu0
      %v1220 = vadd.f32 0.0, %v1219
      %1221 = vmatprep.mubr.bf16.mxu0 %v975
      %1222 = vmatmul.mubr.bf16.gmra.mxu0 %v974
      %v1223 = vpop.f32.mrf.mxu0
      %v1224 = vadd.f32 0.0, %v1223
      %v1225 = vpop.f32.mrf.mxu0
      %v1226 = vadd.f32 0.0, %v1225
      %v1227 = vpop.f32.mrf.mxu0
      %v1228 = vadd.f32 0.0, %v1227
      %v1229 = vpop.f32.mrf.mxu0
      %v1230 = vadd.f32 0.0, %v1229
      %1231 = vmatprep.mubr.bf16.mxu0 %v979
      %1232 = vmatmul.mubr.bf16.gmra.mxu0 %v978
      %v1233 = vpop.f32.mrf.mxu0
      %v1234 = vadd.f32 0.0, %v1233
      %v1235 = vpop.f32.mrf.mxu0
      %v1236 = vadd.f32 0.0, %v1235
      %v1237 = vpop.f32.mrf.mxu0
      %v1238 = vadd.f32 0.0, %v1237
      %v1239 = vpop.f32.mrf.mxu0
      %v1240 = vadd.f32 0.0, %v1239
      %1241 = vmatprep.mubr.bf16.mxu0 %v983
      %1242 = vmatmul.mubr.bf16.gmra.mxu0 %v982
      %v1243 = vpop.f32.mrf.mxu0
      %v1244 = vadd.f32 0.0, %v1243
      %v1245 = vpop.f32.mrf.mxu0
      %v1246 = vadd.f32 0.0, %v1245
      %v1247 = vpop.f32.mrf.mxu0
      %v1248 = vadd.f32 0.0, %v1247
      %v1249 = vpop.f32.mrf.mxu0
      %v1250 = vadd.f32 0.0, %v1249
      %1251 = vmatprep.mubr.bf16.mxu0 %v987
      %1252 = vmatmul.mubr.bf16.gmra.mxu0 %v986
      %v1253 = vpop.f32.mrf.mxu0
      %v1254 = vadd.f32 0.0, %v1253
      %v1255 = vpop.f32.mrf.mxu0
      %v1256 = vadd.f32 0.0, %v1255
      %v1257 = vpop.f32.mrf.mxu0
      %v1258 = vadd.f32 0.0, %v1257
      %v1259 = vpop.f32.mrf.mxu0
      %v1260 = vadd.f32 0.0, %v1259
      %1261 = vmatprep.mubr.bf16.mxu0 %v991
      %1262 = vmatmul.mubr.bf16.gmra.mxu0 %v990
      %v1263 = vpop.f32.mrf.mxu0
      %v1264 = vadd.f32 0.0, %v1263
      %v1265 = vpop.f32.mrf.mxu0
      %v1266 = vadd.f32 0.0, %v1265
      %v1267 = vpop.f32.mrf.mxu0
      %v1268 = vadd.f32 0.0, %v1267
      %v1269 = vpop.f32.mrf.mxu0
      %v1270 = vadd.f32 0.0, %v1269
      %1271 = vmatprep.mubr.bf16.mxu0 %v995
      %1272 = vmatmul.mubr.bf16.gmra.mxu0 %v994
      %v1273 = vpop.f32.mrf.mxu0
      %v1274 = vadd.f32 0.0, %v1273
      %v1275 = vpop.f32.mrf.mxu0
      %v1276 = vadd.f32 0.0, %v1275
      %v1277 = vpop.f32.mrf.mxu0
      %v1278 = vadd.f32 0.0, %v1277
      %v1279 = vpop.f32.mrf.mxu0
      %v1280 = vadd.f32 0.0, %v1279
      %1281 = vmatprep.mubr.bf16.mxu0 %v999
      %1282 = vmatmul.mubr.bf16.gmra.mxu0 %v998
      %v1283 = vpop.f32.mrf.mxu0
      %v1284 = vadd.f32 0.0, %v1283
      %v1285 = vpop.f32.mrf.mxu0
      %v1286 = vadd.f32 0.0, %v1285
      %v1287 = vpop.f32.mrf.mxu0
      %v1288 = vadd.f32 0.0, %v1287
      %v1289 = vpop.f32.mrf.mxu0
      %v1290 = vadd.f32 0.0, %v1289
      %1291 = vmatprep.mubr.bf16.mxu0 %v1003
      %1292 = vmatmul.mubr.bf16.gmra.mxu0 %v1002
      %v1293 = vpop.f32.mrf.mxu0
      %v1294 = vadd.f32 0.0, %v1293
      %v1295 = vpop.f32.mrf.mxu0
      %v1296 = vadd.f32 0.0, %v1295
      %v1297 = vpop.f32.mrf.mxu0
      %v1298 = vadd.f32 0.0, %v1297
      %v1299 = vpop.f32.mrf.mxu0
      %v1300 = vadd.f32 0.0, %v1299
      %1301 = vmatprep.mubr.bf16.mxu0 %v1007
      %1302 = vmatmul.mubr.bf16.gmra.mxu0 %v1006
      %v1303 = vpop.f32.mrf.mxu0
      %v1304 = vadd.f32 0.0, %v1303
      %v1305 = vpop.f32.mrf.mxu0
      %v1306 = vadd.f32 0.0, %v1305
      %v1307 = vpop.f32.mrf.mxu0
      %v1308 = vadd.f32 0.0, %v1307
      %v1309 = vpop.f32.mrf.mxu0
      %v1310 = vadd.f32 0.0, %v1309
      %1311 = vmatprep.mubr.bf16.mxu0 %v1011
      %1312 = vmatmul.mubr.bf16.gmra.mxu0 %v1010
      %v1313 = vpop.f32.mrf.mxu0
      %v1314 = vadd.f32 0.0, %v1313
      %v1315 = vpop.f32.mrf.mxu0
      %v1316 = vadd.f32 0.0, %v1315
      %v1317 = vpop.f32.mrf.mxu0
      %v1318 = vadd.f32 0.0, %v1317
      %v1319 = vpop.f32.mrf.mxu0
      %v1320 = vadd.f32 0.0, %v1319
      %1321 = vmatprep.mubr.bf16.mxu0 %v1015
      %1322 = vmatmul.mubr.bf16.gmra.mxu0 %v1014
      %v1323 = vpop.f32.mrf.mxu0
      %v1324 = vadd.f32 0.0, %v1323
      %v1325 = vpop.f32.mrf.mxu0
      %v1326 = vadd.f32 0.0, %v1325
      %v1327 = vpop.f32.mrf.mxu0
      %v1328 = vadd.f32 0.0, %v1327
      %v1329 = vpop.f32.mrf.mxu0
      %v1330 = vadd.f32 0.0, %v1329
      %1331 = vmatprep.mubr.bf16.mxu0 %v1019
      %1332 = vmatmul.mubr.bf16.gmra.mxu0 %v1018
      %v1333 = vpop.f32.mrf.mxu0
      %v1334 = vadd.f32 0.0, %v1333
      %v1335 = vpop.f32.mrf.mxu0
      %v1336 = vadd.f32 0.0, %v1335
      %v1337 = vpop.f32.mrf.mxu0
      %v1338 = vadd.f32 0.0, %v1337
      %v1339 = vpop.f32.mrf.mxu0
      %v1340 = vadd.f32 0.0, %v1339
      %1341 = vmatprep.mubr.bf16.mxu0 %v1023
      %1342 = vmatmul.mubr.bf16.gmra.mxu0 %v1022
      %v1343 = vpop.f32.mrf.mxu0
      %v1344 = vadd.f32 0.0, %v1343
      %v1345 = vpop.f32.mrf.mxu0
      %v1346 = vadd.f32 0.0, %v1345
      %v1347 = vpop.f32.mrf.mxu0
      %v1348 = vadd.f32 0.0, %v1347
      %v1349 = vpop.f32.mrf.mxu0
      %v1350 = vadd.f32 0.0, %v1349
      %1351 = vmatprep.mubr.bf16.mxu0 %v1027
      %1352 = vmatmul.mubr.bf16.gmra.mxu0 %v1026
      %v1353 = vpop.f32.mrf.mxu0
      %v1354 = vadd.f32 0.0, %v1353
      %v1355 = vpop.f32.mrf.mxu0
      %v1356 = vadd.f32 0.0, %v1355
      %v1357 = vpop.f32.mrf.mxu0
      %v1358 = vadd.f32 0.0, %v1357
      %v1359 = vpop.f32.mrf.mxu0
      %v1360 = vadd.f32 0.0, %v1359
      %1361 = vmatprep.mubr.bf16.mxu0 %v1031
      %1362 = vmatmul.mubr.bf16.gmra.mxu0 %v1030
      %v1363 = vpop.f32.mrf.mxu0
      %v1364 = vadd.f32 0.0, %v1363
      %v1365 = vpop.f32.mrf.mxu0
      %v1366 = vadd.f32 0.0, %v1365
      %v1367 = vpop.f32.mrf.mxu0
      %v1368 = vadd.f32 0.0, %v1367
      %v1369 = vpop.f32.mrf.mxu0
      %v1370 = vadd.f32 0.0, %v1369
      %1371 = vdwg.mxu0
      %1372 = vmatprep.subr.bf16.mxu0 %v639
      %1373 = vmatpush1.bf16.msra.mxu0 %v638
      %1374 = vmatprep.subr.bf16.mxu0 %v637
      %1375 = vmatpush1.bf16.msra.mxu0 %v636
      %1376 = vmatprep.subr.bf16.mxu0 %v635
      %1377 = vmatpush1.bf16.msra.mxu0 %v634
      %1378 = vmatprep.subr.bf16.mxu0 %v633
      %1379 = vmatpush1.bf16.msra.mxu0 %v632
      %1380 = vmatprep.subr.bf16.mxu0 %v631
      %1381 = vmatpush1.bf16.msra.mxu0 %v630
      %1382 = vmatprep.subr.bf16.mxu0 %v629
      %1383 = vmatpush1.bf16.msra.mxu0 %v628
      %1384 = vmatprep.subr.bf16.mxu0 %v627
      %1385 = vmatpush1.bf16.msra.mxu0 %v626
      %1386 = vmatprep.subr.bf16.mxu0 %v625
      %1387 = vmatpush1.bf16.msra.mxu0 %v624
      %1388 = vmatprep.subr.bf16.mxu0 0
      %1389 = vmatpush2.bf16.msra.mxu0 0
      %1390 = vmatprep.subr.bf16.mxu0 0
      %1391 = vmatpush2.bf16.msra.mxu0 0
      %1392 = vmatprep.subr.bf16.mxu0 %v651
      %1393 = vmatpush2.bf16.msra.mxu0 %v650
      %1394 = vmatprep.subr.bf16.mxu0 %v649
      %1395 = vmatpush2.bf16.msra.mxu0 %v648
      %1396 = vmatprep.subr.bf16.mxu0 %v647
      %1397 = vmatpush2.bf16.msra.mxu0 %v646
      %1398 = vmatprep.subr.bf16.mxu0 %v645
      %1399 = vmatpush2.bf16.msra.mxu0 %v644
      %1400 = vmatprep.subr.bf16.mxu0 %v643
      %1401 = vmatpush2.bf16.msra.mxu0 %v642
      %1402 = vmatprep.subr.bf16.mxu0 %v641
      %1403 = vmatpush2.bf16.msra.mxu0 %v640
      %1404 = vmatprep.mubr.bf16.mxu0 %v1093
      %1405 = vmatmul.mubr.bf16.gmra.mxu0 %v960
      %v1406 = vpop.f32.mrf.mxu0
      %v1407 = vadd.f32 %v1184, %v1406
      %v1408 = vpop.f32.mrf.mxu0
      %v1409 = vadd.f32 %v1186, %v1408
      %v1410 = vpop.f32.mrf.mxu0
      %v1411 = vadd.f32 %v1188, %v1410
      %v1412 = vpop.f32.mrf.mxu0
      %v1413 = vadd.f32 %v1190, %v1412
      %1414 = vmatprep.mubr.bf16.mxu0 %v1096
      %1415 = vmatmul.mubr.bf16.gmra.mxu0 %v964
      %v1416 = vpop.f32.mrf.mxu0
      %v1417 = vadd.f32 %v1194, %v1416
      %v1418 = vpop.f32.mrf.mxu0
      %v1419 = vadd.f32 %v1196, %v1418
      %v1420 = vpop.f32.mrf.mxu0
      %v1421 = vadd.f32 %v1198, %v1420
      %v1422 = vpop.f32.mrf.mxu0
      %v1423 = vadd.f32 %v1200, %v1422
      %1424 = vmatprep.mubr.bf16.mxu0 %v1099
      %1425 = vmatmul.mubr.bf16.gmra.mxu0 %v968
      %v1426 = vpop.f32.mrf.mxu0
      %v1427 = vadd.f32 %v1204, %v1426
      %v1428 = vpop.f32.mrf.mxu0
      %v1429 = vadd.f32 %v1206, %v1428
      %v1430 = vpop.f32.mrf.mxu0
      %v1431 = vadd.f32 %v1208, %v1430
      %v1432 = vpop.f32.mrf.mxu0
      %v1433 = vadd.f32 %v1210, %v1432
      %1434 = vmatprep.mubr.bf16.mxu0 %v1102
      %1435 = vmatmul.mubr.bf16.gmra.mxu0 %v972
      %v1436 = vpop.f32.mrf.mxu0
      %v1437 = vadd.f32 %v1214, %v1436
      %v1438 = vpop.f32.mrf.mxu0
      %v1439 = vadd.f32 %v1216, %v1438
      %v1440 = vpop.f32.mrf.mxu0
      %v1441 = vadd.f32 %v1218, %v1440
      %v1442 = vpop.f32.mrf.mxu0
      %v1443 = vadd.f32 %v1220, %v1442
      %1444 = vmatprep.mubr.bf16.mxu0 %v1105
      %1445 = vmatmul.mubr.bf16.gmra.mxu0 %v976
      %v1446 = vpop.f32.mrf.mxu0
      %v1447 = vadd.f32 %v1224, %v1446
      %v1448 = vpop.f32.mrf.mxu0
      %v1449 = vadd.f32 %v1226, %v1448
      %v1450 = vpop.f32.mrf.mxu0
      %v1451 = vadd.f32 %v1228, %v1450
      %v1452 = vpop.f32.mrf.mxu0
      %v1453 = vadd.f32 %v1230, %v1452
      %1454 = vmatprep.mubr.bf16.mxu0 %v1108
      %1455 = vmatmul.mubr.bf16.gmra.mxu0 %v980
      %v1456 = vpop.f32.mrf.mxu0
      %v1457 = vadd.f32 %v1234, %v1456
      %v1458 = vpop.f32.mrf.mxu0
      %v1459 = vadd.f32 %v1236, %v1458
      %v1460 = vpop.f32.mrf.mxu0
      %v1461 = vadd.f32 %v1238, %v1460
      %v1462 = vpop.f32.mrf.mxu0
      %v1463 = vadd.f32 %v1240, %v1462
      %1464 = vmatprep.mubr.bf16.mxu0 %v1111
      %1465 = vmatmul.mubr.bf16.gmra.mxu0 %v984
      %v1466 = vpop.f32.mrf.mxu0
      %v1467 = vadd.f32 %v1244, %v1466
      %v1468 = vpop.f32.mrf.mxu0
      %v1469 = vadd.f32 %v1246, %v1468
      %v1470 = vpop.f32.mrf.mxu0
      %v1471 = vadd.f32 %v1248, %v1470
      %v1472 = vpop.f32.mrf.mxu0
      %v1473 = vadd.f32 %v1250, %v1472
      %1474 = vmatprep.mubr.bf16.mxu0 %v1114
      %1475 = vmatmul.mubr.bf16.gmra.mxu0 %v988
      %v1476 = vpop.f32.mrf.mxu0
      %v1477 = vadd.f32 %v1254, %v1476
      %v1478 = vpop.f32.mrf.mxu0
      %v1479 = vadd.f32 %v1256, %v1478
      %v1480 = vpop.f32.mrf.mxu0
      %v1481 = vadd.f32 %v1258, %v1480
      %v1482 = vpop.f32.mrf.mxu0
      %v1483 = vadd.f32 %v1260, %v1482
      %1484 = vmatprep.mubr.bf16.mxu0 %v1117
      %1485 = vmatmul.mubr.bf16.gmra.mxu0 %v992
      %v1486 = vpop.f32.mrf.mxu0
      %v1487 = vadd.f32 %v1264, %v1486
      %v1488 = vpop.f32.mrf.mxu0
      %v1489 = vadd.f32 %v1266, %v1488
      %v1490 = vpop.f32.mrf.mxu0
      %v1491 = vadd.f32 %v1268, %v1490
      %v1492 = vpop.f32.mrf.mxu0
      %v1493 = vadd.f32 %v1270, %v1492
      %1494 = vmatprep.mubr.bf16.mxu0 %v1120
      %1495 = vmatmul.mubr.bf16.gmra.mxu0 %v996
      %v1496 = vpop.f32.mrf.mxu0
      %v1497 = vadd.f32 %v1274, %v1496
      %v1498 = vpop.f32.mrf.mxu0
      %v1499 = vadd.f32 %v1276, %v1498
      %v1500 = vpop.f32.mrf.mxu0
      %v1501 = vadd.f32 %v1278, %v1500
      %v1502 = vpop.f32.mrf.mxu0
      %v1503 = vadd.f32 %v1280, %v1502
      %1504 = vmatprep.mubr.bf16.mxu0 %v1123
      %1505 = vmatmul.mubr.bf16.gmra.mxu0 %v1000
      %v1506 = vpop.f32.mrf.mxu0
      %v1507 = vadd.f32 %v1284, %v1506
      %v1508 = vpop.f32.mrf.mxu0
      %v1509 = vadd.f32 %v1286, %v1508
      %v1510 = vpop.f32.mrf.mxu0
      %v1511 = vadd.f32 %v1288, %v1510
      %v1512 = vpop.f32.mrf.mxu0
      %v1513 = vadd.f32 %v1290, %v1512
      %1514 = vmatprep.mubr.bf16.mxu0 %v1126
      %1515 = vmatmul.mubr.bf16.gmra.mxu0 %v1004
      %v1516 = vpop.f32.mrf.mxu0
      %v1517 = vadd.f32 %v1294, %v1516
      %v1518 = vpop.f32.mrf.mxu0
      %v1519 = vadd.f32 %v1296, %v1518
      %v1520 = vpop.f32.mrf.mxu0
      %v1521 = vadd.f32 %v1298, %v1520
      %v1522 = vpop.f32.mrf.mxu0
      %v1523 = vadd.f32 %v1300, %v1522
      %1524 = vmatprep.mubr.bf16.mxu0 %v1129
      %1525 = vmatmul.mubr.bf16.gmra.mxu0 %v1008
      %v1526 = vpop.f32.mrf.mxu0
      %v1527 = vadd.f32 %v1304, %v1526
      %v1528 = vpop.f32.mrf.mxu0
      %v1529 = vadd.f32 %v1306, %v1528
      %v1530 = vpop.f32.mrf.mxu0
      %v1531 = vadd.f32 %v1308, %v1530
      %v1532 = vpop.f32.mrf.mxu0
      %v1533 = vadd.f32 %v1310, %v1532
      %1534 = vmatprep.mubr.bf16.mxu0 %v1132
      %1535 = vmatmul.mubr.bf16.gmra.mxu0 %v1012
      %v1536 = vpop.f32.mrf.mxu0
      %v1537 = vadd.f32 %v1314, %v1536
      %v1538 = vpop.f32.mrf.mxu0
      %v1539 = vadd.f32 %v1316, %v1538
      %v1540 = vpop.f32.mrf.mxu0
      %v1541 = vadd.f32 %v1318, %v1540
      %v1542 = vpop.f32.mrf.mxu0
      %v1543 = vadd.f32 %v1320, %v1542
      %1544 = vmatprep.mubr.bf16.mxu0 %v1135
      %1545 = vmatmul.mubr.bf16.gmra.mxu0 %v1016
      %v1546 = vpop.f32.mrf.mxu0
      %v1547 = vadd.f32 %v1324, %v1546
      %v1548 = vpop.f32.mrf.mxu0
      %v1549 = vadd.f32 %v1326, %v1548
      %v1550 = vpop.f32.mrf.mxu0
      %v1551 = vadd.f32 %v1328, %v1550
      %v1552 = vpop.f32.mrf.mxu0
      %v1553 = vadd.f32 %v1330, %v1552
      %1554 = vmatprep.mubr.bf16.mxu0 %v1138
      %1555 = vmatmul.mubr.bf16.gmra.mxu0 %v1020
      %v1556 = vpop.f32.mrf.mxu0
      %v1557 = vadd.f32 %v1334, %v1556
      %v1558 = vpop.f32.mrf.mxu0
      %v1559 = vadd.f32 %v1336, %v1558
      %v1560 = vpop.f32.mrf.mxu0
      %v1561 = vadd.f32 %v1338, %v1560
      %v1562 = vpop.f32.mrf.mxu0
      %v1563 = vadd.f32 %v1340, %v1562
      %1564 = vmatprep.mubr.bf16.mxu0 %v1141
      %1565 = vmatmul.mubr.bf16.gmra.mxu0 %v1024
      %v1566 = vpop.f32.mrf.mxu0
      %v1567 = vadd.f32 %v1344, %v1566
      %v1568 = vpop.f32.mrf.mxu0
      %v1569 = vadd.f32 %v1346, %v1568
      %v1570 = vpop.f32.mrf.mxu0
      %v1571 = vadd.f32 %v1348, %v1570
      %v1572 = vpop.f32.mrf.mxu0
      %v1573 = vadd.f32 %v1350, %v1572
      %1574 = vmatprep.mubr.bf16.mxu0 %v1144
      %1575 = vmatmul.mubr.bf16.gmra.mxu0 %v1028
      %v1576 = vpop.f32.mrf.mxu0
      %v1577 = vadd.f32 %v1354, %v1576
      %v1578 = vpop.f32.mrf.mxu0
      %v1579 = vadd.f32 %v1356, %v1578
      %v1580 = vpop.f32.mrf.mxu0
      %v1581 = vadd.f32 %v1358, %v1580
      %v1582 = vpop.f32.mrf.mxu0
      %v1583 = vadd.f32 %v1360, %v1582
      %1584 = vmatprep.mubr.bf16.mxu0 %v1147
      %1585 = vmatmul.mubr.bf16.gmra.mxu0 %v1032
      %v1586 = vpop.f32.mrf.mxu0
      %v1587 = vadd.f32 %v1364, %v1586
      %v1588 = vpop.f32.mrf.mxu0
      %v1589 = vadd.f32 %v1366, %v1588
      %v1590 = vpop.f32.mrf.mxu0
      %v1591 = vadd.f32 %v1368, %v1590
      %v1592 = vpop.f32.mrf.mxu0
      %v1593 = vadd.f32 %v1370, %v1592
      %1594 = vdwg.mxu0
      %v1595 = vld [vmem:[%s3] sm:$0xff]
      %v1596 = vld [vmem:[%s3 + $0x8] sm:$0xff]
      %v1597 = vld [vmem:[%s3 + $0x10] sm:$0xff]
      %v1598 = vld [vmem:[%s3 + $0x18] sm:$0xff]
      %v1599 = vld [vmem:[%s3 + $0x20] sm:$0xff]
      %v1600 = vld [vmem:[%s3 + $0x28] sm:$0xff]
      %v1601 = vld [vmem:[%s3 + $0x30] sm:$0xff]
      %v1602 = vld [vmem:[%s3 + $0x38] sm:$0xff]
      %v1603 = vld [vmem:[%s3 + $0x40] sm:$0xff]
      %v1604 = vld [vmem:[%s3 + $0x48] sm:$0xff]
      %v1605 = vld [vmem:[%s3 + $0x50] sm:$0xff]
      %v1606 = vld [vmem:[%s3 + $0x58] sm:$0xff]
      %v1607 = vld [vmem:[%s3 + $0x60] sm:$0xff]
      %v1608 = vld [vmem:[%s3 + $0x68] sm:$0xff]
      %v1609 = vld [vmem:[%s3 + $0x70] sm:$0xff]
      %v1610 = vld [vmem:[%s3 + $0x78] sm:$0xff]
      %v1611 = vld [vmem:[%s3 + $0x80] sm:$0xff]
      %v1612 = vld [vmem:[%s3 + $0x88] sm:$0xff]
      %v1613 = vld [vmem:[%s3 + $0x90] sm:$0xff]
      %v1614 = vld [vmem:[%s3 + $0x98] sm:$0xff]
      %v1615 = vld [vmem:[%s3 + $0xa0] sm:$0xff]
      %v1616 = vld [vmem:[%s3 + $0xa8] sm:$0xff]
      %v1617 = vld [vmem:[%s3 + $0xb0] sm:$0xff]
      %v1618 = vld [vmem:[%s3 + $0xb8] sm:$0xff]
      %v1619 = vld [vmem:[%s3 + $0xc0] sm:$0xff]
      %v1620 = vld [vmem:[%s3 + $0xc8] sm:$0xff]
      %v1621 = vld [vmem:[%s3 + $0xd0] sm:$0xff]
      %v1622 = vld [vmem:[%s3 + $0xd8] sm:$0xff]
      %v1623 = vld [vmem:[%s3 + $0xe0] sm:$0xff]
      %v1624 = vld [vmem:[%s3 + $0xe8] sm:$0xff]
      %v1625 = vld [vmem:[%s3 + $0xf0] sm:$0xff]
      %v1626 = vld [vmem:[%s3 + $0xf8] sm:$0xff]
      %v1627 = vld [vmem:[%s3 + $0x100] sm:$0xff]
      %v1628 = vld [vmem:[%s3 + $0x108] sm:$0xff]
      %v1629 = vld [vmem:[%s3 + $0x110] sm:$0xff]
      %v1630 = vld [vmem:[%s3 + $0x118] sm:$0xff]
      %v1631 = vld [vmem:[%s3 + $0x120] sm:$0xff]
      %v1632 = vld [vmem:[%s3 + $0x128] sm:$0xff]
      %1634 = vset.pattern.permute.xlu0 0
      %1635 = vperm.xlu0 %1634, %v1595
      %v1636 = vpop.permute.xlu0 %1635
      %1639 = vset.pattern.permute.xlu0 0
      %1640 = vperm.xlu0 %1639, %v1596
      %v1641 = vpop.permute.xlu0 %1640
      %1644 = vset.pattern.permute.xlu0 0
      %1645 = vperm.xlu0 %1644, %v1597
      %v1646 = vpop.permute.xlu0 %1645
      %1649 = vset.pattern.permute.xlu0 0
      %1650 = vperm.xlu0 %1649, %v1598
      %v1651 = vpop.permute.xlu0 %1650
      %1654 = vset.pattern.permute.xlu0 0
      %1655 = vperm.xlu0 %1654, %v1599
      %v1656 = vpop.permute.xlu0 %1655
      %1659 = vset.pattern.permute.xlu0 0
      %1660 = vperm.xlu0 %1659, %v1600
      %v1661 = vpop.permute.xlu0 %1660
      %1664 = vset.pattern.permute.xlu0 0
      %1665 = vperm.xlu0 %1664, %v1601
      %v1666 = vpop.permute.xlu0 %1665
      %1669 = vset.pattern.permute.xlu0 0
      %1670 = vperm.xlu0 %1669, %v1602
      %v1671 = vpop.permute.xlu0 %1670
      %1674 = vset.pattern.permute.xlu0 0
      %1675 = vperm.xlu0 %1674, %v1603
      %v1676 = vpop.permute.xlu0 %1675
      %1679 = vset.pattern.permute.xlu0 0
      %1680 = vperm.xlu0 %1679, %v1604
      %v1681 = vpop.permute.xlu0 %1680
      %1684 = vset.pattern.permute.xlu0 0
      %1685 = vperm.xlu0 %1684, %v1605
      %v1686 = vpop.permute.xlu0 %1685
      %1689 = vset.pattern.permute.xlu0 0
      %1690 = vperm.xlu0 %1689, %v1606
      %v1691 = vpop.permute.xlu0 %1690
      %1694 = vset.pattern.permute.xlu0 0
      %1695 = vperm.xlu0 %1694, %v1607
      %v1696 = vpop.permute.xlu0 %1695
      %1699 = vset.pattern.permute.xlu0 0
      %1700 = vperm.xlu0 %1699, %v1608
      %v1701 = vpop.permute.xlu0 %1700
      %1704 = vset.pattern.permute.xlu0 0
      %1705 = vperm.xlu0 %1704, %v1609
      %v1706 = vpop.permute.xlu0 %1705
      %1709 = vset.pattern.permute.xlu0 0
      %1710 = vperm.xlu0 %1709, %v1610
      %v1711 = vpop.permute.xlu0 %1710
      %1714 = vset.pattern.permute.xlu0 0
      %1715 = vperm.xlu0 %1714, %v1611
      %v1716 = vpop.permute.xlu0 %1715
      %1719 = vset.pattern.permute.xlu0 0
      %1720 = vperm.xlu0 %1719, %v1612
      %v1721 = vpop.permute.xlu0 %1720
      %1724 = vset.pattern.permute.xlu0 0
      %1725 = vperm.xlu0 %1724, %v1613
      %v1726 = vpop.permute.xlu0 %1725
      %1729 = vset.pattern.permute.xlu0 0
      %1730 = vperm.xlu0 %1729, %v1614
      %v1731 = vpop.permute.xlu0 %1730
      %1734 = vset.pattern.permute.xlu0 0
      %1735 = vperm.xlu0 %1734, %v1615
      %v1736 = vpop.permute.xlu0 %1735
      %1739 = vset.pattern.permute.xlu0 0
      %1740 = vperm.xlu0 %1739, %v1616
      %v1741 = vpop.permute.xlu0 %1740
      %1744 = vset.pattern.permute.xlu0 0
      %1745 = vperm.xlu0 %1744, %v1617
      %v1746 = vpop.permute.xlu0 %1745
      %1749 = vset.pattern.permute.xlu0 0
      %1750 = vperm.xlu0 %1749, %v1618
      %v1751 = vpop.permute.xlu0 %1750
      %1754 = vset.pattern.permute.xlu0 0
      %1755 = vperm.xlu0 %1754, %v1619
      %v1756 = vpop.permute.xlu0 %1755
      %1759 = vset.pattern.permute.xlu0 0
      %1760 = vperm.xlu0 %1759, %v1620
      %v1761 = vpop.permute.xlu0 %1760
      %1764 = vset.pattern.permute.xlu0 0
      %1765 = vperm.xlu0 %1764, %v1621
      %v1766 = vpop.permute.xlu0 %1765
      %1769 = vset.pattern.permute.xlu0 0
      %1770 = vperm.xlu0 %1769, %v1622
      %v1771 = vpop.permute.xlu0 %1770
      %1774 = vset.pattern.permute.xlu0 0
      %1775 = vperm.xlu0 %1774, %v1623
      %v1776 = vpop.permute.xlu0 %1775
      %1779 = vset.pattern.permute.xlu0 0
      %1780 = vperm.xlu0 %1779, %v1624
      %v1781 = vpop.permute.xlu0 %1780
      %1784 = vset.pattern.permute.xlu0 0
      %1785 = vperm.xlu0 %1784, %v1625
      %v1786 = vpop.permute.xlu0 %1785
      %1789 = vset.pattern.permute.xlu0 0
      %1790 = vperm.xlu0 %1789, %v1626
      %v1791 = vpop.permute.xlu0 %1790
      %1794 = vset.pattern.permute.xlu0 0
      %1795 = vperm.xlu0 %1794, %v1627
      %v1796 = vpop.permute.xlu0 %1795
      %1799 = vset.pattern.permute.xlu0 0
      %1800 = vperm.xlu0 %1799, %v1628
      %v1801 = vpop.permute.xlu0 %1800
      %1804 = vset.pattern.permute.xlu0 0
      %1805 = vperm.xlu0 %1804, %v1629
      %v1806 = vpop.permute.xlu0 %1805
      %1809 = vset.pattern.permute.xlu0 0
      %1810 = vperm.xlu0 %1809, %v1630
      %v1811 = vpop.permute.xlu0 %1810
      %1814 = vset.pattern.permute.xlu0 0
      %1815 = vperm.xlu0 %1814, %v1631
      %v1816 = vpop.permute.xlu0 %1815
      %1819 = vset.pattern.permute.xlu0 0
      %1820 = vperm.xlu0 %1819, %v1632
      %v1821 = vpop.permute.xlu0 %1820
      %v1823 = vmul.f32 %v1407, %v1636
      %v1824 = vmul.f32 %v1409, %v1636
      %v1825 = vmul.f32 %v1411, %v1641
      %v1826 = vmul.f32 %v1413, %v1641
      %v1827 = vmul.f32 %v1417, %v1646
      %v1828 = vmul.f32 %v1419, %v1646
      %v1829 = vmul.f32 %v1421, %v1651
      %v1830 = vmul.f32 %v1423, %v1651
      %v1831 = vmul.f32 %v1427, %v1656
      %v1832 = vmul.f32 %v1429, %v1656
      %v1833 = vmul.f32 %v1431, %v1661
      %v1834 = vmul.f32 %v1433, %v1661
      %v1835 = vmul.f32 %v1437, %v1666
      %v1836 = vmul.f32 %v1439, %v1666
      %v1837 = vmul.f32 %v1441, %v1671
      %v1838 = vmul.f32 %v1443, %v1671
      %v1839 = vmul.f32 %v1447, %v1676
      %v1840 = vmul.f32 %v1449, %v1676
      %v1841 = vmul.f32 %v1451, %v1681
      %v1842 = vmul.f32 %v1453, %v1681
      %v1843 = vmul.f32 %v1457, %v1686
      %v1844 = vmul.f32 %v1459, %v1686
      %v1845 = vmul.f32 %v1461, %v1691
      %v1846 = vmul.f32 %v1463, %v1691
      %v1847 = vmul.f32 %v1467, %v1696
      %v1848 = vmul.f32 %v1469, %v1696
      %v1849 = vmul.f32 %v1471, %v1701
      %v1850 = vmul.f32 %v1473, %v1701
      %v1851 = vmul.f32 %v1477, %v1706
      %v1852 = vmul.f32 %v1479, %v1706
      %v1853 = vmul.f32 %v1481, %v1711
      %v1854 = vmul.f32 %v1483, %v1711
      %v1855 = vmul.f32 %v1487, %v1716
      %v1856 = vmul.f32 %v1489, %v1716
      %v1857 = vmul.f32 %v1491, %v1721
      %v1858 = vmul.f32 %v1493, %v1721
      %v1859 = vmul.f32 %v1497, %v1726
      %v1860 = vmul.f32 %v1499, %v1726
      %v1861 = vmul.f32 %v1501, %v1731
      %v1862 = vmul.f32 %v1503, %v1731
      %v1863 = vmul.f32 %v1507, %v1736
      %v1864 = vmul.f32 %v1509, %v1736
      %v1865 = vmul.f32 %v1511, %v1741
      %v1866 = vmul.f32 %v1513, %v1741
      %v1867 = vmul.f32 %v1517, %v1746
      %v1868 = vmul.f32 %v1519, %v1746
      %v1869 = vmul.f32 %v1521, %v1751
      %v1870 = vmul.f32 %v1523, %v1751
      %v1871 = vmul.f32 %v1527, %v1756
      %v1872 = vmul.f32 %v1529, %v1756
      %v1873 = vmul.f32 %v1531, %v1761
      %v1874 = vmul.f32 %v1533, %v1761
      %v1875 = vmul.f32 %v1537, %v1766
      %v1876 = vmul.f32 %v1539, %v1766
      %v1877 = vmul.f32 %v1541, %v1771
      %v1878 = vmul.f32 %v1543, %v1771
      %v1879 = vmul.f32 %v1547, %v1776
      %v1880 = vmul.f32 %v1549, %v1776
      %v1881 = vmul.f32 %v1551, %v1781
      %v1882 = vmul.f32 %v1553, %v1781
      %v1883 = vmul.f32 %v1557, %v1786
      %v1884 = vmul.f32 %v1559, %v1786
      %v1885 = vmul.f32 %v1561, %v1791
      %v1886 = vmul.f32 %v1563, %v1791
      %v1887 = vmul.f32 %v1567, %v1796
      %v1888 = vmul.f32 %v1569, %v1796
      %v1889 = vmul.f32 %v1571, %v1801
      %v1890 = vmul.f32 %v1573, %v1801
      %v1891 = vmul.f32 %v1577, %v1806
      %v1892 = vmul.f32 %v1579, %v1806
      %v1893 = vmul.f32 %v1581, %v1811
      %v1894 = vmul.f32 %v1583, %v1811
      %v1895 = vmul.f32 %v1587, %v1816
      %v1896 = vmul.f32 %v1589, %v1816
      %v1897 = vmul.f32 %v1591, %v1821
      %v1898 = vmul.f32 %v1593, %v1821
      %v1899 = vld [vmem:[%s4] sm:$0xff]
      %v1900 = vld [vmem:[%s4 + $0x8] sm:$0xff]
      %v1901 = vld [vmem:[%s4 + $0x10] sm:$0xff]
      %v1902 = vld [vmem:[%s4 + $0x18] sm:$0xff]
      %v1903 = vld [vmem:[%s4 + $0x20] sm:$0xff]
      %v1904 = vld [vmem:[%s4 + $0x28] sm:$0xff]
      %v1905 = vld [vmem:[%s4 + $0x30] sm:$0xff]
      %v1906 = vld [vmem:[%s4 + $0x38] sm:$0xff]
      %v1907 = vld [vmem:[%s4 + $0x40] sm:$0xff]
      %v1908 = vld [vmem:[%s4 + $0x48] sm:$0xff]
      %v1909 = vld [vmem:[%s4 + $0x50] sm:$0xff]
      %v1910 = vld [vmem:[%s4 + $0x58] sm:$0xff]
      %v1911 = vld [vmem:[%s4 + $0x60] sm:$0xff]
      %v1912 = vld [vmem:[%s4 + $0x68] sm:$0xff]
      %v1913 = vld [vmem:[%s4 + $0x70] sm:$0xff]
      %v1914 = vld [vmem:[%s4 + $0x78] sm:$0xff]
      %v1915 = vld [vmem:[%s4 + $0x80] sm:$0xff]
      %v1916 = vld [vmem:[%s4 + $0x88] sm:$0xff]
      %v1917 = vld [vmem:[%s4 + $0x90] sm:$0xff]
      %v1918 = vld [vmem:[%s4 + $0x98] sm:$0xff]
      %v1919 = vld [vmem:[%s4 + $0xa0] sm:$0xff]
      %v1920 = vld [vmem:[%s4 + $0xa8] sm:$0xff]
      %v1921 = vld [vmem:[%s4 + $0xb0] sm:$0xff]
      %v1922 = vld [vmem:[%s4 + $0xb8] sm:$0xff]
      %v1923 = vld [vmem:[%s4 + $0xc0] sm:$0xff]
      %v1924 = vld [vmem:[%s4 + $0xc8] sm:$0xff]
      %v1925 = vld [vmem:[%s4 + $0xd0] sm:$0xff]
      %v1926 = vld [vmem:[%s4 + $0xd8] sm:$0xff]
      %v1927 = vld [vmem:[%s4 + $0xe0] sm:$0xff]
      %v1928 = vld [vmem:[%s4 + $0xe8] sm:$0xff]
      %v1929 = vld [vmem:[%s4 + $0xf0] sm:$0xff]
      %v1930 = vld [vmem:[%s4 + $0xf8] sm:$0xff]
      %v1931 = vld [vmem:[%s4 + $0x100] sm:$0xff]
      %v1932 = vld [vmem:[%s4 + $0x108] sm:$0xff]
      %v1933 = vld [vmem:[%s4 + $0x110] sm:$0xff]
      %v1934 = vld [vmem:[%s4 + $0x118] sm:$0xff]
      %v1935 = vld [vmem:[%s4 + $0x120] sm:$0xff]
      %v1936 = vld [vmem:[%s4 + $0x128] sm:$0xff]
      %1938 = vset.pattern.permute.xlu0 0
      %1939 = vperm.xlu0 %1938, %v1899
      %v1940 = vpop.permute.xlu0 %1939
      %1943 = vset.pattern.permute.xlu0 0
      %1944 = vperm.xlu0 %1943, %v1900
      %v1945 = vpop.permute.xlu0 %1944
      %1948 = vset.pattern.permute.xlu0 0
      %1949 = vperm.xlu0 %1948, %v1901
      %v1950 = vpop.permute.xlu0 %1949
      %1953 = vset.pattern.permute.xlu0 0
      %1954 = vperm.xlu0 %1953, %v1902
      %v1955 = vpop.permute.xlu0 %1954
      %1958 = vset.pattern.permute.xlu0 0
      %1959 = vperm.xlu0 %1958, %v1903
      %v1960 = vpop.permute.xlu0 %1959
      %1963 = vset.pattern.permute.xlu0 0
      %1964 = vperm.xlu0 %1963, %v1904
      %v1965 = vpop.permute.xlu0 %1964
      %1968 = vset.pattern.permute.xlu0 0
      %1969 = vperm.xlu0 %1968, %v1905
      %v1970 = vpop.permute.xlu0 %1969
      %1973 = vset.pattern.permute.xlu0 0
      %1974 = vperm.xlu0 %1973, %v1906
      %v1975 = vpop.permute.xlu0 %1974
      %1978 = vset.pattern.permute.xlu0 0
      %1979 = vperm.xlu0 %1978, %v1907
      %v1980 = vpop.permute.xlu0 %1979
      %1983 = vset.pattern.permute.xlu0 0
      %1984 = vperm.xlu0 %1983, %v1908
      %v1985 = vpop.permute.xlu0 %1984
      %1988 = vset.pattern.permute.xlu0 0
      %1989 = vperm.xlu0 %1988, %v1909
      %v1990 = vpop.permute.xlu0 %1989
      %1993 = vset.pattern.permute.xlu0 0
      %1994 = vperm.xlu0 %1993, %v1910
      %v1995 = vpop.permute.xlu0 %1994
      %1998 = vset.pattern.permute.xlu0 0
      %1999 = vperm.xlu0 %1998, %v1911
      %v2000 = vpop.permute.xlu0 %1999
      %2003 = vset.pattern.permute.xlu0 0
      %2004 = vperm.xlu0 %2003, %v1912
      %v2005 = vpop.permute.xlu0 %2004
      %2008 = vset.pattern.permute.xlu0 0
      %2009 = vperm.xlu0 %2008, %v1913
      %v2010 = vpop.permute.xlu0 %2009
      %2013 = vset.pattern.permute.xlu0 0
      %2014 = vperm.xlu0 %2013, %v1914
      %v2015 = vpop.permute.xlu0 %2014
      %2018 = vset.pattern.permute.xlu0 0
      %2019 = vperm.xlu0 %2018, %v1915
      %v2020 = vpop.permute.xlu0 %2019
      %2023 = vset.pattern.permute.xlu0 0
      %2024 = vperm.xlu0 %2023, %v1916
      %v2025 = vpop.permute.xlu0 %2024
      %2028 = vset.pattern.permute.xlu0 0
      %2029 = vperm.xlu0 %2028, %v1917
      %v2030 = vpop.permute.xlu0 %2029
      %2033 = vset.pattern.permute.xlu0 0
      %2034 = vperm.xlu0 %2033, %v1918
      %v2035 = vpop.permute.xlu0 %2034
      %2038 = vset.pattern.permute.xlu0 0
      %2039 = vperm.xlu0 %2038, %v1919
      %v2040 = vpop.permute.xlu0 %2039
      %2043 = vset.pattern.permute.xlu0 0
      %2044 = vperm.xlu0 %2043, %v1920
      %v2045 = vpop.permute.xlu0 %2044
      %2048 = vset.pattern.permute.xlu0 0
      %2049 = vperm.xlu0 %2048, %v1921
      %v2050 = vpop.permute.xlu0 %2049
      %2053 = vset.pattern.permute.xlu0 0
      %2054 = vperm.xlu0 %2053, %v1922
      %v2055 = vpop.permute.xlu0 %2054
      %2058 = vset.pattern.permute.xlu0 0
      %2059 = vperm.xlu0 %2058, %v1923
      %v2060 = vpop.permute.xlu0 %2059
      %2063 = vset.pattern.permute.xlu0 0
      %2064 = vperm.xlu0 %2063, %v1924
      %v2065 = vpop.permute.xlu0 %2064
      %2068 = vset.pattern.permute.xlu0 0
      %2069 = vperm.xlu0 %2068, %v1925
      %v2070 = vpop.permute.xlu0 %2069
      %2073 = vset.pattern.permute.xlu0 0
      %2074 = vperm.xlu0 %2073, %v1926
      %v2075 = vpop.permute.xlu0 %2074
      %2078 = vset.pattern.permute.xlu0 0
      %2079 = vperm.xlu0 %2078, %v1927
      %v2080 = vpop.permute.xlu0 %2079
      %2083 = vset.pattern.permute.xlu0 0
      %2084 = vperm.xlu0 %2083, %v1928
      %v2085 = vpop.permute.xlu0 %2084
      %2088 = vset.pattern.permute.xlu0 0
      %2089 = vperm.xlu0 %2088, %v1929
      %v2090 = vpop.permute.xlu0 %2089
      %2093 = vset.pattern.permute.xlu0 0
      %2094 = vperm.xlu0 %2093, %v1930
      %v2095 = vpop.permute.xlu0 %2094
      %2098 = vset.pattern.permute.xlu0 0
      %2099 = vperm.xlu0 %2098, %v1931
      %v2100 = vpop.permute.xlu0 %2099
      %2103 = vset.pattern.permute.xlu0 0
      %2104 = vperm.xlu0 %2103, %v1932
      %v2105 = vpop.permute.xlu0 %2104
      %2108 = vset.pattern.permute.xlu0 0
      %2109 = vperm.xlu0 %2108, %v1933
      %v2110 = vpop.permute.xlu0 %2109
      %2113 = vset.pattern.permute.xlu0 0
      %2114 = vperm.xlu0 %2113, %v1934
      %v2115 = vpop.permute.xlu0 %2114
      %2118 = vset.pattern.permute.xlu0 0
      %2119 = vperm.xlu0 %2118, %v1935
      %v2120 = vpop.permute.xlu0 %2119
      %2123 = vset.pattern.permute.xlu0 0
      %2124 = vperm.xlu0 %2123, %v1936
      %v2125 = vpop.permute.xlu0 %2124
      %v2127 = vadd.f32 %v1823, %v1940
      %v2128 = vadd.f32 %v1824, %v1940
      %v2129 = vadd.f32 %v1825, %v1945
      %v2130 = vadd.f32 %v1826, %v1945
      %v2131 = vadd.f32 %v1827, %v1950
      %v2132 = vadd.f32 %v1828, %v1950
      %v2133 = vadd.f32 %v1829, %v1955
      %v2134 = vadd.f32 %v1830, %v1955
      %v2135 = vadd.f32 %v1831, %v1960
      %v2136 = vadd.f32 %v1832, %v1960
      %v2137 = vadd.f32 %v1833, %v1965
      %v2138 = vadd.f32 %v1834, %v1965
      %v2139 = vadd.f32 %v1835, %v1970
      %v2140 = vadd.f32 %v1836, %v1970
      %v2141 = vadd.f32 %v1837, %v1975
      %v2142 = vadd.f32 %v1838, %v1975
      %v2143 = vadd.f32 %v1839, %v1980
      %v2144 = vadd.f32 %v1840, %v1980
      %v2145 = vadd.f32 %v1841, %v1985
      %v2146 = vadd.f32 %v1842, %v1985
      %v2147 = vadd.f32 %v1843, %v1990
      %v2148 = vadd.f32 %v1844, %v1990
      %v2149 = vadd.f32 %v1845, %v1995
      %v2150 = vadd.f32 %v1846, %v1995
      %v2151 = vadd.f32 %v1847, %v2000
      %v2152 = vadd.f32 %v1848, %v2000
      %v2153 = vadd.f32 %v1849, %v2005
      %v2154 = vadd.f32 %v1850, %v2005
      %v2155 = vadd.f32 %v1851, %v2010
      %v2156 = vadd.f32 %v1852, %v2010
      %v2157 = vadd.f32 %v1853, %v2015
      %v2158 = vadd.f32 %v1854, %v2015
      %v2159 = vadd.f32 %v1855, %v2020
      %v2160 = vadd.f32 %v1856, %v2020
      %v2161 = vadd.f32 %v1857, %v2025
      %v2162 = vadd.f32 %v1858, %v2025
      %v2163 = vadd.f32 %v1859, %v2030
      %v2164 = vadd.f32 %v1860, %v2030
      %v2165 = vadd.f32 %v1861, %v2035
      %v2166 = vadd.f32 %v1862, %v2035
      %v2167 = vadd.f32 %v1863, %v2040
      %v2168 = vadd.f32 %v1864, %v2040
      %v2169 = vadd.f32 %v1865, %v2045
      %v2170 = vadd.f32 %v1866, %v2045
      %v2171 = vadd.f32 %v1867, %v2050
      %v2172 = vadd.f32 %v1868, %v2050
      %v2173 = vadd.f32 %v1869, %v2055
      %v2174 = vadd.f32 %v1870, %v2055
      %v2175 = vadd.f32 %v1871, %v2060
      %v2176 = vadd.f32 %v1872, %v2060
      %v2177 = vadd.f32 %v1873, %v2065
      %v2178 = vadd.f32 %v1874, %v2065
      %v2179 = vadd.f32 %v1875, %v2070
      %v2180 = vadd.f32 %v1876, %v2070
      %v2181 = vadd.f32 %v1877, %v2075
      %v2182 = vadd.f32 %v1878, %v2075
      %v2183 = vadd.f32 %v1879, %v2080
      %v2184 = vadd.f32 %v1880, %v2080
      %v2185 = vadd.f32 %v1881, %v2085
      %v2186 = vadd.f32 %v1882, %v2085
      %v2187 = vadd.f32 %v1883, %v2090
      %v2188 = vadd.f32 %v1884, %v2090
      %v2189 = vadd.f32 %v1885, %v2095
      %v2190 = vadd.f32 %v1886, %v2095
      %v2191 = vadd.f32 %v1887, %v2100
      %v2192 = vadd.f32 %v1888, %v2100
      %v2193 = vadd.f32 %v1889, %v2105
      %v2194 = vadd.f32 %v1890, %v2105
      %v2195 = vadd.f32 %v1891, %v2110
      %v2196 = vadd.f32 %v1892, %v2110
      %v2197 = vadd.f32 %v1893, %v2115
      %v2198 = vadd.f32 %v1894, %v2115
      %v2199 = vadd.f32 %v1895, %v2120
      %v2200 = vadd.f32 %v1896, %v2120
      %v2201 = vadd.f32 %v1897, %v2125
      %v2202 = vadd.f32 %v1898, %v2125
      %v2203 = vmax.f32 %v2127, 0.0
      %v2204 = vmax.f32 %v2128, 0.0
      %v2205 = vmax.f32 %v2129, 0.0
      %v2206 = vmax.f32 %v2130, 0.0
      %v2207 = vmax.f32 %v2131, 0.0
      %v2208 = vmax.f32 %v2132, 0.0
      %v2209 = vmax.f32 %v2133, 0.0
      %v2210 = vmax.f32 %v2134, 0.0
      %v2211 = vmax.f32 %v2135, 0.0
      %v2212 = vmax.f32 %v2136, 0.0
      %v2213 = vmax.f32 %v2137, 0.0
      %v2214 = vmax.f32 %v2138, 0.0
      %v2215 = vmax.f32 %v2139, 0.0
      %v2216 = vmax.f32 %v2140, 0.0
      %v2217 = vmax.f32 %v2141, 0.0
      %v2218 = vmax.f32 %v2142, 0.0
      %v2219 = vmax.f32 %v2143, 0.0
      %v2220 = vmax.f32 %v2144, 0.0
      %v2221 = vmax.f32 %v2145, 0.0
      %v2222 = vmax.f32 %v2146, 0.0
      %v2223 = vmax.f32 %v2147, 0.0
      %v2224 = vmax.f32 %v2148, 0.0
      %v2225 = vmax.f32 %v2149, 0.0
      %v2226 = vmax.f32 %v2150, 0.0
      %v2227 = vmax.f32 %v2151, 0.0
      %v2228 = vmax.f32 %v2152, 0.0
      %v2229 = vmax.f32 %v2153, 0.0
      %v2230 = vmax.f32 %v2154, 0.0
      %v2231 = vmax.f32 %v2155, 0.0
      %v2232 = vmax.f32 %v2156, 0.0
      %v2233 = vmax.f32 %v2157, 0.0
      %v2234 = vmax.f32 %v2158, 0.0
      %v2235 = vmax.f32 %v2159, 0.0
      %v2236 = vmax.f32 %v2160, 0.0
      %v2237 = vmax.f32 %v2161, 0.0
      %v2238 = vmax.f32 %v2162, 0.0
      %v2239 = vmax.f32 %v2163, 0.0
      %v2240 = vmax.f32 %v2164, 0.0
      %v2241 = vmax.f32 %v2165, 0.0
      %v2242 = vmax.f32 %v2166, 0.0
      %v2243 = vmax.f32 %v2167, 0.0
      %v2244 = vmax.f32 %v2168, 0.0
      %v2245 = vmax.f32 %v2169, 0.0
      %v2246 = vmax.f32 %v2170, 0.0
      %v2247 = vmax.f32 %v2171, 0.0
      %v2248 = vmax.f32 %v2172, 0.0
      %v2249 = vmax.f32 %v2173, 0.0
      %v2250 = vmax.f32 %v2174, 0.0
      %v2251 = vmax.f32 %v2175, 0.0
      %v2252 = vmax.f32 %v2176, 0.0
      %v2253 = vmax.f32 %v2177, 0.0
      %v2254 = vmax.f32 %v2178, 0.0
      %v2255 = vmax.f32 %v2179, 0.0
      %v2256 = vmax.f32 %v2180, 0.0
      %v2257 = vmax.f32 %v2181, 0.0
      %v2258 = vmax.f32 %v2182, 0.0
      %v2259 = vmax.f32 %v2183, 0.0
      %v2260 = vmax.f32 %v2184, 0.0
      %v2261 = vmax.f32 %v2185, 0.0
      %v2262 = vmax.f32 %v2186, 0.0
      %v2263 = vmax.f32 %v2187, 0.0
      %v2264 = vmax.f32 %v2188, 0.0
      %v2265 = vmax.f32 %v2189, 0.0
      %v2266 = vmax.f32 %v2190, 0.0
      %v2267 = vmax.f32 %v2191, 0.0
      %v2268 = vmax.f32 %v2192, 0.0
      %v2269 = vmax.f32 %v2193, 0.0
      %v2270 = vmax.f32 %v2194, 0.0
      %v2271 = vmax.f32 %v2195, 0.0
      %v2272 = vmax.f32 %v2196, 0.0
      %v2273 = vmax.f32 %v2197, 0.0
      %v2274 = vmax.f32 %v2198, 0.0
      %v2275 = vmax.f32 %v2199, 0.0
      %v2276 = vmax.f32 %v2200, 0.0
      %v2277 = vmax.f32 %v2201, 0.0
      %v2278 = vmax.f32 %v2202, 0.0
      %2279 = vst [vmem:[%s467] sm:$0xff] %v2203
      %2280 = vst [vmem:[%s467 + $0x8] sm:$0xff] %v2204
      %2281 = vst [vmem:[%s467 + $0x10] sm:$0xff] %v2205
      %2282 = vst [vmem:[%s467 + $0x18] sm:$0xff] %v2206
      %2283 = vst [vmem:[%s467 + $0x20] sm:$0xff] %v2207
      %2284 = vst [vmem:[%s467 + $0x28] sm:$0xff] %v2208
      %2285 = vst [vmem:[%s467 + $0x30] sm:$0xff] %v2209
      %2286 = vst [vmem:[%s467 + $0x38] sm:$0xff] %v2210
      %2287 = vst [vmem:[%s467 + $0x40] sm:$0xff] %v2211
      %2288 = vst [vmem:[%s467 + $0x48] sm:$0xff] %v2212
      %2289 = vst [vmem:[%s467 + $0x50] sm:$0xff] %v2213
      %2290 = vst [vmem:[%s467 + $0x58] sm:$0xff] %v2214
      %2291 = vst [vmem:[%s467 + $0x60] sm:$0xff] %v2215
      %2292 = vst [vmem:[%s467 + $0x68] sm:$0xff] %v2216
      %2293 = vst [vmem:[%s467 + $0x70] sm:$0xff] %v2217
      %2294 = vst [vmem:[%s467 + $0x78] sm:$0xff] %v2218
      %2295 = vst [vmem:[%s467 + $0x80] sm:$0xff] %v2219
      %2296 = vst [vmem:[%s467 + $0x88] sm:$0xff] %v2220
      %2297 = vst [vmem:[%s467 + $0x90] sm:$0xff] %v2221
      %2298 = vst [vmem:[%s467 + $0x98] sm:$0xff] %v2222
      %2299 = vst [vmem:[%s467 + $0xa0] sm:$0xff] %v2223
      %2300 = vst [vmem:[%s467 + $0xa8] sm:$0xff] %v2224
      %2301 = vst [vmem:[%s467 + $0xb0] sm:$0xff] %v2225
      %2302 = vst [vmem:[%s467 + $0xb8] sm:$0xff] %v2226
      %2303 = vst [vmem:[%s467 + $0xc0] sm:$0xff] %v2227
      %2304 = vst [vmem:[%s467 + $0xc8] sm:$0xff] %v2228
      %2305 = vst [vmem:[%s467 + $0xd0] sm:$0xff] %v2229
      %2306 = vst [vmem:[%s467 + $0xd8] sm:$0xff] %v2230
      %2307 = vst [vmem:[%s467 + $0xe0] sm:$0xff] %v2231
      %2308 = vst [vmem:[%s467 + $0xe8] sm:$0xff] %v2232
      %2309 = vst [vmem:[%s467 + $0xf0] sm:$0xff] %v2233
      %2310 = vst [vmem:[%s467 + $0xf8] sm:$0xff] %v2234
      %2311 = vst [vmem:[%s467 + $0x100] sm:$0xff] %v2235
      %2312 = vst [vmem:[%s467 + $0x108] sm:$0xff] %v2236
      %2313 = vst [vmem:[%s467 + $0x110] sm:$0xff] %v2237
      %2314 = vst [vmem:[%s467 + $0x118] sm:$0xff] %v2238
      %2315 = vst [vmem:[%s467 + $0x120] sm:$0xff] %v2239
      %2316 = vst [vmem:[%s467 + $0x128] sm:$0xff] %v2240
      %2317 = vst [vmem:[%s467 + $0x130] sm:$0xff] %v2241
      %2318 = vst [vmem:[%s467 + $0x138] sm:$0xff] %v2242
      %2319 = vst [vmem:[%s467 + $0x140] sm:$0xff] %v2243
      %2320 = vst [vmem:[%s467 + $0x148] sm:$0xff] %v2244
      %2321 = vst [vmem:[%s467 + $0x150] sm:$0xff] %v2245
      %2322 = vst [vmem:[%s467 + $0x158] sm:$0xff] %v2246
      %2323 = vst [vmem:[%s467 + $0x160] sm:$0xff] %v2247
      %2324 = vst [vmem:[%s467 + $0x168] sm:$0xff] %v2248
      %2325 = vst [vmem:[%s467 + $0x170] sm:$0xff] %v2249
      %2326 = vst [vmem:[%s467 + $0x178] sm:$0xff] %v2250
      %v2327 = vpack.c.bf16 %v2253, %v2251
      %v2328 = vpack.c.bf16 %v2254, %v2252
      %v2329 = vpack.c.bf16 %v2257, %v2255
      %v2330 = vpack.c.bf16 %v2258, %v2256
      %v2331 = vpack.c.bf16 %v2261, %v2259
      %v2332 = vpack.c.bf16 %v2262, %v2260
      %v2333 = vpack.c.bf16 %v2265, %v2263
      %v2334 = vpack.c.bf16 %v2266, %v2264
      %v2335 = vpack.c.bf16 %v2269, %v2267
      %v2336 = vpack.c.bf16 %v2270, %v2268
      %v2337 = vpack.c.bf16 %v2273, %v2271
      %v2338 = vpack.c.bf16 %v2274, %v2272
      %v2339 = vpack.c.bf16 %v2277, %v2275
      %v2340 = vpack.c.bf16 %v2278, %v2276
      %v2343 = vrot.slane %v652, 6
      %v2344 = vrot.slane %v653, 6
      %v2347 = vmul.f32 %v652, %v2343
      %v2348 = vmul.f32 %v653, %v2344
      %v2349 = vpack.c.bf16 %v2347, %v2347
      %v2350 = vpack.c.bf16 %v2348, %v2348
      %2365 = vrot.lane.b32.xlu0 %v2327, 9
      %v2366 = vpop.permute.xlu0 %2365
      %2367 = vrot.lane.b32.xlu0 %v2328, 9
      %v2368 = vpop.permute.xlu0 %2367
      %2369 = vrot.lane.b32.xlu0 %v2329, 9
      %v2370 = vpop.permute.xlu0 %2369
      %2371 = vrot.lane.b32.xlu0 %v2330, 9
      %v2372 = vpop.permute.xlu0 %2371
      %2373 = vrot.lane.b32.xlu0 %v2331, 9
      %v2374 = vpop.permute.xlu0 %2373
      %2375 = vrot.lane.b32.xlu0 %v2332, 9
      %v2376 = vpop.permute.xlu0 %2375
      %2377 = vrot.lane.b32.xlu0 %v2333, 9
      %v2378 = vpop.permute.xlu0 %2377
      %2379 = vrot.lane.b32.xlu0 %v2334, 9
      %v2380 = vpop.permute.xlu0 %2379
      %2381 = vrot.lane.b32.xlu0 %v2335, 9
      %v2382 = vpop.permute.xlu0 %2381
      %2383 = vrot.lane.b32.xlu0 %v2336, 9
      %v2384 = vpop.permute.xlu0 %2383
      %2385 = vrot.lane.b32.xlu0 %v2337, 9
      %v2386 = vpop.permute.xlu0 %2385
      %2387 = vrot.lane.b32.xlu0 %v2338, 9
      %v2388 = vpop.permute.xlu0 %2387
      %2389 = vrot.lane.b32.xlu0 %v2339, 9
      %v2390 = vpop.permute.xlu0 %2389
      %2391 = vrot.lane.b32.xlu0 %v2340, 9
      %v2392 = vpop.permute.xlu0 %2391
      %vm2393 = vcmask 72704
      %v2394 = vsel %vm2393, %v2366, %v2368
      %v2395 = vsel %vm2393, %v2370, %v2372
      %v2396 = vsel %vm2393, %v2374, %v2376
      %v2397 = vsel %vm2393, %v2378, %v2380
      %v2398 = vsel %vm2393, %v2382, %v2384
      %v2399 = vsel %vm2393, %v2386, %v2388
      %v2400 = vsel %vm2393, %v2390, %v2392
      %vm2408 = vcmask 72704
      %v2411 = vsel %vm2408, 0, %v2366
      %v2414 = vsel %vm2408, 0, %v2370
      %v2417 = vsel %vm2408, 0, %v2374
      %v2420 = vsel %vm2408, 0, %v2378
      %v2423 = vsel %vm2408, 0, %v2382
      %v2426 = vsel %vm2408, 0, %v2386
      %v2429 = vsel %vm2408, 0, %v2390
      %v2432 = vpack.i.b16 %v2349, %v2349
      %v2434 = vlaneseq
      %v2435 = vshrl.u32 %v2434, 7
      %v2436 = vsub.s32 1, %v2435
      %v2437 = vrot.slane %v2432, %v2436
      %v2439 = vpack.i.b16 %v2350, %v2350
      %v2441 = vlaneseq
      %v2442 = vshrl.u32 %v2441, 7
      %v2443 = vsub.s32 1, %v2442
      %v2444 = vrot.slane %v2439, %v2443
      %v2445 = vmul.bf16 %v2411, %v2437
      %v2446 = vmul.bf16 %v2394, %v2444
      %v2447 = vmul.bf16 %v2414, %v2437
      %v2448 = vmul.bf16 %v2395, %v2444
      %v2449 = vmul.bf16 %v2417, %v2437
      %v2450 = vmul.bf16 %v2396, %v2444
      %v2451 = vmul.bf16 %v2420, %v2437
      %v2452 = vmul.bf16 %v2397, %v2444
      %v2453 = vmul.bf16 %v2423, %v2437
      %v2454 = vmul.bf16 %v2398, %v2444
      %v2455 = vmul.bf16 %v2426, %v2437
      %v2456 = vmul.bf16 %v2399, %v2444
      %v2457 = vmul.bf16 %v2429, %v2437
      %v2458 = vmul.bf16 %v2400, %v2444
      %v2459 = vld [vmem:[%s5] sm:$0xf]
      %v2460 = vld [vmem:[%s5 + $0x4] sm:$0xf]
      %v2461 = vld [vmem:[%s5 + $0x8] sm:$0xf]
      %v2462 = vld [vmem:[%s5 + $0xc] sm:$0xf]
      %v2463 = vld [vmem:[%s5 + $0x10] sm:$0xf]
      %v2464 = vld [vmem:[%s5 + $0x14] sm:$0xf]
      %v2465 = vld [vmem:[%s5 + $0x18] sm:$0xf]
      %v2466 = vld [vmem:[%s5 + $0x1c] sm:$0xf]
      %v2467 = vld [vmem:[%s5 + $0x20] sm:$0xf]
      %v2468 = vld [vmem:[%s5 + $0x24] sm:$0xf]
      %v2469 = vld [vmem:[%s5 + $0x28] sm:$0xf]
      %v2470 = vld [vmem:[%s5 + $0x2c] sm:$0xf]
      %v2471 = vld [vmem:[%s5 + $0x30] sm:$0xf]
      %v2472 = vld [vmem:[%s5 + $0x34] sm:$0xf]
      %v2473 = vld [vmem:[%s5 + $0x38] sm:$0xf]
      %v2474 = vld [vmem:[%s5 + $0x3c] sm:$0xf]
      %v2475 = vld [vmem:[%s5 + $0x40] sm:$0xf]
      %v2476 = vld [vmem:[%s5 + $0x44] sm:$0xf]
      %v2477 = vld [vmem:[%s5 + $0x48] sm:$0xf]
      %v2478 = vld [vmem:[%s5 + $0x4c] sm:$0xf]
      %v2479 = vld [vmem:[%s5 + $0x50] sm:$0xf]
      %v2480 = vld [vmem:[%s5 + $0x54] sm:$0xf]
      %v2481 = vld [vmem:[%s5 + $0x58] sm:$0xf]
      %v2482 = vld [vmem:[%s5 + $0x5c] sm:$0xf]
      %v2483 = vld [vmem:[%s5 + $0x60] sm:$0xf]
      %v2484 = vld [vmem:[%s5 + $0x64] sm:$0xf]
      %v2485 = vld [vmem:[%s5 + $0x68] sm:$0xf]
      %v2486 = vld [vmem:[%s5 + $0x6c] sm:$0xf]
      %v2487 = vld [vmem:[%s5 + $0x70] sm:$0xf]
      %v2488 = vld [vmem:[%s5 + $0x74] sm:$0xf]
      %v2489 = vld [vmem:[%s5 + $0x78] sm:$0xf]
      %v2490 = vld [vmem:[%s5 + $0x7c] sm:$0xf]
      %v2491 = vrot.slane %v652, 4
      %v2492 = vrot.slane %v653, 4
      %v2495 = vmul.f32 %v652, %v2491
      %v2496 = vmul.f32 %v653, %v2492
      %v2497 = vpack.c.bf16 %v2495, %v2495
      %v2498 = vpack.c.bf16 %v2496, %v2496
      %2499 = vrot.lane.b32.xlu0 %v2327, 8
      %v2500 = vpop.permute.xlu0 %2499
      %2501 = vrot.lane.b32.xlu0 %v2328, 8
      %v2502 = vpop.permute.xlu0 %2501
      %2503 = vrot.lane.b32.xlu0 %v2329, 8
      %v2504 = vpop.permute.xlu0 %2503
      %2505 = vrot.lane.b32.xlu0 %v2330, 8
      %v2506 = vpop.permute.xlu0 %2505
      %2507 = vrot.lane.b32.xlu0 %v2331, 8
      %v2508 = vpop.permute.xlu0 %2507
      %2509 = vrot.lane.b32.xlu0 %v2332, 8
      %v2510 = vpop.permute.xlu0 %2509
      %2511 = vrot.lane.b32.xlu0 %v2333, 8
      %v2512 = vpop.permute.xlu0 %2511
      %2513 = vrot.lane.b32.xlu0 %v2334, 8
      %v2514 = vpop.permute.xlu0 %2513
      %2515 = vrot.lane.b32.xlu0 %v2335, 8
      %v2516 = vpop.permute.xlu0 %2515
      %2517 = vrot.lane.b32.xlu0 %v2336, 8
      %v2518 = vpop.permute.xlu0 %2517
      %2519 = vrot.lane.b32.xlu0 %v2337, 8
      %v2520 = vpop.permute.xlu0 %2519
      %2521 = vrot.lane.b32.xlu0 %v2338, 8
      %v2522 = vpop.permute.xlu0 %2521
      %2523 = vrot.lane.b32.xlu0 %v2339, 8
      %v2524 = vpop.permute.xlu0 %2523
      %2525 = vrot.lane.b32.xlu0 %v2340, 8
      %v2526 = vpop.permute.xlu0 %2525
      %vm2527 = vcmask 64512
      %v2528 = vsel %vm2527, %v2500, %v2502
      %v2529 = vsel %vm2527, %v2504, %v2506
      %v2530 = vsel %vm2527, %v2508, %v2510
      %v2531 = vsel %vm2527, %v2512, %v2514
      %v2532 = vsel %vm2527, %v2516, %v2518
      %v2533 = vsel %vm2527, %v2520, %v2522
      %v2534 = vsel %vm2527, %v2524, %v2526
      %vm2542 = vcmask 64512
      %v2544 = vsel %vm2542, 0, %v2500
      %v2547 = vsel %vm2542, 0, %v2504
      %v2550 = vsel %vm2542, 0, %v2508
      %v2553 = vsel %vm2542, 0, %v2512
      %v2556 = vsel %vm2542, 0, %v2516
      %v2559 = vsel %vm2542, 0, %v2520
      %v2562 = vsel %vm2542, 0, %v2524
      %v2565 = vpack.i.b16 %v2497, %v2497
      %v2567 = vlaneseq
      %v2568 = vshrl.u32 %v2567, 7
      %v2569 = vsub.s32 1, %v2568
      %v2570 = vrot.slane %v2565, %v2569
      %v2572 = vpack.i.b16 %v2498, %v2498
      %v2574 = vlaneseq
      %v2575 = vshrl.u32 %v2574, 7
      %v2576 = vsub.s32 1, %v2575
      %v2577 = vrot.slane %v2572, %v2576
      %v2578 = vmul.bf16 %v2544, %v2570
      %v2579 = vmul.bf16 %v2528, %v2577
      %v2580 = vmul.bf16 %v2547, %v2570
      %v2581 = vmul.bf16 %v2529, %v2577
      %v2582 = vmul.bf16 %v2550, %v2570
      %v2583 = vmul.bf16 %v2530, %v2577
      %v2584 = vmul.bf16 %v2553, %v2570
      %v2585 = vmul.bf16 %v2531, %v2577
      %v2586 = vmul.bf16 %v2556, %v2570
      %v2587 = vmul.bf16 %v2532, %v2577
      %v2588 = vmul.bf16 %v2559, %v2570
      %v2589 = vmul.bf16 %v2533, %v2577
      %v2590 = vmul.bf16 %v2562, %v2570
      %v2591 = vmul.bf16 %v2534, %v2577
      %s2592 = scalar_lea.vmem %s5, 128
      %v2593 = vld [vmem:[%s2592] sm:$0xf]
      %v2594 = vld [vmem:[%s2592 + $0x4] sm:$0xf]
      %v2595 = vld [vmem:[%s2592 + $0x8] sm:$0xf]
      %v2596 = vld [vmem:[%s2592 + $0xc] sm:$0xf]
      %v2597 = vld [vmem:[%s2592 + $0x10] sm:$0xf]
      %v2598 = vld [vmem:[%s2592 + $0x14] sm:$0xf]
      %v2599 = vld [vmem:[%s2592 + $0x18] sm:$0xf]
      %v2600 = vld [vmem:[%s2592 + $0x1c] sm:$0xf]
      %v2601 = vld [vmem:[%s2592 + $0x20] sm:$0xf]
      %v2602 = vld [vmem:[%s2592 + $0x24] sm:$0xf]
      %v2603 = vld [vmem:[%s2592 + $0x28] sm:$0xf]
      %v2604 = vld [vmem:[%s2592 + $0x2c] sm:$0xf]
      %v2605 = vld [vmem:[%s2592 + $0x30] sm:$0xf]
      %v2606 = vld [vmem:[%s2592 + $0x34] sm:$0xf]
      %v2607 = vld [vmem:[%s2592 + $0x38] sm:$0xf]
      %v2608 = vld [vmem:[%s2592 + $0x3c] sm:$0xf]
      %v2609 = vld [vmem:[%s2592 + $0x40] sm:$0xf]
      %v2610 = vld [vmem:[%s2592 + $0x44] sm:$0xf]
      %v2611 = vld [vmem:[%s2592 + $0x48] sm:$0xf]
      %v2612 = vld [vmem:[%s2592 + $0x4c] sm:$0xf]
      %v2613 = vld [vmem:[%s2592 + $0x50] sm:$0xf]
      %v2614 = vld [vmem:[%s2592 + $0x54] sm:$0xf]
      %v2615 = vld [vmem:[%s2592 + $0x58] sm:$0xf]
      %v2616 = vld [vmem:[%s2592 + $0x5c] sm:$0xf]
      %v2617 = vld [vmem:[%s2592 + $0x60] sm:$0xf]
      %v2618 = vld [vmem:[%s2592 + $0x64] sm:$0xf]
      %v2619 = vld [vmem:[%s2592 + $0x68] sm:$0xf]
      %v2620 = vld [vmem:[%s2592 + $0x6c] sm:$0xf]
      %v2621 = vld [vmem:[%s2592 + $0x70] sm:$0xf]
      %v2622 = vld [vmem:[%s2592 + $0x74] sm:$0xf]
      %v2623 = vld [vmem:[%s2592 + $0x78] sm:$0xf]
      %v2624 = vld [vmem:[%s2592 + $0x7c] sm:$0xf]
      %v2657 = vunpack.c.l.b16 %v2593
      %v2658 = vunpack.c.l.b16 %v2594
      %v2659 = vunpack.c.l.b16 %v2595
      %v2660 = vunpack.c.l.b16 %v2596
      %v2661 = vunpack.c.l.b16 %v2597
      %v2662 = vunpack.c.l.b16 %v2598
      %v2663 = vunpack.c.l.b16 %v2599
      %v2664 = vunpack.c.l.b16 %v2600
      %v2665 = vunpack.c.l.b16 %v2601
      %v2666 = vunpack.c.l.b16 %v2602
      %v2667 = vunpack.c.l.b16 %v2603
      %v2668 = vunpack.c.l.b16 %v2604
      %v2669 = vunpack.c.l.b16 %v2605
      %v2670 = vunpack.c.l.b16 %v2606
      %v2671 = vunpack.c.l.b16 %v2607
      %v2672 = vunpack.c.l.b16 %v2608
      %v2673 = vunpack.c.l.b16 %v2609
      %v2674 = vunpack.c.l.b16 %v2610
      %v2675 = vunpack.c.l.b16 %v2611
      %v2676 = vunpack.c.l.b16 %v2612
      %v2677 = vunpack.c.l.b16 %v2613
      %v2678 = vunpack.c.l.b16 %v2614
      %v2679 = vunpack.c.l.b16 %v2615
      %v2680 = vunpack.c.l.b16 %v2616
      %v2681 = vunpack.c.l.b16 %v2617
      %v2682 = vunpack.c.l.b16 %v2618
      %v2683 = vunpack.c.l.b16 %v2619
      %v2684 = vunpack.c.l.b16 %v2620
      %v2685 = vunpack.c.l.b16 %v2621
      %v2686 = vunpack.c.l.b16 %v2622
      %v2687 = vunpack.c.l.b16 %v2623
      %v2688 = vunpack.c.l.b16 %v2624
      %v2689 = vpack.c.b16 %v2658, %v2657
      %v2690 = vpack.c.b16 %v2660, %v2659
      %v2691 = vpack.c.b16 %v2662, %v2661
      %v2692 = vpack.c.b16 %v2664, %v2663
      %v2693 = vpack.c.b16 %v2666, %v2665
      %v2694 = vpack.c.b16 %v2668, %v2667
      %v2695 = vpack.c.b16 %v2670, %v2669
      %v2696 = vpack.c.b16 %v2672, %v2671
      %v2697 = vpack.c.b16 %v2674, %v2673
      %v2698 = vpack.c.b16 %v2676, %v2675
      %v2699 = vpack.c.b16 %v2678, %v2677
      %v2700 = vpack.c.b16 %v2680, %v2679
      %v2701 = vpack.c.b16 %v2682, %v2681
      %v2702 = vpack.c.b16 %v2684, %v2683
      %v2703 = vpack.c.b16 %v2686, %v2685
      %v2704 = vpack.c.b16 %v2688, %v2687
      %vm2705 = vcmask 916480
      %v2707 = vsel %vm2705, %v2689, 0
      %v2710 = vsel %vm2705, %v2690, 0
      %v2713 = vsel %vm2705, %v2691, 0
      %v2716 = vsel %vm2705, %v2692, 0
      %v2719 = vsel %vm2705, %v2693, 0
      %v2722 = vsel %vm2705, %v2694, 0
      %v2725 = vsel %vm2705, %v2695, 0
      %v2728 = vsel %vm2705, %v2696, 0
      %v2731 = vsel %vm2705, %v2697, 0
      %v2734 = vsel %vm2705, %v2698, 0
      %v2737 = vsel %vm2705, %v2699, 0
      %v2740 = vsel %vm2705, %v2700, 0
      %v2743 = vsel %vm2705, %v2701, 0
      %v2746 = vsel %vm2705, %v2702, 0
      %v2749 = vsel %vm2705, %v2703, 0
      %v2752 = vsel %vm2705, %v2704, 0
      %2754 = vmatprep.subr.bf16.mxu0 0
      %2755 = vmatpush1.bf16.msra.mxu0 0
      %2756 = vmatprep.subr.bf16.mxu0 %v2591
      %2757 = vmatpush1.bf16.msra.mxu0 %v2590
      %2758 = vmatprep.subr.bf16.mxu0 %v2589
      %2759 = vmatpush1.bf16.msra.mxu0 %v2588
      %2760 = vmatprep.subr.bf16.mxu0 %v2587
      %2761 = vmatpush1.bf16.msra.mxu0 %v2586
      %2762 = vmatprep.subr.bf16.mxu0 %v2585
      %2763 = vmatpush1.bf16.msra.mxu0 %v2584
      %2764 = vmatprep.subr.bf16.mxu0 %v2583
      %2765 = vmatpush1.bf16.msra.mxu0 %v2582
      %2766 = vmatprep.subr.bf16.mxu0 %v2581
      %2767 = vmatpush1.bf16.msra.mxu0 %v2580
      %2768 = vmatprep.subr.bf16.mxu0 %v2579
      %2769 = vmatpush1.bf16.msra.mxu0 %v2578
      %2770 = vmatprep.subr.bf16.mxu0 0
      %2771 = vmatpush2.bf16.msra.mxu0 0
      %2772 = vmatprep.subr.bf16.mxu0 0
      %2773 = vmatpush2.bf16.msra.mxu0 0
      %2774 = vmatprep.subr.bf16.mxu0 0
      %2775 = vmatpush2.bf16.msra.mxu0 0
      %2776 = vmatprep.subr.bf16.mxu0 0
      %2777 = vmatpush2.bf16.msra.mxu0 0
      %2778 = vmatprep.subr.bf16.mxu0 0
      %2779 = vmatpush2.bf16.msra.mxu0 0
      %2780 = vmatprep.subr.bf16.mxu0 0
      %2781 = vmatpush2.bf16.msra.mxu0 0
      %2782 = vmatprep.subr.bf16.mxu0 0
      %2783 = vmatpush2.bf16.msra.mxu0 0
      %2784 = vmatprep.subr.bf16.mxu0 0
      %2785 = vmatpush2.bf16.msra.mxu0 0
      %2786 = vmatprep.mubr.bf16.mxu0 0
      %2787 = vmatmul.mubr.bf16.gmra.mxu0 %v2707
      %v2788 = vpop.f32.mrf.mxu0
      %v2789 = vadd.f32 0.0, %v2788
      %v2790 = vpop.f32.mrf.mxu0
      %v2791 = vadd.f32 0.0, %v2790
      %v2792 = vpop.f32.mrf.mxu0
      %v2793 = vadd.f32 0.0, %v2792
      %v2794 = vpop.f32.mrf.mxu0
      %v2795 = vadd.f32 0.0, %v2794
      %2796 = vmatprep.mubr.bf16.mxu0 0
      %2797 = vmatmul.mubr.bf16.gmra.mxu0 %v2710
      %v2798 = vpop.f32.mrf.mxu0
      %v2799 = vadd.f32 0.0, %v2798
      %v2800 = vpop.f32.mrf.mxu0
      %v2801 = vadd.f32 0.0, %v2800
      %v2802 = vpop.f32.mrf.mxu0
      %v2803 = vadd.f32 0.0, %v2802
      %v2804 = vpop.f32.mrf.mxu0
      %v2805 = vadd.f32 0.0, %v2804
      %2806 = vmatprep.mubr.bf16.mxu0 0
      %2807 = vmatmul.mubr.bf16.gmra.mxu0 %v2713
      %v2808 = vpop.f32.mrf.mxu0
      %v2809 = vadd.f32 0.0, %v2808
      %v2810 = vpop.f32.mrf.mxu0
      %v2811 = vadd.f32 0.0, %v2810
      %v2812 = vpop.f32.mrf.mxu0
      %v2813 = vadd.f32 0.0, %v2812
      %v2814 = vpop.f32.mrf.mxu0
      %v2815 = vadd.f32 0.0, %v2814
      %2816 = vmatprep.mubr.bf16.mxu0 0
      %2817 = vmatmul.mubr.bf16.gmra.mxu0 %v2716
      %v2818 = vpop.f32.mrf.mxu0
      %v2819 = vadd.f32 0.0, %v2818
      %v2820 = vpop.f32.mrf.mxu0
      %v2821 = vadd.f32 0.0, %v2820
      %v2822 = vpop.f32.mrf.mxu0
      %v2823 = vadd.f32 0.0, %v2822
      %v2824 = vpop.f32.mrf.mxu0
      %v2825 = vadd.f32 0.0, %v2824
      %2826 = vmatprep.mubr.bf16.mxu0 0
      %2827 = vmatmul.mubr.bf16.gmra.mxu0 %v2719
      %v2828 = vpop.f32.mrf.mxu0
      %v2829 = vadd.f32 0.0, %v2828
      %v2830 = vpop.f32.mrf.mxu0
      %v2831 = vadd.f32 0.0, %v2830
      %v2832 = vpop.f32.mrf.mxu0
      %v2833 = vadd.f32 0.0, %v2832
      %v2834 = vpop.f32.mrf.mxu0
      %v2835 = vadd.f32 0.0, %v2834
      %2836 = vmatprep.mubr.bf16.mxu0 0
      %2837 = vmatmul.mubr.bf16.gmra.mxu0 %v2722
      %v2838 = vpop.f32.mrf.mxu0
      %v2839 = vadd.f32 0.0, %v2838
      %v2840 = vpop.f32.mrf.mxu0
      %v2841 = vadd.f32 0.0, %v2840
      %v2842 = vpop.f32.mrf.mxu0
      %v2843 = vadd.f32 0.0, %v2842
      %v2844 = vpop.f32.mrf.mxu0
      %v2845 = vadd.f32 0.0, %v2844
      %2846 = vmatprep.mubr.bf16.mxu0 0
      %2847 = vmatmul.mubr.bf16.gmra.mxu0 %v2725
      %v2848 = vpop.f32.mrf.mxu0
      %v2849 = vadd.f32 0.0, %v2848
      %v2850 = vpop.f32.mrf.mxu0
      %v2851 = vadd.f32 0.0, %v2850
      %v2852 = vpop.f32.mrf.mxu0
      %v2853 = vadd.f32 0.0, %v2852
      %v2854 = vpop.f32.mrf.mxu0
      %v2855 = vadd.f32 0.0, %v2854
      %2856 = vmatprep.mubr.bf16.mxu0 0
      %2857 = vmatmul.mubr.bf16.gmra.mxu0 %v2728
      %v2858 = vpop.f32.mrf.mxu0
      %v2859 = vadd.f32 0.0, %v2858
      %v2860 = vpop.f32.mrf.mxu0
      %v2861 = vadd.f32 0.0, %v2860
      %v2862 = vpop.f32.mrf.mxu0
      %v2863 = vadd.f32 0.0, %v2862
      %v2864 = vpop.f32.mrf.mxu0
      %v2865 = vadd.f32 0.0, %v2864
      %2866 = vmatprep.mubr.bf16.mxu0 0
      %2867 = vmatmul.mubr.bf16.gmra.mxu0 %v2731
      %v2868 = vpop.f32.mrf.mxu0
      %v2869 = vadd.f32 0.0, %v2868
      %v2870 = vpop.f32.mrf.mxu0
      %v2871 = vadd.f32 0.0, %v2870
      %v2872 = vpop.f32.mrf.mxu0
      %v2873 = vadd.f32 0.0, %v2872
      %v2874 = vpop.f32.mrf.mxu0
      %v2875 = vadd.f32 0.0, %v2874
      %2876 = vmatprep.mubr.bf16.mxu0 0
      %2877 = vmatmul.mubr.bf16.gmra.mxu0 %v2734
      %v2878 = vpop.f32.mrf.mxu0
      %v2879 = vadd.f32 0.0, %v2878
      %v2880 = vpop.f32.mrf.mxu0
      %v2881 = vadd.f32 0.0, %v2880
      %v2882 = vpop.f32.mrf.mxu0
      %v2883 = vadd.f32 0.0, %v2882
      %v2884 = vpop.f32.mrf.mxu0
      %v2885 = vadd.f32 0.0, %v2884
      %2886 = vmatprep.mubr.bf16.mxu0 0
      %2887 = vmatmul.mubr.bf16.gmra.mxu0 %v2737
      %v2888 = vpop.f32.mrf.mxu0
      %v2889 = vadd.f32 0.0, %v2888
      %v2890 = vpop.f32.mrf.mxu0
      %v2891 = vadd.f32 0.0, %v2890
      %v2892 = vpop.f32.mrf.mxu0
      %v2893 = vadd.f32 0.0, %v2892
      %v2894 = vpop.f32.mrf.mxu0
      %v2895 = vadd.f32 0.0, %v2894
      %2896 = vmatprep.mubr.bf16.mxu0 0
      %2897 = vmatmul.mubr.bf16.gmra.mxu0 %v2740
      %v2898 = vpop.f32.mrf.mxu0
      %v2899 = vadd.f32 0.0, %v2898
      %v2900 = vpop.f32.mrf.mxu0
      %v2901 = vadd.f32 0.0, %v2900
      %v2902 = vpop.f32.mrf.mxu0
      %v2903 = vadd.f32 0.0, %v2902
      %v2904 = vpop.f32.mrf.mxu0
      %v2905 = vadd.f32 0.0, %v2904
      %2906 = vmatprep.mubr.bf16.mxu0 0
      %2907 = vmatmul.mubr.bf16.gmra.mxu0 %v2743
      %v2908 = vpop.f32.mrf.mxu0
      %v2909 = vadd.f32 0.0, %v2908
      %v2910 = vpop.f32.mrf.mxu0
      %v2911 = vadd.f32 0.0, %v2910
      %v2912 = vpop.f32.mrf.mxu0
      %v2913 = vadd.f32 0.0, %v2912
      %v2914 = vpop.f32.mrf.mxu0
      %v2915 = vadd.f32 0.0, %v2914
      %2916 = vmatprep.mubr.bf16.mxu0 0
      %2917 = vmatmul.mubr.bf16.gmra.mxu0 %v2746
      %v2918 = vpop.f32.mrf.mxu0
      %v2919 = vadd.f32 0.0, %v2918
      %v2920 = vpop.f32.mrf.mxu0
      %v2921 = vadd.f32 0.0, %v2920
      %v2922 = vpop.f32.mrf.mxu0
      %v2923 = vadd.f32 0.0, %v2922
      %v2924 = vpop.f32.mrf.mxu0
      %v2925 = vadd.f32 0.0, %v2924
      %2926 = vmatprep.mubr.bf16.mxu0 0
      %2927 = vmatmul.mubr.bf16.gmra.mxu0 %v2749
      %v2928 = vpop.f32.mrf.mxu0
      %v2929 = vadd.f32 0.0, %v2928
      %v2930 = vpop.f32.mrf.mxu0
      %v2931 = vadd.f32 0.0, %v2930
      %v2932 = vpop.f32.mrf.mxu0
      %v2933 = vadd.f32 0.0, %v2932
      %v2934 = vpop.f32.mrf.mxu0
      %v2935 = vadd.f32 0.0, %v2934
      %2936 = vmatprep.mubr.bf16.mxu0 0
      %2937 = vmatmul.mubr.bf16.gmra.mxu0 %v2752
      %v2938 = vpop.f32.mrf.mxu0
      %v2939 = vadd.f32 0.0, %v2938
      %v2940 = vpop.f32.mrf.mxu0
      %v2941 = vadd.f32 0.0, %v2940
      %v2942 = vpop.f32.mrf.mxu0
      %v2943 = vadd.f32 0.0, %v2942
      %v2944 = vpop.f32.mrf.mxu0
      %v2945 = vadd.f32 0.0, %v2944
      %2946 = vdwg.mxu0
      %v2979 = vunpack.c.l.b16 %v2459
      %v2980 = vunpack.c.l.b16 %v2460
      %v2981 = vunpack.c.l.b16 %v2461
      %v2982 = vunpack.c.l.b16 %v2462
      %v2983 = vunpack.c.l.b16 %v2463
      %v2984 = vunpack.c.l.b16 %v2464
      %v2985 = vunpack.c.l.b16 %v2465
      %v2986 = vunpack.c.l.b16 %v2466
      %v2987 = vunpack.c.l.b16 %v2467
      %v2988 = vunpack.c.l.b16 %v2468
      %v2989 = vunpack.c.l.b16 %v2469
      %v2990 = vunpack.c.l.b16 %v2470
      %v2991 = vunpack.c.l.b16 %v2471
      %v2992 = vunpack.c.l.b16 %v2472
      %v2993 = vunpack.c.l.b16 %v2473
      %v2994 = vunpack.c.l.b16 %v2474
      %v2995 = vunpack.c.l.b16 %v2475
      %v2996 = vunpack.c.l.b16 %v2476
      %v2997 = vunpack.c.l.b16 %v2477
      %v2998 = vunpack.c.l.b16 %v2478
      %v2999 = vunpack.c.l.b16 %v2479
      %v3000 = vunpack.c.l.b16 %v2480
      %v3001 = vunpack.c.l.b16 %v2481
      %v3002 = vunpack.c.l.b16 %v2482
      %v3003 = vunpack.c.l.b16 %v2483
      %v3004 = vunpack.c.l.b16 %v2484
      %v3005 = vunpack.c.l.b16 %v2485
      %v3006 = vunpack.c.l.b16 %v2486
      %v3007 = vunpack.c.l.b16 %v2487
      %v3008 = vunpack.c.l.b16 %v2488
      %v3009 = vunpack.c.l.b16 %v2489
      %v3010 = vunpack.c.l.b16 %v2490
      %v3011 = vpack.c.b16 %v2980, %v2979
      %v3012 = vpack.c.b16 %v2982, %v2981
      %v3013 = vpack.c.b16 %v2984, %v2983
      %v3014 = vpack.c.b16 %v2986, %v2985
      %v3015 = vpack.c.b16 %v2988, %v2987
      %v3016 = vpack.c.b16 %v2990, %v2989
      %v3017 = vpack.c.b16 %v2992, %v2991
      %v3018 = vpack.c.b16 %v2994, %v2993
      %v3019 = vpack.c.b16 %v2996, %v2995
      %v3020 = vpack.c.b16 %v2998, %v2997
      %v3021 = vpack.c.b16 %v3000, %v2999
      %v3022 = vpack.c.b16 %v3002, %v3001
      %v3023 = vpack.c.b16 %v3004, %v3003
      %v3024 = vpack.c.b16 %v3006, %v3005
      %v3025 = vpack.c.b16 %v3008, %v3007
      %v3026 = vpack.c.b16 %v3010, %v3009
      %v3028 = vsel %vm2705, %v3011, 0
      %v3031 = vsel %vm2705, %v3012, 0
      %v3034 = vsel %vm2705, %v3013, 0
      %v3037 = vsel %vm2705, %v3014, 0
      %v3040 = vsel %vm2705, %v3015, 0
      %v3043 = vsel %vm2705, %v3016, 0
      %v3046 = vsel %vm2705, %v3017, 0
      %v3049 = vsel %vm2705, %v3018, 0
      %v3052 = vsel %vm2705, %v3019, 0
      %v3055 = vsel %vm2705, %v3020, 0
      %v3058 = vsel %vm2705, %v3021, 0
      %v3061 = vsel %vm2705, %v3022, 0
      %v3064 = vsel %vm2705, %v3023, 0
      %v3067 = vsel %vm2705, %v3024, 0
      %v3070 = vsel %vm2705, %v3025, 0
      %v3073 = vsel %vm2705, %v3026, 0
      %3075 = vmatprep.subr.bf16.mxu0 0
      %3076 = vmatpush1.bf16.msra.mxu0 0
      %3077 = vmatprep.subr.bf16.mxu0 %v2458
      %3078 = vmatpush1.bf16.msra.mxu0 %v2457
      %3079 = vmatprep.subr.bf16.mxu0 %v2456
      %3080 = vmatpush1.bf16.msra.mxu0 %v2455
      %3081 = vmatprep.subr.bf16.mxu0 %v2454
      %3082 = vmatpush1.bf16.msra.mxu0 %v2453
      %3083 = vmatprep.subr.bf16.mxu0 %v2452
      %3084 = vmatpush1.bf16.msra.mxu0 %v2451
      %3085 = vmatprep.subr.bf16.mxu0 %v2450
      %3086 = vmatpush1.bf16.msra.mxu0 %v2449
      %3087 = vmatprep.subr.bf16.mxu0 %v2448
      %3088 = vmatpush1.bf16.msra.mxu0 %v2447
      %3089 = vmatprep.subr.bf16.mxu0 %v2446
      %3090 = vmatpush1.bf16.msra.mxu0 %v2445
      %3091 = vmatprep.subr.bf16.mxu0 0
      %3092 = vmatpush2.bf16.msra.mxu0 0
      %3093 = vmatprep.subr.bf16.mxu0 0
      %3094 = vmatpush2.bf16.msra.mxu0 0
      %3095 = vmatprep.subr.bf16.mxu0 0
      %3096 = vmatpush2.bf16.msra.mxu0 0
      %3097 = vmatprep.subr.bf16.mxu0 0
      %3098 = vmatpush2.bf16.msra.mxu0 0
      %3099 = vmatprep.subr.bf16.mxu0 0
      %3100 = vmatpush2.bf16.msra.mxu0 0
      %3101 = vmatprep.subr.bf16.mxu0 0
      %3102 = vmatpush2.bf16.msra.mxu0 0
      %3103 = vmatprep.subr.bf16.mxu0 0
      %3104 = vmatpush2.bf16.msra.mxu0 0
      %3105 = vmatprep.subr.bf16.mxu0 0
      %3106 = vmatpush2.bf16.msra.mxu0 0
      %3107 = vmatprep.mubr.bf16.mxu0 0
      %3108 = vmatmul.mubr.bf16.gmra.mxu0 %v3028
      %v3109 = vpop.f32.mrf.mxu0
      %v3110 = vadd.f32 %v2789, %v3109
      %v3111 = vpop.f32.mrf.mxu0
      %v3112 = vadd.f32 %v2791, %v3111
      %v3113 = vpop.f32.mrf.mxu0
      %v3114 = vadd.f32 %v2793, %v3113
      %v3115 = vpop.f32.mrf.mxu0
      %v3116 = vadd.f32 %v2795, %v3115
      %3117 = vmatprep.mubr.bf16.mxu0 0
      %3118 = vmatmul.mubr.bf16.gmra.mxu0 %v3031
      %v3119 = vpop.f32.mrf.mxu0
      %v3120 = vadd.f32 %v2799, %v3119
      %v3121 = vpop.f32.mrf.mxu0
      %v3122 = vadd.f32 %v2801, %v3121
      %v3123 = vpop.f32.mrf.mxu0
      %v3124 = vadd.f32 %v2803, %v3123
      %v3125 = vpop.f32.mrf.mxu0
      %v3126 = vadd.f32 %v2805, %v3125
      %3127 = vmatprep.mubr.bf16.mxu0 0
      %3128 = vmatmul.mubr.bf16.gmra.mxu0 %v3034
      %v3129 = vpop.f32.mrf.mxu0
      %v3130 = vadd.f32 %v2809, %v3129
      %v3131 = vpop.f32.mrf.mxu0
      %v3132 = vadd.f32 %v2811, %v3131
      %v3133 = vpop.f32.mrf.mxu0
      %v3134 = vadd.f32 %v2813, %v3133
      %v3135 = vpop.f32.mrf.mxu0
      %v3136 = vadd.f32 %v2815, %v3135
      %3137 = vmatprep.mubr.bf16.mxu0 0
      %3138 = vmatmul.mubr.bf16.gmra.mxu0 %v3037
      %v3139 = vpop.f32.mrf.mxu0
      %v3140 = vadd.f32 %v2819, %v3139
      %v3141 = vpop.f32.mrf.mxu0
      %v3142 = vadd.f32 %v2821, %v3141
      %v3143 = vpop.f32.mrf.mxu0
      %v3144 = vadd.f32 %v2823, %v3143
      %v3145 = vpop.f32.mrf.mxu0
      %v3146 = vadd.f32 %v2825, %v3145
      %3147 = vmatprep.mubr.bf16.mxu0 0
      %3148 = vmatmul.mubr.bf16.gmra.mxu0 %v3040
      %v3149 = vpop.f32.mrf.mxu0
      %v3150 = vadd.f32 %v2829, %v3149
      %v3151 = vpop.f32.mrf.mxu0
      %v3152 = vadd.f32 %v2831, %v3151
      %v3153 = vpop.f32.mrf.mxu0
      %v3154 = vadd.f32 %v2833, %v3153
      %v3155 = vpop.f32.mrf.mxu0
      %v3156 = vadd.f32 %v2835, %v3155
      %3157 = vmatprep.mubr.bf16.mxu0 0
      %3158 = vmatmul.mubr.bf16.gmra.mxu0 %v3043
      %v3159 = vpop.f32.mrf.mxu0
      %v3160 = vadd.f32 %v2839, %v3159
      %v3161 = vpop.f32.mrf.mxu0
      %v3162 = vadd.f32 %v2841, %v3161
      %v3163 = vpop.f32.mrf.mxu0
      %v3164 = vadd.f32 %v2843, %v3163
      %v3165 = vpop.f32.mrf.mxu0
      %v3166 = vadd.f32 %v2845, %v3165
      %3167 = vmatprep.mubr.bf16.mxu0 0
      %3168 = vmatmul.mubr.bf16.gmra.mxu0 %v3046
      %v3169 = vpop.f32.mrf.mxu0
      %v3170 = vadd.f32 %v2849, %v3169
      %v3171 = vpop.f32.mrf.mxu0
      %v3172 = vadd.f32 %v2851, %v3171
      %v3173 = vpop.f32.mrf.mxu0
      %v3174 = vadd.f32 %v2853, %v3173
      %v3175 = vpop.f32.mrf.mxu0
      %v3176 = vadd.f32 %v2855, %v3175
      %3177 = vmatprep.mubr.bf16.mxu0 0
      %3178 = vmatmul.mubr.bf16.gmra.mxu0 %v3049
      %v3179 = vpop.f32.mrf.mxu0
      %v3180 = vadd.f32 %v2859, %v3179
      %v3181 = vpop.f32.mrf.mxu0
      %v3182 = vadd.f32 %v2861, %v3181
      %v3183 = vpop.f32.mrf.mxu0
      %v3184 = vadd.f32 %v2863, %v3183
      %v3185 = vpop.f32.mrf.mxu0
      %v3186 = vadd.f32 %v2865, %v3185
      %3187 = vmatprep.mubr.bf16.mxu0 0
      %3188 = vmatmul.mubr.bf16.gmra.mxu0 %v3052
      %v3189 = vpop.f32.mrf.mxu0
      %v3190 = vadd.f32 %v2869, %v3189
      %v3191 = vpop.f32.mrf.mxu0
      %v3192 = vadd.f32 %v2871, %v3191
      %v3193 = vpop.f32.mrf.mxu0
      %v3194 = vadd.f32 %v2873, %v3193
      %v3195 = vpop.f32.mrf.mxu0
      %v3196 = vadd.f32 %v2875, %v3195
      %3197 = vmatprep.mubr.bf16.mxu0 0
      %3198 = vmatmul.mubr.bf16.gmra.mxu0 %v3055
      %v3199 = vpop.f32.mrf.mxu0
      %v3200 = vadd.f32 %v2879, %v3199
      %v3201 = vpop.f32.mrf.mxu0
      %v3202 = vadd.f32 %v2881, %v3201
      %v3203 = vpop.f32.mrf.mxu0
      %v3204 = vadd.f32 %v2883, %v3203
      %v3205 = vpop.f32.mrf.mxu0
      %v3206 = vadd.f32 %v2885, %v3205
      %3207 = vmatprep.mubr.bf16.mxu0 0
      %3208 = vmatmul.mubr.bf16.gmra.mxu0 %v3058
      %v3209 = vpop.f32.mrf.mxu0
      %v3210 = vadd.f32 %v2889, %v3209
      %v3211 = vpop.f32.mrf.mxu0
      %v3212 = vadd.f32 %v2891, %v3211
      %v3213 = vpop.f32.mrf.mxu0
      %v3214 = vadd.f32 %v2893, %v3213
      %v3215 = vpop.f32.mrf.mxu0
      %v3216 = vadd.f32 %v2895, %v3215
      %3217 = vmatprep.mubr.bf16.mxu0 0
      %3218 = vmatmul.mubr.bf16.gmra.mxu0 %v3061
      %v3219 = vpop.f32.mrf.mxu0
      %v3220 = vadd.f32 %v2899, %v3219
      %v3221 = vpop.f32.mrf.mxu0
      %v3222 = vadd.f32 %v2901, %v3221
      %v3223 = vpop.f32.mrf.mxu0
      %v3224 = vadd.f32 %v2903, %v3223
      %v3225 = vpop.f32.mrf.mxu0
      %v3226 = vadd.f32 %v2905, %v3225
      %3227 = vmatprep.mubr.bf16.mxu0 0
      %3228 = vmatmul.mubr.bf16.gmra.mxu0 %v3064
      %v3229 = vpop.f32.mrf.mxu0
      %v3230 = vadd.f32 %v2909, %v3229
      %v3231 = vpop.f32.mrf.mxu0
      %v3232 = vadd.f32 %v2911, %v3231
      %v3233 = vpop.f32.mrf.mxu0
      %v3234 = vadd.f32 %v2913, %v3233
      %v3235 = vpop.f32.mrf.mxu0
      %v3236 = vadd.f32 %v2915, %v3235
      %3237 = vmatprep.mubr.bf16.mxu0 0
      %3238 = vmatmul.mubr.bf16.gmra.mxu0 %v3067
      %v3239 = vpop.f32.mrf.mxu0
      %v3240 = vadd.f32 %v2919, %v3239
      %v3241 = vpop.f32.mrf.mxu0
      %v3242 = vadd.f32 %v2921, %v3241
      %v3243 = vpop.f32.mrf.mxu0
      %v3244 = vadd.f32 %v2923, %v3243
      %v3245 = vpop.f32.mrf.mxu0
      %v3246 = vadd.f32 %v2925, %v3245
      %3247 = vmatprep.mubr.bf16.mxu0 0
      %3248 = vmatmul.mubr.bf16.gmra.mxu0 %v3070
      %v3249 = vpop.f32.mrf.mxu0
      %v3250 = vadd.f32 %v2929, %v3249
      %v3251 = vpop.f32.mrf.mxu0
      %v3252 = vadd.f32 %v2931, %v3251
      %v3253 = vpop.f32.mrf.mxu0
      %v3254 = vadd.f32 %v2933, %v3253
      %v3255 = vpop.f32.mrf.mxu0
      %v3256 = vadd.f32 %v2935, %v3255
      %3257 = vmatprep.mubr.bf16.mxu0 0
      %3258 = vmatmul.mubr.bf16.gmra.mxu0 %v3073
      %v3259 = vpop.f32.mrf.mxu0
      %v3260 = vadd.f32 %v2939, %v3259
      %v3261 = vpop.f32.mrf.mxu0
      %v3262 = vadd.f32 %v2941, %v3261
      %v3263 = vpop.f32.mrf.mxu0
      %v3264 = vadd.f32 %v2943, %v3263
      %v3265 = vpop.f32.mrf.mxu0
      %v3266 = vadd.f32 %v2945, %v3265
      %3267 = vdwg.mxu0
      %v3268 = vrot.slane %v652, 7
      %v3269 = vrot.slane %v653, 7
      %v3272 = vmul.f32 %v652, %v3268
      %v3273 = vmul.f32 %v653, %v3269
      %v3274 = vpack.c.bf16 %v3272, %v3272
      %v3275 = vpack.c.bf16 %v3273, %v3273
      %3276 = vrot.lane.b32.xlu0 %v2327, 7
      %v3277 = vpop.permute.xlu0 %3276
      %3278 = vrot.lane.b32.xlu0 %v2328, 7
      %v3279 = vpop.permute.xlu0 %3278
      %3280 = vrot.lane.b32.xlu0 %v2329, 7
      %v3281 = vpop.permute.xlu0 %3280
      %3282 = vrot.lane.b32.xlu0 %v2330, 7
      %v3283 = vpop.permute.xlu0 %3282
      %3284 = vrot.lane.b32.xlu0 %v2331, 7
      %v3285 = vpop.permute.xlu0 %3284
      %3286 = vrot.lane.b32.xlu0 %v2332, 7
      %v3287 = vpop.permute.xlu0 %3286
      %3288 = vrot.lane.b32.xlu0 %v2333, 7
      %v3289 = vpop.permute.xlu0 %3288
      %3290 = vrot.lane.b32.xlu0 %v2334, 7
      %v3291 = vpop.permute.xlu0 %3290
      %3292 = vrot.lane.b32.xlu0 %v2335, 7
      %v3293 = vpop.permute.xlu0 %3292
      %3294 = vrot.lane.b32.xlu0 %v2336, 7
      %v3295 = vpop.permute.xlu0 %3294
      %3296 = vrot.lane.b32.xlu0 %v2337, 7
      %v3297 = vpop.permute.xlu0 %3296
      %3298 = vrot.lane.b32.xlu0 %v2338, 7
      %v3299 = vpop.permute.xlu0 %3298
      %3300 = vrot.lane.b32.xlu0 %v2339, 7
      %v3301 = vpop.permute.xlu0 %3300
      %3302 = vrot.lane.b32.xlu0 %v2340, 7
      %v3303 = vpop.permute.xlu0 %3302
      %vm3304 = vcmask 56320
      %v3305 = vsel %vm3304, %v3277, %v3279
      %v3306 = vsel %vm3304, %v3281, %v3283
      %v3307 = vsel %vm3304, %v3285, %v3287
      %v3308 = vsel %vm3304, %v3289, %v3291
      %v3309 = vsel %vm3304, %v3293, %v3295
      %v3310 = vsel %vm3304, %v3297, %v3299
      %v3311 = vsel %vm3304, %v3301, %v3303
      %vm3319 = vcmask 56320
      %v3321 = vsel %vm3319, 0, %v3277
      %v3324 = vsel %vm3319, 0, %v3281
      %v3327 = vsel %vm3319, 0, %v3285
      %v3330 = vsel %vm3319, 0, %v3289
      %v3333 = vsel %vm3319, 0, %v3293
      %v3336 = vsel %vm3319, 0, %v3297
      %v3339 = vsel %vm3319, 0, %v3301
      %v3342 = vpack.i.b16 %v3274, %v3274
      %v3344 = vlaneseq
      %v3345 = vshrl.u32 %v3344, 7
      %v3346 = vsub.s32 1, %v3345
      %v3347 = vrot.slane %v3342, %v3346
      %v3349 = vpack.i.b16 %v3275, %v3275
      %v3351 = vlaneseq
      %v3352 = vshrl.u32 %v3351, 7
      %v3353 = vsub.s32 1, %v3352
      %v3354 = vrot.slane %v3349, %v3353
      %v3355 = vmul.bf16 %v3321, %v3347
      %v3356 = vmul.bf16 %v3305, %v3354
      %v3357 = vmul.bf16 %v3324, %v3347
      %v3358 = vmul.bf16 %v3306, %v3354
      %v3359 = vmul.bf16 %v3327, %v3347
      %v3360 = vmul.bf16 %v3307, %v3354
      %v3361 = vmul.bf16 %v3330, %v3347
      %v3362 = vmul.bf16 %v3308, %v3354
      %v3363 = vmul.bf16 %v3333, %v3347
      %v3364 = vmul.bf16 %v3309, %v3354
      %v3365 = vmul.bf16 %v3336, %v3347
      %v3366 = vmul.bf16 %v3310, %v3354
      %v3367 = vmul.bf16 %v3339, %v3347
      %v3368 = vmul.bf16 %v3311, %v3354
      %s3369 = scalar_lea.vmem %s5, 256
      %v3370 = vld [vmem:[%s3369] sm:$0xf]
      %v3371 = vld [vmem:[%s3369 + $0x4] sm:$0xf]
      %v3372 = vld [vmem:[%s3369 + $0x8] sm:$0xf]
      %v3373 = vld [vmem:[%s3369 + $0xc] sm:$0xf]
      %v3374 = vld [vmem:[%s3369 + $0x10] sm:$0xf]
      %v3375 = vld [vmem:[%s3369 + $0x14] sm:$0xf]
      %v3376 = vld [vmem:[%s3369 + $0x18] sm:$0xf]
      %v3377 = vld [vmem:[%s3369 + $0x1c] sm:$0xf]
      %v3378 = vld [vmem:[%s3369 + $0x20] sm:$0xf]
      %v3379 = vld [vmem:[%s3369 + $0x24] sm:$0xf]
      %v3380 = vld [vmem:[%s3369 + $0x28] sm:$0xf]
      %v3381 = vld [vmem:[%s3369 + $0x2c] sm:$0xf]
      %v3382 = vld [vmem:[%s3369 + $0x30] sm:$0xf]
      %v3383 = vld [vmem:[%s3369 + $0x34] sm:$0xf]
      %v3384 = vld [vmem:[%s3369 + $0x38] sm:$0xf]
      %v3385 = vld [vmem:[%s3369 + $0x3c] sm:$0xf]
      %v3386 = vld [vmem:[%s3369 + $0x40] sm:$0xf]
      %v3387 = vld [vmem:[%s3369 + $0x44] sm:$0xf]
      %v3388 = vld [vmem:[%s3369 + $0x48] sm:$0xf]
      %v3389 = vld [vmem:[%s3369 + $0x4c] sm:$0xf]
      %v3390 = vld [vmem:[%s3369 + $0x50] sm:$0xf]
      %v3391 = vld [vmem:[%s3369 + $0x54] sm:$0xf]
      %v3392 = vld [vmem:[%s3369 + $0x58] sm:$0xf]
      %v3393 = vld [vmem:[%s3369 + $0x5c] sm:$0xf]
      %v3394 = vld [vmem:[%s3369 + $0x60] sm:$0xf]
      %v3395 = vld [vmem:[%s3369 + $0x64] sm:$0xf]
      %v3396 = vld [vmem:[%s3369 + $0x68] sm:$0xf]
      %v3397 = vld [vmem:[%s3369 + $0x6c] sm:$0xf]
      %v3398 = vld [vmem:[%s3369 + $0x70] sm:$0xf]
      %v3399 = vld [vmem:[%s3369 + $0x74] sm:$0xf]
      %v3400 = vld [vmem:[%s3369 + $0x78] sm:$0xf]
      %v3401 = vld [vmem:[%s3369 + $0x7c] sm:$0xf]
      %v3434 = vunpack.c.l.b16 %v3370
      %v3435 = vunpack.c.l.b16 %v3371
      %v3436 = vunpack.c.l.b16 %v3372
      %v3437 = vunpack.c.l.b16 %v3373
      %v3438 = vunpack.c.l.b16 %v3374
      %v3439 = vunpack.c.l.b16 %v3375
      %v3440 = vunpack.c.l.b16 %v3376
      %v3441 = vunpack.c.l.b16 %v3377
      %v3442 = vunpack.c.l.b16 %v3378
      %v3443 = vunpack.c.l.b16 %v3379
      %v3444 = vunpack.c.l.b16 %v3380
      %v3445 = vunpack.c.l.b16 %v3381
      %v3446 = vunpack.c.l.b16 %v3382
      %v3447 = vunpack.c.l.b16 %v3383
      %v3448 = vunpack.c.l.b16 %v3384
      %v3449 = vunpack.c.l.b16 %v3385
      %v3450 = vunpack.c.l.b16 %v3386
      %v3451 = vunpack.c.l.b16 %v3387
      %v3452 = vunpack.c.l.b16 %v3388
      %v3453 = vunpack.c.l.b16 %v3389
      %v3454 = vunpack.c.l.b16 %v3390
      %v3455 = vunpack.c.l.b16 %v3391
      %v3456 = vunpack.c.l.b16 %v3392
      %v3457 = vunpack.c.l.b16 %v3393
      %v3458 = vunpack.c.l.b16 %v3394
      %v3459 = vunpack.c.l.b16 %v3395
      %v3460 = vunpack.c.l.b16 %v3396
      %v3461 = vunpack.c.l.b16 %v3397
      %v3462 = vunpack.c.l.b16 %v3398
      %v3463 = vunpack.c.l.b16 %v3399
      %v3464 = vunpack.c.l.b16 %v3400
      %v3465 = vunpack.c.l.b16 %v3401
      %v3466 = vpack.c.b16 %v3435, %v3434
      %v3467 = vpack.c.b16 %v3437, %v3436
      %v3468 = vpack.c.b16 %v3439, %v3438
      %v3469 = vpack.c.b16 %v3441, %v3440
      %v3470 = vpack.c.b16 %v3443, %v3442
      %v3471 = vpack.c.b16 %v3445, %v3444
      %v3472 = vpack.c.b16 %v3447, %v3446
      %v3473 = vpack.c.b16 %v3449, %v3448
      %v3474 = vpack.c.b16 %v3451, %v3450
      %v3475 = vpack.c.b16 %v3453, %v3452
      %v3476 = vpack.c.b16 %v3455, %v3454
      %v3477 = vpack.c.b16 %v3457, %v3456
      %v3478 = vpack.c.b16 %v3459, %v3458
      %v3479 = vpack.c.b16 %v3461, %v3460
      %v3480 = vpack.c.b16 %v3463, %v3462
      %v3481 = vpack.c.b16 %v3465, %v3464
      %v3483 = vsel %vm2705, %v3466, 0
      %v3486 = vsel %vm2705, %v3467, 0
      %v3489 = vsel %vm2705, %v3468, 0
      %v3492 = vsel %vm2705, %v3469, 0
      %v3495 = vsel %vm2705, %v3470, 0
      %v3498 = vsel %vm2705, %v3471, 0
      %v3501 = vsel %vm2705, %v3472, 0
      %v3504 = vsel %vm2705, %v3473, 0
      %v3507 = vsel %vm2705, %v3474, 0
      %v3510 = vsel %vm2705, %v3475, 0
      %v3513 = vsel %vm2705, %v3476, 0
      %v3516 = vsel %vm2705, %v3477, 0
      %v3519 = vsel %vm2705, %v3478, 0
      %v3522 = vsel %vm2705, %v3479, 0
      %v3525 = vsel %vm2705, %v3480, 0
      %v3528 = vsel %vm2705, %v3481, 0
      %3530 = vmatprep.subr.bf16.mxu0 0
      %3531 = vmatpush1.bf16.msra.mxu0 0
      %3532 = vmatprep.subr.bf16.mxu0 %v3368
      %3533 = vmatpush1.bf16.msra.mxu0 %v3367
      %3534 = vmatprep.subr.bf16.mxu0 %v3366
      %3535 = vmatpush1.bf16.msra.mxu0 %v3365
      %3536 = vmatprep.subr.bf16.mxu0 %v3364
      %3537 = vmatpush1.bf16.msra.mxu0 %v3363
      %3538 = vmatprep.subr.bf16.mxu0 %v3362
      %3539 = vmatpush1.bf16.msra.mxu0 %v3361
      %3540 = vmatprep.subr.bf16.mxu0 %v3360
      %3541 = vmatpush1.bf16.msra.mxu0 %v3359
      %3542 = vmatprep.subr.bf16.mxu0 %v3358
      %3543 = vmatpush1.bf16.msra.mxu0 %v3357
      %3544 = vmatprep.subr.bf16.mxu0 %v3356
      %3545 = vmatpush1.bf16.msra.mxu0 %v3355
      %3546 = vmatprep.subr.bf16.mxu0 0
      %3547 = vmatpush2.bf16.msra.mxu0 0
      %3548 = vmatprep.subr.bf16.mxu0 0
      %3549 = vmatpush2.bf16.msra.mxu0 0
      %3550 = vmatprep.subr.bf16.mxu0 0
      %3551 = vmatpush2.bf16.msra.mxu0 0
      %3552 = vmatprep.subr.bf16.mxu0 0
      %3553 = vmatpush2.bf16.msra.mxu0 0
      %3554 = vmatprep.subr.bf16.mxu0 0
      %3555 = vmatpush2.bf16.msra.mxu0 0
      %3556 = vmatprep.subr.bf16.mxu0 0
      %3557 = vmatpush2.bf16.msra.mxu0 0
      %3558 = vmatprep.subr.bf16.mxu0 0
      %3559 = vmatpush2.bf16.msra.mxu0 0
      %3560 = vmatprep.subr.bf16.mxu0 0
      %3561 = vmatpush2.bf16.msra.mxu0 0
      %3562 = vmatprep.mubr.bf16.mxu0 0
      %3563 = vmatmul.mubr.bf16.gmra.mxu0 %v3483
      %v3564 = vpop.f32.mrf.mxu0
      %v3565 = vadd.f32 0.0, %v3564
      %v3566 = vpop.f32.mrf.mxu0
      %v3567 = vadd.f32 0.0, %v3566
      %v3568 = vpop.f32.mrf.mxu0
      %v3569 = vadd.f32 0.0, %v3568
      %v3570 = vpop.f32.mrf.mxu0
      %v3571 = vadd.f32 0.0, %v3570
      %3572 = vmatprep.mubr.bf16.mxu0 0
      %3573 = vmatmul.mubr.bf16.gmra.mxu0 %v3486
      %v3574 = vpop.f32.mrf.mxu0
      %v3575 = vadd.f32 0.0, %v3574
      %v3576 = vpop.f32.mrf.mxu0
      %v3577 = vadd.f32 0.0, %v3576
      %v3578 = vpop.f32.mrf.mxu0
      %v3579 = vadd.f32 0.0, %v3578
      %v3580 = vpop.f32.mrf.mxu0
      %v3581 = vadd.f32 0.0, %v3580
      %3582 = vmatprep.mubr.bf16.mxu0 0
      %3583 = vmatmul.mubr.bf16.gmra.mxu0 %v3489
      %v3584 = vpop.f32.mrf.mxu0
      %v3585 = vadd.f32 0.0, %v3584
      %v3586 = vpop.f32.mrf.mxu0
      %v3587 = vadd.f32 0.0, %v3586
      %v3588 = vpop.f32.mrf.mxu0
      %v3589 = vadd.f32 0.0, %v3588
      %v3590 = vpop.f32.mrf.mxu0
      %v3591 = vadd.f32 0.0, %v3590
      %3592 = vmatprep.mubr.bf16.mxu0 0
      %3593 = vmatmul.mubr.bf16.gmra.mxu0 %v3492
      %v3594 = vpop.f32.mrf.mxu0
      %v3595 = vadd.f32 0.0, %v3594
      %v3596 = vpop.f32.mrf.mxu0
      %v3597 = vadd.f32 0.0, %v3596
      %v3598 = vpop.f32.mrf.mxu0
      %v3599 = vadd.f32 0.0, %v3598
      %v3600 = vpop.f32.mrf.mxu0
      %v3601 = vadd.f32 0.0, %v3600
      %3602 = vmatprep.mubr.bf16.mxu0 0
      %3603 = vmatmul.mubr.bf16.gmra.mxu0 %v3495
      %v3604 = vpop.f32.mrf.mxu0
      %v3605 = vadd.f32 0.0, %v3604
      %v3606 = vpop.f32.mrf.mxu0
      %v3607 = vadd.f32 0.0, %v3606
      %v3608 = vpop.f32.mrf.mxu0
      %v3609 = vadd.f32 0.0, %v3608
      %v3610 = vpop.f32.mrf.mxu0
      %v3611 = vadd.f32 0.0, %v3610
      %3612 = vmatprep.mubr.bf16.mxu0 0
      %3613 = vmatmul.mubr.bf16.gmra.mxu0 %v3498
      %v3614 = vpop.f32.mrf.mxu0
      %v3615 = vadd.f32 0.0, %v3614
      %v3616 = vpop.f32.mrf.mxu0
      %v3617 = vadd.f32 0.0, %v3616
      %v3618 = vpop.f32.mrf.mxu0
      %v3619 = vadd.f32 0.0, %v3618
      %v3620 = vpop.f32.mrf.mxu0
      %v3621 = vadd.f32 0.0, %v3620
      %3622 = vmatprep.mubr.bf16.mxu0 0
      %3623 = vmatmul.mubr.bf16.gmra.mxu0 %v3501
      %v3624 = vpop.f32.mrf.mxu0
      %v3625 = vadd.f32 0.0, %v3624
      %v3626 = vpop.f32.mrf.mxu0
      %v3627 = vadd.f32 0.0, %v3626
      %v3628 = vpop.f32.mrf.mxu0
      %v3629 = vadd.f32 0.0, %v3628
      %v3630 = vpop.f32.mrf.mxu0
      %v3631 = vadd.f32 0.0, %v3630
      %3632 = vmatprep.mubr.bf16.mxu0 0
      %3633 = vmatmul.mubr.bf16.gmra.mxu0 %v3504
      %v3634 = vpop.f32.mrf.mxu0
      %v3635 = vadd.f32 0.0, %v3634
      %v3636 = vpop.f32.mrf.mxu0
      %v3637 = vadd.f32 0.0, %v3636
      %v3638 = vpop.f32.mrf.mxu0
      %v3639 = vadd.f32 0.0, %v3638
      %v3640 = vpop.f32.mrf.mxu0
      %v3641 = vadd.f32 0.0, %v3640
      %3642 = vmatprep.mubr.bf16.mxu0 0
      %3643 = vmatmul.mubr.bf16.gmra.mxu0 %v3507
      %v3644 = vpop.f32.mrf.mxu0
      %v3645 = vadd.f32 0.0, %v3644
      %v3646 = vpop.f32.mrf.mxu0
      %v3647 = vadd.f32 0.0, %v3646
      %v3648 = vpop.f32.mrf.mxu0
      %v3649 = vadd.f32 0.0, %v3648
      %v3650 = vpop.f32.mrf.mxu0
      %v3651 = vadd.f32 0.0, %v3650
      %3652 = vmatprep.mubr.bf16.mxu0 0
      %3653 = vmatmul.mubr.bf16.gmra.mxu0 %v3510
      %v3654 = vpop.f32.mrf.mxu0
      %v3655 = vadd.f32 0.0, %v3654
      %v3656 = vpop.f32.mrf.mxu0
      %v3657 = vadd.f32 0.0, %v3656
      %v3658 = vpop.f32.mrf.mxu0
      %v3659 = vadd.f32 0.0, %v3658
      %v3660 = vpop.f32.mrf.mxu0
      %v3661 = vadd.f32 0.0, %v3660
      %3662 = vmatprep.mubr.bf16.mxu0 0
      %3663 = vmatmul.mubr.bf16.gmra.mxu0 %v3513
      %v3664 = vpop.f32.mrf.mxu0
      %v3665 = vadd.f32 0.0, %v3664
      %v3666 = vpop.f32.mrf.mxu0
      %v3667 = vadd.f32 0.0, %v3666
      %v3668 = vpop.f32.mrf.mxu0
      %v3669 = vadd.f32 0.0, %v3668
      %v3670 = vpop.f32.mrf.mxu0
      %v3671 = vadd.f32 0.0, %v3670
      %3672 = vmatprep.mubr.bf16.mxu0 0
      %3673 = vmatmul.mubr.bf16.gmra.mxu0 %v3516
      %v3674 = vpop.f32.mrf.mxu0
      %v3675 = vadd.f32 0.0, %v3674
      %v3676 = vpop.f32.mrf.mxu0
      %v3677 = vadd.f32 0.0, %v3676
      %v3678 = vpop.f32.mrf.mxu0
      %v3679 = vadd.f32 0.0, %v3678
      %v3680 = vpop.f32.mrf.mxu0
      %v3681 = vadd.f32 0.0, %v3680
      %3682 = vmatprep.mubr.bf16.mxu0 0
      %3683 = vmatmul.mubr.bf16.gmra.mxu0 %v3519
      %v3684 = vpop.f32.mrf.mxu0
      %v3685 = vadd.f32 0.0, %v3684
      %v3686 = vpop.f32.mrf.mxu0
      %v3687 = vadd.f32 0.0, %v3686
      %v3688 = vpop.f32.mrf.mxu0
      %v3689 = vadd.f32 0.0, %v3688
      %v3690 = vpop.f32.mrf.mxu0
      %v3691 = vadd.f32 0.0, %v3690
      %3692 = vmatprep.mubr.bf16.mxu0 0
      %3693 = vmatmul.mubr.bf16.gmra.mxu0 %v3522
      %v3694 = vpop.f32.mrf.mxu0
      %v3695 = vadd.f32 0.0, %v3694
      %v3696 = vpop.f32.mrf.mxu0
      %v3697 = vadd.f32 0.0, %v3696
      %v3698 = vpop.f32.mrf.mxu0
      %v3699 = vadd.f32 0.0, %v3698
      %v3700 = vpop.f32.mrf.mxu0
      %v3701 = vadd.f32 0.0, %v3700
      %3702 = vmatprep.mubr.bf16.mxu0 0
      %3703 = vmatmul.mubr.bf16.gmra.mxu0 %v3525
      %v3704 = vpop.f32.mrf.mxu0
      %v3705 = vadd.f32 0.0, %v3704
      %v3706 = vpop.f32.mrf.mxu0
      %v3707 = vadd.f32 0.0, %v3706
      %v3708 = vpop.f32.mrf.mxu0
      %v3709 = vadd.f32 0.0, %v3708
      %v3710 = vpop.f32.mrf.mxu0
      %v3711 = vadd.f32 0.0, %v3710
      %3712 = vmatprep.mubr.bf16.mxu0 0
      %3713 = vmatmul.mubr.bf16.gmra.mxu0 %v3528
      %v3714 = vpop.f32.mrf.mxu0
      %v3715 = vadd.f32 0.0, %v3714
      %v3716 = vpop.f32.mrf.mxu0
      %v3717 = vadd.f32 0.0, %v3716
      %v3718 = vpop.f32.mrf.mxu0
      %v3719 = vadd.f32 0.0, %v3718
      %v3720 = vpop.f32.mrf.mxu0
      %v3721 = vadd.f32 0.0, %v3720
      %3722 = vdwg.mxu0
      %v3723 = vadd.f32 %v3110, %v3565
      %v3724 = vadd.f32 %v3112, %v3567
      %v3725 = vadd.f32 %v3114, %v3569
      %v3726 = vadd.f32 %v3116, %v3571
      %v3727 = vadd.f32 %v3120, %v3575
      %v3728 = vadd.f32 %v3122, %v3577
      %v3729 = vadd.f32 %v3124, %v3579
      %v3730 = vadd.f32 %v3126, %v3581
      %v3731 = vadd.f32 %v3130, %v3585
      %v3732 = vadd.f32 %v3132, %v3587
      %v3733 = vadd.f32 %v3134, %v3589
      %v3734 = vadd.f32 %v3136, %v3591
      %v3735 = vadd.f32 %v3140, %v3595
      %v3736 = vadd.f32 %v3142, %v3597
      %v3737 = vadd.f32 %v3144, %v3599
      %v3738 = vadd.f32 %v3146, %v3601
      %v3739 = vadd.f32 %v3150, %v3605
      %v3740 = vadd.f32 %v3152, %v3607
      %v3741 = vadd.f32 %v3154, %v3609
      %v3742 = vadd.f32 %v3156, %v3611
      %v3743 = vadd.f32 %v3160, %v3615
      %v3744 = vadd.f32 %v3162, %v3617
      %v3745 = vadd.f32 %v3164, %v3619
      %v3746 = vadd.f32 %v3166, %v3621
      %v3747 = vadd.f32 %v3170, %v3625
      %v3748 = vadd.f32 %v3172, %v3627
      %v3749 = vadd.f32 %v3174, %v3629
      %v3750 = vadd.f32 %v3176, %v3631
      %v3751 = vadd.f32 %v3180, %v3635
      %v3752 = vadd.f32 %v3182, %v3637
      %v3753 = vadd.f32 %v3184, %v3639
      %v3754 = vadd.f32 %v3186, %v3641
      %v3755 = vadd.f32 %v3190, %v3645
      %v3756 = vadd.f32 %v3192, %v3647
      %v3757 = vadd.f32 %v3194, %v3649
      %v3758 = vadd.f32 %v3196, %v3651
      %v3759 = vadd.f32 %v3200, %v3655
      %v3760 = vadd.f32 %v3202, %v3657
      %v3761 = vadd.f32 %v3204, %v3659
      %v3762 = vadd.f32 %v3206, %v3661
      %v3763 = vadd.f32 %v3210, %v3665
      %v3764 = vadd.f32 %v3212, %v3667
      %v3765 = vadd.f32 %v3214, %v3669
      %v3766 = vadd.f32 %v3216, %v3671
      %v3767 = vadd.f32 %v3220, %v3675
      %v3768 = vadd.f32 %v3222, %v3677
      %v3769 = vadd.f32 %v3224, %v3679
      %v3770 = vadd.f32 %v3226, %v3681
      %v3771 = vadd.f32 %v3230, %v3685
      %v3772 = vadd.f32 %v3232, %v3687
      %v3773 = vadd.f32 %v3234, %v3689
      %v3774 = vadd.f32 %v3236, %v3691
      %v3775 = vadd.f32 %v3240, %v3695
      %v3776 = vadd.f32 %v3242, %v3697
      %v3777 = vadd.f32 %v3244, %v3699
      %v3778 = vadd.f32 %v3246, %v3701
      %v3779 = vadd.f32 %v3250, %v3705
      %v3780 = vadd.f32 %v3252, %v3707
      %v3781 = vadd.f32 %v3254, %v3709
      %v3782 = vadd.f32 %v3256, %v3711
      %v3783 = vadd.f32 %v3260, %v3715
      %v3784 = vadd.f32 %v3262, %v3717
      %v3785 = vadd.f32 %v3264, %v3719
      %v3786 = vadd.f32 %v3266, %v3721
      %v3787 = vrot.slane %v652, 2
      %v3788 = vrot.slane %v653, 2
      %v3791 = vmul.f32 %v652, %v3787
      %v3792 = vmul.f32 %v653, %v3788
      %v3793 = vpack.c.bf16 %v3791, %v3791
      %v3794 = vpack.c.bf16 %v3792, %v3792
      %3795 = vrot.lane.b32.xlu0 %v2327, 1
      %v3796 = vpop.permute.xlu0 %3795
      %3797 = vrot.lane.b32.xlu0 %v2328, 1
      %v3798 = vpop.permute.xlu0 %3797
      %3799 = vrot.lane.b32.xlu0 %v2329, 1
      %v3800 = vpop.permute.xlu0 %3799
      %3801 = vrot.lane.b32.xlu0 %v2330, 1
      %v3802 = vpop.permute.xlu0 %3801
      %3803 = vrot.lane.b32.xlu0 %v2331, 1
      %v3804 = vpop.permute.xlu0 %3803
      %3805 = vrot.lane.b32.xlu0 %v2332, 1
      %v3806 = vpop.permute.xlu0 %3805
      %3807 = vrot.lane.b32.xlu0 %v2333, 1
      %v3808 = vpop.permute.xlu0 %3807
      %3809 = vrot.lane.b32.xlu0 %v2334, 1
      %v3810 = vpop.permute.xlu0 %3809
      %3811 = vrot.lane.b32.xlu0 %v2335, 1
      %v3812 = vpop.permute.xlu0 %3811
      %3813 = vrot.lane.b32.xlu0 %v2336, 1
      %v3814 = vpop.permute.xlu0 %3813
      %3815 = vrot.lane.b32.xlu0 %v2337, 1
      %v3816 = vpop.permute.xlu0 %3815
      %3817 = vrot.lane.b32.xlu0 %v2338, 1
      %v3818 = vpop.permute.xlu0 %3817
      %3819 = vrot.lane.b32.xlu0 %v2339, 1
      %v3820 = vpop.permute.xlu0 %3819
      %3821 = vrot.lane.b32.xlu0 %v2340, 1
      %v3822 = vpop.permute.xlu0 %3821
      %vm3823 = vcmask 7168
      %v3824 = vsel %vm3823, %v3796, %v3798
      %v3825 = vsel %vm3823, %v3800, %v3802
      %v3826 = vsel %vm3823, %v3804, %v3806
      %v3827 = vsel %vm3823, %v3808, %v3810
      %v3828 = vsel %vm3823, %v3812, %v3814
      %v3829 = vsel %vm3823, %v3816, %v3818
      %v3830 = vsel %vm3823, %v3820, %v3822
      %vm3838 = vcmask 7168
      %v3840 = vsel %vm3838, 0, %v3796
      %v3843 = vsel %vm3838, 0, %v3800
      %v3846 = vsel %vm3838, 0, %v3804
      %v3849 = vsel %vm3838, 0, %v3808
      %v3852 = vsel %vm3838, 0, %v3812
      %v3855 = vsel %vm3838, 0, %v3816
      %v3858 = vsel %vm3838, 0, %v3820
      %v3861 = vpack.i.b16 %v3793, %v3793
      %v3863 = vlaneseq
      %v3864 = vshrl.u32 %v3863, 7
      %v3865 = vsub.s32 3, %v3864
      %v3866 = vrot.slane %v3861, %v3865
      %v3868 = vpack.i.b16 %v3794, %v3794
      %v3870 = vlaneseq
      %v3871 = vshrl.u32 %v3870, 7
      %v3872 = vsub.s32 3, %v3871
      %v3873 = vrot.slane %v3868, %v3872
      %v3874 = vmul.bf16 %v3840, %v3866
      %v3875 = vmul.bf16 %v3824, %v3873
      %v3876 = vmul.bf16 %v3843, %v3866
      %v3877 = vmul.bf16 %v3825, %v3873
      %v3878 = vmul.bf16 %v3846, %v3866
      %v3879 = vmul.bf16 %v3826, %v3873
      %v3880 = vmul.bf16 %v3849, %v3866
      %v3881 = vmul.bf16 %v3827, %v3873
      %v3882 = vmul.bf16 %v3852, %v3866
      %v3883 = vmul.bf16 %v3828, %v3873
      %v3884 = vmul.bf16 %v3855, %v3866
      %v3885 = vmul.bf16 %v3829, %v3873
      %v3886 = vmul.bf16 %v3858, %v3866
      %v3887 = vmul.bf16 %v3830, %v3873
      %s3888 = scalar_lea.vmem %s5, 384
      %v3889 = vld [vmem:[%s3888] sm:$0xf]
      %v3890 = vld [vmem:[%s3888 + $0x4] sm:$0xf]
      %v3891 = vld [vmem:[%s3888 + $0x8] sm:$0xf]
      %v3892 = vld [vmem:[%s3888 + $0xc] sm:$0xf]
      %v3893 = vld [vmem:[%s3888 + $0x10] sm:$0xf]
      %v3894 = vld [vmem:[%s3888 + $0x14] sm:$0xf]
      %v3895 = vld [vmem:[%s3888 + $0x18] sm:$0xf]
      %v3896 = vld [vmem:[%s3888 + $0x1c] sm:$0xf]
      %v3897 = vld [vmem:[%s3888 + $0x20] sm:$0xf]
      %v3898 = vld [vmem:[%s3888 + $0x24] sm:$0xf]
      %v3899 = vld [vmem:[%s3888 + $0x28] sm:$0xf]
      %v3900 = vld [vmem:[%s3888 + $0x2c] sm:$0xf]
      %v3901 = vld [vmem:[%s3888 + $0x30] sm:$0xf]
      %v3902 = vld [vmem:[%s3888 + $0x34] sm:$0xf]
      %v3903 = vld [vmem:[%s3888 + $0x38] sm:$0xf]
      %v3904 = vld [vmem:[%s3888 + $0x3c] sm:$0xf]
      %v3905 = vld [vmem:[%s3888 + $0x40] sm:$0xf]
      %v3906 = vld [vmem:[%s3888 + $0x44] sm:$0xf]
      %v3907 = vld [vmem:[%s3888 + $0x48] sm:$0xf]
      %v3908 = vld [vmem:[%s3888 + $0x4c] sm:$0xf]
      %v3909 = vld [vmem:[%s3888 + $0x50] sm:$0xf]
      %v3910 = vld [vmem:[%s3888 + $0x54] sm:$0xf]
      %v3911 = vld [vmem:[%s3888 + $0x58] sm:$0xf]
      %v3912 = vld [vmem:[%s3888 + $0x5c] sm:$0xf]
      %v3913 = vld [vmem:[%s3888 + $0x60] sm:$0xf]
      %v3914 = vld [vmem:[%s3888 + $0x64] sm:$0xf]
      %v3915 = vld [vmem:[%s3888 + $0x68] sm:$0xf]
      %v3916 = vld [vmem:[%s3888 + $0x6c] sm:$0xf]
      %v3917 = vld [vmem:[%s3888 + $0x70] sm:$0xf]
      %v3918 = vld [vmem:[%s3888 + $0x74] sm:$0xf]
      %v3919 = vld [vmem:[%s3888 + $0x78] sm:$0xf]
      %v3920 = vld [vmem:[%s3888 + $0x7c] sm:$0xf]
      %v3953 = vunpack.c.l.b16 %v3889
      %v3954 = vunpack.c.l.b16 %v3890
      %v3955 = vunpack.c.l.b16 %v3891
      %v3956 = vunpack.c.l.b16 %v3892
      %v3957 = vunpack.c.l.b16 %v3893
      %v3958 = vunpack.c.l.b16 %v3894
      %v3959 = vunpack.c.l.b16 %v3895
      %v3960 = vunpack.c.l.b16 %v3896
      %v3961 = vunpack.c.l.b16 %v3897
      %v3962 = vunpack.c.l.b16 %v3898
      %v3963 = vunpack.c.l.b16 %v3899
      %v3964 = vunpack.c.l.b16 %v3900
      %v3965 = vunpack.c.l.b16 %v3901
      %v3966 = vunpack.c.l.b16 %v3902
      %v3967 = vunpack.c.l.b16 %v3903
      %v3968 = vunpack.c.l.b16 %v3904
      %v3969 = vunpack.c.l.b16 %v3905
      %v3970 = vunpack.c.l.b16 %v3906
      %v3971 = vunpack.c.l.b16 %v3907
      %v3972 = vunpack.c.l.b16 %v3908
      %v3973 = vunpack.c.l.b16 %v3909
      %v3974 = vunpack.c.l.b16 %v3910
      %v3975 = vunpack.c.l.b16 %v3911
      %v3976 = vunpack.c.l.b16 %v3912
      %v3977 = vunpack.c.l.b16 %v3913
      %v3978 = vunpack.c.l.b16 %v3914
      %v3979 = vunpack.c.l.b16 %v3915
      %v3980 = vunpack.c.l.b16 %v3916
      %v3981 = vunpack.c.l.b16 %v3917
      %v3982 = vunpack.c.l.b16 %v3918
      %v3983 = vunpack.c.l.b16 %v3919
      %v3984 = vunpack.c.l.b16 %v3920
      %v3985 = vpack.c.b16 %v3954, %v3953
      %v3986 = vpack.c.b16 %v3956, %v3955
      %v3987 = vpack.c.b16 %v3958, %v3957
      %v3988 = vpack.c.b16 %v3960, %v3959
      %v3989 = vpack.c.b16 %v3962, %v3961
      %v3990 = vpack.c.b16 %v3964, %v3963
      %v3991 = vpack.c.b16 %v3966, %v3965
      %v3992 = vpack.c.b16 %v3968, %v3967
      %v3993 = vpack.c.b16 %v3970, %v3969
      %v3994 = vpack.c.b16 %v3972, %v3971
      %v3995 = vpack.c.b16 %v3974, %v3973
      %v3996 = vpack.c.b16 %v3976, %v3975
      %v3997 = vpack.c.b16 %v3978, %v3977
      %v3998 = vpack.c.b16 %v3980, %v3979
      %v3999 = vpack.c.b16 %v3982, %v3981
      %v4000 = vpack.c.b16 %v3984, %v3983
      %v4002 = vsel %vm2705, %v3985, 0
      %v4005 = vsel %vm2705, %v3986, 0
      %v4008 = vsel %vm2705, %v3987, 0
      %v4011 = vsel %vm2705, %v3988, 0
      %v4014 = vsel %vm2705, %v3989, 0
      %v4017 = vsel %vm2705, %v3990, 0
      %v4020 = vsel %vm2705, %v3991, 0
      %v4023 = vsel %vm2705, %v3992, 0
      %v4026 = vsel %vm2705, %v3993, 0
      %v4029 = vsel %vm2705, %v3994, 0
      %v4032 = vsel %vm2705, %v3995, 0
      %v4035 = vsel %vm2705, %v3996, 0
      %v4038 = vsel %vm2705, %v3997, 0
      %v4041 = vsel %vm2705, %v3998, 0
      %v4044 = vsel %vm2705, %v3999, 0
      %v4047 = vsel %vm2705, %v4000, 0
      %4049 = vmatprep.subr.bf16.mxu0 0
      %4050 = vmatpush1.bf16.msra.mxu0 0
      %4051 = vmatprep.subr.bf16.mxu0 %v3887
      %4052 = vmatpush1.bf16.msra.mxu0 %v3886
      %4053 = vmatprep.subr.bf16.mxu0 %v3885
      %4054 = vmatpush1.bf16.msra.mxu0 %v3884
      %4055 = vmatprep.subr.bf16.mxu0 %v3883
      %4056 = vmatpush1.bf16.msra.mxu0 %v3882
      %4057 = vmatprep.subr.bf16.mxu0 %v3881
      %4058 = vmatpush1.bf16.msra.mxu0 %v3880
      %4059 = vmatprep.subr.bf16.mxu0 %v3879
      %4060 = vmatpush1.bf16.msra.mxu0 %v3878
      %4061 = vmatprep.subr.bf16.mxu0 %v3877
      %4062 = vmatpush1.bf16.msra.mxu0 %v3876
      %4063 = vmatprep.subr.bf16.mxu0 %v3875
      %4064 = vmatpush1.bf16.msra.mxu0 %v3874
      %4065 = vmatprep.subr.bf16.mxu0 0
      %4066 = vmatpush2.bf16.msra.mxu0 0
      %4067 = vmatprep.subr.bf16.mxu0 0
      %4068 = vmatpush2.bf16.msra.mxu0 0
      %4069 = vmatprep.subr.bf16.mxu0 0
      %4070 = vmatpush2.bf16.msra.mxu0 0
      %4071 = vmatprep.subr.bf16.mxu0 0
      %4072 = vmatpush2.bf16.msra.mxu0 0
      %4073 = vmatprep.subr.bf16.mxu0 0
      %4074 = vmatpush2.bf16.msra.mxu0 0
      %4075 = vmatprep.subr.bf16.mxu0 0
      %4076 = vmatpush2.bf16.msra.mxu0 0
      %4077 = vmatprep.subr.bf16.mxu0 0
      %4078 = vmatpush2.bf16.msra.mxu0 0
      %4079 = vmatprep.subr.bf16.mxu0 0
      %4080 = vmatpush2.bf16.msra.mxu0 0
      %4081 = vmatprep.mubr.bf16.mxu0 0
      %4082 = vmatmul.mubr.bf16.gmra.mxu0 %v4002
      %v4083 = vpop.f32.mrf.mxu0
      %v4084 = vadd.f32 0.0, %v4083
      %v4085 = vpop.f32.mrf.mxu0
      %v4086 = vadd.f32 0.0, %v4085
      %v4087 = vpop.f32.mrf.mxu0
      %v4088 = vadd.f32 0.0, %v4087
      %v4089 = vpop.f32.mrf.mxu0
      %v4090 = vadd.f32 0.0, %v4089
      %4091 = vmatprep.mubr.bf16.mxu0 0
      %4092 = vmatmul.mubr.bf16.gmra.mxu0 %v4005
      %v4093 = vpop.f32.mrf.mxu0
      %v4094 = vadd.f32 0.0, %v4093
      %v4095 = vpop.f32.mrf.mxu0
      %v4096 = vadd.f32 0.0, %v4095
      %v4097 = vpop.f32.mrf.mxu0
      %v4098 = vadd.f32 0.0, %v4097
      %v4099 = vpop.f32.mrf.mxu0
      %v4100 = vadd.f32 0.0, %v4099
      %4101 = vmatprep.mubr.bf16.mxu0 0
      %4102 = vmatmul.mubr.bf16.gmra.mxu0 %v4008
      %v4103 = vpop.f32.mrf.mxu0
      %v4104 = vadd.f32 0.0, %v4103
      %v4105 = vpop.f32.mrf.mxu0
      %v4106 = vadd.f32 0.0, %v4105
      %v4107 = vpop.f32.mrf.mxu0
      %v4108 = vadd.f32 0.0, %v4107
      %v4109 = vpop.f32.mrf.mxu0
      %v4110 = vadd.f32 0.0, %v4109
      %4111 = vmatprep.mubr.bf16.mxu0 0
      %4112 = vmatmul.mubr.bf16.gmra.mxu0 %v4011
      %v4113 = vpop.f32.mrf.mxu0
      %v4114 = vadd.f32 0.0, %v4113
      %v4115 = vpop.f32.mrf.mxu0
      %v4116 = vadd.f32 0.0, %v4115
      %v4117 = vpop.f32.mrf.mxu0
      %v4118 = vadd.f32 0.0, %v4117
      %v4119 = vpop.f32.mrf.mxu0
      %v4120 = vadd.f32 0.0, %v4119
      %4121 = vmatprep.mubr.bf16.mxu0 0
      %4122 = vmatmul.mubr.bf16.gmra.mxu0 %v4014
      %v4123 = vpop.f32.mrf.mxu0
      %v4124 = vadd.f32 0.0, %v4123
      %v4125 = vpop.f32.mrf.mxu0
      %v4126 = vadd.f32 0.0, %v4125
      %v4127 = vpop.f32.mrf.mxu0
      %v4128 = vadd.f32 0.0, %v4127
      %v4129 = vpop.f32.mrf.mxu0
      %v4130 = vadd.f32 0.0, %v4129
      %4131 = vmatprep.mubr.bf16.mxu0 0
      %4132 = vmatmul.mubr.bf16.gmra.mxu0 %v4017
      %v4133 = vpop.f32.mrf.mxu0
      %v4134 = vadd.f32 0.0, %v4133
      %v4135 = vpop.f32.mrf.mxu0
      %v4136 = vadd.f32 0.0, %v4135
      %v4137 = vpop.f32.mrf.mxu0
      %v4138 = vadd.f32 0.0, %v4137
      %v4139 = vpop.f32.mrf.mxu0
      %v4140 = vadd.f32 0.0, %v4139
      %4141 = vmatprep.mubr.bf16.mxu0 0
      %4142 = vmatmul.mubr.bf16.gmra.mxu0 %v4020
      %v4143 = vpop.f32.mrf.mxu0
      %v4144 = vadd.f32 0.0, %v4143
      %v4145 = vpop.f32.mrf.mxu0
      %v4146 = vadd.f32 0.0, %v4145
      %v4147 = vpop.f32.mrf.mxu0
      %v4148 = vadd.f32 0.0, %v4147
      %v4149 = vpop.f32.mrf.mxu0
      %v4150 = vadd.f32 0.0, %v4149
      %4151 = vmatprep.mubr.bf16.mxu0 0
      %4152 = vmatmul.mubr.bf16.gmra.mxu0 %v4023
      %v4153 = vpop.f32.mrf.mxu0
      %v4154 = vadd.f32 0.0, %v4153
      %v4155 = vpop.f32.mrf.mxu0
      %v4156 = vadd.f32 0.0, %v4155
      %v4157 = vpop.f32.mrf.mxu0
      %v4158 = vadd.f32 0.0, %v4157
      %v4159 = vpop.f32.mrf.mxu0
      %v4160 = vadd.f32 0.0, %v4159
      %4161 = vmatprep.mubr.bf16.mxu0 0
      %4162 = vmatmul.mubr.bf16.gmra.mxu0 %v4026
      %v4163 = vpop.f32.mrf.mxu0
      %v4164 = vadd.f32 0.0, %v4163
      %v4165 = vpop.f32.mrf.mxu0
      %v4166 = vadd.f32 0.0, %v4165
      %v4167 = vpop.f32.mrf.mxu0
      %v4168 = vadd.f32 0.0, %v4167
      %v4169 = vpop.f32.mrf.mxu0
      %v4170 = vadd.f32 0.0, %v4169
      %4171 = vmatprep.mubr.bf16.mxu0 0
      %4172 = vmatmul.mubr.bf16.gmra.mxu0 %v4029
      %v4173 = vpop.f32.mrf.mxu0
      %v4174 = vadd.f32 0.0, %v4173
      %v4175 = vpop.f32.mrf.mxu0
      %v4176 = vadd.f32 0.0, %v4175
      %v4177 = vpop.f32.mrf.mxu0
      %v4178 = vadd.f32 0.0, %v4177
      %v4179 = vpop.f32.mrf.mxu0
      %v4180 = vadd.f32 0.0, %v4179
      %4181 = vmatprep.mubr.bf16.mxu0 0
      %4182 = vmatmul.mubr.bf16.gmra.mxu0 %v4032
      %v4183 = vpop.f32.mrf.mxu0
      %v4184 = vadd.f32 0.0, %v4183
      %v4185 = vpop.f32.mrf.mxu0
      %v4186 = vadd.f32 0.0, %v4185
      %v4187 = vpop.f32.mrf.mxu0
      %v4188 = vadd.f32 0.0, %v4187
      %v4189 = vpop.f32.mrf.mxu0
      %v4190 = vadd.f32 0.0, %v4189
      %4191 = vmatprep.mubr.bf16.mxu0 0
      %4192 = vmatmul.mubr.bf16.gmra.mxu0 %v4035
      %v4193 = vpop.f32.mrf.mxu0
      %v4194 = vadd.f32 0.0, %v4193
      %v4195 = vpop.f32.mrf.mxu0
      %v4196 = vadd.f32 0.0, %v4195
      %v4197 = vpop.f32.mrf.mxu0
      %v4198 = vadd.f32 0.0, %v4197
      %v4199 = vpop.f32.mrf.mxu0
      %v4200 = vadd.f32 0.0, %v4199
      %4201 = vmatprep.mubr.bf16.mxu0 0
      %4202 = vmatmul.mubr.bf16.gmra.mxu0 %v4038
      %v4203 = vpop.f32.mrf.mxu0
      %v4204 = vadd.f32 0.0, %v4203
      %v4205 = vpop.f32.mrf.mxu0
      %v4206 = vadd.f32 0.0, %v4205
      %v4207 = vpop.f32.mrf.mxu0
      %v4208 = vadd.f32 0.0, %v4207
      %v4209 = vpop.f32.mrf.mxu0
      %v4210 = vadd.f32 0.0, %v4209
      %4211 = vmatprep.mubr.bf16.mxu0 0
      %4212 = vmatmul.mubr.bf16.gmra.mxu0 %v4041
      %v4213 = vpop.f32.mrf.mxu0
      %v4214 = vadd.f32 0.0, %v4213
      %v4215 = vpop.f32.mrf.mxu0
      %v4216 = vadd.f32 0.0, %v4215
      %v4217 = vpop.f32.mrf.mxu0
      %v4218 = vadd.f32 0.0, %v4217
      %v4219 = vpop.f32.mrf.mxu0
      %v4220 = vadd.f32 0.0, %v4219
      %4221 = vmatprep.mubr.bf16.mxu0 0
      %4222 = vmatmul.mubr.bf16.gmra.mxu0 %v4044
      %v4223 = vpop.f32.mrf.mxu0
      %v4224 = vadd.f32 0.0, %v4223
      %v4225 = vpop.f32.mrf.mxu0
      %v4226 = vadd.f32 0.0, %v4225
      %v4227 = vpop.f32.mrf.mxu0
      %v4228 = vadd.f32 0.0, %v4227
      %v4229 = vpop.f32.mrf.mxu0
      %v4230 = vadd.f32 0.0, %v4229
      %4231 = vmatprep.mubr.bf16.mxu0 0
      %4232 = vmatmul.mubr.bf16.gmra.mxu0 %v4047
      %v4233 = vpop.f32.mrf.mxu0
      %v4234 = vadd.f32 0.0, %v4233
      %v4235 = vpop.f32.mrf.mxu0
      %v4236 = vadd.f32 0.0, %v4235
      %v4237 = vpop.f32.mrf.mxu0
      %v4238 = vadd.f32 0.0, %v4237
      %v4239 = vpop.f32.mrf.mxu0
      %v4240 = vadd.f32 0.0, %v4239
      %4241 = vdwg.mxu0
      %v4242 = vadd.f32 %v3723, %v4084
      %v4243 = vadd.f32 %v3724, %v4086
      %v4244 = vadd.f32 %v3725, %v4088
      %v4245 = vadd.f32 %v3726, %v4090
      %v4246 = vadd.f32 %v3727, %v4094
      %v4247 = vadd.f32 %v3728, %v4096
      %v4248 = vadd.f32 %v3729, %v4098
      %v4249 = vadd.f32 %v3730, %v4100
      %v4250 = vadd.f32 %v3731, %v4104
      %v4251 = vadd.f32 %v3732, %v4106
      %v4252 = vadd.f32 %v3733, %v4108
      %v4253 = vadd.f32 %v3734, %v4110
      %v4254 = vadd.f32 %v3735, %v4114
      %v4255 = vadd.f32 %v3736, %v4116
      %v4256 = vadd.f32 %v3737, %v4118
      %v4257 = vadd.f32 %v3738, %v4120
      %v4258 = vadd.f32 %v3739, %v4124
      %v4259 = vadd.f32 %v3740, %v4126
      %v4260 = vadd.f32 %v3741, %v4128
      %v4261 = vadd.f32 %v3742, %v4130
      %v4262 = vadd.f32 %v3743, %v4134
      %v4263 = vadd.f32 %v3744, %v4136
      %v4264 = vadd.f32 %v3745, %v4138
      %v4265 = vadd.f32 %v3746, %v4140
      %v4266 = vadd.f32 %v3747, %v4144
      %v4267 = vadd.f32 %v3748, %v4146
      %v4268 = vadd.f32 %v3749, %v4148
      %v4269 = vadd.f32 %v3750, %v4150
      %v4270 = vadd.f32 %v3751, %v4154
      %v4271 = vadd.f32 %v3752, %v4156
      %v4272 = vadd.f32 %v3753, %v4158
      %v4273 = vadd.f32 %v3754, %v4160
      %v4274 = vadd.f32 %v3755, %v4164
      %v4275 = vadd.f32 %v3756, %v4166
      %v4276 = vadd.f32 %v3757, %v4168
      %v4277 = vadd.f32 %v3758, %v4170
      %v4278 = vadd.f32 %v3759, %v4174
      %v4279 = vadd.f32 %v3760, %v4176
      %v4280 = vadd.f32 %v3761, %v4178
      %v4281 = vadd.f32 %v3762, %v4180
      %v4282 = vadd.f32 %v3763, %v4184
      %v4283 = vadd.f32 %v3764, %v4186
      %v4284 = vadd.f32 %v3765, %v4188
      %v4285 = vadd.f32 %v3766, %v4190
      %v4286 = vadd.f32 %v3767, %v4194
      %v4287 = vadd.f32 %v3768, %v4196
      %v4288 = vadd.f32 %v3769, %v4198
      %v4289 = vadd.f32 %v3770, %v4200
      %v4290 = vadd.f32 %v3771, %v4204
      %v4291 = vadd.f32 %v3772, %v4206
      %v4292 = vadd.f32 %v3773, %v4208
      %v4293 = vadd.f32 %v3774, %v4210
      %v4294 = vadd.f32 %v3775, %v4214
      %v4295 = vadd.f32 %v3776, %v4216
      %v4296 = vadd.f32 %v3777, %v4218
      %v4297 = vadd.f32 %v3778, %v4220
      %v4298 = vadd.f32 %v3779, %v4224
      %v4299 = vadd.f32 %v3780, %v4226
      %v4300 = vadd.f32 %v3781, %v4228
      %v4301 = vadd.f32 %v3782, %v4230
      %v4302 = vadd.f32 %v3783, %v4234
      %v4303 = vadd.f32 %v3784, %v4236
      %v4304 = vadd.f32 %v3785, %v4238
      %v4305 = vadd.f32 %v3786, %v4240
      %v4306 = vmul.f32 %v652, %v652
      %v4307 = vmul.f32 %v653, %v653
      %v4308 = vpack.c.bf16 %v4306, %v4306
      %v4309 = vpack.c.bf16 %v4307, %v4307
      %v4311 = vpack.i.b16 %v4308, %v4308
      %v4313 = vlaneseq
      %v4314 = vshrl.u32 %v4313, 7
      %v4315 = vsub.s32 3, %v4314
      %v4316 = vrot.slane %v4311, %v4315
      %v4318 = vpack.i.b16 %v4309, %v4309
      %v4320 = vlaneseq
      %v4321 = vshrl.u32 %v4320, 7
      %v4322 = vsub.s32 3, %v4321
      %v4323 = vrot.slane %v4318, %v4322
      %v4324 = vmul.bf16 %v2327, %v4316
      %v4325 = vmul.bf16 %v2328, %v4323
      %v4326 = vmul.bf16 %v2329, %v4316
      %v4327 = vmul.bf16 %v2330, %v4323
      %v4328 = vmul.bf16 %v2331, %v4316
      %v4329 = vmul.bf16 %v2332, %v4323
      %v4330 = vmul.bf16 %v2333, %v4316
      %v4331 = vmul.bf16 %v2334, %v4323
      %v4332 = vmul.bf16 %v2335, %v4316
      %v4333 = vmul.bf16 %v2336, %v4323
      %v4334 = vmul.bf16 %v2337, %v4316
      %v4335 = vmul.bf16 %v2338, %v4323
      %v4336 = vmul.bf16 %v2339, %v4316
      %v4337 = vmul.bf16 %v2340, %v4323
      %s4338 = scalar_lea.vmem %s5, 512
      %v4339 = vld [vmem:[%s4338] sm:$0xf]
      %v4340 = vld [vmem:[%s4338 + $0x4] sm:$0xf]
      %v4341 = vld [vmem:[%s4338 + $0x8] sm:$0xf]
      %v4342 = vld [vmem:[%s4338 + $0xc] sm:$0xf]
      %v4343 = vld [vmem:[%s4338 + $0x10] sm:$0xf]
      %v4344 = vld [vmem:[%s4338 + $0x14] sm:$0xf]
      %v4345 = vld [vmem:[%s4338 + $0x18] sm:$0xf]
      %v4346 = vld [vmem:[%s4338 + $0x1c] sm:$0xf]
      %v4347 = vld [vmem:[%s4338 + $0x20] sm:$0xf]
      %v4348 = vld [vmem:[%s4338 + $0x24] sm:$0xf]
      %v4349 = vld [vmem:[%s4338 + $0x28] sm:$0xf]
      %v4350 = vld [vmem:[%s4338 + $0x2c] sm:$0xf]
      %v4351 = vld [vmem:[%s4338 + $0x30] sm:$0xf]
      %v4352 = vld [vmem:[%s4338 + $0x34] sm:$0xf]
      %v4353 = vld [vmem:[%s4338 + $0x38] sm:$0xf]
      %v4354 = vld [vmem:[%s4338 + $0x3c] sm:$0xf]
      %v4355 = vld [vmem:[%s4338 + $0x40] sm:$0xf]
      %v4356 = vld [vmem:[%s4338 + $0x44] sm:$0xf]
      %v4357 = vld [vmem:[%s4338 + $0x48] sm:$0xf]
      %v4358 = vld [vmem:[%s4338 + $0x4c] sm:$0xf]
      %v4359 = vld [vmem:[%s4338 + $0x50] sm:$0xf]
      %v4360 = vld [vmem:[%s4338 + $0x54] sm:$0xf]
      %v4361 = vld [vmem:[%s4338 + $0x58] sm:$0xf]
      %v4362 = vld [vmem:[%s4338 + $0x5c] sm:$0xf]
      %v4363 = vld [vmem:[%s4338 + $0x60] sm:$0xf]
      %v4364 = vld [vmem:[%s4338 + $0x64] sm:$0xf]
      %v4365 = vld [vmem:[%s4338 + $0x68] sm:$0xf]
      %v4366 = vld [vmem:[%s4338 + $0x6c] sm:$0xf]
      %v4367 = vld [vmem:[%s4338 + $0x70] sm:$0xf]
      %v4368 = vld [vmem:[%s4338 + $0x74] sm:$0xf]
      %v4369 = vld [vmem:[%s4338 + $0x78] sm:$0xf]
      %v4370 = vld [vmem:[%s4338 + $0x7c] sm:$0xf]
      %v4403 = vunpack.c.l.b16 %v4339
      %v4404 = vunpack.c.l.b16 %v4340
      %v4405 = vunpack.c.l.b16 %v4341
      %v4406 = vunpack.c.l.b16 %v4342
      %v4407 = vunpack.c.l.b16 %v4343
      %v4408 = vunpack.c.l.b16 %v4344
      %v4409 = vunpack.c.l.b16 %v4345
      %v4410 = vunpack.c.l.b16 %v4346
      %v4411 = vunpack.c.l.b16 %v4347
      %v4412 = vunpack.c.l.b16 %v4348
      %v4413 = vunpack.c.l.b16 %v4349
      %v4414 = vunpack.c.l.b16 %v4350
      %v4415 = vunpack.c.l.b16 %v4351
      %v4416 = vunpack.c.l.b16 %v4352
      %v4417 = vunpack.c.l.b16 %v4353
      %v4418 = vunpack.c.l.b16 %v4354
      %v4419 = vunpack.c.l.b16 %v4355
      %v4420 = vunpack.c.l.b16 %v4356
      %v4421 = vunpack.c.l.b16 %v4357
      %v4422 = vunpack.c.l.b16 %v4358
      %v4423 = vunpack.c.l.b16 %v4359
      %v4424 = vunpack.c.l.b16 %v4360
      %v4425 = vunpack.c.l.b16 %v4361
      %v4426 = vunpack.c.l.b16 %v4362
      %v4427 = vunpack.c.l.b16 %v4363
      %v4428 = vunpack.c.l.b16 %v4364
      %v4429 = vunpack.c.l.b16 %v4365
      %v4430 = vunpack.c.l.b16 %v4366
      %v4431 = vunpack.c.l.b16 %v4367
      %v4432 = vunpack.c.l.b16 %v4368
      %v4433 = vunpack.c.l.b16 %v4369
      %v4434 = vunpack.c.l.b16 %v4370
      %v4435 = vpack.c.b16 %v4404, %v4403
      %v4436 = vpack.c.b16 %v4406, %v4405
      %v4437 = vpack.c.b16 %v4408, %v4407
      %v4438 = vpack.c.b16 %v4410, %v4409
      %v4439 = vpack.c.b16 %v4412, %v4411
      %v4440 = vpack.c.b16 %v4414, %v4413
      %v4441 = vpack.c.b16 %v4416, %v4415
      %v4442 = vpack.c.b16 %v4418, %v4417
      %v4443 = vpack.c.b16 %v4420, %v4419
      %v4444 = vpack.c.b16 %v4422, %v4421
      %v4445 = vpack.c.b16 %v4424, %v4423
      %v4446 = vpack.c.b16 %v4426, %v4425
      %v4447 = vpack.c.b16 %v4428, %v4427
      %v4448 = vpack.c.b16 %v4430, %v4429
      %v4449 = vpack.c.b16 %v4432, %v4431
      %v4450 = vpack.c.b16 %v4434, %v4433
      %v4452 = vsel %vm2705, %v4435, 0
      %v4455 = vsel %vm2705, %v4436, 0
      %v4458 = vsel %vm2705, %v4437, 0
      %v4461 = vsel %vm2705, %v4438, 0
      %v4464 = vsel %vm2705, %v4439, 0
      %v4467 = vsel %vm2705, %v4440, 0
      %v4470 = vsel %vm2705, %v4441, 0
      %v4473 = vsel %vm2705, %v4442, 0
      %v4476 = vsel %vm2705, %v4443, 0
      %v4479 = vsel %vm2705, %v4444, 0
      %v4482 = vsel %vm2705, %v4445, 0
      %v4485 = vsel %vm2705, %v4446, 0
      %v4488 = vsel %vm2705, %v4447, 0
      %v4491 = vsel %vm2705, %v4448, 0
      %v4494 = vsel %vm2705, %v4449, 0
      %v4497 = vsel %vm2705, %v4450, 0
      %4499 = vmatprep.subr.bf16.mxu0 0
      %4500 = vmatpush1.bf16.msra.mxu0 0
      %4501 = vmatprep.subr.bf16.mxu0 %v4337
      %4502 = vmatpush1.bf16.msra.mxu0 %v4336
      %4503 = vmatprep.subr.bf16.mxu0 %v4335
      %4504 = vmatpush1.bf16.msra.mxu0 %v4334
      %4505 = vmatprep.subr.bf16.mxu0 %v4333
      %4506 = vmatpush1.bf16.msra.mxu0 %v4332
      %4507 = vmatprep.subr.bf16.mxu0 %v4331
      %4508 = vmatpush1.bf16.msra.mxu0 %v4330
      %4509 = vmatprep.subr.bf16.mxu0 %v4329
      %4510 = vmatpush1.bf16.msra.mxu0 %v4328
      %4511 = vmatprep.subr.bf16.mxu0 %v4327
      %4512 = vmatpush1.bf16.msra.mxu0 %v4326
      %4513 = vmatprep.subr.bf16.mxu0 %v4325
      %4514 = vmatpush1.bf16.msra.mxu0 %v4324
      %4515 = vmatprep.subr.bf16.mxu0 0
      %4516 = vmatpush2.bf16.msra.mxu0 0
      %4517 = vmatprep.subr.bf16.mxu0 0
      %4518 = vmatpush2.bf16.msra.mxu0 0
      %4519 = vmatprep.subr.bf16.mxu0 0
      %4520 = vmatpush2.bf16.msra.mxu0 0
      %4521 = vmatprep.subr.bf16.mxu0 0
      %4522 = vmatpush2.bf16.msra.mxu0 0
      %4523 = vmatprep.subr.bf16.mxu0 0
      %4524 = vmatpush2.bf16.msra.mxu0 0
      %4525 = vmatprep.subr.bf16.mxu0 0
      %4526 = vmatpush2.bf16.msra.mxu0 0
      %4527 = vmatprep.subr.bf16.mxu0 0
      %4528 = vmatpush2.bf16.msra.mxu0 0
      %4529 = vmatprep.subr.bf16.mxu0 0
      %4530 = vmatpush2.bf16.msra.mxu0 0
      %4531 = vmatprep.mubr.bf16.mxu0 0
      %4532 = vmatmul.mubr.bf16.gmra.mxu0 %v4452
      %v4533 = vpop.f32.mrf.mxu0
      %v4534 = vadd.f32 0.0, %v4533
      %v4535 = vpop.f32.mrf.mxu0
      %v4536 = vadd.f32 0.0, %v4535
      %v4537 = vpop.f32.mrf.mxu0
      %v4538 = vadd.f32 0.0, %v4537
      %v4539 = vpop.f32.mrf.mxu0
      %v4540 = vadd.f32 0.0, %v4539
      %4541 = vmatprep.mubr.bf16.mxu0 0
      %4542 = vmatmul.mubr.bf16.gmra.mxu0 %v4455
      %v4543 = vpop.f32.mrf.mxu0
      %v4544 = vadd.f32 0.0, %v4543
      %v4545 = vpop.f32.mrf.mxu0
      %v4546 = vadd.f32 0.0, %v4545
      %v4547 = vpop.f32.mrf.mxu0
      %v4548 = vadd.f32 0.0, %v4547
      %v4549 = vpop.f32.mrf.mxu0
      %v4550 = vadd.f32 0.0, %v4549
      %4551 = vmatprep.mubr.bf16.mxu0 0
      %4552 = vmatmul.mubr.bf16.gmra.mxu0 %v4458
      %v4553 = vpop.f32.mrf.mxu0
      %v4554 = vadd.f32 0.0, %v4553
      %v4555 = vpop.f32.mrf.mxu0
      %v4556 = vadd.f32 0.0, %v4555
      %v4557 = vpop.f32.mrf.mxu0
      %v4558 = vadd.f32 0.0, %v4557
      %v4559 = vpop.f32.mrf.mxu0
      %v4560 = vadd.f32 0.0, %v4559
      %4561 = vmatprep.mubr.bf16.mxu0 0
      %4562 = vmatmul.mubr.bf16.gmra.mxu0 %v4461
      %v4563 = vpop.f32.mrf.mxu0
      %v4564 = vadd.f32 0.0, %v4563
      %v4565 = vpop.f32.mrf.mxu0
      %v4566 = vadd.f32 0.0, %v4565
      %v4567 = vpop.f32.mrf.mxu0
      %v4568 = vadd.f32 0.0, %v4567
      %v4569 = vpop.f32.mrf.mxu0
      %v4570 = vadd.f32 0.0, %v4569
      %4571 = vmatprep.mubr.bf16.mxu0 0
      %4572 = vmatmul.mubr.bf16.gmra.mxu0 %v4464
      %v4573 = vpop.f32.mrf.mxu0
      %v4574 = vadd.f32 0.0, %v4573
      %v4575 = vpop.f32.mrf.mxu0
      %v4576 = vadd.f32 0.0, %v4575
      %v4577 = vpop.f32.mrf.mxu0
      %v4578 = vadd.f32 0.0, %v4577
      %v4579 = vpop.f32.mrf.mxu0
      %v4580 = vadd.f32 0.0, %v4579
      %4581 = vmatprep.mubr.bf16.mxu0 0
      %4582 = vmatmul.mubr.bf16.gmra.mxu0 %v4467
      %v4583 = vpop.f32.mrf.mxu0
      %v4584 = vadd.f32 0.0, %v4583
      %v4585 = vpop.f32.mrf.mxu0
      %v4586 = vadd.f32 0.0, %v4585
      %v4587 = vpop.f32.mrf.mxu0
      %v4588 = vadd.f32 0.0, %v4587
      %v4589 = vpop.f32.mrf.mxu0
      %v4590 = vadd.f32 0.0, %v4589
      %4591 = vmatprep.mubr.bf16.mxu0 0
      %4592 = vmatmul.mubr.bf16.gmra.mxu0 %v4470
      %v4593 = vpop.f32.mrf.mxu0
      %v4594 = vadd.f32 0.0, %v4593
      %v4595 = vpop.f32.mrf.mxu0
      %v4596 = vadd.f32 0.0, %v4595
      %v4597 = vpop.f32.mrf.mxu0
      %v4598 = vadd.f32 0.0, %v4597
      %v4599 = vpop.f32.mrf.mxu0
      %v4600 = vadd.f32 0.0, %v4599
      %4601 = vmatprep.mubr.bf16.mxu0 0
      %4602 = vmatmul.mubr.bf16.gmra.mxu0 %v4473
      %v4603 = vpop.f32.mrf.mxu0
      %v4604 = vadd.f32 0.0, %v4603
      %v4605 = vpop.f32.mrf.mxu0
      %v4606 = vadd.f32 0.0, %v4605
      %v4607 = vpop.f32.mrf.mxu0
      %v4608 = vadd.f32 0.0, %v4607
      %v4609 = vpop.f32.mrf.mxu0
      %v4610 = vadd.f32 0.0, %v4609
      %4611 = vmatprep.mubr.bf16.mxu0 0
      %4612 = vmatmul.mubr.bf16.gmra.mxu0 %v4476
      %v4613 = vpop.f32.mrf.mxu0
      %v4614 = vadd.f32 0.0, %v4613
      %v4615 = vpop.f32.mrf.mxu0
      %v4616 = vadd.f32 0.0, %v4615
      %v4617 = vpop.f32.mrf.mxu0
      %v4618 = vadd.f32 0.0, %v4617
      %v4619 = vpop.f32.mrf.mxu0
      %v4620 = vadd.f32 0.0, %v4619
      %4621 = vmatprep.mubr.bf16.mxu0 0
      %4622 = vmatmul.mubr.bf16.gmra.mxu0 %v4479
      %v4623 = vpop.f32.mrf.mxu0
      %v4624 = vadd.f32 0.0, %v4623
      %v4625 = vpop.f32.mrf.mxu0
      %v4626 = vadd.f32 0.0, %v4625
      %v4627 = vpop.f32.mrf.mxu0
      %v4628 = vadd.f32 0.0, %v4627
      %v4629 = vpop.f32.mrf.mxu0
      %v4630 = vadd.f32 0.0, %v4629
      %4631 = vmatprep.mubr.bf16.mxu0 0
      %4632 = vmatmul.mubr.bf16.gmra.mxu0 %v4482
      %v4633 = vpop.f32.mrf.mxu0
      %v4634 = vadd.f32 0.0, %v4633
      %v4635 = vpop.f32.mrf.mxu0
      %v4636 = vadd.f32 0.0, %v4635
      %v4637 = vpop.f32.mrf.mxu0
      %v4638 = vadd.f32 0.0, %v4637
      %v4639 = vpop.f32.mrf.mxu0
      %v4640 = vadd.f32 0.0, %v4639
      %4641 = vmatprep.mubr.bf16.mxu0 0
      %4642 = vmatmul.mubr.bf16.gmra.mxu0 %v4485
      %v4643 = vpop.f32.mrf.mxu0
      %v4644 = vadd.f32 0.0, %v4643
      %v4645 = vpop.f32.mrf.mxu0
      %v4646 = vadd.f32 0.0, %v4645
      %v4647 = vpop.f32.mrf.mxu0
      %v4648 = vadd.f32 0.0, %v4647
      %v4649 = vpop.f32.mrf.mxu0
      %v4650 = vadd.f32 0.0, %v4649
      %4651 = vmatprep.mubr.bf16.mxu0 0
      %4652 = vmatmul.mubr.bf16.gmra.mxu0 %v4488
      %v4653 = vpop.f32.mrf.mxu0
      %v4654 = vadd.f32 0.0, %v4653
      %v4655 = vpop.f32.mrf.mxu0
      %v4656 = vadd.f32 0.0, %v4655
      %v4657 = vpop.f32.mrf.mxu0
      %v4658 = vadd.f32 0.0, %v4657
      %v4659 = vpop.f32.mrf.mxu0
      %v4660 = vadd.f32 0.0, %v4659
      %4661 = vmatprep.mubr.bf16.mxu0 0
      %4662 = vmatmul.mubr.bf16.gmra.mxu0 %v4491
      %v4663 = vpop.f32.mrf.mxu0
      %v4664 = vadd.f32 0.0, %v4663
      %v4665 = vpop.f32.mrf.mxu0
      %v4666 = vadd.f32 0.0, %v4665
      %v4667 = vpop.f32.mrf.mxu0
      %v4668 = vadd.f32 0.0, %v4667
      %v4669 = vpop.f32.mrf.mxu0
      %v4670 = vadd.f32 0.0, %v4669
      %4671 = vmatprep.mubr.bf16.mxu0 0
      %4672 = vmatmul.mubr.bf16.gmra.mxu0 %v4494
      %v4673 = vpop.f32.mrf.mxu0
      %v4674 = vadd.f32 0.0, %v4673
      %v4675 = vpop.f32.mrf.mxu0
      %v4676 = vadd.f32 0.0, %v4675
      %v4677 = vpop.f32.mrf.mxu0
      %v4678 = vadd.f32 0.0, %v4677
      %v4679 = vpop.f32.mrf.mxu0
      %v4680 = vadd.f32 0.0, %v4679
      %4681 = vmatprep.mubr.bf16.mxu0 0
      %4682 = vmatmul.mubr.bf16.gmra.mxu0 %v4497
      %v4683 = vpop.f32.mrf.mxu0
      %v4684 = vadd.f32 0.0, %v4683
      %v4685 = vpop.f32.mrf.mxu0
      %v4686 = vadd.f32 0.0, %v4685
      %v4687 = vpop.f32.mrf.mxu0
      %v4688 = vadd.f32 0.0, %v4687
      %v4689 = vpop.f32.mrf.mxu0
      %v4690 = vadd.f32 0.0, %v4689
      %4691 = vdwg.mxu0
      %v4692 = vadd.f32 %v4242, %v4534
      %v4693 = vadd.f32 %v4243, %v4536
      %v4694 = vadd.f32 %v4244, %v4538
      %v4695 = vadd.f32 %v4245, %v4540
      %v4696 = vadd.f32 %v4246, %v4544
      %v4697 = vadd.f32 %v4247, %v4546
      %v4698 = vadd.f32 %v4248, %v4548
      %v4699 = vadd.f32 %v4249, %v4550
      %v4700 = vadd.f32 %v4250, %v4554
      %v4701 = vadd.f32 %v4251, %v4556
      %v4702 = vadd.f32 %v4252, %v4558
      %v4703 = vadd.f32 %v4253, %v4560
      %v4704 = vadd.f32 %v4254, %v4564
      %v4705 = vadd.f32 %v4255, %v4566
      %v4706 = vadd.f32 %v4256, %v4568
      %v4707 = vadd.f32 %v4257, %v4570
      %v4708 = vadd.f32 %v4258, %v4574
      %v4709 = vadd.f32 %v4259, %v4576
      %v4710 = vadd.f32 %v4260, %v4578
      %v4711 = vadd.f32 %v4261, %v4580
      %v4712 = vadd.f32 %v4262, %v4584
      %v4713 = vadd.f32 %v4263, %v4586
      %v4714 = vadd.f32 %v4264, %v4588
      %v4715 = vadd.f32 %v4265, %v4590
      %v4716 = vadd.f32 %v4266, %v4594
      %v4717 = vadd.f32 %v4267, %v4596
      %v4718 = vadd.f32 %v4268, %v4598
      %v4719 = vadd.f32 %v4269, %v4600
      %v4720 = vadd.f32 %v4270, %v4604
      %v4721 = vadd.f32 %v4271, %v4606
      %v4722 = vadd.f32 %v4272, %v4608
      %v4723 = vadd.f32 %v4273, %v4610
      %v4724 = vadd.f32 %v4274, %v4614
      %v4725 = vadd.f32 %v4275, %v4616
      %v4726 = vadd.f32 %v4276, %v4618
      %v4727 = vadd.f32 %v4277, %v4620
      %v4728 = vadd.f32 %v4278, %v4624
      %v4729 = vadd.f32 %v4279, %v4626
      %v4730 = vadd.f32 %v4280, %v4628
      %v4731 = vadd.f32 %v4281, %v4630
      %v4732 = vadd.f32 %v4282, %v4634
      %v4733 = vadd.f32 %v4283, %v4636
      %v4734 = vadd.f32 %v4284, %v4638
      %v4735 = vadd.f32 %v4285, %v4640
      %v4736 = vadd.f32 %v4286, %v4644
      %v4737 = vadd.f32 %v4287, %v4646
      %v4738 = vadd.f32 %v4288, %v4648
      %v4739 = vadd.f32 %v4289, %v4650
      %v4740 = vadd.f32 %v4290, %v4654
      %v4741 = vadd.f32 %v4291, %v4656
      %v4742 = vadd.f32 %v4292, %v4658
      %v4743 = vadd.f32 %v4293, %v4660
      %v4744 = vadd.f32 %v4294, %v4664
      %v4745 = vadd.f32 %v4295, %v4666
      %v4746 = vadd.f32 %v4296, %v4668
      %v4747 = vadd.f32 %v4297, %v4670
      %v4748 = vadd.f32 %v4298, %v4674
      %v4749 = vadd.f32 %v4299, %v4676
      %v4750 = vadd.f32 %v4300, %v4678
      %v4751 = vadd.f32 %v4301, %v4680
      %v4752 = vadd.f32 %v4302, %v4684
      %v4753 = vadd.f32 %v4303, %v4686
      %v4754 = vadd.f32 %v4304, %v4688
      %v4755 = vadd.f32 %v4305, %v4690
      %v4756 = vrot.slane %v652, 3
      %v4757 = vrot.slane %v653, 3
      %v4760 = vmul.f32 %v652, %v4756
      %v4761 = vmul.f32 %v653, %v4757
      %v4762 = vpack.c.bf16 %v4760, %v4760
      %v4763 = vpack.c.bf16 %v4761, %v4761
      %4764 = vrot.lane.b32.xlu0 %v2327, 127
      %v4765 = vpop.permute.xlu0 %4764
      %4766 = vrot.lane.b32.xlu0 %v2328, 127
      %v4767 = vpop.permute.xlu0 %4766
      %4768 = vrot.lane.b32.xlu0 %v2329, 127
      %v4769 = vpop.permute.xlu0 %4768
      %4770 = vrot.lane.b32.xlu0 %v2330, 127
      %v4771 = vpop.permute.xlu0 %4770
      %4772 = vrot.lane.b32.xlu0 %v2331, 127
      %v4773 = vpop.permute.xlu0 %4772
      %4774 = vrot.lane.b32.xlu0 %v2332, 127
      %v4775 = vpop.permute.xlu0 %4774
      %4776 = vrot.lane.b32.xlu0 %v2333, 127
      %v4777 = vpop.permute.xlu0 %4776
      %4778 = vrot.lane.b32.xlu0 %v2334, 127
      %v4779 = vpop.permute.xlu0 %4778
      %4780 = vrot.lane.b32.xlu0 %v2335, 127
      %v4781 = vpop.permute.xlu0 %4780
      %4782 = vrot.lane.b32.xlu0 %v2336, 127
      %v4783 = vpop.permute.xlu0 %4782
      %4784 = vrot.lane.b32.xlu0 %v2337, 127
      %v4785 = vpop.permute.xlu0 %4784
      %4786 = vrot.lane.b32.xlu0 %v2338, 127
      %v4787 = vpop.permute.xlu0 %4786
      %4788 = vrot.lane.b32.xlu0 %v2339, 127
      %v4789 = vpop.permute.xlu0 %4788
      %4790 = vrot.lane.b32.xlu0 %v2340, 127
      %v4791 = vpop.permute.xlu0 %4790
      %vm4792 = vcmask 1039360
      %v4793 = vsel %vm4792, %v4765, %v4767
      %v4794 = vsel %vm4792, %v4769, %v4771
      %v4795 = vsel %vm4792, %v4773, %v4775
      %v4796 = vsel %vm4792, %v4777, %v4779
      %v4797 = vsel %vm4792, %v4781, %v4783
      %v4798 = vsel %vm4792, %v4785, %v4787
      %v4799 = vsel %vm4792, %v4789, %v4791
      %vm4807 = vcmask 1039360
      %v4809 = vsel %vm4807, %v4767, 0
      %v4812 = vsel %vm4807, %v4771, 0
      %v4815 = vsel %vm4807, %v4775, 0
      %v4818 = vsel %vm4807, %v4779, 0
      %v4821 = vsel %vm4807, %v4783, 0
      %v4824 = vsel %vm4807, %v4787, 0
      %v4827 = vsel %vm4807, %v4791, 0
      %v4830 = vpack.i.b16 %v4762, %v4762
      %v4832 = vlaneseq
      %v4833 = vshrl.u32 %v4832, 7
      %v4834 = vsub.s32 3, %v4833
      %v4835 = vrot.slane %v4830, %v4834
      %v4837 = vpack.i.b16 %v4763, %v4763
      %v4839 = vlaneseq
      %v4840 = vshrl.u32 %v4839, 7
      %v4841 = vsub.s32 3, %v4840
      %v4842 = vrot.slane %v4837, %v4841
      %v4843 = vmul.bf16 %v4793, %v4835
      %v4844 = vmul.bf16 %v4809, %v4842
      %v4845 = vmul.bf16 %v4794, %v4835
      %v4846 = vmul.bf16 %v4812, %v4842
      %v4847 = vmul.bf16 %v4795, %v4835
      %v4848 = vmul.bf16 %v4815, %v4842
      %v4849 = vmul.bf16 %v4796, %v4835
      %v4850 = vmul.bf16 %v4818, %v4842
      %v4851 = vmul.bf16 %v4797, %v4835
      %v4852 = vmul.bf16 %v4821, %v4842
      %v4853 = vmul.bf16 %v4798, %v4835
      %v4854 = vmul.bf16 %v4824, %v4842
      %v4855 = vmul.bf16 %v4799, %v4835
      %v4856 = vmul.bf16 %v4827, %v4842
      %s4857 = scalar_lea.vmem %s5, 640
      %v4858 = vld [vmem:[%s4857] sm:$0xf]
      %v4859 = vld [vmem:[%s4857 + $0x4] sm:$0xf]
      %v4860 = vld [vmem:[%s4857 + $0x8] sm:$0xf]
      %v4861 = vld [vmem:[%s4857 + $0xc] sm:$0xf]
      %v4862 = vld [vmem:[%s4857 + $0x10] sm:$0xf]
      %v4863 = vld [vmem:[%s4857 + $0x14] sm:$0xf]
      %v4864 = vld [vmem:[%s4857 + $0x18] sm:$0xf]
      %v4865 = vld [vmem:[%s4857 + $0x1c] sm:$0xf]
      %v4866 = vld [vmem:[%s4857 + $0x20] sm:$0xf]
      %v4867 = vld [vmem:[%s4857 + $0x24] sm:$0xf]
      %v4868 = vld [vmem:[%s4857 + $0x28] sm:$0xf]
      %v4869 = vld [vmem:[%s4857 + $0x2c] sm:$0xf]
      %v4870 = vld [vmem:[%s4857 + $0x30] sm:$0xf]
      %v4871 = vld [vmem:[%s4857 + $0x34] sm:$0xf]
      %v4872 = vld [vmem:[%s4857 + $0x38] sm:$0xf]
      %v4873 = vld [vmem:[%s4857 + $0x3c] sm:$0xf]
      %v4874 = vld [vmem:[%s4857 + $0x40] sm:$0xf]
      %v4875 = vld [vmem:[%s4857 + $0x44] sm:$0xf]
      %v4876 = vld [vmem:[%s4857 + $0x48] sm:$0xf]
      %v4877 = vld [vmem:[%s4857 + $0x4c] sm:$0xf]
      %v4878 = vld [vmem:[%s4857 + $0x50] sm:$0xf]
      %v4879 = vld [vmem:[%s4857 + $0x54] sm:$0xf]
      %v4880 = vld [vmem:[%s4857 + $0x58] sm:$0xf]
      %v4881 = vld [vmem:[%s4857 + $0x5c] sm:$0xf]
      %v4882 = vld [vmem:[%s4857 + $0x60] sm:$0xf]
      %v4883 = vld [vmem:[%s4857 + $0x64] sm:$0xf]
      %v4884 = vld [vmem:[%s4857 + $0x68] sm:$0xf]
      %v4885 = vld [vmem:[%s4857 + $0x6c] sm:$0xf]
      %v4886 = vld [vmem:[%s4857 + $0x70] sm:$0xf]
      %v4887 = vld [vmem:[%s4857 + $0x74] sm:$0xf]
      %v4888 = vld [vmem:[%s4857 + $0x78] sm:$0xf]
      %v4889 = vld [vmem:[%s4857 + $0x7c] sm:$0xf]
      %v4922 = vunpack.c.l.b16 %v4858
      %v4923 = vunpack.c.l.b16 %v4859
      %v4924 = vunpack.c.l.b16 %v4860
      %v4925 = vunpack.c.l.b16 %v4861
      %v4926 = vunpack.c.l.b16 %v4862
      %v4927 = vunpack.c.l.b16 %v4863
      %v4928 = vunpack.c.l.b16 %v4864
      %v4929 = vunpack.c.l.b16 %v4865
      %v4930 = vunpack.c.l.b16 %v4866
      %v4931 = vunpack.c.l.b16 %v4867
      %v4932 = vunpack.c.l.b16 %v4868
      %v4933 = vunpack.c.l.b16 %v4869
      %v4934 = vunpack.c.l.b16 %v4870
      %v4935 = vunpack.c.l.b16 %v4871
      %v4936 = vunpack.c.l.b16 %v4872
      %v4937 = vunpack.c.l.b16 %v4873
      %v4938 = vunpack.c.l.b16 %v4874
      %v4939 = vunpack.c.l.b16 %v4875
      %v4940 = vunpack.c.l.b16 %v4876
      %v4941 = vunpack.c.l.b16 %v4877
      %v4942 = vunpack.c.l.b16 %v4878
      %v4943 = vunpack.c.l.b16 %v4879
      %v4944 = vunpack.c.l.b16 %v4880
      %v4945 = vunpack.c.l.b16 %v4881
      %v4946 = vunpack.c.l.b16 %v4882
      %v4947 = vunpack.c.l.b16 %v4883
      %v4948 = vunpack.c.l.b16 %v4884
      %v4949 = vunpack.c.l.b16 %v4885
      %v4950 = vunpack.c.l.b16 %v4886
      %v4951 = vunpack.c.l.b16 %v4887
      %v4952 = vunpack.c.l.b16 %v4888
      %v4953 = vunpack.c.l.b16 %v4889
      %v4954 = vpack.c.b16 %v4923, %v4922
      %v4955 = vpack.c.b16 %v4925, %v4924
      %v4956 = vpack.c.b16 %v4927, %v4926
      %v4957 = vpack.c.b16 %v4929, %v4928
      %v4958 = vpack.c.b16 %v4931, %v4930
      %v4959 = vpack.c.b16 %v4933, %v4932
      %v4960 = vpack.c.b16 %v4935, %v4934
      %v4961 = vpack.c.b16 %v4937, %v4936
      %v4962 = vpack.c.b16 %v4939, %v4938
      %v4963 = vpack.c.b16 %v4941, %v4940
      %v4964 = vpack.c.b16 %v4943, %v4942
      %v4965 = vpack.c.b16 %v4945, %v4944
      %v4966 = vpack.c.b16 %v4947, %v4946
      %v4967 = vpack.c.b16 %v4949, %v4948
      %v4968 = vpack.c.b16 %v4951, %v4950
      %v4969 = vpack.c.b16 %v4953, %v4952
      %v4971 = vsel %vm2705, %v4954, 0
      %v4974 = vsel %vm2705, %v4955, 0
      %v4977 = vsel %vm2705, %v4956, 0
      %v4980 = vsel %vm2705, %v4957, 0
      %v4983 = vsel %vm2705, %v4958, 0
      %v4986 = vsel %vm2705, %v4959, 0
      %v4989 = vsel %vm2705, %v4960, 0
      %v4992 = vsel %vm2705, %v4961, 0
      %v4995 = vsel %vm2705, %v4962, 0
      %v4998 = vsel %vm2705, %v4963, 0
      %v5001 = vsel %vm2705, %v4964, 0
      %v5004 = vsel %vm2705, %v4965, 0
      %v5007 = vsel %vm2705, %v4966, 0
      %v5010 = vsel %vm2705, %v4967, 0
      %v5013 = vsel %vm2705, %v4968, 0
      %v5016 = vsel %vm2705, %v4969, 0
      %5018 = vmatprep.subr.bf16.mxu0 0
      %5019 = vmatpush1.bf16.msra.mxu0 0
      %5020 = vmatprep.subr.bf16.mxu0 %v4856
      %5021 = vmatpush1.bf16.msra.mxu0 %v4855
      %5022 = vmatprep.subr.bf16.mxu0 %v4854
      %5023 = vmatpush1.bf16.msra.mxu0 %v4853
      %5024 = vmatprep.subr.bf16.mxu0 %v4852
      %5025 = vmatpush1.bf16.msra.mxu0 %v4851
      %5026 = vmatprep.subr.bf16.mxu0 %v4850
      %5027 = vmatpush1.bf16.msra.mxu0 %v4849
      %5028 = vmatprep.subr.bf16.mxu0 %v4848
      %5029 = vmatpush1.bf16.msra.mxu0 %v4847
      %5030 = vmatprep.subr.bf16.mxu0 %v4846
      %5031 = vmatpush1.bf16.msra.mxu0 %v4845
      %5032 = vmatprep.subr.bf16.mxu0 %v4844
      %5033 = vmatpush1.bf16.msra.mxu0 %v4843
      %5034 = vmatprep.subr.bf16.mxu0 0
      %5035 = vmatpush2.bf16.msra.mxu0 0
      %5036 = vmatprep.subr.bf16.mxu0 0
      %5037 = vmatpush2.bf16.msra.mxu0 0
      %5038 = vmatprep.subr.bf16.mxu0 0
      %5039 = vmatpush2.bf16.msra.mxu0 0
      %5040 = vmatprep.subr.bf16.mxu0 0
      %5041 = vmatpush2.bf16.msra.mxu0 0
      %5042 = vmatprep.subr.bf16.mxu0 0
      %5043 = vmatpush2.bf16.msra.mxu0 0
      %5044 = vmatprep.subr.bf16.mxu0 0
      %5045 = vmatpush2.bf16.msra.mxu0 0
      %5046 = vmatprep.subr.bf16.mxu0 0
      %5047 = vmatpush2.bf16.msra.mxu0 0
      %5048 = vmatprep.subr.bf16.mxu0 0
      %5049 = vmatpush2.bf16.msra.mxu0 0
      %5050 = vmatprep.mubr.bf16.mxu0 0
      %5051 = vmatmul.mubr.bf16.gmra.mxu0 %v4971
      %v5052 = vpop.f32.mrf.mxu0
      %v5053 = vadd.f32 0.0, %v5052
      %v5054 = vpop.f32.mrf.mxu0
      %v5055 = vadd.f32 0.0, %v5054
      %v5056 = vpop.f32.mrf.mxu0
      %v5057 = vadd.f32 0.0, %v5056
      %v5058 = vpop.f32.mrf.mxu0
      %v5059 = vadd.f32 0.0, %v5058
      %5060 = vmatprep.mubr.bf16.mxu0 0
      %5061 = vmatmul.mubr.bf16.gmra.mxu0 %v4974
      %v5062 = vpop.f32.mrf.mxu0
      %v5063 = vadd.f32 0.0, %v5062
      %v5064 = vpop.f32.mrf.mxu0
      %v5065 = vadd.f32 0.0, %v5064
      %v5066 = vpop.f32.mrf.mxu0
      %v5067 = vadd.f32 0.0, %v5066
      %v5068 = vpop.f32.mrf.mxu0
      %v5069 = vadd.f32 0.0, %v5068
      %5070 = vmatprep.mubr.bf16.mxu0 0
      %5071 = vmatmul.mubr.bf16.gmra.mxu0 %v4977
      %v5072 = vpop.f32.mrf.mxu0
      %v5073 = vadd.f32 0.0, %v5072
      %v5074 = vpop.f32.mrf.mxu0
      %v5075 = vadd.f32 0.0, %v5074
      %v5076 = vpop.f32.mrf.mxu0
      %v5077 = vadd.f32 0.0, %v5076
      %v5078 = vpop.f32.mrf.mxu0
      %v5079 = vadd.f32 0.0, %v5078
      %5080 = vmatprep.mubr.bf16.mxu0 0
      %5081 = vmatmul.mubr.bf16.gmra.mxu0 %v4980
      %v5082 = vpop.f32.mrf.mxu0
      %v5083 = vadd.f32 0.0, %v5082
      %v5084 = vpop.f32.mrf.mxu0
      %v5085 = vadd.f32 0.0, %v5084
      %v5086 = vpop.f32.mrf.mxu0
      %v5087 = vadd.f32 0.0, %v5086
      %v5088 = vpop.f32.mrf.mxu0
      %v5089 = vadd.f32 0.0, %v5088
      %5090 = vmatprep.mubr.bf16.mxu0 0
      %5091 = vmatmul.mubr.bf16.gmra.mxu0 %v4983
      %v5092 = vpop.f32.mrf.mxu0
      %v5093 = vadd.f32 0.0, %v5092
      %v5094 = vpop.f32.mrf.mxu0
      %v5095 = vadd.f32 0.0, %v5094
      %v5096 = vpop.f32.mrf.mxu0
      %v5097 = vadd.f32 0.0, %v5096
      %v5098 = vpop.f32.mrf.mxu0
      %v5099 = vadd.f32 0.0, %v5098
      %5100 = vmatprep.mubr.bf16.mxu0 0
      %5101 = vmatmul.mubr.bf16.gmra.mxu0 %v4986
      %v5102 = vpop.f32.mrf.mxu0
      %v5103 = vadd.f32 0.0, %v5102
      %v5104 = vpop.f32.mrf.mxu0
      %v5105 = vadd.f32 0.0, %v5104
      %v5106 = vpop.f32.mrf.mxu0
      %v5107 = vadd.f32 0.0, %v5106
      %v5108 = vpop.f32.mrf.mxu0
      %v5109 = vadd.f32 0.0, %v5108
      %5110 = vmatprep.mubr.bf16.mxu0 0
      %5111 = vmatmul.mubr.bf16.gmra.mxu0 %v4989
      %v5112 = vpop.f32.mrf.mxu0
      %v5113 = vadd.f32 0.0, %v5112
      %v5114 = vpop.f32.mrf.mxu0
      %v5115 = vadd.f32 0.0, %v5114
      %v5116 = vpop.f32.mrf.mxu0
      %v5117 = vadd.f32 0.0, %v5116
      %v5118 = vpop.f32.mrf.mxu0
      %v5119 = vadd.f32 0.0, %v5118
      %5120 = vmatprep.mubr.bf16.mxu0 0
      %5121 = vmatmul.mubr.bf16.gmra.mxu0 %v4992
      %v5122 = vpop.f32.mrf.mxu0
      %v5123 = vadd.f32 0.0, %v5122
      %v5124 = vpop.f32.mrf.mxu0
      %v5125 = vadd.f32 0.0, %v5124
      %v5126 = vpop.f32.mrf.mxu0
      %v5127 = vadd.f32 0.0, %v5126
      %v5128 = vpop.f32.mrf.mxu0
      %v5129 = vadd.f32 0.0, %v5128
      %5130 = vmatprep.mubr.bf16.mxu0 0
      %5131 = vmatmul.mubr.bf16.gmra.mxu0 %v4995
      %v5132 = vpop.f32.mrf.mxu0
      %v5133 = vadd.f32 0.0, %v5132
      %v5134 = vpop.f32.mrf.mxu0
      %v5135 = vadd.f32 0.0, %v5134
      %v5136 = vpop.f32.mrf.mxu0
      %v5137 = vadd.f32 0.0, %v5136
      %v5138 = vpop.f32.mrf.mxu0
      %v5139 = vadd.f32 0.0, %v5138
      %5140 = vmatprep.mubr.bf16.mxu0 0
      %5141 = vmatmul.mubr.bf16.gmra.mxu0 %v4998
      %v5142 = vpop.f32.mrf.mxu0
      %v5143 = vadd.f32 0.0, %v5142
      %v5144 = vpop.f32.mrf.mxu0
      %v5145 = vadd.f32 0.0, %v5144
      %v5146 = vpop.f32.mrf.mxu0
      %v5147 = vadd.f32 0.0, %v5146
      %v5148 = vpop.f32.mrf.mxu0
      %v5149 = vadd.f32 0.0, %v5148
      %5150 = vmatprep.mubr.bf16.mxu0 0
      %5151 = vmatmul.mubr.bf16.gmra.mxu0 %v5001
      %v5152 = vpop.f32.mrf.mxu0
      %v5153 = vadd.f32 0.0, %v5152
      %v5154 = vpop.f32.mrf.mxu0
      %v5155 = vadd.f32 0.0, %v5154
      %v5156 = vpop.f32.mrf.mxu0
      %v5157 = vadd.f32 0.0, %v5156
      %v5158 = vpop.f32.mrf.mxu0
      %v5159 = vadd.f32 0.0, %v5158
      %5160 = vmatprep.mubr.bf16.mxu0 0
      %5161 = vmatmul.mubr.bf16.gmra.mxu0 %v5004
      %v5162 = vpop.f32.mrf.mxu0
      %v5163 = vadd.f32 0.0, %v5162
      %v5164 = vpop.f32.mrf.mxu0
      %v5165 = vadd.f32 0.0, %v5164
      %v5166 = vpop.f32.mrf.mxu0
      %v5167 = vadd.f32 0.0, %v5166
      %v5168 = vpop.f32.mrf.mxu0
      %v5169 = vadd.f32 0.0, %v5168
      %5170 = vmatprep.mubr.bf16.mxu0 0
      %5171 = vmatmul.mubr.bf16.gmra.mxu0 %v5007
      %v5172 = vpop.f32.mrf.mxu0
      %v5173 = vadd.f32 0.0, %v5172
      %v5174 = vpop.f32.mrf.mxu0
      %v5175 = vadd.f32 0.0, %v5174
      %v5176 = vpop.f32.mrf.mxu0
      %v5177 = vadd.f32 0.0, %v5176
      %v5178 = vpop.f32.mrf.mxu0
      %v5179 = vadd.f32 0.0, %v5178
      %5180 = vmatprep.mubr.bf16.mxu0 0
      %5181 = vmatmul.mubr.bf16.gmra.mxu0 %v5010
      %v5182 = vpop.f32.mrf.mxu0
      %v5183 = vadd.f32 0.0, %v5182
      %v5184 = vpop.f32.mrf.mxu0
      %v5185 = vadd.f32 0.0, %v5184
      %v5186 = vpop.f32.mrf.mxu0
      %v5187 = vadd.f32 0.0, %v5186
      %v5188 = vpop.f32.mrf.mxu0
      %v5189 = vadd.f32 0.0, %v5188
      %5190 = vmatprep.mubr.bf16.mxu0 0
      %5191 = vmatmul.mubr.bf16.gmra.mxu0 %v5013
      %v5192 = vpop.f32.mrf.mxu0
      %v5193 = vadd.f32 0.0, %v5192
      %v5194 = vpop.f32.mrf.mxu0
      %v5195 = vadd.f32 0.0, %v5194
      %v5196 = vpop.f32.mrf.mxu0
      %v5197 = vadd.f32 0.0, %v5196
      %v5198 = vpop.f32.mrf.mxu0
      %v5199 = vadd.f32 0.0, %v5198
      %5200 = vmatprep.mubr.bf16.mxu0 0
      %5201 = vmatmul.mubr.bf16.gmra.mxu0 %v5016
      %v5202 = vpop.f32.mrf.mxu0
      %v5203 = vadd.f32 0.0, %v5202
      %v5204 = vpop.f32.mrf.mxu0
      %v5205 = vadd.f32 0.0, %v5204
      %v5206 = vpop.f32.mrf.mxu0
      %v5207 = vadd.f32 0.0, %v5206
      %v5208 = vpop.f32.mrf.mxu0
      %v5209 = vadd.f32 0.0, %v5208
      %5210 = vdwg.mxu0
      %v5211 = vadd.f32 %v4692, %v5053
      %v5212 = vadd.f32 %v4693, %v5055
      %v5213 = vadd.f32 %v4694, %v5057
      %v5214 = vadd.f32 %v4695, %v5059
      %v5215 = vadd.f32 %v4696, %v5063
      %v5216 = vadd.f32 %v4697, %v5065
      %v5217 = vadd.f32 %v4698, %v5067
      %v5218 = vadd.f32 %v4699, %v5069
      %v5219 = vadd.f32 %v4700, %v5073
      %v5220 = vadd.f32 %v4701, %v5075
      %v5221 = vadd.f32 %v4702, %v5077
      %v5222 = vadd.f32 %v4703, %v5079
      %v5223 = vadd.f32 %v4704, %v5083
      %v5224 = vadd.f32 %v4705, %v5085
      %v5225 = vadd.f32 %v4706, %v5087
      %v5226 = vadd.f32 %v4707, %v5089
      %v5227 = vadd.f32 %v4708, %v5093
      %v5228 = vadd.f32 %v4709, %v5095
      %v5229 = vadd.f32 %v4710, %v5097
      %v5230 = vadd.f32 %v4711, %v5099
      %v5231 = vadd.f32 %v4712, %v5103
      %v5232 = vadd.f32 %v4713, %v5105
      %v5233 = vadd.f32 %v4714, %v5107
      %v5234 = vadd.f32 %v4715, %v5109
      %v5235 = vadd.f32 %v4716, %v5113
      %v5236 = vadd.f32 %v4717, %v5115
      %v5237 = vadd.f32 %v4718, %v5117
      %v5238 = vadd.f32 %v4719, %v5119
      %v5239 = vadd.f32 %v4720, %v5123
      %v5240 = vadd.f32 %v4721, %v5125
      %v5241 = vadd.f32 %v4722, %v5127
      %v5242 = vadd.f32 %v4723, %v5129
      %v5243 = vadd.f32 %v4724, %v5133
      %v5244 = vadd.f32 %v4725, %v5135
      %v5245 = vadd.f32 %v4726, %v5137
      %v5246 = vadd.f32 %v4727, %v5139
      %v5247 = vadd.f32 %v4728, %v5143
      %v5248 = vadd.f32 %v4729, %v5145
      %v5249 = vadd.f32 %v4730, %v5147
      %v5250 = vadd.f32 %v4731, %v5149
      %v5251 = vadd.f32 %v4732, %v5153
      %v5252 = vadd.f32 %v4733, %v5155
      %v5253 = vadd.f32 %v4734, %v5157
      %v5254 = vadd.f32 %v4735, %v5159
      %v5255 = vadd.f32 %v4736, %v5163
      %v5256 = vadd.f32 %v4737, %v5165
      %v5257 = vadd.f32 %v4738, %v5167
      %v5258 = vadd.f32 %v4739, %v5169
      %v5259 = vadd.f32 %v4740, %v5173
      %v5260 = vadd.f32 %v4741, %v5175
      %v5261 = vadd.f32 %v4742, %v5177
      %v5262 = vadd.f32 %v4743, %v5179
      %v5263 = vadd.f32 %v4744, %v5183
      %v5264 = vadd.f32 %v4745, %v5185
      %v5265 = vadd.f32 %v4746, %v5187
      %v5266 = vadd.f32 %v4747, %v5189
      %v5267 = vadd.f32 %v4748, %v5193
      %v5268 = vadd.f32 %v4749, %v5195
      %v5269 = vadd.f32 %v4750, %v5197
      %v5270 = vadd.f32 %v4751, %v5199
      %v5271 = vadd.f32 %v4752, %v5203
      %v5272 = vadd.f32 %v4753, %v5205
      %v5273 = vadd.f32 %v4754, %v5207
      %v5274 = vadd.f32 %v4755, %v5209
      %v5275 = vrot.slane %v652, 5
      %v5276 = vrot.slane %v653, 5
      %v5279 = vmul.f32 %v652, %v5275
      %v5280 = vmul.f32 %v653, %v5276
      %v5281 = vpack.c.bf16 %v5279, %v5279
      %v5282 = vpack.c.bf16 %v5280, %v5280
      %5283 = vrot.lane.b32.xlu0 %v2327, 121
      %v5284 = vpop.permute.xlu0 %5283
      %5285 = vrot.lane.b32.xlu0 %v2328, 121
      %v5286 = vpop.permute.xlu0 %5285
      %5287 = vrot.lane.b32.xlu0 %v2329, 121
      %v5288 = vpop.permute.xlu0 %5287
      %5289 = vrot.lane.b32.xlu0 %v2330, 121
      %v5290 = vpop.permute.xlu0 %5289
      %5291 = vrot.lane.b32.xlu0 %v2331, 121
      %v5292 = vpop.permute.xlu0 %5291
      %5293 = vrot.lane.b32.xlu0 %v2332, 121
      %v5294 = vpop.permute.xlu0 %5293
      %5295 = vrot.lane.b32.xlu0 %v2333, 121
      %v5296 = vpop.permute.xlu0 %5295
      %5297 = vrot.lane.b32.xlu0 %v2334, 121
      %v5298 = vpop.permute.xlu0 %5297
      %5299 = vrot.lane.b32.xlu0 %v2335, 121
      %v5300 = vpop.permute.xlu0 %5299
      %5301 = vrot.lane.b32.xlu0 %v2336, 121
      %v5302 = vpop.permute.xlu0 %5301
      %5303 = vrot.lane.b32.xlu0 %v2337, 121
      %v5304 = vpop.permute.xlu0 %5303
      %5305 = vrot.lane.b32.xlu0 %v2338, 121
      %v5306 = vpop.permute.xlu0 %5305
      %5307 = vrot.lane.b32.xlu0 %v2339, 121
      %v5308 = vpop.permute.xlu0 %5307
      %5309 = vrot.lane.b32.xlu0 %v2340, 121
      %v5310 = vpop.permute.xlu0 %5309
      %vm5311 = vcmask 990208
      %v5312 = vsel %vm5311, %v5284, %v5286
      %v5313 = vsel %vm5311, %v5288, %v5290
      %v5314 = vsel %vm5311, %v5292, %v5294
      %v5315 = vsel %vm5311, %v5296, %v5298
      %v5316 = vsel %vm5311, %v5300, %v5302
      %v5317 = vsel %vm5311, %v5304, %v5306
      %v5318 = vsel %vm5311, %v5308, %v5310
      %vm5326 = vcmask 990208
      %v5328 = vsel %vm5326, %v5286, 0
      %v5331 = vsel %vm5326, %v5290, 0
      %v5334 = vsel %vm5326, %v5294, 0
      %v5337 = vsel %vm5326, %v5298, 0
      %v5340 = vsel %vm5326, %v5302, 0
      %v5343 = vsel %vm5326, %v5306, 0
      %v5346 = vsel %vm5326, %v5310, 0
      %v5349 = vshrl.u32 %v5281, 16
      %v5350 = vpack.i.b16 %v5349, %v5349
      %v5352 = vlaneseq
      %v5353 = vshrl.u32 %v5352, 7
      %v5354 = vsub.s32 1, %v5353
      %v5355 = vrot.slane %v5350, %v5354
      %v5357 = vshrl.u32 %v5282, 16
      %v5358 = vpack.i.b16 %v5357, %v5357
      %v5360 = vlaneseq
      %v5361 = vshrl.u32 %v5360, 7
      %v5362 = vsub.s32 1, %v5361
      %v5363 = vrot.slane %v5358, %v5362
      %v5364 = vmul.bf16 %v5312, %v5355
      %v5365 = vmul.bf16 %v5328, %v5363
      %v5366 = vmul.bf16 %v5313, %v5355
      %v5367 = vmul.bf16 %v5331, %v5363
      %v5368 = vmul.bf16 %v5314, %v5355
      %v5369 = vmul.bf16 %v5334, %v5363
      %v5370 = vmul.bf16 %v5315, %v5355
      %v5371 = vmul.bf16 %v5337, %v5363
      %v5372 = vmul.bf16 %v5316, %v5355
      %v5373 = vmul.bf16 %v5340, %v5363
      %v5374 = vmul.bf16 %v5317, %v5355
      %v5375 = vmul.bf16 %v5343, %v5363
      %v5376 = vmul.bf16 %v5318, %v5355
      %v5377 = vmul.bf16 %v5346, %v5363
      %s5378 = scalar_lea.vmem %s5, 768
      %v5379 = vld [vmem:[%s5378] sm:$0xf]
      %v5380 = vld [vmem:[%s5378 + $0x4] sm:$0xf]
      %v5381 = vld [vmem:[%s5378 + $0x8] sm:$0xf]
      %v5382 = vld [vmem:[%s5378 + $0xc] sm:$0xf]
      %v5383 = vld [vmem:[%s5378 + $0x10] sm:$0xf]
      %v5384 = vld [vmem:[%s5378 + $0x14] sm:$0xf]
      %v5385 = vld [vmem:[%s5378 + $0x18] sm:$0xf]
      %v5386 = vld [vmem:[%s5378 + $0x1c] sm:$0xf]
      %v5387 = vld [vmem:[%s5378 + $0x20] sm:$0xf]
      %v5388 = vld [vmem:[%s5378 + $0x24] sm:$0xf]
      %v5389 = vld [vmem:[%s5378 + $0x28] sm:$0xf]
      %v5390 = vld [vmem:[%s5378 + $0x2c] sm:$0xf]
      %v5391 = vld [vmem:[%s5378 + $0x30] sm:$0xf]
      %v5392 = vld [vmem:[%s5378 + $0x34] sm:$0xf]
      %v5393 = vld [vmem:[%s5378 + $0x38] sm:$0xf]
      %v5394 = vld [vmem:[%s5378 + $0x3c] sm:$0xf]
      %v5395 = vld [vmem:[%s5378 + $0x40] sm:$0xf]
      %v5396 = vld [vmem:[%s5378 + $0x44] sm:$0xf]
      %v5397 = vld [vmem:[%s5378 + $0x48] sm:$0xf]
      %v5398 = vld [vmem:[%s5378 + $0x4c] sm:$0xf]
      %v5399 = vld [vmem:[%s5378 + $0x50] sm:$0xf]
      %v5400 = vld [vmem:[%s5378 + $0x54] sm:$0xf]
      %v5401 = vld [vmem:[%s5378 + $0x58] sm:$0xf]
      %v5402 = vld [vmem:[%s5378 + $0x5c] sm:$0xf]
      %v5403 = vld [vmem:[%s5378 + $0x60] sm:$0xf]
      %v5404 = vld [vmem:[%s5378 + $0x64] sm:$0xf]
      %v5405 = vld [vmem:[%s5378 + $0x68] sm:$0xf]
      %v5406 = vld [vmem:[%s5378 + $0x6c] sm:$0xf]
      %v5407 = vld [vmem:[%s5378 + $0x70] sm:$0xf]
      %v5408 = vld [vmem:[%s5378 + $0x74] sm:$0xf]
      %v5409 = vld [vmem:[%s5378 + $0x78] sm:$0xf]
      %v5410 = vld [vmem:[%s5378 + $0x7c] sm:$0xf]
      %v5443 = vunpack.c.l.b16 %v5379
      %v5444 = vunpack.c.l.b16 %v5380
      %v5445 = vunpack.c.l.b16 %v5381
      %v5446 = vunpack.c.l.b16 %v5382
      %v5447 = vunpack.c.l.b16 %v5383
      %v5448 = vunpack.c.l.b16 %v5384
      %v5449 = vunpack.c.l.b16 %v5385
      %v5450 = vunpack.c.l.b16 %v5386
      %v5451 = vunpack.c.l.b16 %v5387
      %v5452 = vunpack.c.l.b16 %v5388
      %v5453 = vunpack.c.l.b16 %v5389
      %v5454 = vunpack.c.l.b16 %v5390
      %v5455 = vunpack.c.l.b16 %v5391
      %v5456 = vunpack.c.l.b16 %v5392
      %v5457 = vunpack.c.l.b16 %v5393
      %v5458 = vunpack.c.l.b16 %v5394
      %v5459 = vunpack.c.l.b16 %v5395
      %v5460 = vunpack.c.l.b16 %v5396
      %v5461 = vunpack.c.l.b16 %v5397
      %v5462 = vunpack.c.l.b16 %v5398
      %v5463 = vunpack.c.l.b16 %v5399
      %v5464 = vunpack.c.l.b16 %v5400
      %v5465 = vunpack.c.l.b16 %v5401
      %v5466 = vunpack.c.l.b16 %v5402
      %v5467 = vunpack.c.l.b16 %v5403
      %v5468 = vunpack.c.l.b16 %v5404
      %v5469 = vunpack.c.l.b16 %v5405
      %v5470 = vunpack.c.l.b16 %v5406
      %v5471 = vunpack.c.l.b16 %v5407
      %v5472 = vunpack.c.l.b16 %v5408
      %v5473 = vunpack.c.l.b16 %v5409
      %v5474 = vunpack.c.l.b16 %v5410
      %v5475 = vpack.c.b16 %v5444, %v5443
      %v5476 = vpack.c.b16 %v5446, %v5445
      %v5477 = vpack.c.b16 %v5448, %v5447
      %v5478 = vpack.c.b16 %v5450, %v5449
      %v5479 = vpack.c.b16 %v5452, %v5451
      %v5480 = vpack.c.b16 %v5454, %v5453
      %v5481 = vpack.c.b16 %v5456, %v5455
      %v5482 = vpack.c.b16 %v5458, %v5457
      %v5483 = vpack.c.b16 %v5460, %v5459
      %v5484 = vpack.c.b16 %v5462, %v5461
      %v5485 = vpack.c.b16 %v5464, %v5463
      %v5486 = vpack.c.b16 %v5466, %v5465
      %v5487 = vpack.c.b16 %v5468, %v5467
      %v5488 = vpack.c.b16 %v5470, %v5469
      %v5489 = vpack.c.b16 %v5472, %v5471
      %v5490 = vpack.c.b16 %v5474, %v5473
      %v5492 = vsel %vm2705, %v5475, 0
      %v5495 = vsel %vm2705, %v5476, 0
      %v5498 = vsel %vm2705, %v5477, 0
      %v5501 = vsel %vm2705, %v5478, 0
      %v5504 = vsel %vm2705, %v5479, 0
      %v5507 = vsel %vm2705, %v5480, 0
      %v5510 = vsel %vm2705, %v5481, 0
      %v5513 = vsel %vm2705, %v5482, 0
      %v5516 = vsel %vm2705, %v5483, 0
      %v5519 = vsel %vm2705, %v5484, 0
      %v5522 = vsel %vm2705, %v5485, 0
      %v5525 = vsel %vm2705, %v5486, 0
      %v5528 = vsel %vm2705, %v5487, 0
      %v5531 = vsel %vm2705, %v5488, 0
      %v5534 = vsel %vm2705, %v5489, 0
      %v5537 = vsel %vm2705, %v5490, 0
      %5539 = vmatprep.subr.bf16.mxu0 0
      %5540 = vmatpush1.bf16.msra.mxu0 0
      %5541 = vmatprep.subr.bf16.mxu0 %v5377
      %5542 = vmatpush1.bf16.msra.mxu0 %v5376
      %5543 = vmatprep.subr.bf16.mxu0 %v5375
      %5544 = vmatpush1.bf16.msra.mxu0 %v5374
      %5545 = vmatprep.subr.bf16.mxu0 %v5373
      %5546 = vmatpush1.bf16.msra.mxu0 %v5372
      %5547 = vmatprep.subr.bf16.mxu0 %v5371
      %5548 = vmatpush1.bf16.msra.mxu0 %v5370
      %5549 = vmatprep.subr.bf16.mxu0 %v5369
      %5550 = vmatpush1.bf16.msra.mxu0 %v5368
      %5551 = vmatprep.subr.bf16.mxu0 %v5367
      %5552 = vmatpush1.bf16.msra.mxu0 %v5366
      %5553 = vmatprep.subr.bf16.mxu0 %v5365
      %5554 = vmatpush1.bf16.msra.mxu0 %v5364
      %5555 = vmatprep.subr.bf16.mxu0 0
      %5556 = vmatpush2.bf16.msra.mxu0 0
      %5557 = vmatprep.subr.bf16.mxu0 0
      %5558 = vmatpush2.bf16.msra.mxu0 0
      %5559 = vmatprep.subr.bf16.mxu0 0
      %5560 = vmatpush2.bf16.msra.mxu0 0
      %5561 = vmatprep.subr.bf16.mxu0 0
      %5562 = vmatpush2.bf16.msra.mxu0 0
      %5563 = vmatprep.subr.bf16.mxu0 0
      %5564 = vmatpush2.bf16.msra.mxu0 0
      %5565 = vmatprep.subr.bf16.mxu0 0
      %5566 = vmatpush2.bf16.msra.mxu0 0
      %5567 = vmatprep.subr.bf16.mxu0 0
      %5568 = vmatpush2.bf16.msra.mxu0 0
      %5569 = vmatprep.subr.bf16.mxu0 0
      %5570 = vmatpush2.bf16.msra.mxu0 0
      %5571 = vmatprep.mubr.bf16.mxu0 0
      %5572 = vmatmul.mubr.bf16.gmra.mxu0 %v5492
      %v5573 = vpop.f32.mrf.mxu0
      %v5574 = vadd.f32 0.0, %v5573
      %v5575 = vpop.f32.mrf.mxu0
      %v5576 = vadd.f32 0.0, %v5575
      %v5577 = vpop.f32.mrf.mxu0
      %v5578 = vadd.f32 0.0, %v5577
      %v5579 = vpop.f32.mrf.mxu0
      %v5580 = vadd.f32 0.0, %v5579
      %5581 = vmatprep.mubr.bf16.mxu0 0
      %5582 = vmatmul.mubr.bf16.gmra.mxu0 %v5495
      %v5583 = vpop.f32.mrf.mxu0
      %v5584 = vadd.f32 0.0, %v5583
      %v5585 = vpop.f32.mrf.mxu0
      %v5586 = vadd.f32 0.0, %v5585
      %v5587 = vpop.f32.mrf.mxu0
      %v5588 = vadd.f32 0.0, %v5587
      %v5589 = vpop.f32.mrf.mxu0
      %v5590 = vadd.f32 0.0, %v5589
      %5591 = vmatprep.mubr.bf16.mxu0 0
      %5592 = vmatmul.mubr.bf16.gmra.mxu0 %v5498
      %v5593 = vpop.f32.mrf.mxu0
      %v5594 = vadd.f32 0.0, %v5593
      %v5595 = vpop.f32.mrf.mxu0
      %v5596 = vadd.f32 0.0, %v5595
      %v5597 = vpop.f32.mrf.mxu0
      %v5598 = vadd.f32 0.0, %v5597
      %v5599 = vpop.f32.mrf.mxu0
      %v5600 = vadd.f32 0.0, %v5599
      %5601 = vmatprep.mubr.bf16.mxu0 0
      %5602 = vmatmul.mubr.bf16.gmra.mxu0 %v5501
      %v5603 = vpop.f32.mrf.mxu0
      %v5604 = vadd.f32 0.0, %v5603
      %v5605 = vpop.f32.mrf.mxu0
      %v5606 = vadd.f32 0.0, %v5605
      %v5607 = vpop.f32.mrf.mxu0
      %v5608 = vadd.f32 0.0, %v5607
      %v5609 = vpop.f32.mrf.mxu0
      %v5610 = vadd.f32 0.0, %v5609
      %5611 = vmatprep.mubr.bf16.mxu0 0
      %5612 = vmatmul.mubr.bf16.gmra.mxu0 %v5504
      %v5613 = vpop.f32.mrf.mxu0
      %v5614 = vadd.f32 0.0, %v5613
      %v5615 = vpop.f32.mrf.mxu0
      %v5616 = vadd.f32 0.0, %v5615
      %v5617 = vpop.f32.mrf.mxu0
      %v5618 = vadd.f32 0.0, %v5617
      %v5619 = vpop.f32.mrf.mxu0
      %v5620 = vadd.f32 0.0, %v5619
      %5621 = vmatprep.mubr.bf16.mxu0 0
      %5622 = vmatmul.mubr.bf16.gmra.mxu0 %v5507
      %v5623 = vpop.f32.mrf.mxu0
      %v5624 = vadd.f32 0.0, %v5623
      %v5625 = vpop.f32.mrf.mxu0
      %v5626 = vadd.f32 0.0, %v5625
      %v5627 = vpop.f32.mrf.mxu0
      %v5628 = vadd.f32 0.0, %v5627
      %v5629 = vpop.f32.mrf.mxu0
      %v5630 = vadd.f32 0.0, %v5629
      %5631 = vmatprep.mubr.bf16.mxu0 0
      %5632 = vmatmul.mubr.bf16.gmra.mxu0 %v5510
      %v5633 = vpop.f32.mrf.mxu0
      %v5634 = vadd.f32 0.0, %v5633
      %v5635 = vpop.f32.mrf.mxu0
      %v5636 = vadd.f32 0.0, %v5635
      %v5637 = vpop.f32.mrf.mxu0
      %v5638 = vadd.f32 0.0, %v5637
      %v5639 = vpop.f32.mrf.mxu0
      %v5640 = vadd.f32 0.0, %v5639
      %5641 = vmatprep.mubr.bf16.mxu0 0
      %5642 = vmatmul.mubr.bf16.gmra.mxu0 %v5513
      %v5643 = vpop.f32.mrf.mxu0
      %v5644 = vadd.f32 0.0, %v5643
      %v5645 = vpop.f32.mrf.mxu0
      %v5646 = vadd.f32 0.0, %v5645
      %v5647 = vpop.f32.mrf.mxu0
      %v5648 = vadd.f32 0.0, %v5647
      %v5649 = vpop.f32.mrf.mxu0
      %v5650 = vadd.f32 0.0, %v5649
      %5651 = vmatprep.mubr.bf16.mxu0 0
      %5652 = vmatmul.mubr.bf16.gmra.mxu0 %v5516
      %v5653 = vpop.f32.mrf.mxu0
      %v5654 = vadd.f32 0.0, %v5653
      %v5655 = vpop.f32.mrf.mxu0
      %v5656 = vadd.f32 0.0, %v5655
      %v5657 = vpop.f32.mrf.mxu0
      %v5658 = vadd.f32 0.0, %v5657
      %v5659 = vpop.f32.mrf.mxu0
      %v5660 = vadd.f32 0.0, %v5659
      %5661 = vmatprep.mubr.bf16.mxu0 0
      %5662 = vmatmul.mubr.bf16.gmra.mxu0 %v5519
      %v5663 = vpop.f32.mrf.mxu0
      %v5664 = vadd.f32 0.0, %v5663
      %v5665 = vpop.f32.mrf.mxu0
      %v5666 = vadd.f32 0.0, %v5665
      %v5667 = vpop.f32.mrf.mxu0
      %v5668 = vadd.f32 0.0, %v5667
      %v5669 = vpop.f32.mrf.mxu0
      %v5670 = vadd.f32 0.0, %v5669
      %5671 = vmatprep.mubr.bf16.mxu0 0
      %5672 = vmatmul.mubr.bf16.gmra.mxu0 %v5522
      %v5673 = vpop.f32.mrf.mxu0
      %v5674 = vadd.f32 0.0, %v5673
      %v5675 = vpop.f32.mrf.mxu0
      %v5676 = vadd.f32 0.0, %v5675
      %v5677 = vpop.f32.mrf.mxu0
      %v5678 = vadd.f32 0.0, %v5677
      %v5679 = vpop.f32.mrf.mxu0
      %v5680 = vadd.f32 0.0, %v5679
      %5681 = vmatprep.mubr.bf16.mxu0 0
      %5682 = vmatmul.mubr.bf16.gmra.mxu0 %v5525
      %v5683 = vpop.f32.mrf.mxu0
      %v5684 = vadd.f32 0.0, %v5683
      %v5685 = vpop.f32.mrf.mxu0
      %v5686 = vadd.f32 0.0, %v5685
      %v5687 = vpop.f32.mrf.mxu0
      %v5688 = vadd.f32 0.0, %v5687
      %v5689 = vpop.f32.mrf.mxu0
      %v5690 = vadd.f32 0.0, %v5689
      %5691 = vmatprep.mubr.bf16.mxu0 0
      %5692 = vmatmul.mubr.bf16.gmra.mxu0 %v5528
      %v5693 = vpop.f32.mrf.mxu0
      %v5694 = vadd.f32 0.0, %v5693
      %v5695 = vpop.f32.mrf.mxu0
      %v5696 = vadd.f32 0.0, %v5695
      %v5697 = vpop.f32.mrf.mxu0
      %v5698 = vadd.f32 0.0, %v5697
      %v5699 = vpop.f32.mrf.mxu0
      %v5700 = vadd.f32 0.0, %v5699
      %5701 = vmatprep.mubr.bf16.mxu0 0
      %5702 = vmatmul.mubr.bf16.gmra.mxu0 %v5531
      %v5703 = vpop.f32.mrf.mxu0
      %v5704 = vadd.f32 0.0, %v5703
      %v5705 = vpop.f32.mrf.mxu0
      %v5706 = vadd.f32 0.0, %v5705
      %v5707 = vpop.f32.mrf.mxu0
      %v5708 = vadd.f32 0.0, %v5707
      %v5709 = vpop.f32.mrf.mxu0
      %v5710 = vadd.f32 0.0, %v5709
      %5711 = vmatprep.mubr.bf16.mxu0 0
      %5712 = vmatmul.mubr.bf16.gmra.mxu0 %v5534
      %v5713 = vpop.f32.mrf.mxu0
      %v5714 = vadd.f32 0.0, %v5713
      %v5715 = vpop.f32.mrf.mxu0
      %v5716 = vadd.f32 0.0, %v5715
      %v5717 = vpop.f32.mrf.mxu0
      %v5718 = vadd.f32 0.0, %v5717
      %v5719 = vpop.f32.mrf.mxu0
      %v5720 = vadd.f32 0.0, %v5719
      %5721 = vmatprep.mubr.bf16.mxu0 0
      %5722 = vmatmul.mubr.bf16.gmra.mxu0 %v5537
      %v5723 = vpop.f32.mrf.mxu0
      %v5724 = vadd.f32 0.0, %v5723
      %v5725 = vpop.f32.mrf.mxu0
      %v5726 = vadd.f32 0.0, %v5725
      %v5727 = vpop.f32.mrf.mxu0
      %v5728 = vadd.f32 0.0, %v5727
      %v5729 = vpop.f32.mrf.mxu0
      %v5730 = vadd.f32 0.0, %v5729
      %5731 = vdwg.mxu0
      %v5732 = vadd.f32 %v5211, %v5574
      %v5733 = vadd.f32 %v5212, %v5576
      %v5734 = vadd.f32 %v5213, %v5578
      %v5735 = vadd.f32 %v5214, %v5580
      %v5736 = vadd.f32 %v5215, %v5584
      %v5737 = vadd.f32 %v5216, %v5586
      %v5738 = vadd.f32 %v5217, %v5588
      %v5739 = vadd.f32 %v5218, %v5590
      %v5740 = vadd.f32 %v5219, %v5594
      %v5741 = vadd.f32 %v5220, %v5596
      %v5742 = vadd.f32 %v5221, %v5598
      %v5743 = vadd.f32 %v5222, %v5600
      %v5744 = vadd.f32 %v5223, %v5604
      %v5745 = vadd.f32 %v5224, %v5606
      %v5746 = vadd.f32 %v5225, %v5608
      %v5747 = vadd.f32 %v5226, %v5610
      %v5748 = vadd.f32 %v5227, %v5614
      %v5749 = vadd.f32 %v5228, %v5616
      %v5750 = vadd.f32 %v5229, %v5618
      %v5751 = vadd.f32 %v5230, %v5620
      %v5752 = vadd.f32 %v5231, %v5624
      %v5753 = vadd.f32 %v5232, %v5626
      %v5754 = vadd.f32 %v5233, %v5628
      %v5755 = vadd.f32 %v5234, %v5630
      %v5756 = vadd.f32 %v5235, %v5634
      %v5757 = vadd.f32 %v5236, %v5636
      %v5758 = vadd.f32 %v5237, %v5638
      %v5759 = vadd.f32 %v5238, %v5640
      %v5760 = vadd.f32 %v5239, %v5644
      %v5761 = vadd.f32 %v5240, %v5646
      %v5762 = vadd.f32 %v5241, %v5648
      %v5763 = vadd.f32 %v5242, %v5650
      %v5764 = vadd.f32 %v5243, %v5654
      %v5765 = vadd.f32 %v5244, %v5656
      %v5766 = vadd.f32 %v5245, %v5658
      %v5767 = vadd.f32 %v5246, %v5660
      %v5768 = vadd.f32 %v5247, %v5664
      %v5769 = vadd.f32 %v5248, %v5666
      %v5770 = vadd.f32 %v5249, %v5668
      %v5771 = vadd.f32 %v5250, %v5670
      %v5772 = vadd.f32 %v5251, %v5674
      %v5773 = vadd.f32 %v5252, %v5676
      %v5774 = vadd.f32 %v5253, %v5678
      %v5775 = vadd.f32 %v5254, %v5680
      %v5776 = vadd.f32 %v5255, %v5684
      %v5777 = vadd.f32 %v5256, %v5686
      %v5778 = vadd.f32 %v5257, %v5688
      %v5779 = vadd.f32 %v5258, %v5690
      %v5780 = vadd.f32 %v5259, %v5694
      %v5781 = vadd.f32 %v5260, %v5696
      %v5782 = vadd.f32 %v5261, %v5698
      %v5783 = vadd.f32 %v5262, %v5700
      %v5784 = vadd.f32 %v5263, %v5704
      %v5785 = vadd.f32 %v5264, %v5706
      %v5786 = vadd.f32 %v5265, %v5708
      %v5787 = vadd.f32 %v5266, %v5710
      %v5788 = vadd.f32 %v5267, %v5714
      %v5789 = vadd.f32 %v5268, %v5716
      %v5790 = vadd.f32 %v5269, %v5718
      %v5791 = vadd.f32 %v5270, %v5720
      %v5792 = vadd.f32 %v5271, %v5724
      %v5793 = vadd.f32 %v5272, %v5726
      %v5794 = vadd.f32 %v5273, %v5728
      %v5795 = vadd.f32 %v5274, %v5730
      %5796 = vrot.lane.b32.xlu0 %v2327, 120
      %v5797 = vpop.permute.xlu0 %5796
      %5798 = vrot.lane.b32.xlu0 %v2328, 120
      %v5799 = vpop.permute.xlu0 %5798
      %5800 = vrot.lane.b32.xlu0 %v2329, 120
      %v5801 = vpop.permute.xlu0 %5800
      %5802 = vrot.lane.b32.xlu0 %v2330, 120
      %v5803 = vpop.permute.xlu0 %5802
      %5804 = vrot.lane.b32.xlu0 %v2331, 120
      %v5805 = vpop.permute.xlu0 %5804
      %5806 = vrot.lane.b32.xlu0 %v2332, 120
      %v5807 = vpop.permute.xlu0 %5806
      %5808 = vrot.lane.b32.xlu0 %v2333, 120
      %v5809 = vpop.permute.xlu0 %5808
      %5810 = vrot.lane.b32.xlu0 %v2334, 120
      %v5811 = vpop.permute.xlu0 %5810
      %5812 = vrot.lane.b32.xlu0 %v2335, 120
      %v5813 = vpop.permute.xlu0 %5812
      %5814 = vrot.lane.b32.xlu0 %v2336, 120
      %v5815 = vpop.permute.xlu0 %5814
      %5816 = vrot.lane.b32.xlu0 %v2337, 120
      %v5817 = vpop.permute.xlu0 %5816
      %5818 = vrot.lane.b32.xlu0 %v2338, 120
      %v5819 = vpop.permute.xlu0 %5818
      %5820 = vrot.lane.b32.xlu0 %v2339, 120
      %v5821 = vpop.permute.xlu0 %5820
      %5822 = vrot.lane.b32.xlu0 %v2340, 120
      %v5823 = vpop.permute.xlu0 %5822
      %vm5824 = vcmask 982016
      %v5825 = vsel %vm5824, %v5797, %v5799
      %v5826 = vsel %vm5824, %v5801, %v5803
      %v5827 = vsel %vm5824, %v5805, %v5807
      %v5828 = vsel %vm5824, %v5809, %v5811
      %v5829 = vsel %vm5824, %v5813, %v5815
      %v5830 = vsel %vm5824, %v5817, %v5819
      %v5831 = vsel %vm5824, %v5821, %v5823
      %vm5839 = vcmask 982016
      %v5841 = vsel %vm5839, %v5799, 0
      %v5844 = vsel %vm5839, %v5803, 0
      %v5847 = vsel %vm5839, %v5807, 0
      %v5850 = vsel %vm5839, %v5811, 0
      %v5853 = vsel %vm5839, %v5815, 0
      %v5856 = vsel %vm5839, %v5819, 0
      %v5859 = vsel %vm5839, %v5823, 0
      %v5861 = vshrl.u32 %v4762, 16
      %v5862 = vpack.i.b16 %v5861, %v5861
      %v5864 = vlaneseq
      %v5865 = vshrl.u32 %v5864, 7
      %v5866 = vsub.s32 1, %v5865
      %v5867 = vrot.slane %v5862, %v5866
      %v5868 = vshrl.u32 %v4763, 16
      %v5869 = vpack.i.b16 %v5868, %v5868
      %v5871 = vlaneseq
      %v5872 = vshrl.u32 %v5871, 7
      %v5873 = vsub.s32 1, %v5872
      %v5874 = vrot.slane %v5869, %v5873
      %v5875 = vmul.bf16 %v5825, %v5867
      %v5876 = vmul.bf16 %v5841, %v5874
      %v5877 = vmul.bf16 %v5826, %v5867
      %v5878 = vmul.bf16 %v5844, %v5874
      %v5879 = vmul.bf16 %v5827, %v5867
      %v5880 = vmul.bf16 %v5847, %v5874
      %v5881 = vmul.bf16 %v5828, %v5867
      %v5882 = vmul.bf16 %v5850, %v5874
      %v5883 = vmul.bf16 %v5829, %v5867
      %v5884 = vmul.bf16 %v5853, %v5874
      %v5885 = vmul.bf16 %v5830, %v5867
      %v5886 = vmul.bf16 %v5856, %v5874
      %v5887 = vmul.bf16 %v5831, %v5867
      %v5888 = vmul.bf16 %v5859, %v5874
      %s5889 = scalar_lea.vmem %s5, 896
      %v5890 = vld [vmem:[%s5889] sm:$0xf]
      %v5891 = vld [vmem:[%s5889 + $0x4] sm:$0xf]
      %v5892 = vld [vmem:[%s5889 + $0x8] sm:$0xf]
      %v5893 = vld [vmem:[%s5889 + $0xc] sm:$0xf]
      %v5894 = vld [vmem:[%s5889 + $0x10] sm:$0xf]
      %v5895 = vld [vmem:[%s5889 + $0x14] sm:$0xf]
      %v5896 = vld [vmem:[%s5889 + $0x18] sm:$0xf]
      %v5897 = vld [vmem:[%s5889 + $0x1c] sm:$0xf]
      %v5898 = vld [vmem:[%s5889 + $0x20] sm:$0xf]
      %v5899 = vld [vmem:[%s5889 + $0x24] sm:$0xf]
      %v5900 = vld [vmem:[%s5889 + $0x28] sm:$0xf]
      %v5901 = vld [vmem:[%s5889 + $0x2c] sm:$0xf]
      %v5902 = vld [vmem:[%s5889 + $0x30] sm:$0xf]
      %v5903 = vld [vmem:[%s5889 + $0x34] sm:$0xf]
      %v5904 = vld [vmem:[%s5889 + $0x38] sm:$0xf]
      %v5905 = vld [vmem:[%s5889 + $0x3c] sm:$0xf]
      %v5906 = vld [vmem:[%s5889 + $0x40] sm:$0xf]
      %v5907 = vld [vmem:[%s5889 + $0x44] sm:$0xf]
      %v5908 = vld [vmem:[%s5889 + $0x48] sm:$0xf]
      %v5909 = vld [vmem:[%s5889 + $0x4c] sm:$0xf]
      %v5910 = vld [vmem:[%s5889 + $0x50] sm:$0xf]
      %v5911 = vld [vmem:[%s5889 + $0x54] sm:$0xf]
      %v5912 = vld [vmem:[%s5889 + $0x58] sm:$0xf]
      %v5913 = vld [vmem:[%s5889 + $0x5c] sm:$0xf]
      %v5914 = vld [vmem:[%s5889 + $0x60] sm:$0xf]
      %v5915 = vld [vmem:[%s5889 + $0x64] sm:$0xf]
      %v5916 = vld [vmem:[%s5889 + $0x68] sm:$0xf]
      %v5917 = vld [vmem:[%s5889 + $0x6c] sm:$0xf]
      %v5918 = vld [vmem:[%s5889 + $0x70] sm:$0xf]
      %v5919 = vld [vmem:[%s5889 + $0x74] sm:$0xf]
      %v5920 = vld [vmem:[%s5889 + $0x78] sm:$0xf]
      %v5921 = vld [vmem:[%s5889 + $0x7c] sm:$0xf]
      %v5954 = vunpack.c.l.b16 %v5890
      %v5955 = vunpack.c.l.b16 %v5891
      %v5956 = vunpack.c.l.b16 %v5892
      %v5957 = vunpack.c.l.b16 %v5893
      %v5958 = vunpack.c.l.b16 %v5894
      %v5959 = vunpack.c.l.b16 %v5895
      %v5960 = vunpack.c.l.b16 %v5896
      %v5961 = vunpack.c.l.b16 %v5897
      %v5962 = vunpack.c.l.b16 %v5898
      %v5963 = vunpack.c.l.b16 %v5899
      %v5964 = vunpack.c.l.b16 %v5900
      %v5965 = vunpack.c.l.b16 %v5901
      %v5966 = vunpack.c.l.b16 %v5902
      %v5967 = vunpack.c.l.b16 %v5903
      %v5968 = vunpack.c.l.b16 %v5904
      %v5969 = vunpack.c.l.b16 %v5905
      %v5970 = vunpack.c.l.b16 %v5906
      %v5971 = vunpack.c.l.b16 %v5907
      %v5972 = vunpack.c.l.b16 %v5908
      %v5973 = vunpack.c.l.b16 %v5909
      %v5974 = vunpack.c.l.b16 %v5910
      %v5975 = vunpack.c.l.b16 %v5911
      %v5976 = vunpack.c.l.b16 %v5912
      %v5977 = vunpack.c.l.b16 %v5913
      %v5978 = vunpack.c.l.b16 %v5914
      %v5979 = vunpack.c.l.b16 %v5915
      %v5980 = vunpack.c.l.b16 %v5916
      %v5981 = vunpack.c.l.b16 %v5917
      %v5982 = vunpack.c.l.b16 %v5918
      %v5983 = vunpack.c.l.b16 %v5919
      %v5984 = vunpack.c.l.b16 %v5920
      %v5985 = vunpack.c.l.b16 %v5921
      %v5986 = vpack.c.b16 %v5955, %v5954
      %v5987 = vpack.c.b16 %v5957, %v5956
      %v5988 = vpack.c.b16 %v5959, %v5958
      %v5989 = vpack.c.b16 %v5961, %v5960
      %v5990 = vpack.c.b16 %v5963, %v5962
      %v5991 = vpack.c.b16 %v5965, %v5964
      %v5992 = vpack.c.b16 %v5967, %v5966
      %v5993 = vpack.c.b16 %v5969, %v5968
      %v5994 = vpack.c.b16 %v5971, %v5970
      %v5995 = vpack.c.b16 %v5973, %v5972
      %v5996 = vpack.c.b16 %v5975, %v5974
      %v5997 = vpack.c.b16 %v5977, %v5976
      %v5998 = vpack.c.b16 %v5979, %v5978
      %v5999 = vpack.c.b16 %v5981, %v5980
      %v6000 = vpack.c.b16 %v5983, %v5982
      %v6001 = vpack.c.b16 %v5985, %v5984
      %v6003 = vsel %vm2705, %v5986, 0
      %v6006 = vsel %vm2705, %v5987, 0
      %v6009 = vsel %vm2705, %v5988, 0
      %v6012 = vsel %vm2705, %v5989, 0
      %v6015 = vsel %vm2705, %v5990, 0
      %v6018 = vsel %vm2705, %v5991, 0
      %v6021 = vsel %vm2705, %v5992, 0
      %v6024 = vsel %vm2705, %v5993, 0
      %v6027 = vsel %vm2705, %v5994, 0
      %v6030 = vsel %vm2705, %v5995, 0
      %v6033 = vsel %vm2705, %v5996, 0
      %v6036 = vsel %vm2705, %v5997, 0
      %v6039 = vsel %vm2705, %v5998, 0
      %v6042 = vsel %vm2705, %v5999, 0
      %v6045 = vsel %vm2705, %v6000, 0
      %v6048 = vsel %vm2705, %v6001, 0
      %6050 = vmatprep.subr.bf16.mxu0 0
      %6051 = vmatpush1.bf16.msra.mxu0 0
      %6052 = vmatprep.subr.bf16.mxu0 %v5888
      %6053 = vmatpush1.bf16.msra.mxu0 %v5887
      %6054 = vmatprep.subr.bf16.mxu0 %v5886
      %6055 = vmatpush1.bf16.msra.mxu0 %v5885
      %6056 = vmatprep.subr.bf16.mxu0 %v5884
      %6057 = vmatpush1.bf16.msra.mxu0 %v5883
      %6058 = vmatprep.subr.bf16.mxu0 %v5882
      %6059 = vmatpush1.bf16.msra.mxu0 %v5881
      %6060 = vmatprep.subr.bf16.mxu0 %v5880
      %6061 = vmatpush1.bf16.msra.mxu0 %v5879
      %6062 = vmatprep.subr.bf16.mxu0 %v5878
      %6063 = vmatpush1.bf16.msra.mxu0 %v5877
      %6064 = vmatprep.subr.bf16.mxu0 %v5876
      %6065 = vmatpush1.bf16.msra.mxu0 %v5875
      %6066 = vmatprep.subr.bf16.mxu0 0
      %6067 = vmatpush2.bf16.msra.mxu0 0
      %6068 = vmatprep.subr.bf16.mxu0 0
      %6069 = vmatpush2.bf16.msra.mxu0 0
      %6070 = vmatprep.subr.bf16.mxu0 0
      %6071 = vmatpush2.bf16.msra.mxu0 0
      %6072 = vmatprep.subr.bf16.mxu0 0
      %6073 = vmatpush2.bf16.msra.mxu0 0
      %6074 = vmatprep.subr.bf16.mxu0 0
      %6075 = vmatpush2.bf16.msra.mxu0 0
      %6076 = vmatprep.subr.bf16.mxu0 0
      %6077 = vmatpush2.bf16.msra.mxu0 0
      %6078 = vmatprep.subr.bf16.mxu0 0
      %6079 = vmatpush2.bf16.msra.mxu0 0
      %6080 = vmatprep.subr.bf16.mxu0 0
      %6081 = vmatpush2.bf16.msra.mxu0 0
      %6082 = vmatprep.mubr.bf16.mxu0 0
      %6083 = vmatmul.mubr.bf16.gmra.mxu0 %v6003
      %v6084 = vpop.f32.mrf.mxu0
      %v6085 = vadd.f32 0.0, %v6084
      %v6086 = vpop.f32.mrf.mxu0
      %v6087 = vadd.f32 0.0, %v6086
      %v6088 = vpop.f32.mrf.mxu0
      %v6089 = vadd.f32 0.0, %v6088
      %v6090 = vpop.f32.mrf.mxu0
      %v6091 = vadd.f32 0.0, %v6090
      %6092 = vmatprep.mubr.bf16.mxu0 0
      %6093 = vmatmul.mubr.bf16.gmra.mxu0 %v6006
      %v6094 = vpop.f32.mrf.mxu0
      %v6095 = vadd.f32 0.0, %v6094
      %v6096 = vpop.f32.mrf.mxu0
      %v6097 = vadd.f32 0.0, %v6096
      %v6098 = vpop.f32.mrf.mxu0
      %v6099 = vadd.f32 0.0, %v6098
      %v6100 = vpop.f32.mrf.mxu0
      %v6101 = vadd.f32 0.0, %v6100
      %6102 = vmatprep.mubr.bf16.mxu0 0
      %6103 = vmatmul.mubr.bf16.gmra.mxu0 %v6009
      %v6104 = vpop.f32.mrf.mxu0
      %v6105 = vadd.f32 0.0, %v6104
      %v6106 = vpop.f32.mrf.mxu0
      %v6107 = vadd.f32 0.0, %v6106
      %v6108 = vpop.f32.mrf.mxu0
      %v6109 = vadd.f32 0.0, %v6108
      %v6110 = vpop.f32.mrf.mxu0
      %v6111 = vadd.f32 0.0, %v6110
      %6112 = vmatprep.mubr.bf16.mxu0 0
      %6113 = vmatmul.mubr.bf16.gmra.mxu0 %v6012
      %v6114 = vpop.f32.mrf.mxu0
      %v6115 = vadd.f32 0.0, %v6114
      %v6116 = vpop.f32.mrf.mxu0
      %v6117 = vadd.f32 0.0, %v6116
      %v6118 = vpop.f32.mrf.mxu0
      %v6119 = vadd.f32 0.0, %v6118
      %v6120 = vpop.f32.mrf.mxu0
      %v6121 = vadd.f32 0.0, %v6120
      %6122 = vmatprep.mubr.bf16.mxu0 0
      %6123 = vmatmul.mubr.bf16.gmra.mxu0 %v6015
      %v6124 = vpop.f32.mrf.mxu0
      %v6125 = vadd.f32 0.0, %v6124
      %v6126 = vpop.f32.mrf.mxu0
      %v6127 = vadd.f32 0.0, %v6126
      %v6128 = vpop.f32.mrf.mxu0
      %v6129 = vadd.f32 0.0, %v6128
      %v6130 = vpop.f32.mrf.mxu0
      %v6131 = vadd.f32 0.0, %v6130
      %6132 = vmatprep.mubr.bf16.mxu0 0
      %6133 = vmatmul.mubr.bf16.gmra.mxu0 %v6018
      %v6134 = vpop.f32.mrf.mxu0
      %v6135 = vadd.f32 0.0, %v6134
      %v6136 = vpop.f32.mrf.mxu0
      %v6137 = vadd.f32 0.0, %v6136
      %v6138 = vpop.f32.mrf.mxu0
      %v6139 = vadd.f32 0.0, %v6138
      %v6140 = vpop.f32.mrf.mxu0
      %v6141 = vadd.f32 0.0, %v6140
      %6142 = vmatprep.mubr.bf16.mxu0 0
      %6143 = vmatmul.mubr.bf16.gmra.mxu0 %v6021
      %v6144 = vpop.f32.mrf.mxu0
      %v6145 = vadd.f32 0.0, %v6144
      %v6146 = vpop.f32.mrf.mxu0
      %v6147 = vadd.f32 0.0, %v6146
      %v6148 = vpop.f32.mrf.mxu0
      %v6149 = vadd.f32 0.0, %v6148
      %v6150 = vpop.f32.mrf.mxu0
      %v6151 = vadd.f32 0.0, %v6150
      %6152 = vmatprep.mubr.bf16.mxu0 0
      %6153 = vmatmul.mubr.bf16.gmra.mxu0 %v6024
      %v6154 = vpop.f32.mrf.mxu0
      %v6155 = vadd.f32 0.0, %v6154
      %v6156 = vpop.f32.mrf.mxu0
      %v6157 = vadd.f32 0.0, %v6156
      %v6158 = vpop.f32.mrf.mxu0
      %v6159 = vadd.f32 0.0, %v6158
      %v6160 = vpop.f32.mrf.mxu0
      %v6161 = vadd.f32 0.0, %v6160
      %6162 = vmatprep.mubr.bf16.mxu0 0
      %6163 = vmatmul.mubr.bf16.gmra.mxu0 %v6027
      %v6164 = vpop.f32.mrf.mxu0
      %v6165 = vadd.f32 0.0, %v6164
      %v6166 = vpop.f32.mrf.mxu0
      %v6167 = vadd.f32 0.0, %v6166
      %v6168 = vpop.f32.mrf.mxu0
      %v6169 = vadd.f32 0.0, %v6168
      %v6170 = vpop.f32.mrf.mxu0
      %v6171 = vadd.f32 0.0, %v6170
      %6172 = vmatprep.mubr.bf16.mxu0 0
      %6173 = vmatmul.mubr.bf16.gmra.mxu0 %v6030
      %v6174 = vpop.f32.mrf.mxu0
      %v6175 = vadd.f32 0.0, %v6174
      %v6176 = vpop.f32.mrf.mxu0
      %v6177 = vadd.f32 0.0, %v6176
      %v6178 = vpop.f32.mrf.mxu0
      %v6179 = vadd.f32 0.0, %v6178
      %v6180 = vpop.f32.mrf.mxu0
      %v6181 = vadd.f32 0.0, %v6180
      %6182 = vmatprep.mubr.bf16.mxu0 0
      %6183 = vmatmul.mubr.bf16.gmra.mxu0 %v6033
      %v6184 = vpop.f32.mrf.mxu0
      %v6185 = vadd.f32 0.0, %v6184
      %v6186 = vpop.f32.mrf.mxu0
      %v6187 = vadd.f32 0.0, %v6186
      %v6188 = vpop.f32.mrf.mxu0
      %v6189 = vadd.f32 0.0, %v6188
      %v6190 = vpop.f32.mrf.mxu0
      %v6191 = vadd.f32 0.0, %v6190
      %6192 = vmatprep.mubr.bf16.mxu0 0
      %6193 = vmatmul.mubr.bf16.gmra.mxu0 %v6036
      %v6194 = vpop.f32.mrf.mxu0
      %v6195 = vadd.f32 0.0, %v6194
      %v6196 = vpop.f32.mrf.mxu0
      %v6197 = vadd.f32 0.0, %v6196
      %v6198 = vpop.f32.mrf.mxu0
      %v6199 = vadd.f32 0.0, %v6198
      %v6200 = vpop.f32.mrf.mxu0
      %v6201 = vadd.f32 0.0, %v6200
      %6202 = vmatprep.mubr.bf16.mxu0 0
      %6203 = vmatmul.mubr.bf16.gmra.mxu0 %v6039
      %v6204 = vpop.f32.mrf.mxu0
      %v6205 = vadd.f32 0.0, %v6204
      %v6206 = vpop.f32.mrf.mxu0
      %v6207 = vadd.f32 0.0, %v6206
      %v6208 = vpop.f32.mrf.mxu0
      %v6209 = vadd.f32 0.0, %v6208
      %v6210 = vpop.f32.mrf.mxu0
      %v6211 = vadd.f32 0.0, %v6210
      %6212 = vmatprep.mubr.bf16.mxu0 0
      %6213 = vmatmul.mubr.bf16.gmra.mxu0 %v6042
      %v6214 = vpop.f32.mrf.mxu0
      %v6215 = vadd.f32 0.0, %v6214
      %v6216 = vpop.f32.mrf.mxu0
      %v6217 = vadd.f32 0.0, %v6216
      %v6218 = vpop.f32.mrf.mxu0
      %v6219 = vadd.f32 0.0, %v6218
      %v6220 = vpop.f32.mrf.mxu0
      %v6221 = vadd.f32 0.0, %v6220
      %6222 = vmatprep.mubr.bf16.mxu0 0
      %6223 = vmatmul.mubr.bf16.gmra.mxu0 %v6045
      %v6224 = vpop.f32.mrf.mxu0
      %v6225 = vadd.f32 0.0, %v6224
      %v6226 = vpop.f32.mrf.mxu0
      %v6227 = vadd.f32 0.0, %v6226
      %v6228 = vpop.f32.mrf.mxu0
      %v6229 = vadd.f32 0.0, %v6228
      %v6230 = vpop.f32.mrf.mxu0
      %v6231 = vadd.f32 0.0, %v6230
      %6232 = vmatprep.mubr.bf16.mxu0 0
      %6233 = vmatmul.mubr.bf16.gmra.mxu0 %v6048
      %v6234 = vpop.f32.mrf.mxu0
      %v6235 = vadd.f32 0.0, %v6234
      %v6236 = vpop.f32.mrf.mxu0
      %v6237 = vadd.f32 0.0, %v6236
      %v6238 = vpop.f32.mrf.mxu0
      %v6239 = vadd.f32 0.0, %v6238
      %v6240 = vpop.f32.mrf.mxu0
      %v6241 = vadd.f32 0.0, %v6240
      %6242 = vdwg.mxu0
      %v6243 = vadd.f32 %v5732, %v6085
      %v6244 = vadd.f32 %v5733, %v6087
      %v6245 = vadd.f32 %v5734, %v6089
      %v6246 = vadd.f32 %v5735, %v6091
      %v6247 = vadd.f32 %v5736, %v6095
      %v6248 = vadd.f32 %v5737, %v6097
      %v6249 = vadd.f32 %v5738, %v6099
      %v6250 = vadd.f32 %v5739, %v6101
      %v6251 = vadd.f32 %v5740, %v6105
      %v6252 = vadd.f32 %v5741, %v6107
      %v6253 = vadd.f32 %v5742, %v6109
      %v6254 = vadd.f32 %v5743, %v6111
      %v6255 = vadd.f32 %v5744, %v6115
      %v6256 = vadd.f32 %v5745, %v6117
      %v6257 = vadd.f32 %v5746, %v6119
      %v6258 = vadd.f32 %v5747, %v6121
      %v6259 = vadd.f32 %v5748, %v6125
      %v6260 = vadd.f32 %v5749, %v6127
      %v6261 = vadd.f32 %v5750, %v6129
      %v6262 = vadd.f32 %v5751, %v6131
      %v6263 = vadd.f32 %v5752, %v6135
      %v6264 = vadd.f32 %v5753, %v6137
      %v6265 = vadd.f32 %v5754, %v6139
      %v6266 = vadd.f32 %v5755, %v6141
      %v6267 = vadd.f32 %v5756, %v6145
      %v6268 = vadd.f32 %v5757, %v6147
      %v6269 = vadd.f32 %v5758, %v6149
      %v6270 = vadd.f32 %v5759, %v6151
      %v6271 = vadd.f32 %v5760, %v6155
      %v6272 = vadd.f32 %v5761, %v6157
      %v6273 = vadd.f32 %v5762, %v6159
      %v6274 = vadd.f32 %v5763, %v6161
      %v6275 = vadd.f32 %v5764, %v6165
      %v6276 = vadd.f32 %v5765, %v6167
      %v6277 = vadd.f32 %v5766, %v6169
      %v6278 = vadd.f32 %v5767, %v6171
      %v6279 = vadd.f32 %v5768, %v6175
      %v6280 = vadd.f32 %v5769, %v6177
      %v6281 = vadd.f32 %v5770, %v6179
      %v6282 = vadd.f32 %v5771, %v6181
      %v6283 = vadd.f32 %v5772, %v6185
      %v6284 = vadd.f32 %v5773, %v6187
      %v6285 = vadd.f32 %v5774, %v6189
      %v6286 = vadd.f32 %v5775, %v6191
      %v6287 = vadd.f32 %v5776, %v6195
      %v6288 = vadd.f32 %v5777, %v6197
      %v6289 = vadd.f32 %v5778, %v6199
      %v6290 = vadd.f32 %v5779, %v6201
      %v6291 = vadd.f32 %v5780, %v6205
      %v6292 = vadd.f32 %v5781, %v6207
      %v6293 = vadd.f32 %v5782, %v6209
      %v6294 = vadd.f32 %v5783, %v6211
      %v6295 = vadd.f32 %v5784, %v6215
      %v6296 = vadd.f32 %v5785, %v6217
      %v6297 = vadd.f32 %v5786, %v6219
      %v6298 = vadd.f32 %v5787, %v6221
      %v6299 = vadd.f32 %v5788, %v6225
      %v6300 = vadd.f32 %v5789, %v6227
      %v6301 = vadd.f32 %v5790, %v6229
      %v6302 = vadd.f32 %v5791, %v6231
      %v6303 = vadd.f32 %v5792, %v6235
      %v6304 = vadd.f32 %v5793, %v6237
      %v6305 = vadd.f32 %v5794, %v6239
      %v6306 = vadd.f32 %v5795, %v6241
      %6307 = vrot.lane.b32.xlu0 %v2327, 119
      %v6308 = vpop.permute.xlu0 %6307
      %6309 = vrot.lane.b32.xlu0 %v2328, 119
      %v6310 = vpop.permute.xlu0 %6309
      %6311 = vrot.lane.b32.xlu0 %v2329, 119
      %v6312 = vpop.permute.xlu0 %6311
      %6313 = vrot.lane.b32.xlu0 %v2330, 119
      %v6314 = vpop.permute.xlu0 %6313
      %6315 = vrot.lane.b32.xlu0 %v2331, 119
      %v6316 = vpop.permute.xlu0 %6315
      %6317 = vrot.lane.b32.xlu0 %v2332, 119
      %v6318 = vpop.permute.xlu0 %6317
      %6319 = vrot.lane.b32.xlu0 %v2333, 119
      %v6320 = vpop.permute.xlu0 %6319
      %6321 = vrot.lane.b32.xlu0 %v2334, 119
      %v6322 = vpop.permute.xlu0 %6321
      %6323 = vrot.lane.b32.xlu0 %v2335, 119
      %v6324 = vpop.permute.xlu0 %6323
      %6325 = vrot.lane.b32.xlu0 %v2336, 119
      %v6326 = vpop.permute.xlu0 %6325
      %6327 = vrot.lane.b32.xlu0 %v2337, 119
      %v6328 = vpop.permute.xlu0 %6327
      %6329 = vrot.lane.b32.xlu0 %v2338, 119
      %v6330 = vpop.permute.xlu0 %6329
      %6331 = vrot.lane.b32.xlu0 %v2339, 119
      %v6332 = vpop.permute.xlu0 %6331
      %6333 = vrot.lane.b32.xlu0 %v2340, 119
      %v6334 = vpop.permute.xlu0 %6333
      %vm6335 = vcmask 973824
      %v6336 = vsel %vm6335, %v6308, %v6310
      %v6337 = vsel %vm6335, %v6312, %v6314
      %v6338 = vsel %vm6335, %v6316, %v6318
      %v6339 = vsel %vm6335, %v6320, %v6322
      %v6340 = vsel %vm6335, %v6324, %v6326
      %v6341 = vsel %vm6335, %v6328, %v6330
      %v6342 = vsel %vm6335, %v6332, %v6334
      %vm6350 = vcmask 973824
      %v6352 = vsel %vm6350, %v6310, 0
      %v6355 = vsel %vm6350, %v6314, 0
      %v6358 = vsel %vm6350, %v6318, 0
      %v6361 = vsel %vm6350, %v6322, 0
      %v6364 = vsel %vm6350, %v6326, 0
      %v6367 = vsel %vm6350, %v6330, 0
      %v6370 = vsel %vm6350, %v6334, 0
      %v6372 = vshrl.u32 %v2349, 16
      %v6373 = vpack.i.b16 %v6372, %v6372
      %v6375 = vlaneseq
      %v6376 = vshrl.u32 %v6375, 7
      %v6377 = vsub.s32 1, %v6376
      %v6378 = vrot.slane %v6373, %v6377
      %v6379 = vshrl.u32 %v2350, 16
      %v6380 = vpack.i.b16 %v6379, %v6379
      %v6382 = vlaneseq
      %v6383 = vshrl.u32 %v6382, 7
      %v6384 = vsub.s32 1, %v6383
      %v6385 = vrot.slane %v6380, %v6384
      %v6386 = vmul.bf16 %v6336, %v6378
      %v6387 = vmul.bf16 %v6352, %v6385
      %v6388 = vmul.bf16 %v6337, %v6378
      %v6389 = vmul.bf16 %v6355, %v6385
      %v6390 = vmul.bf16 %v6338, %v6378
      %v6391 = vmul.bf16 %v6358, %v6385
      %v6392 = vmul.bf16 %v6339, %v6378
      %v6393 = vmul.bf16 %v6361, %v6385
      %v6394 = vmul.bf16 %v6340, %v6378
      %v6395 = vmul.bf16 %v6364, %v6385
      %v6396 = vmul.bf16 %v6341, %v6378
      %v6397 = vmul.bf16 %v6367, %v6385
      %v6398 = vmul.bf16 %v6342, %v6378
      %v6399 = vmul.bf16 %v6370, %v6385
      %s6400 = scalar_lea.vmem %s5, 1024
      %v6401 = vld [vmem:[%s6400] sm:$0xf]
      %v6402 = vld [vmem:[%s6400 + $0x4] sm:$0xf]
      %v6403 = vld [vmem:[%s6400 + $0x8] sm:$0xf]
      %v6404 = vld [vmem:[%s6400 + $0xc] sm:$0xf]
      %v6405 = vld [vmem:[%s6400 + $0x10] sm:$0xf]
      %v6406 = vld [vmem:[%s6400 + $0x14] sm:$0xf]
      %v6407 = vld [vmem:[%s6400 + $0x18] sm:$0xf]
      %v6408 = vld [vmem:[%s6400 + $0x1c] sm:$0xf]
      %v6409 = vld [vmem:[%s6400 + $0x20] sm:$0xf]
      %v6410 = vld [vmem:[%s6400 + $0x24] sm:$0xf]
      %v6411 = vld [vmem:[%s6400 + $0x28] sm:$0xf]
      %v6412 = vld [vmem:[%s6400 + $0x2c] sm:$0xf]
      %v6413 = vld [vmem:[%s6400 + $0x30] sm:$0xf]
      %v6414 = vld [vmem:[%s6400 + $0x34] sm:$0xf]
      %v6415 = vld [vmem:[%s6400 + $0x38] sm:$0xf]
      %v6416 = vld [vmem:[%s6400 + $0x3c] sm:$0xf]
      %v6417 = vld [vmem:[%s6400 + $0x40] sm:$0xf]
      %v6418 = vld [vmem:[%s6400 + $0x44] sm:$0xf]
      %v6419 = vld [vmem:[%s6400 + $0x48] sm:$0xf]
      %v6420 = vld [vmem:[%s6400 + $0x4c] sm:$0xf]
      %v6421 = vld [vmem:[%s6400 + $0x50] sm:$0xf]
      %v6422 = vld [vmem:[%s6400 + $0x54] sm:$0xf]
      %v6423 = vld [vmem:[%s6400 + $0x58] sm:$0xf]
      %v6424 = vld [vmem:[%s6400 + $0x5c] sm:$0xf]
      %v6425 = vld [vmem:[%s6400 + $0x60] sm:$0xf]
      %v6426 = vld [vmem:[%s6400 + $0x64] sm:$0xf]
      %v6427 = vld [vmem:[%s6400 + $0x68] sm:$0xf]
      %v6428 = vld [vmem:[%s6400 + $0x6c] sm:$0xf]
      %v6429 = vld [vmem:[%s6400 + $0x70] sm:$0xf]
      %v6430 = vld [vmem:[%s6400 + $0x74] sm:$0xf]
      %v6431 = vld [vmem:[%s6400 + $0x78] sm:$0xf]
      %v6432 = vld [vmem:[%s6400 + $0x7c] sm:$0xf]
      %v6465 = vunpack.c.l.b16 %v6401
      %v6466 = vunpack.c.l.b16 %v6402
      %v6467 = vunpack.c.l.b16 %v6403
      %v6468 = vunpack.c.l.b16 %v6404
      %v6469 = vunpack.c.l.b16 %v6405
      %v6470 = vunpack.c.l.b16 %v6406
      %v6471 = vunpack.c.l.b16 %v6407
      %v6472 = vunpack.c.l.b16 %v6408
      %v6473 = vunpack.c.l.b16 %v6409
      %v6474 = vunpack.c.l.b16 %v6410
      %v6475 = vunpack.c.l.b16 %v6411
      %v6476 = vunpack.c.l.b16 %v6412
      %v6477 = vunpack.c.l.b16 %v6413
      %v6478 = vunpack.c.l.b16 %v6414
      %v6479 = vunpack.c.l.b16 %v6415
      %v6480 = vunpack.c.l.b16 %v6416
      %v6481 = vunpack.c.l.b16 %v6417
      %v6482 = vunpack.c.l.b16 %v6418
      %v6483 = vunpack.c.l.b16 %v6419
      %v6484 = vunpack.c.l.b16 %v6420
      %v6485 = vunpack.c.l.b16 %v6421
      %v6486 = vunpack.c.l.b16 %v6422
      %v6487 = vunpack.c.l.b16 %v6423
      %v6488 = vunpack.c.l.b16 %v6424
      %v6489 = vunpack.c.l.b16 %v6425
      %v6490 = vunpack.c.l.b16 %v6426
      %v6491 = vunpack.c.l.b16 %v6427
      %v6492 = vunpack.c.l.b16 %v6428
      %v6493 = vunpack.c.l.b16 %v6429
      %v6494 = vunpack.c.l.b16 %v6430
      %v6495 = vunpack.c.l.b16 %v6431
      %v6496 = vunpack.c.l.b16 %v6432
      %v6497 = vpack.c.b16 %v6466, %v6465
      %v6498 = vpack.c.b16 %v6468, %v6467
      %v6499 = vpack.c.b16 %v6470, %v6469
      %v6500 = vpack.c.b16 %v6472, %v6471
      %v6501 = vpack.c.b16 %v6474, %v6473
      %v6502 = vpack.c.b16 %v6476, %v6475
      %v6503 = vpack.c.b16 %v6478, %v6477
      %v6504 = vpack.c.b16 %v6480, %v6479
      %v6505 = vpack.c.b16 %v6482, %v6481
      %v6506 = vpack.c.b16 %v6484, %v6483
      %v6507 = vpack.c.b16 %v6486, %v6485
      %v6508 = vpack.c.b16 %v6488, %v6487
      %v6509 = vpack.c.b16 %v6490, %v6489
      %v6510 = vpack.c.b16 %v6492, %v6491
      %v6511 = vpack.c.b16 %v6494, %v6493
      %v6512 = vpack.c.b16 %v6496, %v6495
      %v6514 = vsel %vm2705, %v6497, 0
      %v6517 = vsel %vm2705, %v6498, 0
      %v6520 = vsel %vm2705, %v6499, 0
      %v6523 = vsel %vm2705, %v6500, 0
      %v6526 = vsel %vm2705, %v6501, 0
      %v6529 = vsel %vm2705, %v6502, 0
      %v6532 = vsel %vm2705, %v6503, 0
      %v6535 = vsel %vm2705, %v6504, 0
      %v6538 = vsel %vm2705, %v6505, 0
      %v6541 = vsel %vm2705, %v6506, 0
      %v6544 = vsel %vm2705, %v6507, 0
      %v6547 = vsel %vm2705, %v6508, 0
      %v6550 = vsel %vm2705, %v6509, 0
      %v6553 = vsel %vm2705, %v6510, 0
      %v6556 = vsel %vm2705, %v6511, 0
      %v6559 = vsel %vm2705, %v6512, 0
      %6561 = vmatprep.subr.bf16.mxu0 0
      %6562 = vmatpush1.bf16.msra.mxu0 0
      %6563 = vmatprep.subr.bf16.mxu0 %v6399
      %6564 = vmatpush1.bf16.msra.mxu0 %v6398
      %6565 = vmatprep.subr.bf16.mxu0 %v6397
      %6566 = vmatpush1.bf16.msra.mxu0 %v6396
      %6567 = vmatprep.subr.bf16.mxu0 %v6395
      %6568 = vmatpush1.bf16.msra.mxu0 %v6394
      %6569 = vmatprep.subr.bf16.mxu0 %v6393
      %6570 = vmatpush1.bf16.msra.mxu0 %v6392
      %6571 = vmatprep.subr.bf16.mxu0 %v6391
      %6572 = vmatpush1.bf16.msra.mxu0 %v6390
      %6573 = vmatprep.subr.bf16.mxu0 %v6389
      %6574 = vmatpush1.bf16.msra.mxu0 %v6388
      %6575 = vmatprep.subr.bf16.mxu0 %v6387
      %6576 = vmatpush1.bf16.msra.mxu0 %v6386
      %6577 = vmatprep.subr.bf16.mxu0 0
      %6578 = vmatpush2.bf16.msra.mxu0 0
      %6579 = vmatprep.subr.bf16.mxu0 0
      %6580 = vmatpush2.bf16.msra.mxu0 0
      %6581 = vmatprep.subr.bf16.mxu0 0
      %6582 = vmatpush2.bf16.msra.mxu0 0
      %6583 = vmatprep.subr.bf16.mxu0 0
      %6584 = vmatpush2.bf16.msra.mxu0 0
      %6585 = vmatprep.subr.bf16.mxu0 0
      %6586 = vmatpush2.bf16.msra.mxu0 0
      %6587 = vmatprep.subr.bf16.mxu0 0
      %6588 = vmatpush2.bf16.msra.mxu0 0
      %6589 = vmatprep.subr.bf16.mxu0 0
      %6590 = vmatpush2.bf16.msra.mxu0 0
      %6591 = vmatprep.subr.bf16.mxu0 0
      %6592 = vmatpush2.bf16.msra.mxu0 0
      %6593 = vmatprep.mubr.bf16.mxu0 0
      %6594 = vmatmul.mubr.bf16.gmra.mxu0 %v6514
      %v6595 = vpop.f32.mrf.mxu0
      %v6596 = vadd.f32 0.0, %v6595
      %v6597 = vpop.f32.mrf.mxu0
      %v6598 = vadd.f32 0.0, %v6597
      %v6599 = vpop.f32.mrf.mxu0
      %v6600 = vadd.f32 0.0, %v6599
      %v6601 = vpop.f32.mrf.mxu0
      %v6602 = vadd.f32 0.0, %v6601
      %6603 = vmatprep.mubr.bf16.mxu0 0
      %6604 = vmatmul.mubr.bf16.gmra.mxu0 %v6517
      %v6605 = vpop.f32.mrf.mxu0
      %v6606 = vadd.f32 0.0, %v6605
      %v6607 = vpop.f32.mrf.mxu0
      %v6608 = vadd.f32 0.0, %v6607
      %v6609 = vpop.f32.mrf.mxu0
      %v6610 = vadd.f32 0.0, %v6609
      %v6611 = vpop.f32.mrf.mxu0
      %v6612 = vadd.f32 0.0, %v6611
      %6613 = vmatprep.mubr.bf16.mxu0 0
      %6614 = vmatmul.mubr.bf16.gmra.mxu0 %v6520
      %v6615 = vpop.f32.mrf.mxu0
      %v6616 = vadd.f32 0.0, %v6615
      %v6617 = vpop.f32.mrf.mxu0
      %v6618 = vadd.f32 0.0, %v6617
      %v6619 = vpop.f32.mrf.mxu0
      %v6620 = vadd.f32 0.0, %v6619
      %v6621 = vpop.f32.mrf.mxu0
      %v6622 = vadd.f32 0.0, %v6621
      %6623 = vmatprep.mubr.bf16.mxu0 0
      %6624 = vmatmul.mubr.bf16.gmra.mxu0 %v6523
      %v6625 = vpop.f32.mrf.mxu0
      %v6626 = vadd.f32 0.0, %v6625
      %v6627 = vpop.f32.mrf.mxu0
      %v6628 = vadd.f32 0.0, %v6627
      %v6629 = vpop.f32.mrf.mxu0
      %v6630 = vadd.f32 0.0, %v6629
      %v6631 = vpop.f32.mrf.mxu0
      %v6632 = vadd.f32 0.0, %v6631
      %6633 = vmatprep.mubr.bf16.mxu0 0
      %6634 = vmatmul.mubr.bf16.gmra.mxu0 %v6526
      %v6635 = vpop.f32.mrf.mxu0
      %v6636 = vadd.f32 0.0, %v6635
      %v6637 = vpop.f32.mrf.mxu0
      %v6638 = vadd.f32 0.0, %v6637
      %v6639 = vpop.f32.mrf.mxu0
      %v6640 = vadd.f32 0.0, %v6639
      %v6641 = vpop.f32.mrf.mxu0
      %v6642 = vadd.f32 0.0, %v6641
      %6643 = vmatprep.mubr.bf16.mxu0 0
      %6644 = vmatmul.mubr.bf16.gmra.mxu0 %v6529
      %v6645 = vpop.f32.mrf.mxu0
      %v6646 = vadd.f32 0.0, %v6645
      %v6647 = vpop.f32.mrf.mxu0
      %v6648 = vadd.f32 0.0, %v6647
      %v6649 = vpop.f32.mrf.mxu0
      %v6650 = vadd.f32 0.0, %v6649
      %v6651 = vpop.f32.mrf.mxu0
      %v6652 = vadd.f32 0.0, %v6651
      %6653 = vmatprep.mubr.bf16.mxu0 0
      %6654 = vmatmul.mubr.bf16.gmra.mxu0 %v6532
      %v6655 = vpop.f32.mrf.mxu0
      %v6656 = vadd.f32 0.0, %v6655
      %v6657 = vpop.f32.mrf.mxu0
      %v6658 = vadd.f32 0.0, %v6657
      %v6659 = vpop.f32.mrf.mxu0
      %v6660 = vadd.f32 0.0, %v6659
      %v6661 = vpop.f32.mrf.mxu0
      %v6662 = vadd.f32 0.0, %v6661
      %6663 = vmatprep.mubr.bf16.mxu0 0
      %6664 = vmatmul.mubr.bf16.gmra.mxu0 %v6535
      %v6665 = vpop.f32.mrf.mxu0
      %v6666 = vadd.f32 0.0, %v6665
      %v6667 = vpop.f32.mrf.mxu0
      %v6668 = vadd.f32 0.0, %v6667
      %v6669 = vpop.f32.mrf.mxu0
      %v6670 = vadd.f32 0.0, %v6669
      %v6671 = vpop.f32.mrf.mxu0
      %v6672 = vadd.f32 0.0, %v6671
      %6673 = vmatprep.mubr.bf16.mxu0 0
      %6674 = vmatmul.mubr.bf16.gmra.mxu0 %v6538
      %v6675 = vpop.f32.mrf.mxu0
      %v6676 = vadd.f32 0.0, %v6675
      %v6677 = vpop.f32.mrf.mxu0
      %v6678 = vadd.f32 0.0, %v6677
      %v6679 = vpop.f32.mrf.mxu0
      %v6680 = vadd.f32 0.0, %v6679
      %v6681 = vpop.f32.mrf.mxu0
      %v6682 = vadd.f32 0.0, %v6681
      %6683 = vmatprep.mubr.bf16.mxu0 0
      %6684 = vmatmul.mubr.bf16.gmra.mxu0 %v6541
      %v6685 = vpop.f32.mrf.mxu0
      %v6686 = vadd.f32 0.0, %v6685
      %v6687 = vpop.f32.mrf.mxu0
      %v6688 = vadd.f32 0.0, %v6687
      %v6689 = vpop.f32.mrf.mxu0
      %v6690 = vadd.f32 0.0, %v6689
      %v6691 = vpop.f32.mrf.mxu0
      %v6692 = vadd.f32 0.0, %v6691
      %6693 = vmatprep.mubr.bf16.mxu0 0
      %6694 = vmatmul.mubr.bf16.gmra.mxu0 %v6544
      %v6695 = vpop.f32.mrf.mxu0
      %v6696 = vadd.f32 0.0, %v6695
      %v6697 = vpop.f32.mrf.mxu0
      %v6698 = vadd.f32 0.0, %v6697
      %v6699 = vpop.f32.mrf.mxu0
      %v6700 = vadd.f32 0.0, %v6699
      %v6701 = vpop.f32.mrf.mxu0
      %v6702 = vadd.f32 0.0, %v6701
      %6703 = vmatprep.mubr.bf16.mxu0 0
      %6704 = vmatmul.mubr.bf16.gmra.mxu0 %v6547
      %v6705 = vpop.f32.mrf.mxu0
      %v6706 = vadd.f32 0.0, %v6705
      %v6707 = vpop.f32.mrf.mxu0
      %v6708 = vadd.f32 0.0, %v6707
      %v6709 = vpop.f32.mrf.mxu0
      %v6710 = vadd.f32 0.0, %v6709
      %v6711 = vpop.f32.mrf.mxu0
      %v6712 = vadd.f32 0.0, %v6711
      %6713 = vmatprep.mubr.bf16.mxu0 0
      %6714 = vmatmul.mubr.bf16.gmra.mxu0 %v6550
      %v6715 = vpop.f32.mrf.mxu0
      %v6716 = vadd.f32 0.0, %v6715
      %v6717 = vpop.f32.mrf.mxu0
      %v6718 = vadd.f32 0.0, %v6717
      %v6719 = vpop.f32.mrf.mxu0
      %v6720 = vadd.f32 0.0, %v6719
      %v6721 = vpop.f32.mrf.mxu0
      %v6722 = vadd.f32 0.0, %v6721
      %6723 = vmatprep.mubr.bf16.mxu0 0
      %6724 = vmatmul.mubr.bf16.gmra.mxu0 %v6553
      %v6725 = vpop.f32.mrf.mxu0
      %v6726 = vadd.f32 0.0, %v6725
      %v6727 = vpop.f32.mrf.mxu0
      %v6728 = vadd.f32 0.0, %v6727
      %v6729 = vpop.f32.mrf.mxu0
      %v6730 = vadd.f32 0.0, %v6729
      %v6731 = vpop.f32.mrf.mxu0
      %v6732 = vadd.f32 0.0, %v6731
      %6733 = vmatprep.mubr.bf16.mxu0 0
      %6734 = vmatmul.mubr.bf16.gmra.mxu0 %v6556
      %v6735 = vpop.f32.mrf.mxu0
      %v6736 = vadd.f32 0.0, %v6735
      %v6737 = vpop.f32.mrf.mxu0
      %v6738 = vadd.f32 0.0, %v6737
      %v6739 = vpop.f32.mrf.mxu0
      %v6740 = vadd.f32 0.0, %v6739
      %v6741 = vpop.f32.mrf.mxu0
      %v6742 = vadd.f32 0.0, %v6741
      %6743 = vmatprep.mubr.bf16.mxu0 0
      %6744 = vmatmul.mubr.bf16.gmra.mxu0 %v6559
      %v6745 = vpop.f32.mrf.mxu0
      %v6746 = vadd.f32 0.0, %v6745
      %v6747 = vpop.f32.mrf.mxu0
      %v6748 = vadd.f32 0.0, %v6747
      %v6749 = vpop.f32.mrf.mxu0
      %v6750 = vadd.f32 0.0, %v6749
      %v6751 = vpop.f32.mrf.mxu0
      %v6752 = vadd.f32 0.0, %v6751
      %6753 = vdwg.mxu0
      %v6754 = vadd.f32 %v6243, %v6596
      %v6755 = vadd.f32 %v6244, %v6598
      %v6756 = vadd.f32 %v6245, %v6600
      %v6757 = vadd.f32 %v6246, %v6602
      %v6758 = vadd.f32 %v6247, %v6606
      %v6759 = vadd.f32 %v6248, %v6608
      %v6760 = vadd.f32 %v6249, %v6610
      %v6761 = vadd.f32 %v6250, %v6612
      %v6762 = vadd.f32 %v6251, %v6616
      %v6763 = vadd.f32 %v6252, %v6618
      %v6764 = vadd.f32 %v6253, %v6620
      %v6765 = vadd.f32 %v6254, %v6622
      %v6766 = vadd.f32 %v6255, %v6626
      %v6767 = vadd.f32 %v6256, %v6628
      %v6768 = vadd.f32 %v6257, %v6630
      %v6769 = vadd.f32 %v6258, %v6632
      %v6770 = vadd.f32 %v6259, %v6636
      %v6771 = vadd.f32 %v6260, %v6638
      %v6772 = vadd.f32 %v6261, %v6640
      %v6773 = vadd.f32 %v6262, %v6642
      %v6774 = vadd.f32 %v6263, %v6646
      %v6775 = vadd.f32 %v6264, %v6648
      %v6776 = vadd.f32 %v6265, %v6650
      %v6777 = vadd.f32 %v6266, %v6652
      %v6778 = vadd.f32 %v6267, %v6656
      %v6779 = vadd.f32 %v6268, %v6658
      %v6780 = vadd.f32 %v6269, %v6660
      %v6781 = vadd.f32 %v6270, %v6662
      %v6782 = vadd.f32 %v6271, %v6666
      %v6783 = vadd.f32 %v6272, %v6668
      %v6784 = vadd.f32 %v6273, %v6670
      %v6785 = vadd.f32 %v6274, %v6672
      %v6786 = vadd.f32 %v6275, %v6676
      %v6787 = vadd.f32 %v6276, %v6678
      %v6788 = vadd.f32 %v6277, %v6680
      %v6789 = vadd.f32 %v6278, %v6682
      %v6790 = vadd.f32 %v6279, %v6686
      %v6791 = vadd.f32 %v6280, %v6688
      %v6792 = vadd.f32 %v6281, %v6690
      %v6793 = vadd.f32 %v6282, %v6692
      %v6794 = vadd.f32 %v6283, %v6696
      %v6795 = vadd.f32 %v6284, %v6698
      %v6796 = vadd.f32 %v6285, %v6700
      %v6797 = vadd.f32 %v6286, %v6702
      %v6798 = vadd.f32 %v6287, %v6706
      %v6799 = vadd.f32 %v6288, %v6708
      %v6800 = vadd.f32 %v6289, %v6710
      %v6801 = vadd.f32 %v6290, %v6712
      %v6802 = vadd.f32 %v6291, %v6716
      %v6803 = vadd.f32 %v6292, %v6718
      %v6804 = vadd.f32 %v6293, %v6720
      %v6805 = vadd.f32 %v6294, %v6722
      %v6806 = vadd.f32 %v6295, %v6726
      %v6807 = vadd.f32 %v6296, %v6728
      %v6808 = vadd.f32 %v6297, %v6730
      %v6809 = vadd.f32 %v6298, %v6732
      %v6810 = vadd.f32 %v6299, %v6736
      %v6811 = vadd.f32 %v6300, %v6738
      %v6812 = vadd.f32 %v6301, %v6740
      %v6813 = vadd.f32 %v6302, %v6742
      %v6814 = vadd.f32 %v6303, %v6746
      %v6815 = vadd.f32 %v6304, %v6748
      %v6816 = vadd.f32 %v6305, %v6750
      %v6817 = vadd.f32 %v6306, %v6752
      %v6818 = vld [vmem:[%s6] sm:$0xff]
      %v6819 = vld [vmem:[%s6 + $0x8] sm:$0xff]
      %v6820 = vld [vmem:[%s6 + $0x10] sm:$0xff]
      %v6821 = vld [vmem:[%s6 + $0x18] sm:$0xff]
      %v6822 = vld [vmem:[%s6 + $0x20] sm:$0xff]
      %v6823 = vld [vmem:[%s6 + $0x28] sm:$0xff]
      %v6824 = vld [vmem:[%s6 + $0x30] sm:$0xff]
      %v6825 = vld [vmem:[%s6 + $0x38] sm:$0xff]
      %v6826 = vld [vmem:[%s6 + $0x40] sm:$0xff]
      %v6827 = vld [vmem:[%s6 + $0x48] sm:$0xff]
      %v6828 = vld [vmem:[%s6 + $0x50] sm:$0xff]
      %v6829 = vld [vmem:[%s6 + $0x58] sm:$0xff]
      %v6830 = vld [vmem:[%s6 + $0x60] sm:$0xff]
      %v6831 = vld [vmem:[%s6 + $0x68] sm:$0xff]
      %v6832 = vld [vmem:[%s6 + $0x70] sm:$0xff]
      %v6833 = vld [vmem:[%s6 + $0x78] sm:$0xff]
      %v6834 = vld [vmem:[%s6 + $0x80] sm:$0xff]
      %v6835 = vld [vmem:[%s6 + $0x88] sm:$0xff]
      %v6836 = vld [vmem:[%s6 + $0x90] sm:$0xff]
      %v6837 = vld [vmem:[%s6 + $0x98] sm:$0xff]
      %v6838 = vld [vmem:[%s6 + $0xa0] sm:$0xff]
      %v6839 = vld [vmem:[%s6 + $0xa8] sm:$0xff]
      %v6840 = vld [vmem:[%s6 + $0xb0] sm:$0xff]
      %v6841 = vld [vmem:[%s6 + $0xb8] sm:$0xff]
      %v6842 = vld [vmem:[%s6 + $0xc0] sm:$0xff]
      %v6843 = vld [vmem:[%s6 + $0xc8] sm:$0xff]
      %v6844 = vld [vmem:[%s6 + $0xd0] sm:$0xff]
      %v6845 = vld [vmem:[%s6 + $0xd8] sm:$0xff]
      %v6846 = vld [vmem:[%s6 + $0xe0] sm:$0xff]
      %v6847 = vld [vmem:[%s6 + $0xe8] sm:$0xff]
      %v6848 = vld [vmem:[%s6 + $0xf0] sm:$0xff]
      %v6849 = vld [vmem:[%s6 + $0xf8] sm:$0xff]
      %6851 = vset.pattern.permute.xlu0 0
      %6852 = vperm.xlu0 %6851, %v6818
      %v6853 = vpop.permute.xlu0 %6852
      %6856 = vset.pattern.permute.xlu0 0
      %6857 = vperm.xlu0 %6856, %v6819
      %v6858 = vpop.permute.xlu0 %6857
      %6861 = vset.pattern.permute.xlu0 0
      %6862 = vperm.xlu0 %6861, %v6820
      %v6863 = vpop.permute.xlu0 %6862
      %6866 = vset.pattern.permute.xlu0 0
      %6867 = vperm.xlu0 %6866, %v6821
      %v6868 = vpop.permute.xlu0 %6867
      %6871 = vset.pattern.permute.xlu0 0
      %6872 = vperm.xlu0 %6871, %v6822
      %v6873 = vpop.permute.xlu0 %6872
      %6876 = vset.pattern.permute.xlu0 0
      %6877 = vperm.xlu0 %6876, %v6823
      %v6878 = vpop.permute.xlu0 %6877
      %6881 = vset.pattern.permute.xlu0 0
      %6882 = vperm.xlu0 %6881, %v6824
      %v6883 = vpop.permute.xlu0 %6882
      %6886 = vset.pattern.permute.xlu0 0
      %6887 = vperm.xlu0 %6886, %v6825
      %v6888 = vpop.permute.xlu0 %6887
      %6891 = vset.pattern.permute.xlu0 0
      %6892 = vperm.xlu0 %6891, %v6826
      %v6893 = vpop.permute.xlu0 %6892
      %6896 = vset.pattern.permute.xlu0 0
      %6897 = vperm.xlu0 %6896, %v6827
      %v6898 = vpop.permute.xlu0 %6897
      %6901 = vset.pattern.permute.xlu0 0
      %6902 = vperm.xlu0 %6901, %v6828
      %v6903 = vpop.permute.xlu0 %6902
      %6906 = vset.pattern.permute.xlu0 0
      %6907 = vperm.xlu0 %6906, %v6829
      %v6908 = vpop.permute.xlu0 %6907
      %6911 = vset.pattern.permute.xlu0 0
      %6912 = vperm.xlu0 %6911, %v6830
      %v6913 = vpop.permute.xlu0 %6912
      %6916 = vset.pattern.permute.xlu0 0
      %6917 = vperm.xlu0 %6916, %v6831
      %v6918 = vpop.permute.xlu0 %6917
      %6921 = vset.pattern.permute.xlu0 0
      %6922 = vperm.xlu0 %6921, %v6832
      %v6923 = vpop.permute.xlu0 %6922
      %6926 = vset.pattern.permute.xlu0 0
      %6927 = vperm.xlu0 %6926, %v6833
      %v6928 = vpop.permute.xlu0 %6927
      %6931 = vset.pattern.permute.xlu0 0
      %6932 = vperm.xlu0 %6931, %v6834
      %v6933 = vpop.permute.xlu0 %6932
      %6936 = vset.pattern.permute.xlu0 0
      %6937 = vperm.xlu0 %6936, %v6835
      %v6938 = vpop.permute.xlu0 %6937
      %6941 = vset.pattern.permute.xlu0 0
      %6942 = vperm.xlu0 %6941, %v6836
      %v6943 = vpop.permute.xlu0 %6942
      %6946 = vset.pattern.permute.xlu0 0
      %6947 = vperm.xlu0 %6946, %v6837
      %v6948 = vpop.permute.xlu0 %6947
      %6951 = vset.pattern.permute.xlu0 0
      %6952 = vperm.xlu0 %6951, %v6838
      %v6953 = vpop.permute.xlu0 %6952
      %6956 = vset.pattern.permute.xlu0 0
      %6957 = vperm.xlu0 %6956, %v6839
      %v6958 = vpop.permute.xlu0 %6957
      %6961 = vset.pattern.permute.xlu0 0
      %6962 = vperm.xlu0 %6961, %v6840
      %v6963 = vpop.permute.xlu0 %6962
      %6966 = vset.pattern.permute.xlu0 0
      %6967 = vperm.xlu0 %6966, %v6841
      %v6968 = vpop.permute.xlu0 %6967
      %6971 = vset.pattern.permute.xlu0 0
      %6972 = vperm.xlu0 %6971, %v6842
      %v6973 = vpop.permute.xlu0 %6972
      %6976 = vset.pattern.permute.xlu0 0
      %6977 = vperm.xlu0 %6976, %v6843
      %v6978 = vpop.permute.xlu0 %6977
      %6981 = vset.pattern.permute.xlu0 0
      %6982 = vperm.xlu0 %6981, %v6844
      %v6983 = vpop.permute.xlu0 %6982
      %6986 = vset.pattern.permute.xlu0 0
      %6987 = vperm.xlu0 %6986, %v6845
      %v6988 = vpop.permute.xlu0 %6987
      %6991 = vset.pattern.permute.xlu0 0
      %6992 = vperm.xlu0 %6991, %v6846
      %v6993 = vpop.permute.xlu0 %6992
      %6996 = vset.pattern.permute.xlu0 0
      %6997 = vperm.xlu0 %6996, %v6847
      %v6998 = vpop.permute.xlu0 %6997
      %7001 = vset.pattern.permute.xlu0 0
      %7002 = vperm.xlu0 %7001, %v6848
      %v7003 = vpop.permute.xlu0 %7002
      %7006 = vset.pattern.permute.xlu0 0
      %7007 = vperm.xlu0 %7006, %v6849
      %v7008 = vpop.permute.xlu0 %7007
      %v7010 = vmul.f32 %v6754, %v6853
      %v7011 = vmul.f32 %v6755, %v6853
      %v7012 = vmul.f32 %v6756, %v6858
      %v7013 = vmul.f32 %v6757, %v6858
      %v7014 = vmul.f32 %v6758, %v6863
      %v7015 = vmul.f32 %v6759, %v6863
      %v7016 = vmul.f32 %v6760, %v6868
      %v7017 = vmul.f32 %v6761, %v6868
      %v7018 = vmul.f32 %v6762, %v6873
      %v7019 = vmul.f32 %v6763, %v6873
      %v7020 = vmul.f32 %v6764, %v6878
      %v7021 = vmul.f32 %v6765, %v6878
      %v7022 = vmul.f32 %v6766, %v6883
      %v7023 = vmul.f32 %v6767, %v6883
      %v7024 = vmul.f32 %v6768, %v6888
      %v7025 = vmul.f32 %v6769, %v6888
      %v7026 = vmul.f32 %v6770, %v6893
      %v7027 = vmul.f32 %v6771, %v6893
      %v7028 = vmul.f32 %v6772, %v6898
      %v7029 = vmul.f32 %v6773, %v6898
      %v7030 = vmul.f32 %v6774, %v6903
      %v7031 = vmul.f32 %v6775, %v6903
      %v7032 = vmul.f32 %v6776, %v6908
      %v7033 = vmul.f32 %v6777, %v6908
      %v7034 = vmul.f32 %v6778, %v6913
      %v7035 = vmul.f32 %v6779, %v6913
      %v7036 = vmul.f32 %v6780, %v6918
      %v7037 = vmul.f32 %v6781, %v6918
      %v7038 = vmul.f32 %v6782, %v6923
      %v7039 = vmul.f32 %v6783, %v6923
      %v7040 = vmul.f32 %v6784, %v6928
      %v7041 = vmul.f32 %v6785, %v6928
      %v7042 = vmul.f32 %v6786, %v6933
      %v7043 = vmul.f32 %v6787, %v6933
      %v7044 = vmul.f32 %v6788, %v6938
      %v7045 = vmul.f32 %v6789, %v6938
      %v7046 = vmul.f32 %v6790, %v6943
      %v7047 = vmul.f32 %v6791, %v6943
      %v7048 = vmul.f32 %v6792, %v6948
      %v7049 = vmul.f32 %v6793, %v6948
      %v7050 = vmul.f32 %v6794, %v6953
      %v7051 = vmul.f32 %v6795, %v6953
      %v7052 = vmul.f32 %v6796, %v6958
      %v7053 = vmul.f32 %v6797, %v6958
      %v7054 = vmul.f32 %v6798, %v6963
      %v7055 = vmul.f32 %v6799, %v6963
      %v7056 = vmul.f32 %v6800, %v6968
      %v7057 = vmul.f32 %v6801, %v6968
      %v7058 = vmul.f32 %v6802, %v6973
      %v7059 = vmul.f32 %v6803, %v6973
      %v7060 = vmul.f32 %v6804, %v6978
      %v7061 = vmul.f32 %v6805, %v6978
      %v7062 = vmul.f32 %v6806, %v6983
      %v7063 = vmul.f32 %v6807, %v6983
      %v7064 = vmul.f32 %v6808, %v6988
      %v7065 = vmul.f32 %v6809, %v6988
      %v7066 = vmul.f32 %v6810, %v6993
      %v7067 = vmul.f32 %v6811, %v6993
      %v7068 = vmul.f32 %v6812, %v6998
      %v7069 = vmul.f32 %v6813, %v6998
      %v7070 = vmul.f32 %v6814, %v7003
      %v7071 = vmul.f32 %v6815, %v7003
      %v7072 = vmul.f32 %v6816, %v7008
      %v7073 = vmul.f32 %v6817, %v7008
      %v7074 = vld [vmem:[%s7] sm:$0xff]
      %v7075 = vld [vmem:[%s7 + $0x8] sm:$0xff]
      %v7076 = vld [vmem:[%s7 + $0x10] sm:$0xff]
      %v7077 = vld [vmem:[%s7 + $0x18] sm:$0xff]
      %v7078 = vld [vmem:[%s7 + $0x20] sm:$0xff]
      %v7079 = vld [vmem:[%s7 + $0x28] sm:$0xff]
      %v7080 = vld [vmem:[%s7 + $0x30] sm:$0xff]
      %v7081 = vld [vmem:[%s7 + $0x38] sm:$0xff]
      %v7082 = vld [vmem:[%s7 + $0x40] sm:$0xff]
      %v7083 = vld [vmem:[%s7 + $0x48] sm:$0xff]
      %v7084 = vld [vmem:[%s7 + $0x50] sm:$0xff]
      %v7085 = vld [vmem:[%s7 + $0x58] sm:$0xff]
      %v7086 = vld [vmem:[%s7 + $0x60] sm:$0xff]
      %v7087 = vld [vmem:[%s7 + $0x68] sm:$0xff]
      %v7088 = vld [vmem:[%s7 + $0x70] sm:$0xff]
      %v7089 = vld [vmem:[%s7 + $0x78] sm:$0xff]
      %v7090 = vld [vmem:[%s7 + $0x80] sm:$0xff]
      %v7091 = vld [vmem:[%s7 + $0x88] sm:$0xff]
      %v7092 = vld [vmem:[%s7 + $0x90] sm:$0xff]
      %v7093 = vld [vmem:[%s7 + $0x98] sm:$0xff]
      %v7094 = vld [vmem:[%s7 + $0xa0] sm:$0xff]
      %v7095 = vld [vmem:[%s7 + $0xa8] sm:$0xff]
      %v7096 = vld [vmem:[%s7 + $0xb0] sm:$0xff]
      %v7097 = vld [vmem:[%s7 + $0xb8] sm:$0xff]
      %v7098 = vld [vmem:[%s7 + $0xc0] sm:$0xff]
      %v7099 = vld [vmem:[%s7 + $0xc8] sm:$0xff]
      %v7100 = vld [vmem:[%s7 + $0xd0] sm:$0xff]
      %v7101 = vld [vmem:[%s7 + $0xd8] sm:$0xff]
      %v7102 = vld [vmem:[%s7 + $0xe0] sm:$0xff]
      %v7103 = vld [vmem:[%s7 + $0xe8] sm:$0xff]
      %v7104 = vld [vmem:[%s7 + $0xf0] sm:$0xff]
      %v7105 = vld [vmem:[%s7 + $0xf8] sm:$0xff]
      %7107 = vset.pattern.permute.xlu0 0
      %7108 = vperm.xlu0 %7107, %v7074
      %v7109 = vpop.permute.xlu0 %7108
      %7112 = vset.pattern.permute.xlu0 0
      %7113 = vperm.xlu0 %7112, %v7075
      %v7114 = vpop.permute.xlu0 %7113
      %7117 = vset.pattern.permute.xlu0 0
      %7118 = vperm.xlu0 %7117, %v7076
      %v7119 = vpop.permute.xlu0 %7118
      %7122 = vset.pattern.permute.xlu0 0
      %7123 = vperm.xlu0 %7122, %v7077
      %v7124 = vpop.permute.xlu0 %7123
      %7127 = vset.pattern.permute.xlu0 0
      %7128 = vperm.xlu0 %7127, %v7078
      %v7129 = vpop.permute.xlu0 %7128
      %7132 = vset.pattern.permute.xlu0 0
      %7133 = vperm.xlu0 %7132, %v7079
      %v7134 = vpop.permute.xlu0 %7133
      %7137 = vset.pattern.permute.xlu0 0
      %7138 = vperm.xlu0 %7137, %v7080
      %v7139 = vpop.permute.xlu0 %7138
      %7142 = vset.pattern.permute.xlu0 0
      %7143 = vperm.xlu0 %7142, %v7081
      %v7144 = vpop.permute.xlu0 %7143
      %7147 = vset.pattern.permute.xlu0 0
      %7148 = vperm.xlu0 %7147, %v7082
      %v7149 = vpop.permute.xlu0 %7148
      %7152 = vset.pattern.permute.xlu0 0
      %7153 = vperm.xlu0 %7152, %v7083
      %v7154 = vpop.permute.xlu0 %7153
      %7157 = vset.pattern.permute.xlu0 0
      %7158 = vperm.xlu0 %7157, %v7084
      %v7159 = vpop.permute.xlu0 %7158
      %7162 = vset.pattern.permute.xlu0 0
      %7163 = vperm.xlu0 %7162, %v7085
      %v7164 = vpop.permute.xlu0 %7163
      %7167 = vset.pattern.permute.xlu0 0
      %7168 = vperm.xlu0 %7167, %v7086
      %v7169 = vpop.permute.xlu0 %7168
      %7172 = vset.pattern.permute.xlu0 0
      %7173 = vperm.xlu0 %7172, %v7087
      %v7174 = vpop.permute.xlu0 %7173
      %7177 = vset.pattern.permute.xlu0 0
      %7178 = vperm.xlu0 %7177, %v7088
      %v7179 = vpop.permute.xlu0 %7178
      %7182 = vset.pattern.permute.xlu0 0
      %7183 = vperm.xlu0 %7182, %v7089
      %v7184 = vpop.permute.xlu0 %7183
      %7187 = vset.pattern.permute.xlu0 0
      %7188 = vperm.xlu0 %7187, %v7090
      %v7189 = vpop.permute.xlu0 %7188
      %7192 = vset.pattern.permute.xlu0 0
      %7193 = vperm.xlu0 %7192, %v7091
      %v7194 = vpop.permute.xlu0 %7193
      %7197 = vset.pattern.permute.xlu0 0
      %7198 = vperm.xlu0 %7197, %v7092
      %v7199 = vpop.permute.xlu0 %7198
      %7202 = vset.pattern.permute.xlu0 0
      %7203 = vperm.xlu0 %7202, %v7093
      %v7204 = vpop.permute.xlu0 %7203
      %7207 = vset.pattern.permute.xlu0 0
      %7208 = vperm.xlu0 %7207, %v7094
      %v7209 = vpop.permute.xlu0 %7208
      %7212 = vset.pattern.permute.xlu0 0
      %7213 = vperm.xlu0 %7212, %v7095
      %v7214 = vpop.permute.xlu0 %7213
      %7217 = vset.pattern.permute.xlu0 0
      %7218 = vperm.xlu0 %7217, %v7096
      %v7219 = vpop.permute.xlu0 %7218
      %7222 = vset.pattern.permute.xlu0 0
      %7223 = vperm.xlu0 %7222, %v7097
      %v7224 = vpop.permute.xlu0 %7223
      %7227 = vset.pattern.permute.xlu0 0
      %7228 = vperm.xlu0 %7227, %v7098
      %v7229 = vpop.permute.xlu0 %7228
      %7232 = vset.pattern.permute.xlu0 0
      %7233 = vperm.xlu0 %7232, %v7099
      %v7234 = vpop.permute.xlu0 %7233
      %7237 = vset.pattern.permute.xlu0 0
      %7238 = vperm.xlu0 %7237, %v7100
      %v7239 = vpop.permute.xlu0 %7238
      %7242 = vset.pattern.permute.xlu0 0
      %7243 = vperm.xlu0 %7242, %v7101
      %v7244 = vpop.permute.xlu0 %7243
      %7247 = vset.pattern.permute.xlu0 0
      %7248 = vperm.xlu0 %7247, %v7102
      %v7249 = vpop.permute.xlu0 %7248
      %7252 = vset.pattern.permute.xlu0 0
      %7253 = vperm.xlu0 %7252, %v7103
      %v7254 = vpop.permute.xlu0 %7253
      %7257 = vset.pattern.permute.xlu0 0
      %7258 = vperm.xlu0 %7257, %v7104
      %v7259 = vpop.permute.xlu0 %7258
      %7262 = vset.pattern.permute.xlu0 0
      %7263 = vperm.xlu0 %7262, %v7105
      %v7264 = vpop.permute.xlu0 %7263
      %v7266 = vadd.f32 %v7010, %v7109
      %v7267 = vadd.f32 %v7011, %v7109
      %v7268 = vadd.f32 %v7012, %v7114
      %v7269 = vadd.f32 %v7013, %v7114
      %v7270 = vadd.f32 %v7014, %v7119
      %v7271 = vadd.f32 %v7015, %v7119
      %v7272 = vadd.f32 %v7016, %v7124
      %v7273 = vadd.f32 %v7017, %v7124
      %v7274 = vadd.f32 %v7018, %v7129
      %v7275 = vadd.f32 %v7019, %v7129
      %v7276 = vadd.f32 %v7020, %v7134
      %v7277 = vadd.f32 %v7021, %v7134
      %v7278 = vadd.f32 %v7022, %v7139
      %v7279 = vadd.f32 %v7023, %v7139
      %v7280 = vadd.f32 %v7024, %v7144
      %v7281 = vadd.f32 %v7025, %v7144
      %v7282 = vadd.f32 %v7026, %v7149
      %v7283 = vadd.f32 %v7027, %v7149
      %v7284 = vadd.f32 %v7028, %v7154
      %v7285 = vadd.f32 %v7029, %v7154
      %v7286 = vadd.f32 %v7030, %v7159
      %v7287 = vadd.f32 %v7031, %v7159
      %v7288 = vadd.f32 %v7032, %v7164
      %v7289 = vadd.f32 %v7033, %v7164
      %v7290 = vadd.f32 %v7034, %v7169
      %v7291 = vadd.f32 %v7035, %v7169
      %v7292 = vadd.f32 %v7036, %v7174
      %v7293 = vadd.f32 %v7037, %v7174
      %v7294 = vadd.f32 %v7038, %v7179
      %v7295 = vadd.f32 %v7039, %v7179
      %v7296 = vadd.f32 %v7040, %v7184
      %v7297 = vadd.f32 %v7041, %v7184
      %v7298 = vadd.f32 %v7042, %v7189
      %v7299 = vadd.f32 %v7043, %v7189
      %v7300 = vadd.f32 %v7044, %v7194
      %v7301 = vadd.f32 %v7045, %v7194
      %v7302 = vadd.f32 %v7046, %v7199
      %v7303 = vadd.f32 %v7047, %v7199
      %v7304 = vadd.f32 %v7048, %v7204
      %v7305 = vadd.f32 %v7049, %v7204
      %v7306 = vadd.f32 %v7050, %v7209
      %v7307 = vadd.f32 %v7051, %v7209
      %v7308 = vadd.f32 %v7052, %v7214
      %v7309 = vadd.f32 %v7053, %v7214
      %v7310 = vadd.f32 %v7054, %v7219
      %v7311 = vadd.f32 %v7055, %v7219
      %v7312 = vadd.f32 %v7056, %v7224
      %v7313 = vadd.f32 %v7057, %v7224
      %v7314 = vadd.f32 %v7058, %v7229
      %v7315 = vadd.f32 %v7059, %v7229
      %v7316 = vadd.f32 %v7060, %v7234
      %v7317 = vadd.f32 %v7061, %v7234
      %v7318 = vadd.f32 %v7062, %v7239
      %v7319 = vadd.f32 %v7063, %v7239
      %v7320 = vadd.f32 %v7064, %v7244
      %v7321 = vadd.f32 %v7065, %v7244
      %v7322 = vadd.f32 %v7066, %v7249
      %v7323 = vadd.f32 %v7067, %v7249
      %v7324 = vadd.f32 %v7068, %v7254
      %v7325 = vadd.f32 %v7069, %v7254
      %v7326 = vadd.f32 %v7070, %v7259
      %v7327 = vadd.f32 %v7071, %v7259
      %v7328 = vadd.f32 %v7072, %v7264
      %v7329 = vadd.f32 %v7073, %v7264
      %v7330 = vmax.f32 %v7266, 0.0
      %v7331 = vmax.f32 %v7267, 0.0
      %v7332 = vmax.f32 %v7268, 0.0
      %v7333 = vmax.f32 %v7269, 0.0
      %v7334 = vmax.f32 %v7270, 0.0
      %v7335 = vmax.f32 %v7271, 0.0
      %v7336 = vmax.f32 %v7272, 0.0
      %v7337 = vmax.f32 %v7273, 0.0
      %v7338 = vmax.f32 %v7274, 0.0
      %v7339 = vmax.f32 %v7275, 0.0
      %v7340 = vmax.f32 %v7276, 0.0
      %v7341 = vmax.f32 %v7277, 0.0
      %v7342 = vmax.f32 %v7278, 0.0
      %v7343 = vmax.f32 %v7279, 0.0
      %v7344 = vmax.f32 %v7280, 0.0
      %v7345 = vmax.f32 %v7281, 0.0
      %v7346 = vmax.f32 %v7282, 0.0
      %v7347 = vmax.f32 %v7283, 0.0
      %v7348 = vmax.f32 %v7284, 0.0
      %v7349 = vmax.f32 %v7285, 0.0
      %v7350 = vmax.f32 %v7286, 0.0
      %v7351 = vmax.f32 %v7287, 0.0
      %v7352 = vmax.f32 %v7288, 0.0
      %v7353 = vmax.f32 %v7289, 0.0
      %v7354 = vmax.f32 %v7290, 0.0
      %v7355 = vmax.f32 %v7291, 0.0
      %v7356 = vmax.f32 %v7292, 0.0
      %v7357 = vmax.f32 %v7293, 0.0
      %v7358 = vmax.f32 %v7294, 0.0
      %v7359 = vmax.f32 %v7295, 0.0
      %v7360 = vmax.f32 %v7296, 0.0
      %v7361 = vmax.f32 %v7297, 0.0
      %v7362 = vmax.f32 %v7298, 0.0
      %v7363 = vmax.f32 %v7299, 0.0
      %v7364 = vmax.f32 %v7300, 0.0
      %v7365 = vmax.f32 %v7301, 0.0
      %v7366 = vmax.f32 %v7302, 0.0
      %v7367 = vmax.f32 %v7303, 0.0
      %v7368 = vmax.f32 %v7304, 0.0
      %v7369 = vmax.f32 %v7305, 0.0
      %v7370 = vmax.f32 %v7306, 0.0
      %v7371 = vmax.f32 %v7307, 0.0
      %v7372 = vmax.f32 %v7308, 0.0
      %v7373 = vmax.f32 %v7309, 0.0
      %v7374 = vmax.f32 %v7310, 0.0
      %v7375 = vmax.f32 %v7311, 0.0
      %v7376 = vmax.f32 %v7312, 0.0
      %v7377 = vmax.f32 %v7313, 0.0
      %v7378 = vmax.f32 %v7314, 0.0
      %v7379 = vmax.f32 %v7315, 0.0
      %v7380 = vmax.f32 %v7316, 0.0
      %v7381 = vmax.f32 %v7317, 0.0
      %v7382 = vmax.f32 %v7318, 0.0
      %v7383 = vmax.f32 %v7319, 0.0
      %v7384 = vmax.f32 %v7320, 0.0
      %v7385 = vmax.f32 %v7321, 0.0
      %v7386 = vmax.f32 %v7322, 0.0
      %v7387 = vmax.f32 %v7323, 0.0
      %v7388 = vmax.f32 %v7324, 0.0
      %v7389 = vmax.f32 %v7325, 0.0
      %v7390 = vmax.f32 %v7326, 0.0
      %v7391 = vmax.f32 %v7327, 0.0
      %v7392 = vmax.f32 %v7328, 0.0
      %v7393 = vmax.f32 %v7329, 0.0
      %v7394 = vpack.c.bf16 %v7332, %v7330
      %v7395 = vpack.c.bf16 %v7333, %v7331
      %v7396 = vpack.c.bf16 %v7336, %v7334
      %v7397 = vpack.c.bf16 %v7337, %v7335
      %v7398 = vpack.c.bf16 %v7340, %v7338
      %v7399 = vpack.c.bf16 %v7341, %v7339
      %v7400 = vpack.c.bf16 %v7344, %v7342
      %v7401 = vpack.c.bf16 %v7345, %v7343
      %v7402 = vpack.c.bf16 %v7348, %v7346
      %v7403 = vpack.c.bf16 %v7349, %v7347
      %v7404 = vpack.c.bf16 %v7352, %v7350
      %v7405 = vpack.c.bf16 %v7353, %v7351
      %v7406 = vpack.c.bf16 %v7356, %v7354
      %v7407 = vpack.c.bf16 %v7357, %v7355
      %v7408 = vpack.c.bf16 %v7360, %v7358
      %v7409 = vpack.c.bf16 %v7361, %v7359
      %v7410 = vpack.c.bf16 %v7364, %v7362
      %v7411 = vpack.c.bf16 %v7365, %v7363
      %v7412 = vpack.c.bf16 %v7368, %v7366
      %v7413 = vpack.c.bf16 %v7369, %v7367
      %v7414 = vpack.c.bf16 %v7372, %v7370
      %v7415 = vpack.c.bf16 %v7373, %v7371
      %v7416 = vpack.c.bf16 %v7376, %v7374
      %v7417 = vpack.c.bf16 %v7377, %v7375
      %v7418 = vpack.c.bf16 %v7380, %v7378
      %v7419 = vpack.c.bf16 %v7381, %v7379
      %v7420 = vpack.c.bf16 %v7384, %v7382
      %v7421 = vpack.c.bf16 %v7385, %v7383
      %v7422 = vpack.c.bf16 %v7388, %v7386
      %v7423 = vpack.c.bf16 %v7389, %v7387
      %v7424 = vpack.c.bf16 %v7392, %v7390
      %v7425 = vpack.c.bf16 %v7393, %v7391
      %v7426 = vpack.c.bf16 %v652, %v652
      %v7427 = vpack.c.bf16 %v653, %v653
      %7460 = vrot.lane.b32.xlu0 %v7394, 64
      %v7461 = vpop.permute.xlu0 %7460
      %7462 = vrot.lane.b32.xlu0 %v7395, 64
      %v7463 = vpop.permute.xlu0 %7462
      %7464 = vrot.lane.b32.xlu0 %v7396, 64
      %v7465 = vpop.permute.xlu0 %7464
      %7466 = vrot.lane.b32.xlu0 %v7397, 64
      %v7467 = vpop.permute.xlu0 %7466
      %7468 = vrot.lane.b32.xlu0 %v7398, 64
      %v7469 = vpop.permute.xlu0 %7468
      %7470 = vrot.lane.b32.xlu0 %v7399, 64
      %v7471 = vpop.permute.xlu0 %7470
      %7472 = vrot.lane.b32.xlu0 %v7400, 64
      %v7473 = vpop.permute.xlu0 %7472
      %7474 = vrot.lane.b32.xlu0 %v7401, 64
      %v7475 = vpop.permute.xlu0 %7474
      %7476 = vrot.lane.b32.xlu0 %v7402, 64
      %v7477 = vpop.permute.xlu0 %7476
      %7478 = vrot.lane.b32.xlu0 %v7403, 64
      %v7479 = vpop.permute.xlu0 %7478
      %7480 = vrot.lane.b32.xlu0 %v7404, 64
      %v7481 = vpop.permute.xlu0 %7480
      %7482 = vrot.lane.b32.xlu0 %v7405, 64
      %v7483 = vpop.permute.xlu0 %7482
      %7484 = vrot.lane.b32.xlu0 %v7406, 64
      %v7485 = vpop.permute.xlu0 %7484
      %7486 = vrot.lane.b32.xlu0 %v7407, 64
      %v7487 = vpop.permute.xlu0 %7486
      %7488 = vrot.lane.b32.xlu0 %v7408, 64
      %v7489 = vpop.permute.xlu0 %7488
      %7490 = vrot.lane.b32.xlu0 %v7409, 64
      %v7491 = vpop.permute.xlu0 %7490
      %7492 = vrot.lane.b32.xlu0 %v7410, 64
      %v7493 = vpop.permute.xlu0 %7492
      %7494 = vrot.lane.b32.xlu0 %v7411, 64
      %v7495 = vpop.permute.xlu0 %7494
      %7496 = vrot.lane.b32.xlu0 %v7412, 64
      %v7497 = vpop.permute.xlu0 %7496
      %7498 = vrot.lane.b32.xlu0 %v7413, 64
      %v7499 = vpop.permute.xlu0 %7498
      %7500 = vrot.lane.b32.xlu0 %v7414, 64
      %v7501 = vpop.permute.xlu0 %7500
      %7502 = vrot.lane.b32.xlu0 %v7415, 64
      %v7503 = vpop.permute.xlu0 %7502
      %7504 = vrot.lane.b32.xlu0 %v7416, 64
      %v7505 = vpop.permute.xlu0 %7504
      %7506 = vrot.lane.b32.xlu0 %v7417, 64
      %v7507 = vpop.permute.xlu0 %7506
      %7508 = vrot.lane.b32.xlu0 %v7418, 64
      %v7509 = vpop.permute.xlu0 %7508
      %7510 = vrot.lane.b32.xlu0 %v7419, 64
      %v7511 = vpop.permute.xlu0 %7510
      %7512 = vrot.lane.b32.xlu0 %v7420, 64
      %v7513 = vpop.permute.xlu0 %7512
      %7514 = vrot.lane.b32.xlu0 %v7421, 64
      %v7515 = vpop.permute.xlu0 %7514
      %7516 = vrot.lane.b32.xlu0 %v7422, 64
      %v7517 = vpop.permute.xlu0 %7516
      %7518 = vrot.lane.b32.xlu0 %v7423, 64
      %v7519 = vpop.permute.xlu0 %7518
      %7520 = vrot.lane.b32.xlu0 %v7424, 64
      %v7521 = vpop.permute.xlu0 %7520
      %7522 = vrot.lane.b32.xlu0 %v7425, 64
      %v7523 = vpop.permute.xlu0 %7522
      %vm7524 = vcmask 523264
      %v7525 = vsel %vm7524, %v7461, %v7463
      %v7526 = vsel %vm7524, %v7465, %v7467
      %v7527 = vsel %vm7524, %v7469, %v7471
      %v7528 = vsel %vm7524, %v7473, %v7475
      %v7529 = vsel %vm7524, %v7477, %v7479
      %v7530 = vsel %vm7524, %v7481, %v7483
      %v7531 = vsel %vm7524, %v7485, %v7487
      %v7532 = vsel %vm7524, %v7489, %v7491
      %v7533 = vsel %vm7524, %v7493, %v7495
      %v7534 = vsel %vm7524, %v7497, %v7499
      %v7535 = vsel %vm7524, %v7501, %v7503
      %v7536 = vsel %vm7524, %v7505, %v7507
      %v7537 = vsel %vm7524, %v7509, %v7511
      %v7538 = vsel %vm7524, %v7513, %v7515
      %v7539 = vsel %vm7524, %v7517, %v7519
      %v7540 = vsel %vm7524, %v7521, %v7523
      %vm7557 = vcmask 523264
      %v7559 = vsel %vm7557, 0, %v7461
      %v7562 = vsel %vm7557, 0, %v7465
      %v7565 = vsel %vm7557, 0, %v7469
      %v7568 = vsel %vm7557, 0, %v7473
      %v7571 = vsel %vm7557, 0, %v7477
      %v7574 = vsel %vm7557, 0, %v7481
      %v7577 = vsel %vm7557, 0, %v7485
      %v7580 = vsel %vm7557, 0, %v7489
      %v7583 = vsel %vm7557, 0, %v7493
      %v7586 = vsel %vm7557, 0, %v7497
      %v7589 = vsel %vm7557, 0, %v7501
      %v7592 = vsel %vm7557, 0, %v7505
      %v7595 = vsel %vm7557, 0, %v7509
      %v7598 = vsel %vm7557, 0, %v7513
      %v7601 = vsel %vm7557, 0, %v7517
      %v7604 = vsel %vm7557, 0, %v7521
      %v7607 = vpack.i.b16 %v7426, %v7426
      %v7609 = vlaneseq
      %v7610 = vshrl.u32 %v7609, 7
      %v7611 = vsub.s32 2, %v7610
      %v7612 = vrot.slane %v7607, %v7611
      %v7614 = vpack.i.b16 %v7427, %v7427
      %v7616 = vlaneseq
      %v7617 = vshrl.u32 %v7616, 7
      %v7618 = vsub.s32 2, %v7617
      %v7619 = vrot.slane %v7614, %v7618
      %v7620 = vmul.bf16 %v7559, %v7612
      %v7621 = vmul.bf16 %v7525, %v7619
      %v7622 = vmul.bf16 %v7562, %v7612
      %v7623 = vmul.bf16 %v7526, %v7619
      %v7624 = vmul.bf16 %v7565, %v7612
      %v7625 = vmul.bf16 %v7527, %v7619
      %v7626 = vmul.bf16 %v7568, %v7612
      %v7627 = vmul.bf16 %v7528, %v7619
      %v7628 = vmul.bf16 %v7571, %v7612
      %v7629 = vmul.bf16 %v7529, %v7619
      %v7630 = vmul.bf16 %v7574, %v7612
      %v7631 = vmul.bf16 %v7530, %v7619
      %v7632 = vmul.bf16 %v7577, %v7612
      %v7633 = vmul.bf16 %v7531, %v7619
      %v7634 = vmul.bf16 %v7580, %v7612
      %v7635 = vmul.bf16 %v7532, %v7619
      %v7636 = vmul.bf16 %v7583, %v7612
      %v7637 = vmul.bf16 %v7533, %v7619
      %v7638 = vmul.bf16 %v7586, %v7612
      %v7639 = vmul.bf16 %v7534, %v7619
      %v7640 = vmul.bf16 %v7589, %v7612
      %v7641 = vmul.bf16 %v7535, %v7619
      %v7642 = vmul.bf16 %v7592, %v7612
      %v7643 = vmul.bf16 %v7536, %v7619
      %v7644 = vmul.bf16 %v7595, %v7612
      %v7645 = vmul.bf16 %v7537, %v7619
      %v7646 = vmul.bf16 %v7598, %v7612
      %v7647 = vmul.bf16 %v7538, %v7619
      %v7648 = vmul.bf16 %v7601, %v7612
      %v7649 = vmul.bf16 %v7539, %v7619
      %v7650 = vmul.bf16 %v7604, %v7612
      %v7651 = vmul.bf16 %v7540, %v7619
      %v7652 = vld [vmem:[%s8] sm:$0xff]
      %v7653 = vld [vmem:[%s8 + $0x8] sm:$0xff]
      %v7654 = vld [vmem:[%s8 + $0x10] sm:$0xff]
      %v7655 = vld [vmem:[%s8 + $0x18] sm:$0xff]
      %v7656 = vld [vmem:[%s8 + $0x20] sm:$0xff]
      %v7657 = vld [vmem:[%s8 + $0x28] sm:$0xff]
      %v7658 = vld [vmem:[%s8 + $0x30] sm:$0xff]
      %v7659 = vld [vmem:[%s8 + $0x38] sm:$0xff]
      %v7660 = vld [vmem:[%s8 + $0x40] sm:$0xff]
      %v7661 = vld [vmem:[%s8 + $0x48] sm:$0xff]
      %v7662 = vld [vmem:[%s8 + $0x50] sm:$0xff]
      %v7663 = vld [vmem:[%s8 + $0x58] sm:$0xff]
      %v7664 = vld [vmem:[%s8 + $0x60] sm:$0xff]
      %v7665 = vld [vmem:[%s8 + $0x68] sm:$0xff]
      %v7666 = vld [vmem:[%s8 + $0x70] sm:$0xff]
      %v7667 = vld [vmem:[%s8 + $0x78] sm:$0xff]
      %v7668 = vld [vmem:[%s8 + $0x80] sm:$0xff]
      %v7669 = vld [vmem:[%s8 + $0x88] sm:$0xff]
      %v7670 = vld [vmem:[%s8 + $0x90] sm:$0xff]
      %v7671 = vld [vmem:[%s8 + $0x98] sm:$0xff]
      %v7672 = vld [vmem:[%s8 + $0xa0] sm:$0xff]
      %v7673 = vld [vmem:[%s8 + $0xa8] sm:$0xff]
      %v7674 = vld [vmem:[%s8 + $0xb0] sm:$0xff]
      %v7675 = vld [vmem:[%s8 + $0xb8] sm:$0xff]
      %v7676 = vld [vmem:[%s8 + $0xc0] sm:$0xff]
      %v7677 = vld [vmem:[%s8 + $0xc8] sm:$0xff]
      %v7678 = vld [vmem:[%s8 + $0xd0] sm:$0xff]
      %v7679 = vld [vmem:[%s8 + $0xd8] sm:$0xff]
      %v7680 = vld [vmem:[%s8 + $0xe0] sm:$0xff]
      %v7681 = vld [vmem:[%s8 + $0xe8] sm:$0xff]
      %v7682 = vld [vmem:[%s8 + $0xf0] sm:$0xff]
      %v7683 = vld [vmem:[%s8 + $0xf8] sm:$0xff]
      %v7684 = vlaneseq
      %v7685 = vshrl.u32 %v7684, 7
      %v7686 = vsub.s32 3, %v7685
      %v7687 = vrot.slane %v7607, %v7686
      %v7688 = vlaneseq
      %v7689 = vshrl.u32 %v7688, 7
      %v7690 = vsub.s32 3, %v7689
      %v7691 = vrot.slane %v7614, %v7690
      %v7692 = vmul.bf16 %v7394, %v7687
      %v7693 = vmul.bf16 %v7395, %v7691
      %v7694 = vmul.bf16 %v7396, %v7687
      %v7695 = vmul.bf16 %v7397, %v7691
      %v7696 = vmul.bf16 %v7398, %v7687
      %v7697 = vmul.bf16 %v7399, %v7691
      %v7698 = vmul.bf16 %v7400, %v7687
      %v7699 = vmul.bf16 %v7401, %v7691
      %v7700 = vmul.bf16 %v7402, %v7687
      %v7701 = vmul.bf16 %v7403, %v7691
      %v7702 = vmul.bf16 %v7404, %v7687
      %v7703 = vmul.bf16 %v7405, %v7691
      %v7704 = vmul.bf16 %v7406, %v7687
      %v7705 = vmul.bf16 %v7407, %v7691
      %v7706 = vmul.bf16 %v7408, %v7687
      %v7707 = vmul.bf16 %v7409, %v7691
      %v7708 = vmul.bf16 %v7410, %v7687
      %v7709 = vmul.bf16 %v7411, %v7691
      %v7710 = vmul.bf16 %v7412, %v7687
      %v7711 = vmul.bf16 %v7413, %v7691
      %v7712 = vmul.bf16 %v7414, %v7687
      %v7713 = vmul.bf16 %v7415, %v7691
      %v7714 = vmul.bf16 %v7416, %v7687
      %v7715 = vmul.bf16 %v7417, %v7691
      %v7716 = vmul.bf16 %v7418, %v7687
      %v7717 = vmul.bf16 %v7419, %v7691
      %v7718 = vmul.bf16 %v7420, %v7687
      %v7719 = vmul.bf16 %v7421, %v7691
      %v7720 = vmul.bf16 %v7422, %v7687
      %v7721 = vmul.bf16 %v7423, %v7691
      %v7722 = vmul.bf16 %v7424, %v7687
      %v7723 = vmul.bf16 %v7425, %v7691
      %s7724 = scalar_lea.vmem %s8, 256
      %v7725 = vld [vmem:[%s7724] sm:$0xff]
      %v7726 = vld [vmem:[%s7724 + $0x8] sm:$0xff]
      %v7727 = vld [vmem:[%s7724 + $0x10] sm:$0xff]
      %v7728 = vld [vmem:[%s7724 + $0x18] sm:$0xff]
      %v7729 = vld [vmem:[%s7724 + $0x20] sm:$0xff]
      %v7730 = vld [vmem:[%s7724 + $0x28] sm:$0xff]
      %v7731 = vld [vmem:[%s7724 + $0x30] sm:$0xff]
      %v7732 = vld [vmem:[%s7724 + $0x38] sm:$0xff]
      %v7733 = vld [vmem:[%s7724 + $0x40] sm:$0xff]
      %v7734 = vld [vmem:[%s7724 + $0x48] sm:$0xff]
      %v7735 = vld [vmem:[%s7724 + $0x50] sm:$0xff]
      %v7736 = vld [vmem:[%s7724 + $0x58] sm:$0xff]
      %v7737 = vld [vmem:[%s7724 + $0x60] sm:$0xff]
      %v7738 = vld [vmem:[%s7724 + $0x68] sm:$0xff]
      %v7739 = vld [vmem:[%s7724 + $0x70] sm:$0xff]
      %v7740 = vld [vmem:[%s7724 + $0x78] sm:$0xff]
      %v7741 = vld [vmem:[%s7724 + $0x80] sm:$0xff]
      %v7742 = vld [vmem:[%s7724 + $0x88] sm:$0xff]
      %v7743 = vld [vmem:[%s7724 + $0x90] sm:$0xff]
      %v7744 = vld [vmem:[%s7724 + $0x98] sm:$0xff]
      %v7745 = vld [vmem:[%s7724 + $0xa0] sm:$0xff]
      %v7746 = vld [vmem:[%s7724 + $0xa8] sm:$0xff]
      %v7747 = vld [vmem:[%s7724 + $0xb0] sm:$0xff]
      %v7748 = vld [vmem:[%s7724 + $0xb8] sm:$0xff]
      %v7749 = vld [vmem:[%s7724 + $0xc0] sm:$0xff]
      %v7750 = vld [vmem:[%s7724 + $0xc8] sm:$0xff]
      %v7751 = vld [vmem:[%s7724 + $0xd0] sm:$0xff]
      %v7752 = vld [vmem:[%s7724 + $0xd8] sm:$0xff]
      %v7753 = vld [vmem:[%s7724 + $0xe0] sm:$0xff]
      %v7754 = vld [vmem:[%s7724 + $0xe8] sm:$0xff]
      %v7755 = vld [vmem:[%s7724 + $0xf0] sm:$0xff]
      %v7756 = vld [vmem:[%s7724 + $0xf8] sm:$0xff]
      %v7789 = vunpack.c.l.b16 %v7725
      %v7790 = vunpack.c.h.b16 %v7725
      %v7791 = vunpack.c.l.b16 %v7726
      %v7792 = vunpack.c.h.b16 %v7726
      %v7793 = vunpack.c.l.b16 %v7727
      %v7794 = vunpack.c.h.b16 %v7727
      %v7795 = vunpack.c.l.b16 %v7728
      %v7796 = vunpack.c.h.b16 %v7728
      %v7797 = vunpack.c.l.b16 %v7729
      %v7798 = vunpack.c.h.b16 %v7729
      %v7799 = vunpack.c.l.b16 %v7730
      %v7800 = vunpack.c.h.b16 %v7730
      %v7801 = vunpack.c.l.b16 %v7731
      %v7802 = vunpack.c.h.b16 %v7731
      %v7803 = vunpack.c.l.b16 %v7732
      %v7804 = vunpack.c.h.b16 %v7732
      %v7805 = vunpack.c.l.b16 %v7733
      %v7806 = vunpack.c.h.b16 %v7733
      %v7807 = vunpack.c.l.b16 %v7734
      %v7808 = vunpack.c.h.b16 %v7734
      %v7809 = vunpack.c.l.b16 %v7735
      %v7810 = vunpack.c.h.b16 %v7735
      %v7811 = vunpack.c.l.b16 %v7736
      %v7812 = vunpack.c.h.b16 %v7736
      %v7813 = vunpack.c.l.b16 %v7737
      %v7814 = vunpack.c.h.b16 %v7737
      %v7815 = vunpack.c.l.b16 %v7738
      %v7816 = vunpack.c.h.b16 %v7738
      %v7817 = vunpack.c.l.b16 %v7739
      %v7818 = vunpack.c.h.b16 %v7739
      %v7819 = vunpack.c.l.b16 %v7740
      %v7820 = vunpack.c.h.b16 %v7740
      %v7821 = vunpack.c.l.b16 %v7741
      %v7822 = vunpack.c.h.b16 %v7741
      %v7823 = vunpack.c.l.b16 %v7742
      %v7824 = vunpack.c.h.b16 %v7742
      %v7825 = vunpack.c.l.b16 %v7743
      %v7826 = vunpack.c.h.b16 %v7743
      %v7827 = vunpack.c.l.b16 %v7744
      %v7828 = vunpack.c.h.b16 %v7744
      %v7829 = vunpack.c.l.b16 %v7745
      %v7830 = vunpack.c.h.b16 %v7745
      %v7831 = vunpack.c.l.b16 %v7746
      %v7832 = vunpack.c.h.b16 %v7746
      %v7833 = vunpack.c.l.b16 %v7747
      %v7834 = vunpack.c.h.b16 %v7747
      %v7835 = vunpack.c.l.b16 %v7748
      %v7836 = vunpack.c.h.b16 %v7748
      %v7837 = vunpack.c.l.b16 %v7749
      %v7838 = vunpack.c.h.b16 %v7749
      %v7839 = vunpack.c.l.b16 %v7750
      %v7840 = vunpack.c.h.b16 %v7750
      %v7841 = vunpack.c.l.b16 %v7751
      %v7842 = vunpack.c.h.b16 %v7751
      %v7843 = vunpack.c.l.b16 %v7752
      %v7844 = vunpack.c.h.b16 %v7752
      %v7845 = vunpack.c.l.b16 %v7753
      %v7846 = vunpack.c.h.b16 %v7753
      %v7847 = vunpack.c.l.b16 %v7754
      %v7848 = vunpack.c.h.b16 %v7754
      %v7849 = vunpack.c.l.b16 %v7755
      %v7850 = vunpack.c.h.b16 %v7755
      %v7851 = vunpack.c.l.b16 %v7756
      %v7852 = vunpack.c.h.b16 %v7756
      %v7853 = vpack.c.b16 %v7791, %v7789
      %v7854 = vpack.c.b16 %v7792, %v7790
      %v7855 = vpack.c.b16 %v7795, %v7793
      %v7856 = vpack.c.b16 %v7796, %v7794
      %v7857 = vpack.c.b16 %v7799, %v7797
      %v7858 = vpack.c.b16 %v7800, %v7798
      %v7859 = vpack.c.b16 %v7803, %v7801
      %v7860 = vpack.c.b16 %v7804, %v7802
      %v7861 = vpack.c.b16 %v7807, %v7805
      %v7862 = vpack.c.b16 %v7808, %v7806
      %v7863 = vpack.c.b16 %v7811, %v7809
      %v7864 = vpack.c.b16 %v7812, %v7810
      %v7865 = vpack.c.b16 %v7815, %v7813
      %v7866 = vpack.c.b16 %v7816, %v7814
      %v7867 = vpack.c.b16 %v7819, %v7817
      %v7868 = vpack.c.b16 %v7820, %v7818
      %v7869 = vpack.c.b16 %v7823, %v7821
      %v7870 = vpack.c.b16 %v7824, %v7822
      %v7871 = vpack.c.b16 %v7827, %v7825
      %v7872 = vpack.c.b16 %v7828, %v7826
      %v7873 = vpack.c.b16 %v7831, %v7829
      %v7874 = vpack.c.b16 %v7832, %v7830
      %v7875 = vpack.c.b16 %v7835, %v7833
      %v7876 = vpack.c.b16 %v7836, %v7834
      %v7877 = vpack.c.b16 %v7839, %v7837
      %v7878 = vpack.c.b16 %v7840, %v7838
      %v7879 = vpack.c.b16 %v7843, %v7841
      %v7880 = vpack.c.b16 %v7844, %v7842
      %v7881 = vpack.c.b16 %v7847, %v7845
      %v7882 = vpack.c.b16 %v7848, %v7846
      %v7883 = vpack.c.b16 %v7851, %v7849
      %v7884 = vpack.c.b16 %v7852, %v7850
      %7917 = vmatprep.subr.bf16.mxu0 %v7707
      %7918 = vmatpush1.bf16.msra.mxu0 %v7706
      %7919 = vmatprep.subr.bf16.mxu0 %v7705
      %7920 = vmatpush1.bf16.msra.mxu0 %v7704
      %7921 = vmatprep.subr.bf16.mxu0 %v7703
      %7922 = vmatpush1.bf16.msra.mxu0 %v7702
      %7923 = vmatprep.subr.bf16.mxu0 %v7701
      %7924 = vmatpush1.bf16.msra.mxu0 %v7700
      %7925 = vmatprep.subr.bf16.mxu0 %v7699
      %7926 = vmatpush1.bf16.msra.mxu0 %v7698
      %7927 = vmatprep.subr.bf16.mxu0 %v7697
      %7928 = vmatpush1.bf16.msra.mxu0 %v7696
      %7929 = vmatprep.subr.bf16.mxu0 %v7695
      %7930 = vmatpush1.bf16.msra.mxu0 %v7694
      %7931 = vmatprep.subr.bf16.mxu0 %v7693
      %7932 = vmatpush1.bf16.msra.mxu0 %v7692
      %7933 = vmatprep.subr.bf16.mxu0 %v7723
      %7934 = vmatpush2.bf16.msra.mxu0 %v7722
      %7935 = vmatprep.subr.bf16.mxu0 %v7721
      %7936 = vmatpush2.bf16.msra.mxu0 %v7720
      %7937 = vmatprep.subr.bf16.mxu0 %v7719
      %7938 = vmatpush2.bf16.msra.mxu0 %v7718
      %7939 = vmatprep.subr.bf16.mxu0 %v7717
      %7940 = vmatpush2.bf16.msra.mxu0 %v7716
      %7941 = vmatprep.subr.bf16.mxu0 %v7715
      %7942 = vmatpush2.bf16.msra.mxu0 %v7714
      %7943 = vmatprep.subr.bf16.mxu0 %v7713
      %7944 = vmatpush2.bf16.msra.mxu0 %v7712
      %7945 = vmatprep.subr.bf16.mxu0 %v7711
      %7946 = vmatpush2.bf16.msra.mxu0 %v7710
      %7947 = vmatprep.subr.bf16.mxu0 %v7709
      %7948 = vmatpush2.bf16.msra.mxu0 %v7708
      %7949 = vmatprep.mubr.bf16.mxu0 %v7854
      %7950 = vmatmul.mubr.bf16.gmra.mxu0 %v7853
      %v7951 = vpop.f32.mrf.mxu0
      %v7952 = vadd.f32 0.0, %v7951
      %v7953 = vpop.f32.mrf.mxu0
      %v7954 = vadd.f32 0.0, %v7953
      %v7955 = vpop.f32.mrf.mxu0
      %v7956 = vadd.f32 0.0, %v7955
      %v7957 = vpop.f32.mrf.mxu0
      %v7958 = vadd.f32 0.0, %v7957
      %7959 = vmatprep.mubr.bf16.mxu0 %v7856
      %7960 = vmatmul.mubr.bf16.gmra.mxu0 %v7855
      %v7961 = vpop.f32.mrf.mxu0
      %v7962 = vadd.f32 0.0, %v7961
      %v7963 = vpop.f32.mrf.mxu0
      %v7964 = vadd.f32 0.0, %v7963
      %v7965 = vpop.f32.mrf.mxu0
      %v7966 = vadd.f32 0.0, %v7965
      %v7967 = vpop.f32.mrf.mxu0
      %v7968 = vadd.f32 0.0, %v7967
      %7969 = vmatprep.mubr.bf16.mxu0 %v7858
      %7970 = vmatmul.mubr.bf16.gmra.mxu0 %v7857
      %v7971 = vpop.f32.mrf.mxu0
      %v7972 = vadd.f32 0.0, %v7971
      %v7973 = vpop.f32.mrf.mxu0
      %v7974 = vadd.f32 0.0, %v7973
      %v7975 = vpop.f32.mrf.mxu0
      %v7976 = vadd.f32 0.0, %v7975
      %v7977 = vpop.f32.mrf.mxu0
      %v7978 = vadd.f32 0.0, %v7977
      %7979 = vmatprep.mubr.bf16.mxu0 %v7860
      %7980 = vmatmul.mubr.bf16.gmra.mxu0 %v7859
      %v7981 = vpop.f32.mrf.mxu0
      %v7982 = vadd.f32 0.0, %v7981
      %v7983 = vpop.f32.mrf.mxu0
      %v7984 = vadd.f32 0.0, %v7983
      %v7985 = vpop.f32.mrf.mxu0
      %v7986 = vadd.f32 0.0, %v7985
      %v7987 = vpop.f32.mrf.mxu0
      %v7988 = vadd.f32 0.0, %v7987
      %7989 = vmatprep.mubr.bf16.mxu0 %v7862
      %7990 = vmatmul.mubr.bf16.gmra.mxu0 %v7861
      %v7991 = vpop.f32.mrf.mxu0
      %v7992 = vadd.f32 0.0, %v7991
      %v7993 = vpop.f32.mrf.mxu0
      %v7994 = vadd.f32 0.0, %v7993
      %v7995 = vpop.f32.mrf.mxu0
      %v7996 = vadd.f32 0.0, %v7995
      %v7997 = vpop.f32.mrf.mxu0
      %v7998 = vadd.f32 0.0, %v7997
      %7999 = vmatprep.mubr.bf16.mxu0 %v7864
      %8000 = vmatmul.mubr.bf16.gmra.mxu0 %v7863
      %v8001 = vpop.f32.mrf.mxu0
      %v8002 = vadd.f32 0.0, %v8001
      %v8003 = vpop.f32.mrf.mxu0
      %v8004 = vadd.f32 0.0, %v8003
      %v8005 = vpop.f32.mrf.mxu0
      %v8006 = vadd.f32 0.0, %v8005
      %v8007 = vpop.f32.mrf.mxu0
      %v8008 = vadd.f32 0.0, %v8007
      %8009 = vmatprep.mubr.bf16.mxu0 %v7866
      %8010 = vmatmul.mubr.bf16.gmra.mxu0 %v7865
      %v8011 = vpop.f32.mrf.mxu0
      %v8012 = vadd.f32 0.0, %v8011
      %v8013 = vpop.f32.mrf.mxu0
      %v8014 = vadd.f32 0.0, %v8013
      %v8015 = vpop.f32.mrf.mxu0
      %v8016 = vadd.f32 0.0, %v8015
      %v8017 = vpop.f32.mrf.mxu0
      %v8018 = vadd.f32 0.0, %v8017
      %8019 = vmatprep.mubr.bf16.mxu0 %v7868
      %8020 = vmatmul.mubr.bf16.gmra.mxu0 %v7867
      %v8021 = vpop.f32.mrf.mxu0
      %v8022 = vadd.f32 0.0, %v8021
      %v8023 = vpop.f32.mrf.mxu0
      %v8024 = vadd.f32 0.0, %v8023
      %v8025 = vpop.f32.mrf.mxu0
      %v8026 = vadd.f32 0.0, %v8025
      %v8027 = vpop.f32.mrf.mxu0
      %v8028 = vadd.f32 0.0, %v8027
      %8029 = vmatprep.mubr.bf16.mxu0 %v7870
      %8030 = vmatmul.mubr.bf16.gmra.mxu0 %v7869
      %v8031 = vpop.f32.mrf.mxu0
      %v8032 = vadd.f32 0.0, %v8031
      %v8033 = vpop.f32.mrf.mxu0
      %v8034 = vadd.f32 0.0, %v8033
      %v8035 = vpop.f32.mrf.mxu0
      %v8036 = vadd.f32 0.0, %v8035
      %v8037 = vpop.f32.mrf.mxu0
      %v8038 = vadd.f32 0.0, %v8037
      %8039 = vmatprep.mubr.bf16.mxu0 %v7872
      %8040 = vmatmul.mubr.bf16.gmra.mxu0 %v7871
      %v8041 = vpop.f32.mrf.mxu0
      %v8042 = vadd.f32 0.0, %v8041
      %v8043 = vpop.f32.mrf.mxu0
      %v8044 = vadd.f32 0.0, %v8043
      %v8045 = vpop.f32.mrf.mxu0
      %v8046 = vadd.f32 0.0, %v8045
      %v8047 = vpop.f32.mrf.mxu0
      %v8048 = vadd.f32 0.0, %v8047
      %8049 = vmatprep.mubr.bf16.mxu0 %v7874
      %8050 = vmatmul.mubr.bf16.gmra.mxu0 %v7873
      %v8051 = vpop.f32.mrf.mxu0
      %v8052 = vadd.f32 0.0, %v8051
      %v8053 = vpop.f32.mrf.mxu0
      %v8054 = vadd.f32 0.0, %v8053
      %v8055 = vpop.f32.mrf.mxu0
      %v8056 = vadd.f32 0.0, %v8055
      %v8057 = vpop.f32.mrf.mxu0
      %v8058 = vadd.f32 0.0, %v8057
      %8059 = vmatprep.mubr.bf16.mxu0 %v7876
      %8060 = vmatmul.mubr.bf16.gmra.mxu0 %v7875
      %v8061 = vpop.f32.mrf.mxu0
      %v8062 = vadd.f32 0.0, %v8061
      %v8063 = vpop.f32.mrf.mxu0
      %v8064 = vadd.f32 0.0, %v8063
      %v8065 = vpop.f32.mrf.mxu0
      %v8066 = vadd.f32 0.0, %v8065
      %v8067 = vpop.f32.mrf.mxu0
      %v8068 = vadd.f32 0.0, %v8067
      %8069 = vmatprep.mubr.bf16.mxu0 %v7878
      %8070 = vmatmul.mubr.bf16.gmra.mxu0 %v7877
      %v8071 = vpop.f32.mrf.mxu0
      %v8072 = vadd.f32 0.0, %v8071
      %v8073 = vpop.f32.mrf.mxu0
      %v8074 = vadd.f32 0.0, %v8073
      %v8075 = vpop.f32.mrf.mxu0
      %v8076 = vadd.f32 0.0, %v8075
      %v8077 = vpop.f32.mrf.mxu0
      %v8078 = vadd.f32 0.0, %v8077
      %8079 = vmatprep.mubr.bf16.mxu0 %v7880
      %8080 = vmatmul.mubr.bf16.gmra.mxu0 %v7879
      %v8081 = vpop.f32.mrf.mxu0
      %v8082 = vadd.f32 0.0, %v8081
      %v8083 = vpop.f32.mrf.mxu0
      %v8084 = vadd.f32 0.0, %v8083
      %v8085 = vpop.f32.mrf.mxu0
      %v8086 = vadd.f32 0.0, %v8085
      %v8087 = vpop.f32.mrf.mxu0
      %v8088 = vadd.f32 0.0, %v8087
      %8089 = vmatprep.mubr.bf16.mxu0 %v7882
      %8090 = vmatmul.mubr.bf16.gmra.mxu0 %v7881
      %v8091 = vpop.f32.mrf.mxu0
      %v8092 = vadd.f32 0.0, %v8091
      %v8093 = vpop.f32.mrf.mxu0
      %v8094 = vadd.f32 0.0, %v8093
      %v8095 = vpop.f32.mrf.mxu0
      %v8096 = vadd.f32 0.0, %v8095
      %v8097 = vpop.f32.mrf.mxu0
      %v8098 = vadd.f32 0.0, %v8097
      %8099 = vmatprep.mubr.bf16.mxu0 %v7884
      %8100 = vmatmul.mubr.bf16.gmra.mxu0 %v7883
      %v8101 = vpop.f32.mrf.mxu0
      %v8102 = vadd.f32 0.0, %v8101
      %v8103 = vpop.f32.mrf.mxu0
      %v8104 = vadd.f32 0.0, %v8103
      %v8105 = vpop.f32.mrf.mxu0
      %v8106 = vadd.f32 0.0, %v8105
      %v8107 = vpop.f32.mrf.mxu0
      %v8108 = vadd.f32 0.0, %v8107
      %8109 = vdwg.mxu0
      %v8142 = vunpack.c.l.b16 %v7652
      %v8143 = vunpack.c.h.b16 %v7652
      %v8144 = vunpack.c.l.b16 %v7653
      %v8145 = vunpack.c.h.b16 %v7653
      %v8146 = vunpack.c.l.b16 %v7654
      %v8147 = vunpack.c.h.b16 %v7654
      %v8148 = vunpack.c.l.b16 %v7655
      %v8149 = vunpack.c.h.b16 %v7655
      %v8150 = vunpack.c.l.b16 %v7656
      %v8151 = vunpack.c.h.b16 %v7656
      %v8152 = vunpack.c.l.b16 %v7657
      %v8153 = vunpack.c.h.b16 %v7657
      %v8154 = vunpack.c.l.b16 %v7658
      %v8155 = vunpack.c.h.b16 %v7658
      %v8156 = vunpack.c.l.b16 %v7659
      %v8157 = vunpack.c.h.b16 %v7659
      %v8158 = vunpack.c.l.b16 %v7660
      %v8159 = vunpack.c.h.b16 %v7660
      %v8160 = vunpack.c.l.b16 %v7661
      %v8161 = vunpack.c.h.b16 %v7661
      %v8162 = vunpack.c.l.b16 %v7662
      %v8163 = vunpack.c.h.b16 %v7662
      %v8164 = vunpack.c.l.b16 %v7663
      %v8165 = vunpack.c.h.b16 %v7663
      %v8166 = vunpack.c.l.b16 %v7664
      %v8167 = vunpack.c.h.b16 %v7664
      %v8168 = vunpack.c.l.b16 %v7665
      %v8169 = vunpack.c.h.b16 %v7665
      %v8170 = vunpack.c.l.b16 %v7666
      %v8171 = vunpack.c.h.b16 %v7666
      %v8172 = vunpack.c.l.b16 %v7667
      %v8173 = vunpack.c.h.b16 %v7667
      %v8174 = vunpack.c.l.b16 %v7668
      %v8175 = vunpack.c.h.b16 %v7668
      %v8176 = vunpack.c.l.b16 %v7669
      %v8177 = vunpack.c.h.b16 %v7669
      %v8178 = vunpack.c.l.b16 %v7670
      %v8179 = vunpack.c.h.b16 %v7670
      %v8180 = vunpack.c.l.b16 %v7671
      %v8181 = vunpack.c.h.b16 %v7671
      %v8182 = vunpack.c.l.b16 %v7672
      %v8183 = vunpack.c.h.b16 %v7672
      %v8184 = vunpack.c.l.b16 %v7673
      %v8185 = vunpack.c.h.b16 %v7673
      %v8186 = vunpack.c.l.b16 %v7674
      %v8187 = vunpack.c.h.b16 %v7674
      %v8188 = vunpack.c.l.b16 %v7675
      %v8189 = vunpack.c.h.b16 %v7675
      %v8190 = vunpack.c.l.b16 %v7676
      %v8191 = vunpack.c.h.b16 %v7676
      %v8192 = vunpack.c.l.b16 %v7677
      %v8193 = vunpack.c.h.b16 %v7677
      %v8194 = vunpack.c.l.b16 %v7678
      %v8195 = vunpack.c.h.b16 %v7678
      %v8196 = vunpack.c.l.b16 %v7679
      %v8197 = vunpack.c.h.b16 %v7679
      %v8198 = vunpack.c.l.b16 %v7680
      %v8199 = vunpack.c.h.b16 %v7680
      %v8200 = vunpack.c.l.b16 %v7681
      %v8201 = vunpack.c.h.b16 %v7681
      %v8202 = vunpack.c.l.b16 %v7682
      %v8203 = vunpack.c.h.b16 %v7682
      %v8204 = vunpack.c.l.b16 %v7683
      %v8205 = vunpack.c.h.b16 %v7683
      %v8206 = vpack.c.b16 %v8144, %v8142
      %v8207 = vpack.c.b16 %v8145, %v8143
      %v8208 = vpack.c.b16 %v8148, %v8146
      %v8209 = vpack.c.b16 %v8149, %v8147
      %v8210 = vpack.c.b16 %v8152, %v8150
      %v8211 = vpack.c.b16 %v8153, %v8151
      %v8212 = vpack.c.b16 %v8156, %v8154
      %v8213 = vpack.c.b16 %v8157, %v8155
      %v8214 = vpack.c.b16 %v8160, %v8158
      %v8215 = vpack.c.b16 %v8161, %v8159
      %v8216 = vpack.c.b16 %v8164, %v8162
      %v8217 = vpack.c.b16 %v8165, %v8163
      %v8218 = vpack.c.b16 %v8168, %v8166
      %v8219 = vpack.c.b16 %v8169, %v8167
      %v8220 = vpack.c.b16 %v8172, %v8170
      %v8221 = vpack.c.b16 %v8173, %v8171
      %v8222 = vpack.c.b16 %v8176, %v8174
      %v8223 = vpack.c.b16 %v8177, %v8175
      %v8224 = vpack.c.b16 %v8180, %v8178
      %v8225 = vpack.c.b16 %v8181, %v8179
      %v8226 = vpack.c.b16 %v8184, %v8182
      %v8227 = vpack.c.b16 %v8185, %v8183
      %v8228 = vpack.c.b16 %v8188, %v8186
      %v8229 = vpack.c.b16 %v8189, %v8187
      %v8230 = vpack.c.b16 %v8192, %v8190
      %v8231 = vpack.c.b16 %v8193, %v8191
      %v8232 = vpack.c.b16 %v8196, %v8194
      %v8233 = vpack.c.b16 %v8197, %v8195
      %v8234 = vpack.c.b16 %v8200, %v8198
      %v8235 = vpack.c.b16 %v8201, %v8199
      %v8236 = vpack.c.b16 %v8204, %v8202
      %v8237 = vpack.c.b16 %v8205, %v8203
      %8270 = vmatprep.subr.bf16.mxu0 %v7635
      %8271 = vmatpush1.bf16.msra.mxu0 %v7634
      %8272 = vmatprep.subr.bf16.mxu0 %v7633
      %8273 = vmatpush1.bf16.msra.mxu0 %v7632
      %8274 = vmatprep.subr.bf16.mxu0 %v7631
      %8275 = vmatpush1.bf16.msra.mxu0 %v7630
      %8276 = vmatprep.subr.bf16.mxu0 %v7629
      %8277 = vmatpush1.bf16.msra.mxu0 %v7628
      %8278 = vmatprep.subr.bf16.mxu0 %v7627
      %8279 = vmatpush1.bf16.msra.mxu0 %v7626
      %8280 = vmatprep.subr.bf16.mxu0 %v7625
      %8281 = vmatpush1.bf16.msra.mxu0 %v7624
      %8282 = vmatprep.subr.bf16.mxu0 %v7623
      %8283 = vmatpush1.bf16.msra.mxu0 %v7622
      %8284 = vmatprep.subr.bf16.mxu0 %v7621
      %8285 = vmatpush1.bf16.msra.mxu0 %v7620
      %8286 = vmatprep.subr.bf16.mxu0 %v7651
      %8287 = vmatpush2.bf16.msra.mxu0 %v7650
      %8288 = vmatprep.subr.bf16.mxu0 %v7649
      %8289 = vmatpush2.bf16.msra.mxu0 %v7648
      %8290 = vmatprep.subr.bf16.mxu0 %v7647
      %8291 = vmatpush2.bf16.msra.mxu0 %v7646
      %8292 = vmatprep.subr.bf16.mxu0 %v7645
      %8293 = vmatpush2.bf16.msra.mxu0 %v7644
      %8294 = vmatprep.subr.bf16.mxu0 %v7643
      %8295 = vmatpush2.bf16.msra.mxu0 %v7642
      %8296 = vmatprep.subr.bf16.mxu0 %v7641
      %8297 = vmatpush2.bf16.msra.mxu0 %v7640
      %8298 = vmatprep.subr.bf16.mxu0 %v7639
      %8299 = vmatpush2.bf16.msra.mxu0 %v7638
      %8300 = vmatprep.subr.bf16.mxu0 %v7637
      %8301 = vmatpush2.bf16.msra.mxu0 %v7636
      %8302 = vmatprep.mubr.bf16.mxu0 %v8207
      %8303 = vmatmul.mubr.bf16.gmra.mxu0 %v8206
      %v8304 = vpop.f32.mrf.mxu0
      %v8305 = vadd.f32 %v7952, %v8304
      %v8306 = vpop.f32.mrf.mxu0
      %v8307 = vadd.f32 %v7954, %v8306
      %v8308 = vpop.f32.mrf.mxu0
      %v8309 = vadd.f32 %v7956, %v8308
      %v8310 = vpop.f32.mrf.mxu0
      %v8311 = vadd.f32 %v7958, %v8310
      %8312 = vmatprep.mubr.bf16.mxu0 %v8209
      %8313 = vmatmul.mubr.bf16.gmra.mxu0 %v8208
      %v8314 = vpop.f32.mrf.mxu0
      %v8315 = vadd.f32 %v7962, %v8314
      %v8316 = vpop.f32.mrf.mxu0
      %v8317 = vadd.f32 %v7964, %v8316
      %v8318 = vpop.f32.mrf.mxu0
      %v8319 = vadd.f32 %v7966, %v8318
      %v8320 = vpop.f32.mrf.mxu0
      %v8321 = vadd.f32 %v7968, %v8320
      %8322 = vmatprep.mubr.bf16.mxu0 %v8211
      %8323 = vmatmul.mubr.bf16.gmra.mxu0 %v8210
      %v8324 = vpop.f32.mrf.mxu0
      %v8325 = vadd.f32 %v7972, %v8324
      %v8326 = vpop.f32.mrf.mxu0
      %v8327 = vadd.f32 %v7974, %v8326
      %v8328 = vpop.f32.mrf.mxu0
      %v8329 = vadd.f32 %v7976, %v8328
      %v8330 = vpop.f32.mrf.mxu0
      %v8331 = vadd.f32 %v7978, %v8330
      %8332 = vmatprep.mubr.bf16.mxu0 %v8213
      %8333 = vmatmul.mubr.bf16.gmra.mxu0 %v8212
      %v8334 = vpop.f32.mrf.mxu0
      %v8335 = vadd.f32 %v7982, %v8334
      %v8336 = vpop.f32.mrf.mxu0
      %v8337 = vadd.f32 %v7984, %v8336
      %v8338 = vpop.f32.mrf.mxu0
      %v8339 = vadd.f32 %v7986, %v8338
      %v8340 = vpop.f32.mrf.mxu0
      %v8341 = vadd.f32 %v7988, %v8340
      %8342 = vmatprep.mubr.bf16.mxu0 %v8215
      %8343 = vmatmul.mubr.bf16.gmra.mxu0 %v8214
      %v8344 = vpop.f32.mrf.mxu0
      %v8345 = vadd.f32 %v7992, %v8344
      %v8346 = vpop.f32.mrf.mxu0
      %v8347 = vadd.f32 %v7994, %v8346
      %v8348 = vpop.f32.mrf.mxu0
      %v8349 = vadd.f32 %v7996, %v8348
      %v8350 = vpop.f32.mrf.mxu0
      %v8351 = vadd.f32 %v7998, %v8350
      %8352 = vmatprep.mubr.bf16.mxu0 %v8217
      %8353 = vmatmul.mubr.bf16.gmra.mxu0 %v8216
      %v8354 = vpop.f32.mrf.mxu0
      %v8355 = vadd.f32 %v8002, %v8354
      %v8356 = vpop.f32.mrf.mxu0
      %v8357 = vadd.f32 %v8004, %v8356
      %v8358 = vpop.f32.mrf.mxu0
      %v8359 = vadd.f32 %v8006, %v8358
      %v8360 = vpop.f32.mrf.mxu0
      %v8361 = vadd.f32 %v8008, %v8360
      %8362 = vmatprep.mubr.bf16.mxu0 %v8219
      %8363 = vmatmul.mubr.bf16.gmra.mxu0 %v8218
      %v8364 = vpop.f32.mrf.mxu0
      %v8365 = vadd.f32 %v8012, %v8364
      %v8366 = vpop.f32.mrf.mxu0
      %v8367 = vadd.f32 %v8014, %v8366
      %v8368 = vpop.f32.mrf.mxu0
      %v8369 = vadd.f32 %v8016, %v8368
      %v8370 = vpop.f32.mrf.mxu0
      %v8371 = vadd.f32 %v8018, %v8370
      %8372 = vmatprep.mubr.bf16.mxu0 %v8221
      %8373 = vmatmul.mubr.bf16.gmra.mxu0 %v8220
      %v8374 = vpop.f32.mrf.mxu0
      %v8375 = vadd.f32 %v8022, %v8374
      %v8376 = vpop.f32.mrf.mxu0
      %v8377 = vadd.f32 %v8024, %v8376
      %v8378 = vpop.f32.mrf.mxu0
      %v8379 = vadd.f32 %v8026, %v8378
      %v8380 = vpop.f32.mrf.mxu0
      %v8381 = vadd.f32 %v8028, %v8380
      %8382 = vmatprep.mubr.bf16.mxu0 %v8223
      %8383 = vmatmul.mubr.bf16.gmra.mxu0 %v8222
      %v8384 = vpop.f32.mrf.mxu0
      %v8385 = vadd.f32 %v8032, %v8384
      %v8386 = vpop.f32.mrf.mxu0
      %v8387 = vadd.f32 %v8034, %v8386
      %v8388 = vpop.f32.mrf.mxu0
      %v8389 = vadd.f32 %v8036, %v8388
      %v8390 = vpop.f32.mrf.mxu0
      %v8391 = vadd.f32 %v8038, %v8390
      %8392 = vmatprep.mubr.bf16.mxu0 %v8225
      %8393 = vmatmul.mubr.bf16.gmra.mxu0 %v8224
      %v8394 = vpop.f32.mrf.mxu0
      %v8395 = vadd.f32 %v8042, %v8394
      %v8396 = vpop.f32.mrf.mxu0
      %v8397 = vadd.f32 %v8044, %v8396
      %v8398 = vpop.f32.mrf.mxu0
      %v8399 = vadd.f32 %v8046, %v8398
      %v8400 = vpop.f32.mrf.mxu0
      %v8401 = vadd.f32 %v8048, %v8400
      %8402 = vmatprep.mubr.bf16.mxu0 %v8227
      %8403 = vmatmul.mubr.bf16.gmra.mxu0 %v8226
      %v8404 = vpop.f32.mrf.mxu0
      %v8405 = vadd.f32 %v8052, %v8404
      %v8406 = vpop.f32.mrf.mxu0
      %v8407 = vadd.f32 %v8054, %v8406
      %v8408 = vpop.f32.mrf.mxu0
      %v8409 = vadd.f32 %v8056, %v8408
      %v8410 = vpop.f32.mrf.mxu0
      %v8411 = vadd.f32 %v8058, %v8410
      %8412 = vmatprep.mubr.bf16.mxu0 %v8229
      %8413 = vmatmul.mubr.bf16.gmra.mxu0 %v8228
      %v8414 = vpop.f32.mrf.mxu0
      %v8415 = vadd.f32 %v8062, %v8414
      %v8416 = vpop.f32.mrf.mxu0
      %v8417 = vadd.f32 %v8064, %v8416
      %v8418 = vpop.f32.mrf.mxu0
      %v8419 = vadd.f32 %v8066, %v8418
      %v8420 = vpop.f32.mrf.mxu0
      %v8421 = vadd.f32 %v8068, %v8420
      %8422 = vmatprep.mubr.bf16.mxu0 %v8231
      %8423 = vmatmul.mubr.bf16.gmra.mxu0 %v8230
      %v8424 = vpop.f32.mrf.mxu0
      %v8425 = vadd.f32 %v8072, %v8424
      %v8426 = vpop.f32.mrf.mxu0
      %v8427 = vadd.f32 %v8074, %v8426
      %v8428 = vpop.f32.mrf.mxu0
      %v8429 = vadd.f32 %v8076, %v8428
      %v8430 = vpop.f32.mrf.mxu0
      %v8431 = vadd.f32 %v8078, %v8430
      %8432 = vmatprep.mubr.bf16.mxu0 %v8233
      %8433 = vmatmul.mubr.bf16.gmra.mxu0 %v8232
      %v8434 = vpop.f32.mrf.mxu0
      %v8435 = vadd.f32 %v8082, %v8434
      %v8436 = vpop.f32.mrf.mxu0
      %v8437 = vadd.f32 %v8084, %v8436
      %v8438 = vpop.f32.mrf.mxu0
      %v8439 = vadd.f32 %v8086, %v8438
      %v8440 = vpop.f32.mrf.mxu0
      %v8441 = vadd.f32 %v8088, %v8440
      %8442 = vmatprep.mubr.bf16.mxu0 %v8235
      %8443 = vmatmul.mubr.bf16.gmra.mxu0 %v8234
      %v8444 = vpop.f32.mrf.mxu0
      %v8445 = vadd.f32 %v8092, %v8444
      %v8446 = vpop.f32.mrf.mxu0
      %v8447 = vadd.f32 %v8094, %v8446
      %v8448 = vpop.f32.mrf.mxu0
      %v8449 = vadd.f32 %v8096, %v8448
      %v8450 = vpop.f32.mrf.mxu0
      %v8451 = vadd.f32 %v8098, %v8450
      %8452 = vmatprep.mubr.bf16.mxu0 %v8237
      %8453 = vmatmul.mubr.bf16.gmra.mxu0 %v8236
      %v8454 = vpop.f32.mrf.mxu0
      %v8455 = vadd.f32 %v8102, %v8454
      %v8456 = vpop.f32.mrf.mxu0
      %v8457 = vadd.f32 %v8104, %v8456
      %v8458 = vpop.f32.mrf.mxu0
      %v8459 = vadd.f32 %v8106, %v8458
      %v8460 = vpop.f32.mrf.mxu0
      %v8461 = vadd.f32 %v8108, %v8460
      %8462 = vdwg.mxu0
      %v8464 = vsel %vm7557, %v7463, 0
      %v8467 = vsel %vm7557, %v7467, 0
      %v8470 = vsel %vm7557, %v7471, 0
      %v8473 = vsel %vm7557, %v7475, 0
      %v8476 = vsel %vm7557, %v7479, 0
      %v8479 = vsel %vm7557, %v7483, 0
      %v8482 = vsel %vm7557, %v7487, 0
      %v8485 = vsel %vm7557, %v7491, 0
      %v8488 = vsel %vm7557, %v7495, 0
      %v8491 = vsel %vm7557, %v7499, 0
      %v8494 = vsel %vm7557, %v7503, 0
      %v8497 = vsel %vm7557, %v7507, 0
      %v8500 = vsel %vm7557, %v7511, 0
      %v8503 = vsel %vm7557, %v7515, 0
      %v8506 = vsel %vm7557, %v7519, 0
      %v8509 = vsel %vm7557, %v7523, 0
      %v8511 = vshrl.u32 %v7426, 16
      %v8512 = vpack.i.b16 %v8511, %v8511
      %v8514 = vlaneseq
      %v8515 = vshrl.u32 %v8514, 7
      %v8516 = vsub.s32 2, %v8515
      %v8517 = vrot.slane %v8512, %v8516
      %v8518 = vshrl.u32 %v7427, 16
      %v8519 = vpack.i.b16 %v8518, %v8518
      %v8521 = vlaneseq
      %v8522 = vshrl.u32 %v8521, 7
      %v8523 = vsub.s32 2, %v8522
      %v8524 = vrot.slane %v8519, %v8523
      %v8525 = vmul.bf16 %v7525, %v8517
      %v8526 = vmul.bf16 %v8464, %v8524
      %v8527 = vmul.bf16 %v7526, %v8517
      %v8528 = vmul.bf16 %v8467, %v8524
      %v8529 = vmul.bf16 %v7527, %v8517
      %v8530 = vmul.bf16 %v8470, %v8524
      %v8531 = vmul.bf16 %v7528, %v8517
      %v8532 = vmul.bf16 %v8473, %v8524
      %v8533 = vmul.bf16 %v7529, %v8517
      %v8534 = vmul.bf16 %v8476, %v8524
      %v8535 = vmul.bf16 %v7530, %v8517
      %v8536 = vmul.bf16 %v8479, %v8524
      %v8537 = vmul.bf16 %v7531, %v8517
      %v8538 = vmul.bf16 %v8482, %v8524
      %v8539 = vmul.bf16 %v7532, %v8517
      %v8540 = vmul.bf16 %v8485, %v8524
      %v8541 = vmul.bf16 %v7533, %v8517
      %v8542 = vmul.bf16 %v8488, %v8524
      %v8543 = vmul.bf16 %v7534, %v8517
      %v8544 = vmul.bf16 %v8491, %v8524
      %v8545 = vmul.bf16 %v7535, %v8517
      %v8546 = vmul.bf16 %v8494, %v8524
      %v8547 = vmul.bf16 %v7536, %v8517
      %v8548 = vmul.bf16 %v8497, %v8524
      %v8549 = vmul.bf16 %v7537, %v8517
      %v8550 = vmul.bf16 %v8500, %v8524
      %v8551 = vmul.bf16 %v7538, %v8517
      %v8552 = vmul.bf16 %v8503, %v8524
      %v8553 = vmul.bf16 %v7539, %v8517
      %v8554 = vmul.bf16 %v8506, %v8524
      %v8555 = vmul.bf16 %v7540, %v8517
      %v8556 = vmul.bf16 %v8509, %v8524
      %s8557 = scalar_lea.vmem %s8, 512
      %v8558 = vld [vmem:[%s8557] sm:$0xff]
      %v8559 = vld [vmem:[%s8557 + $0x8] sm:$0xff]
      %v8560 = vld [vmem:[%s8557 + $0x10] sm:$0xff]
      %v8561 = vld [vmem:[%s8557 + $0x18] sm:$0xff]
      %v8562 = vld [vmem:[%s8557 + $0x20] sm:$0xff]
      %v8563 = vld [vmem:[%s8557 + $0x28] sm:$0xff]
      %v8564 = vld [vmem:[%s8557 + $0x30] sm:$0xff]
      %v8565 = vld [vmem:[%s8557 + $0x38] sm:$0xff]
      %v8566 = vld [vmem:[%s8557 + $0x40] sm:$0xff]
      %v8567 = vld [vmem:[%s8557 + $0x48] sm:$0xff]
      %v8568 = vld [vmem:[%s8557 + $0x50] sm:$0xff]
      %v8569 = vld [vmem:[%s8557 + $0x58] sm:$0xff]
      %v8570 = vld [vmem:[%s8557 + $0x60] sm:$0xff]
      %v8571 = vld [vmem:[%s8557 + $0x68] sm:$0xff]
      %v8572 = vld [vmem:[%s8557 + $0x70] sm:$0xff]
      %v8573 = vld [vmem:[%s8557 + $0x78] sm:$0xff]
      %v8574 = vld [vmem:[%s8557 + $0x80] sm:$0xff]
      %v8575 = vld [vmem:[%s8557 + $0x88] sm:$0xff]
      %v8576 = vld [vmem:[%s8557 + $0x90] sm:$0xff]
      %v8577 = vld [vmem:[%s8557 + $0x98] sm:$0xff]
      %v8578 = vld [vmem:[%s8557 + $0xa0] sm:$0xff]
      %v8579 = vld [vmem:[%s8557 + $0xa8] sm:$0xff]
      %v8580 = vld [vmem:[%s8557 + $0xb0] sm:$0xff]
      %v8581 = vld [vmem:[%s8557 + $0xb8] sm:$0xff]
      %v8582 = vld [vmem:[%s8557 + $0xc0] sm:$0xff]
      %v8583 = vld [vmem:[%s8557 + $0xc8] sm:$0xff]
      %v8584 = vld [vmem:[%s8557 + $0xd0] sm:$0xff]
      %v8585 = vld [vmem:[%s8557 + $0xd8] sm:$0xff]
      %v8586 = vld [vmem:[%s8557 + $0xe0] sm:$0xff]
      %v8587 = vld [vmem:[%s8557 + $0xe8] sm:$0xff]
      %v8588 = vld [vmem:[%s8557 + $0xf0] sm:$0xff]
      %v8589 = vld [vmem:[%s8557 + $0xf8] sm:$0xff]
      %v8622 = vunpack.c.l.b16 %v8558
      %v8623 = vunpack.c.h.b16 %v8558
      %v8624 = vunpack.c.l.b16 %v8559
      %v8625 = vunpack.c.h.b16 %v8559
      %v8626 = vunpack.c.l.b16 %v8560
      %v8627 = vunpack.c.h.b16 %v8560
      %v8628 = vunpack.c.l.b16 %v8561
      %v8629 = vunpack.c.h.b16 %v8561
      %v8630 = vunpack.c.l.b16 %v8562
      %v8631 = vunpack.c.h.b16 %v8562
      %v8632 = vunpack.c.l.b16 %v8563
      %v8633 = vunpack.c.h.b16 %v8563
      %v8634 = vunpack.c.l.b16 %v8564
      %v8635 = vunpack.c.h.b16 %v8564
      %v8636 = vunpack.c.l.b16 %v8565
      %v8637 = vunpack.c.h.b16 %v8565
      %v8638 = vunpack.c.l.b16 %v8566
      %v8639 = vunpack.c.h.b16 %v8566
      %v8640 = vunpack.c.l.b16 %v8567
      %v8641 = vunpack.c.h.b16 %v8567
      %v8642 = vunpack.c.l.b16 %v8568
      %v8643 = vunpack.c.h.b16 %v8568
      %v8644 = vunpack.c.l.b16 %v8569
      %v8645 = vunpack.c.h.b16 %v8569
      %v8646 = vunpack.c.l.b16 %v8570
      %v8647 = vunpack.c.h.b16 %v8570
      %v8648 = vunpack.c.l.b16 %v8571
      %v8649 = vunpack.c.h.b16 %v8571
      %v8650 = vunpack.c.l.b16 %v8572
      %v8651 = vunpack.c.h.b16 %v8572
      %v8652 = vunpack.c.l.b16 %v8573
      %v8653 = vunpack.c.h.b16 %v8573
      %v8654 = vunpack.c.l.b16 %v8574
      %v8655 = vunpack.c.h.b16 %v8574
      %v8656 = vunpack.c.l.b16 %v8575
      %v8657 = vunpack.c.h.b16 %v8575
      %v8658 = vunpack.c.l.b16 %v8576
      %v8659 = vunpack.c.h.b16 %v8576
      %v8660 = vunpack.c.l.b16 %v8577
      %v8661 = vunpack.c.h.b16 %v8577
      %v8662 = vunpack.c.l.b16 %v8578
      %v8663 = vunpack.c.h.b16 %v8578
      %v8664 = vunpack.c.l.b16 %v8579
      %v8665 = vunpack.c.h.b16 %v8579
      %v8666 = vunpack.c.l.b16 %v8580
      %v8667 = vunpack.c.h.b16 %v8580
      %v8668 = vunpack.c.l.b16 %v8581
      %v8669 = vunpack.c.h.b16 %v8581
      %v8670 = vunpack.c.l.b16 %v8582
      %v8671 = vunpack.c.h.b16 %v8582
      %v8672 = vunpack.c.l.b16 %v8583
      %v8673 = vunpack.c.h.b16 %v8583
      %v8674 = vunpack.c.l.b16 %v8584
      %v8675 = vunpack.c.h.b16 %v8584
      %v8676 = vunpack.c.l.b16 %v8585
      %v8677 = vunpack.c.h.b16 %v8585
      %v8678 = vunpack.c.l.b16 %v8586
      %v8679 = vunpack.c.h.b16 %v8586
      %v8680 = vunpack.c.l.b16 %v8587
      %v8681 = vunpack.c.h.b16 %v8587
      %v8682 = vunpack.c.l.b16 %v8588
      %v8683 = vunpack.c.h.b16 %v8588
      %v8684 = vunpack.c.l.b16 %v8589
      %v8685 = vunpack.c.h.b16 %v8589
      %v8686 = vpack.c.b16 %v8624, %v8622
      %v8687 = vpack.c.b16 %v8625, %v8623
      %v8688 = vpack.c.b16 %v8628, %v8626
      %v8689 = vpack.c.b16 %v8629, %v8627
      %v8690 = vpack.c.b16 %v8632, %v8630
      %v8691 = vpack.c.b16 %v8633, %v8631
      %v8692 = vpack.c.b16 %v8636, %v8634
      %v8693 = vpack.c.b16 %v8637, %v8635
      %v8694 = vpack.c.b16 %v8640, %v8638
      %v8695 = vpack.c.b16 %v8641, %v8639
      %v8696 = vpack.c.b16 %v8644, %v8642
      %v8697 = vpack.c.b16 %v8645, %v8643
      %v8698 = vpack.c.b16 %v8648, %v8646
      %v8699 = vpack.c.b16 %v8649, %v8647
      %v8700 = vpack.c.b16 %v8652, %v8650
      %v8701 = vpack.c.b16 %v8653, %v8651
      %v8702 = vpack.c.b16 %v8656, %v8654
      %v8703 = vpack.c.b16 %v8657, %v8655
      %v8704 = vpack.c.b16 %v8660, %v8658
      %v8705 = vpack.c.b16 %v8661, %v8659
      %v8706 = vpack.c.b16 %v8664, %v8662
      %v8707 = vpack.c.b16 %v8665, %v8663
      %v8708 = vpack.c.b16 %v8668, %v8666
      %v8709 = vpack.c.b16 %v8669, %v8667
      %v8710 = vpack.c.b16 %v8672, %v8670
      %v8711 = vpack.c.b16 %v8673, %v8671
      %v8712 = vpack.c.b16 %v8676, %v8674
      %v8713 = vpack.c.b16 %v8677, %v8675
      %v8714 = vpack.c.b16 %v8680, %v8678
      %v8715 = vpack.c.b16 %v8681, %v8679
      %v8716 = vpack.c.b16 %v8684, %v8682
      %v8717 = vpack.c.b16 %v8685, %v8683
      %8750 = vmatprep.subr.bf16.mxu0 %v8540
      %8751 = vmatpush1.bf16.msra.mxu0 %v8539
      %8752 = vmatprep.subr.bf16.mxu0 %v8538
      %8753 = vmatpush1.bf16.msra.mxu0 %v8537
      %8754 = vmatprep.subr.bf16.mxu0 %v8536
      %8755 = vmatpush1.bf16.msra.mxu0 %v8535
      %8756 = vmatprep.subr.bf16.mxu0 %v8534
      %8757 = vmatpush1.bf16.msra.mxu0 %v8533
      %8758 = vmatprep.subr.bf16.mxu0 %v8532
      %8759 = vmatpush1.bf16.msra.mxu0 %v8531
      %8760 = vmatprep.subr.bf16.mxu0 %v8530
      %8761 = vmatpush1.bf16.msra.mxu0 %v8529
      %8762 = vmatprep.subr.bf16.mxu0 %v8528
      %8763 = vmatpush1.bf16.msra.mxu0 %v8527
      %8764 = vmatprep.subr.bf16.mxu0 %v8526
      %8765 = vmatpush1.bf16.msra.mxu0 %v8525
      %8766 = vmatprep.subr.bf16.mxu0 %v8556
      %8767 = vmatpush2.bf16.msra.mxu0 %v8555
      %8768 = vmatprep.subr.bf16.mxu0 %v8554
      %8769 = vmatpush2.bf16.msra.mxu0 %v8553
      %8770 = vmatprep.subr.bf16.mxu0 %v8552
      %8771 = vmatpush2.bf16.msra.mxu0 %v8551
      %8772 = vmatprep.subr.bf16.mxu0 %v8550
      %8773 = vmatpush2.bf16.msra.mxu0 %v8549
      %8774 = vmatprep.subr.bf16.mxu0 %v8548
      %8775 = vmatpush2.bf16.msra.mxu0 %v8547
      %8776 = vmatprep.subr.bf16.mxu0 %v8546
      %8777 = vmatpush2.bf16.msra.mxu0 %v8545
      %8778 = vmatprep.subr.bf16.mxu0 %v8544
      %8779 = vmatpush2.bf16.msra.mxu0 %v8543
      %8780 = vmatprep.subr.bf16.mxu0 %v8542
      %8781 = vmatpush2.bf16.msra.mxu0 %v8541
      %8782 = vmatprep.mubr.bf16.mxu0 %v8687
      %8783 = vmatmul.mubr.bf16.gmra.mxu0 %v8686
      %v8784 = vpop.f32.mrf.mxu0
      %v8785 = vadd.f32 0.0, %v8784
      %v8786 = vpop.f32.mrf.mxu0
      %v8787 = vadd.f32 0.0, %v8786
      %v8788 = vpop.f32.mrf.mxu0
      %v8789 = vadd.f32 0.0, %v8788
      %v8790 = vpop.f32.mrf.mxu0
      %v8791 = vadd.f32 0.0, %v8790
      %8792 = vmatprep.mubr.bf16.mxu0 %v8689
      %8793 = vmatmul.mubr.bf16.gmra.mxu0 %v8688
      %v8794 = vpop.f32.mrf.mxu0
      %v8795 = vadd.f32 0.0, %v8794
      %v8796 = vpop.f32.mrf.mxu0
      %v8797 = vadd.f32 0.0, %v8796
      %v8798 = vpop.f32.mrf.mxu0
      %v8799 = vadd.f32 0.0, %v8798
      %v8800 = vpop.f32.mrf.mxu0
      %v8801 = vadd.f32 0.0, %v8800
      %8802 = vmatprep.mubr.bf16.mxu0 %v8691
      %8803 = vmatmul.mubr.bf16.gmra.mxu0 %v8690
      %v8804 = vpop.f32.mrf.mxu0
      %v8805 = vadd.f32 0.0, %v8804
      %v8806 = vpop.f32.mrf.mxu0
      %v8807 = vadd.f32 0.0, %v8806
      %v8808 = vpop.f32.mrf.mxu0
      %v8809 = vadd.f32 0.0, %v8808
      %v8810 = vpop.f32.mrf.mxu0
      %v8811 = vadd.f32 0.0, %v8810
      %8812 = vmatprep.mubr.bf16.mxu0 %v8693
      %8813 = vmatmul.mubr.bf16.gmra.mxu0 %v8692
      %v8814 = vpop.f32.mrf.mxu0
      %v8815 = vadd.f32 0.0, %v8814
      %v8816 = vpop.f32.mrf.mxu0
      %v8817 = vadd.f32 0.0, %v8816
      %v8818 = vpop.f32.mrf.mxu0
      %v8819 = vadd.f32 0.0, %v8818
      %v8820 = vpop.f32.mrf.mxu0
      %v8821 = vadd.f32 0.0, %v8820
      %8822 = vmatprep.mubr.bf16.mxu0 %v8695
      %8823 = vmatmul.mubr.bf16.gmra.mxu0 %v8694
      %v8824 = vpop.f32.mrf.mxu0
      %v8825 = vadd.f32 0.0, %v8824
      %v8826 = vpop.f32.mrf.mxu0
      %v8827 = vadd.f32 0.0, %v8826
      %v8828 = vpop.f32.mrf.mxu0
      %v8829 = vadd.f32 0.0, %v8828
      %v8830 = vpop.f32.mrf.mxu0
      %v8831 = vadd.f32 0.0, %v8830
      %8832 = vmatprep.mubr.bf16.mxu0 %v8697
      %8833 = vmatmul.mubr.bf16.gmra.mxu0 %v8696
      %v8834 = vpop.f32.mrf.mxu0
      %v8835 = vadd.f32 0.0, %v8834
      %v8836 = vpop.f32.mrf.mxu0
      %v8837 = vadd.f32 0.0, %v8836
      %v8838 = vpop.f32.mrf.mxu0
      %v8839 = vadd.f32 0.0, %v8838
      %v8840 = vpop.f32.mrf.mxu0
      %v8841 = vadd.f32 0.0, %v8840
      %8842 = vmatprep.mubr.bf16.mxu0 %v8699
      %8843 = vmatmul.mubr.bf16.gmra.mxu0 %v8698
      %v8844 = vpop.f32.mrf.mxu0
      %v8845 = vadd.f32 0.0, %v8844
      %v8846 = vpop.f32.mrf.mxu0
      %v8847 = vadd.f32 0.0, %v8846
      %v8848 = vpop.f32.mrf.mxu0
      %v8849 = vadd.f32 0.0, %v8848
      %v8850 = vpop.f32.mrf.mxu0
      %v8851 = vadd.f32 0.0, %v8850
      %8852 = vmatprep.mubr.bf16.mxu0 %v8701
      %8853 = vmatmul.mubr.bf16.gmra.mxu0 %v8700
      %v8854 = vpop.f32.mrf.mxu0
      %v8855 = vadd.f32 0.0, %v8854
      %v8856 = vpop.f32.mrf.mxu0
      %v8857 = vadd.f32 0.0, %v8856
      %v8858 = vpop.f32.mrf.mxu0
      %v8859 = vadd.f32 0.0, %v8858
      %v8860 = vpop.f32.mrf.mxu0
      %v8861 = vadd.f32 0.0, %v8860
      %8862 = vmatprep.mubr.bf16.mxu0 %v8703
      %8863 = vmatmul.mubr.bf16.gmra.mxu0 %v8702
      %v8864 = vpop.f32.mrf.mxu0
      %v8865 = vadd.f32 0.0, %v8864
      %v8866 = vpop.f32.mrf.mxu0
      %v8867 = vadd.f32 0.0, %v8866
      %v8868 = vpop.f32.mrf.mxu0
      %v8869 = vadd.f32 0.0, %v8868
      %v8870 = vpop.f32.mrf.mxu0
      %v8871 = vadd.f32 0.0, %v8870
      %8872 = vmatprep.mubr.bf16.mxu0 %v8705
      %8873 = vmatmul.mubr.bf16.gmra.mxu0 %v8704
      %v8874 = vpop.f32.mrf.mxu0
      %v8875 = vadd.f32 0.0, %v8874
      %v8876 = vpop.f32.mrf.mxu0
      %v8877 = vadd.f32 0.0, %v8876
      %v8878 = vpop.f32.mrf.mxu0
      %v8879 = vadd.f32 0.0, %v8878
      %v8880 = vpop.f32.mrf.mxu0
      %v8881 = vadd.f32 0.0, %v8880
      %8882 = vmatprep.mubr.bf16.mxu0 %v8707
      %8883 = vmatmul.mubr.bf16.gmra.mxu0 %v8706
      %v8884 = vpop.f32.mrf.mxu0
      %v8885 = vadd.f32 0.0, %v8884
      %v8886 = vpop.f32.mrf.mxu0
      %v8887 = vadd.f32 0.0, %v8886
      %v8888 = vpop.f32.mrf.mxu0
      %v8889 = vadd.f32 0.0, %v8888
      %v8890 = vpop.f32.mrf.mxu0
      %v8891 = vadd.f32 0.0, %v8890
      %8892 = vmatprep.mubr.bf16.mxu0 %v8709
      %8893 = vmatmul.mubr.bf16.gmra.mxu0 %v8708
      %v8894 = vpop.f32.mrf.mxu0
      %v8895 = vadd.f32 0.0, %v8894
      %v8896 = vpop.f32.mrf.mxu0
      %v8897 = vadd.f32 0.0, %v8896
      %v8898 = vpop.f32.mrf.mxu0
      %v8899 = vadd.f32 0.0, %v8898
      %v8900 = vpop.f32.mrf.mxu0
      %v8901 = vadd.f32 0.0, %v8900
      %8902 = vmatprep.mubr.bf16.mxu0 %v8711
      %8903 = vmatmul.mubr.bf16.gmra.mxu0 %v8710
      %v8904 = vpop.f32.mrf.mxu0
      %v8905 = vadd.f32 0.0, %v8904
      %v8906 = vpop.f32.mrf.mxu0
      %v8907 = vadd.f32 0.0, %v8906
      %v8908 = vpop.f32.mrf.mxu0
      %v8909 = vadd.f32 0.0, %v8908
      %v8910 = vpop.f32.mrf.mxu0
      %v8911 = vadd.f32 0.0, %v8910
      %8912 = vmatprep.mubr.bf16.mxu0 %v8713
      %8913 = vmatmul.mubr.bf16.gmra.mxu0 %v8712
      %v8914 = vpop.f32.mrf.mxu0
      %v8915 = vadd.f32 0.0, %v8914
      %v8916 = vpop.f32.mrf.mxu0
      %v8917 = vadd.f32 0.0, %v8916
      %v8918 = vpop.f32.mrf.mxu0
      %v8919 = vadd.f32 0.0, %v8918
      %v8920 = vpop.f32.mrf.mxu0
      %v8921 = vadd.f32 0.0, %v8920
      %8922 = vmatprep.mubr.bf16.mxu0 %v8715
      %8923 = vmatmul.mubr.bf16.gmra.mxu0 %v8714
      %v8924 = vpop.f32.mrf.mxu0
      %v8925 = vadd.f32 0.0, %v8924
      %v8926 = vpop.f32.mrf.mxu0
      %v8927 = vadd.f32 0.0, %v8926
      %v8928 = vpop.f32.mrf.mxu0
      %v8929 = vadd.f32 0.0, %v8928
      %v8930 = vpop.f32.mrf.mxu0
      %v8931 = vadd.f32 0.0, %v8930
      %8932 = vmatprep.mubr.bf16.mxu0 %v8717
      %8933 = vmatmul.mubr.bf16.gmra.mxu0 %v8716
      %v8934 = vpop.f32.mrf.mxu0
      %v8935 = vadd.f32 0.0, %v8934
      %v8936 = vpop.f32.mrf.mxu0
      %v8937 = vadd.f32 0.0, %v8936
      %v8938 = vpop.f32.mrf.mxu0
      %v8939 = vadd.f32 0.0, %v8938
      %v8940 = vpop.f32.mrf.mxu0
      %v8941 = vadd.f32 0.0, %v8940
      %8942 = vdwg.mxu0
      %v8943 = vadd.f32 %v8305, %v8785
      %v8944 = vadd.f32 %v8307, %v8787
      %v8945 = vadd.f32 %v8309, %v8789
      %v8946 = vadd.f32 %v8311, %v8791
      %v8947 = vadd.f32 %v8315, %v8795
      %v8948 = vadd.f32 %v8317, %v8797
      %v8949 = vadd.f32 %v8319, %v8799
      %v8950 = vadd.f32 %v8321, %v8801
      %v8951 = vadd.f32 %v8325, %v8805
      %v8952 = vadd.f32 %v8327, %v8807
      %v8953 = vadd.f32 %v8329, %v8809
      %v8954 = vadd.f32 %v8331, %v8811
      %v8955 = vadd.f32 %v8335, %v8815
      %v8956 = vadd.f32 %v8337, %v8817
      %v8957 = vadd.f32 %v8339, %v8819
      %v8958 = vadd.f32 %v8341, %v8821
      %v8959 = vadd.f32 %v8345, %v8825
      %v8960 = vadd.f32 %v8347, %v8827
      %v8961 = vadd.f32 %v8349, %v8829
      %v8962 = vadd.f32 %v8351, %v8831
      %v8963 = vadd.f32 %v8355, %v8835
      %v8964 = vadd.f32 %v8357, %v8837
      %v8965 = vadd.f32 %v8359, %v8839
      %v8966 = vadd.f32 %v8361, %v8841
      %v8967 = vadd.f32 %v8365, %v8845
      %v8968 = vadd.f32 %v8367, %v8847
      %v8969 = vadd.f32 %v8369, %v8849
      %v8970 = vadd.f32 %v8371, %v8851
      %v8971 = vadd.f32 %v8375, %v8855
      %v8972 = vadd.f32 %v8377, %v8857
      %v8973 = vadd.f32 %v8379, %v8859
      %v8974 = vadd.f32 %v8381, %v8861
      %v8975 = vadd.f32 %v8385, %v8865
      %v8976 = vadd.f32 %v8387, %v8867
      %v8977 = vadd.f32 %v8389, %v8869
      %v8978 = vadd.f32 %v8391, %v8871
      %v8979 = vadd.f32 %v8395, %v8875
      %v8980 = vadd.f32 %v8397, %v8877
      %v8981 = vadd.f32 %v8399, %v8879
      %v8982 = vadd.f32 %v8401, %v8881
      %v8983 = vadd.f32 %v8405, %v8885
      %v8984 = vadd.f32 %v8407, %v8887
      %v8985 = vadd.f32 %v8409, %v8889
      %v8986 = vadd.f32 %v8411, %v8891
      %v8987 = vadd.f32 %v8415, %v8895
      %v8988 = vadd.f32 %v8417, %v8897
      %v8989 = vadd.f32 %v8419, %v8899
      %v8990 = vadd.f32 %v8421, %v8901
      %v8991 = vadd.f32 %v8425, %v8905
      %v8992 = vadd.f32 %v8427, %v8907
      %v8993 = vadd.f32 %v8429, %v8909
      %v8994 = vadd.f32 %v8431, %v8911
      %v8995 = vadd.f32 %v8435, %v8915
      %v8996 = vadd.f32 %v8437, %v8917
      %v8997 = vadd.f32 %v8439, %v8919
      %v8998 = vadd.f32 %v8441, %v8921
      %v8999 = vadd.f32 %v8445, %v8925
      %v9000 = vadd.f32 %v8447, %v8927
      %v9001 = vadd.f32 %v8449, %v8929
      %v9002 = vadd.f32 %v8451, %v8931
      %v9003 = vadd.f32 %v8455, %v8935
      %v9004 = vadd.f32 %v8457, %v8937
      %v9005 = vadd.f32 %v8459, %v8939
      %v9006 = vadd.f32 %v8461, %v8941
      %v9007 = vld [vmem:[%s9] sm:$0xff]
      %v9008 = vld [vmem:[%s9 + $0x8] sm:$0xff]
      %v9009 = vld [vmem:[%s9 + $0x10] sm:$0xff]
      %v9010 = vld [vmem:[%s9 + $0x18] sm:$0xff]
      %v9011 = vld [vmem:[%s9 + $0x20] sm:$0xff]
      %v9012 = vld [vmem:[%s9 + $0x28] sm:$0xff]
      %v9013 = vld [vmem:[%s9 + $0x30] sm:$0xff]
      %v9014 = vld [vmem:[%s9 + $0x38] sm:$0xff]
      %v9015 = vld [vmem:[%s9 + $0x40] sm:$0xff]
      %v9016 = vld [vmem:[%s9 + $0x48] sm:$0xff]
      %v9017 = vld [vmem:[%s9 + $0x50] sm:$0xff]
      %v9018 = vld [vmem:[%s9 + $0x58] sm:$0xff]
      %v9019 = vld [vmem:[%s9 + $0x60] sm:$0xff]
      %v9020 = vld [vmem:[%s9 + $0x68] sm:$0xff]
      %v9021 = vld [vmem:[%s9 + $0x70] sm:$0xff]
      %v9022 = vld [vmem:[%s9 + $0x78] sm:$0xff]
      %v9023 = vld [vmem:[%s9 + $0x80] sm:$0xff]
      %v9024 = vld [vmem:[%s9 + $0x88] sm:$0xff]
      %v9025 = vld [vmem:[%s9 + $0x90] sm:$0xff]
      %v9026 = vld [vmem:[%s9 + $0x98] sm:$0xff]
      %v9027 = vld [vmem:[%s9 + $0xa0] sm:$0xff]
      %v9028 = vld [vmem:[%s9 + $0xa8] sm:$0xff]
      %v9029 = vld [vmem:[%s9 + $0xb0] sm:$0xff]
      %v9030 = vld [vmem:[%s9 + $0xb8] sm:$0xff]
      %v9031 = vld [vmem:[%s9 + $0xc0] sm:$0xff]
      %v9032 = vld [vmem:[%s9 + $0xc8] sm:$0xff]
      %v9033 = vld [vmem:[%s9 + $0xd0] sm:$0xff]
      %v9034 = vld [vmem:[%s9 + $0xd8] sm:$0xff]
      %v9035 = vld [vmem:[%s9 + $0xe0] sm:$0xff]
      %v9036 = vld [vmem:[%s9 + $0xe8] sm:$0xff]
      %v9037 = vld [vmem:[%s9 + $0xf0] sm:$0xff]
      %v9038 = vld [vmem:[%s9 + $0xf8] sm:$0xff]
      %9040 = vset.pattern.permute.xlu0 0
      %9041 = vperm.xlu0 %9040, %v9007
      %v9042 = vpop.permute.xlu0 %9041
      %9045 = vset.pattern.permute.xlu0 0
      %9046 = vperm.xlu0 %9045, %v9008
      %v9047 = vpop.permute.xlu0 %9046
      %9050 = vset.pattern.permute.xlu0 0
      %9051 = vperm.xlu0 %9050, %v9009
      %v9052 = vpop.permute.xlu0 %9051
      %9055 = vset.pattern.permute.xlu0 0
      %9056 = vperm.xlu0 %9055, %v9010
      %v9057 = vpop.permute.xlu0 %9056
      %9060 = vset.pattern.permute.xlu0 0
      %9061 = vperm.xlu0 %9060, %v9011
      %v9062 = vpop.permute.xlu0 %9061
      %9065 = vset.pattern.permute.xlu0 0
      %9066 = vperm.xlu0 %9065, %v9012
      %v9067 = vpop.permute.xlu0 %9066
      %9070 = vset.pattern.permute.xlu0 0
      %9071 = vperm.xlu0 %9070, %v9013
      %v9072 = vpop.permute.xlu0 %9071
      %9075 = vset.pattern.permute.xlu0 0
      %9076 = vperm.xlu0 %9075, %v9014
      %v9077 = vpop.permute.xlu0 %9076
      %9080 = vset.pattern.permute.xlu0 0
      %9081 = vperm.xlu0 %9080, %v9015
      %v9082 = vpop.permute.xlu0 %9081
      %9085 = vset.pattern.permute.xlu0 0
      %9086 = vperm.xlu0 %9085, %v9016
      %v9087 = vpop.permute.xlu0 %9086
      %9090 = vset.pattern.permute.xlu0 0
      %9091 = vperm.xlu0 %9090, %v9017
      %v9092 = vpop.permute.xlu0 %9091
      %9095 = vset.pattern.permute.xlu0 0
      %9096 = vperm.xlu0 %9095, %v9018
      %v9097 = vpop.permute.xlu0 %9096
      %9100 = vset.pattern.permute.xlu0 0
      %9101 = vperm.xlu0 %9100, %v9019
      %v9102 = vpop.permute.xlu0 %9101
      %9105 = vset.pattern.permute.xlu0 0
      %9106 = vperm.xlu0 %9105, %v9020
      %v9107 = vpop.permute.xlu0 %9106
      %9110 = vset.pattern.permute.xlu0 0
      %9111 = vperm.xlu0 %9110, %v9021
      %v9112 = vpop.permute.xlu0 %9111
      %9115 = vset.pattern.permute.xlu0 0
      %9116 = vperm.xlu0 %9115, %v9022
      %v9117 = vpop.permute.xlu0 %9116
      %9120 = vset.pattern.permute.xlu0 0
      %9121 = vperm.xlu0 %9120, %v9023
      %v9122 = vpop.permute.xlu0 %9121
      %9125 = vset.pattern.permute.xlu0 0
      %9126 = vperm.xlu0 %9125, %v9024
      %v9127 = vpop.permute.xlu0 %9126
      %9130 = vset.pattern.permute.xlu0 0
      %9131 = vperm.xlu0 %9130, %v9025
      %v9132 = vpop.permute.xlu0 %9131
      %9135 = vset.pattern.permute.xlu0 0
      %9136 = vperm.xlu0 %9135, %v9026
      %v9137 = vpop.permute.xlu0 %9136
      %9140 = vset.pattern.permute.xlu0 0
      %9141 = vperm.xlu0 %9140, %v9027
      %v9142 = vpop.permute.xlu0 %9141
      %9145 = vset.pattern.permute.xlu0 0
      %9146 = vperm.xlu0 %9145, %v9028
      %v9147 = vpop.permute.xlu0 %9146
      %9150 = vset.pattern.permute.xlu0 0
      %9151 = vperm.xlu0 %9150, %v9029
      %v9152 = vpop.permute.xlu0 %9151
      %9155 = vset.pattern.permute.xlu0 0
      %9156 = vperm.xlu0 %9155, %v9030
      %v9157 = vpop.permute.xlu0 %9156
      %9160 = vset.pattern.permute.xlu0 0
      %9161 = vperm.xlu0 %9160, %v9031
      %v9162 = vpop.permute.xlu0 %9161
      %9165 = vset.pattern.permute.xlu0 0
      %9166 = vperm.xlu0 %9165, %v9032
      %v9167 = vpop.permute.xlu0 %9166
      %9170 = vset.pattern.permute.xlu0 0
      %9171 = vperm.xlu0 %9170, %v9033
      %v9172 = vpop.permute.xlu0 %9171
      %9175 = vset.pattern.permute.xlu0 0
      %9176 = vperm.xlu0 %9175, %v9034
      %v9177 = vpop.permute.xlu0 %9176
      %9180 = vset.pattern.permute.xlu0 0
      %9181 = vperm.xlu0 %9180, %v9035
      %v9182 = vpop.permute.xlu0 %9181
      %9185 = vset.pattern.permute.xlu0 0
      %9186 = vperm.xlu0 %9185, %v9036
      %v9187 = vpop.permute.xlu0 %9186
      %9190 = vset.pattern.permute.xlu0 0
      %9191 = vperm.xlu0 %9190, %v9037
      %v9192 = vpop.permute.xlu0 %9191
      %9195 = vset.pattern.permute.xlu0 0
      %9196 = vperm.xlu0 %9195, %v9038
      %v9197 = vpop.permute.xlu0 %9196
      %v9199 = vmul.f32 %v8943, %v9042
      %v9200 = vmul.f32 %v8944, %v9042
      %v9201 = vmul.f32 %v8945, %v9047
      %v9202 = vmul.f32 %v8946, %v9047
      %v9203 = vmul.f32 %v8947, %v9052
      %v9204 = vmul.f32 %v8948, %v9052
      %v9205 = vmul.f32 %v8949, %v9057
      %v9206 = vmul.f32 %v8950, %v9057
      %v9207 = vmul.f32 %v8951, %v9062
      %v9208 = vmul.f32 %v8952, %v9062
      %v9209 = vmul.f32 %v8953, %v9067
      %v9210 = vmul.f32 %v8954, %v9067
      %v9211 = vmul.f32 %v8955, %v9072
      %v9212 = vmul.f32 %v8956, %v9072
      %v9213 = vmul.f32 %v8957, %v9077
      %v9214 = vmul.f32 %v8958, %v9077
      %v9215 = vmul.f32 %v8959, %v9082
      %v9216 = vmul.f32 %v8960, %v9082
      %v9217 = vmul.f32 %v8961, %v9087
      %v9218 = vmul.f32 %v8962, %v9087
      %v9219 = vmul.f32 %v8963, %v9092
      %v9220 = vmul.f32 %v8964, %v9092
      %v9221 = vmul.f32 %v8965, %v9097
      %v9222 = vmul.f32 %v8966, %v9097
      %v9223 = vmul.f32 %v8967, %v9102
      %v9224 = vmul.f32 %v8968, %v9102
      %v9225 = vmul.f32 %v8969, %v9107
      %v9226 = vmul.f32 %v8970, %v9107
      %v9227 = vmul.f32 %v8971, %v9112
      %v9228 = vmul.f32 %v8972, %v9112
      %v9229 = vmul.f32 %v8973, %v9117
      %v9230 = vmul.f32 %v8974, %v9117
      %v9231 = vmul.f32 %v8975, %v9122
      %v9232 = vmul.f32 %v8976, %v9122
      %v9233 = vmul.f32 %v8977, %v9127
      %v9234 = vmul.f32 %v8978, %v9127
      %v9235 = vmul.f32 %v8979, %v9132
      %v9236 = vmul.f32 %v8980, %v9132
      %v9237 = vmul.f32 %v8981, %v9137
      %v9238 = vmul.f32 %v8982, %v9137
      %v9239 = vmul.f32 %v8983, %v9142
      %v9240 = vmul.f32 %v8984, %v9142
      %v9241 = vmul.f32 %v8985, %v9147
      %v9242 = vmul.f32 %v8986, %v9147
      %v9243 = vmul.f32 %v8987, %v9152
      %v9244 = vmul.f32 %v8988, %v9152
      %v9245 = vmul.f32 %v8989, %v9157
      %v9246 = vmul.f32 %v8990, %v9157
      %v9247 = vmul.f32 %v8991, %v9162
      %v9248 = vmul.f32 %v8992, %v9162
      %v9249 = vmul.f32 %v8993, %v9167
      %v9250 = vmul.f32 %v8994, %v9167
      %v9251 = vmul.f32 %v8995, %v9172
      %v9252 = vmul.f32 %v8996, %v9172
      %v9253 = vmul.f32 %v8997, %v9177
      %v9254 = vmul.f32 %v8998, %v9177
      %v9255 = vmul.f32 %v8999, %v9182
      %v9256 = vmul.f32 %v9000, %v9182
      %v9257 = vmul.f32 %v9001, %v9187
      %v9258 = vmul.f32 %v9002, %v9187
      %v9259 = vmul.f32 %v9003, %v9192
      %v9260 = vmul.f32 %v9004, %v9192
      %v9261 = vmul.f32 %v9005, %v9197
      %v9262 = vmul.f32 %v9006, %v9197
      %v9263 = vld [vmem:[%s10] sm:$0xff]
      %v9264 = vld [vmem:[%s10 + $0x8] sm:$0xff]
      %v9265 = vld [vmem:[%s10 + $0x10] sm:$0xff]
      %v9266 = vld [vmem:[%s10 + $0x18] sm:$0xff]
      %v9267 = vld [vmem:[%s10 + $0x20] sm:$0xff]
      %v9268 = vld [vmem:[%s10 + $0x28] sm:$0xff]
      %v9269 = vld [vmem:[%s10 + $0x30] sm:$0xff]
      %v9270 = vld [vmem:[%s10 + $0x38] sm:$0xff]
      %v9271 = vld [vmem:[%s10 + $0x40] sm:$0xff]
      %v9272 = vld [vmem:[%s10 + $0x48] sm:$0xff]
      %v9273 = vld [vmem:[%s10 + $0x50] sm:$0xff]
      %v9274 = vld [vmem:[%s10 + $0x58] sm:$0xff]
      %v9275 = vld [vmem:[%s10 + $0x60] sm:$0xff]
      %v9276 = vld [vmem:[%s10 + $0x68] sm:$0xff]
      %v9277 = vld [vmem:[%s10 + $0x70] sm:$0xff]
      %v9278 = vld [vmem:[%s10 + $0x78] sm:$0xff]
      %v9279 = vld [vmem:[%s10 + $0x80] sm:$0xff]
      %v9280 = vld [vmem:[%s10 + $0x88] sm:$0xff]
      %v9281 = vld [vmem:[%s10 + $0x90] sm:$0xff]
      %v9282 = vld [vmem:[%s10 + $0x98] sm:$0xff]
      %v9283 = vld [vmem:[%s10 + $0xa0] sm:$0xff]
      %v9284 = vld [vmem:[%s10 + $0xa8] sm:$0xff]
      %v9285 = vld [vmem:[%s10 + $0xb0] sm:$0xff]
      %v9286 = vld [vmem:[%s10 + $0xb8] sm:$0xff]
      %v9287 = vld [vmem:[%s10 + $0xc0] sm:$0xff]
      %v9288 = vld [vmem:[%s10 + $0xc8] sm:$0xff]
      %v9289 = vld [vmem:[%s10 + $0xd0] sm:$0xff]
      %v9290 = vld [vmem:[%s10 + $0xd8] sm:$0xff]
      %v9291 = vld [vmem:[%s10 + $0xe0] sm:$0xff]
      %v9292 = vld [vmem:[%s10 + $0xe8] sm:$0xff]
      %v9293 = vld [vmem:[%s10 + $0xf0] sm:$0xff]
      %v9294 = vld [vmem:[%s10 + $0xf8] sm:$0xff]
      %9296 = vset.pattern.permute.xlu0 0
      %9297 = vperm.xlu0 %9296, %v9263
      %v9298 = vpop.permute.xlu0 %9297
      %9301 = vset.pattern.permute.xlu0 0
      %9302 = vperm.xlu0 %9301, %v9264
      %v9303 = vpop.permute.xlu0 %9302
      %9306 = vset.pattern.permute.xlu0 0
      %9307 = vperm.xlu0 %9306, %v9265
      %v9308 = vpop.permute.xlu0 %9307
      %9311 = vset.pattern.permute.xlu0 0
      %9312 = vperm.xlu0 %9311, %v9266
      %v9313 = vpop.permute.xlu0 %9312
      %9316 = vset.pattern.permute.xlu0 0
      %9317 = vperm.xlu0 %9316, %v9267
      %v9318 = vpop.permute.xlu0 %9317
      %9321 = vset.pattern.permute.xlu0 0
      %9322 = vperm.xlu0 %9321, %v9268
      %v9323 = vpop.permute.xlu0 %9322
      %9326 = vset.pattern.permute.xlu0 0
      %9327 = vperm.xlu0 %9326, %v9269
      %v9328 = vpop.permute.xlu0 %9327
      %9331 = vset.pattern.permute.xlu0 0
      %9332 = vperm.xlu0 %9331, %v9270
      %v9333 = vpop.permute.xlu0 %9332
      %9336 = vset.pattern.permute.xlu0 0
      %9337 = vperm.xlu0 %9336, %v9271
      %v9338 = vpop.permute.xlu0 %9337
      %9341 = vset.pattern.permute.xlu0 0
      %9342 = vperm.xlu0 %9341, %v9272
      %v9343 = vpop.permute.xlu0 %9342
      %9346 = vset.pattern.permute.xlu0 0
      %9347 = vperm.xlu0 %9346, %v9273
      %v9348 = vpop.permute.xlu0 %9347
      %9351 = vset.pattern.permute.xlu0 0
      %9352 = vperm.xlu0 %9351, %v9274
      %v9353 = vpop.permute.xlu0 %9352
      %9356 = vset.pattern.permute.xlu0 0
      %9357 = vperm.xlu0 %9356, %v9275
      %v9358 = vpop.permute.xlu0 %9357
      %9361 = vset.pattern.permute.xlu0 0
      %9362 = vperm.xlu0 %9361, %v9276
      %v9363 = vpop.permute.xlu0 %9362
      %9366 = vset.pattern.permute.xlu0 0
      %9367 = vperm.xlu0 %9366, %v9277
      %v9368 = vpop.permute.xlu0 %9367
      %9371 = vset.pattern.permute.xlu0 0
      %9372 = vperm.xlu0 %9371, %v9278
      %v9373 = vpop.permute.xlu0 %9372
      %9376 = vset.pattern.permute.xlu0 0
      %9377 = vperm.xlu0 %9376, %v9279
      %v9378 = vpop.permute.xlu0 %9377
      %9381 = vset.pattern.permute.xlu0 0
      %9382 = vperm.xlu0 %9381, %v9280
      %v9383 = vpop.permute.xlu0 %9382
      %9386 = vset.pattern.permute.xlu0 0
      %9387 = vperm.xlu0 %9386, %v9281
      %v9388 = vpop.permute.xlu0 %9387
      %9391 = vset.pattern.permute.xlu0 0
      %9392 = vperm.xlu0 %9391, %v9282
      %v9393 = vpop.permute.xlu0 %9392
      %9396 = vset.pattern.permute.xlu0 0
      %9397 = vperm.xlu0 %9396, %v9283
      %v9398 = vpop.permute.xlu0 %9397
      %9401 = vset.pattern.permute.xlu0 0
      %9402 = vperm.xlu0 %9401, %v9284
      %v9403 = vpop.permute.xlu0 %9402
      %9406 = vset.pattern.permute.xlu0 0
      %9407 = vperm.xlu0 %9406, %v9285
      %v9408 = vpop.permute.xlu0 %9407
      %9411 = vset.pattern.permute.xlu0 0
      %9412 = vperm.xlu0 %9411, %v9286
      %v9413 = vpop.permute.xlu0 %9412
      %9416 = vset.pattern.permute.xlu0 0
      %9417 = vperm.xlu0 %9416, %v9287
      %v9418 = vpop.permute.xlu0 %9417
      %9421 = vset.pattern.permute.xlu0 0
      %9422 = vperm.xlu0 %9421, %v9288
      %v9423 = vpop.permute.xlu0 %9422
      %9426 = vset.pattern.permute.xlu0 0
      %9427 = vperm.xlu0 %9426, %v9289
      %v9428 = vpop.permute.xlu0 %9427
      %9431 = vset.pattern.permute.xlu0 0
      %9432 = vperm.xlu0 %9431, %v9290
      %v9433 = vpop.permute.xlu0 %9432
      %9436 = vset.pattern.permute.xlu0 0
      %9437 = vperm.xlu0 %9436, %v9291
      %v9438 = vpop.permute.xlu0 %9437
      %9441 = vset.pattern.permute.xlu0 0
      %9442 = vperm.xlu0 %9441, %v9292
      %v9443 = vpop.permute.xlu0 %9442
      %9446 = vset.pattern.permute.xlu0 0
      %9447 = vperm.xlu0 %9446, %v9293
      %v9448 = vpop.permute.xlu0 %9447
      %9451 = vset.pattern.permute.xlu0 0
      %9452 = vperm.xlu0 %9451, %v9294
      %v9453 = vpop.permute.xlu0 %9452
      %v9455 = vadd.f32 %v9199, %v9298
      %v9456 = vadd.f32 %v9200, %v9298
      %v9457 = vadd.f32 %v9201, %v9303
      %v9458 = vadd.f32 %v9202, %v9303
      %v9459 = vadd.f32 %v9203, %v9308
      %v9460 = vadd.f32 %v9204, %v9308
      %v9461 = vadd.f32 %v9205, %v9313
      %v9462 = vadd.f32 %v9206, %v9313
      %v9463 = vadd.f32 %v9207, %v9318
      %v9464 = vadd.f32 %v9208, %v9318
      %v9465 = vadd.f32 %v9209, %v9323
      %v9466 = vadd.f32 %v9210, %v9323
      %v9467 = vadd.f32 %v9211, %v9328
      %v9468 = vadd.f32 %v9212, %v9328
      %v9469 = vadd.f32 %v9213, %v9333
      %v9470 = vadd.f32 %v9214, %v9333
      %v9471 = vadd.f32 %v9215, %v9338
      %v9472 = vadd.f32 %v9216, %v9338
      %v9473 = vadd.f32 %v9217, %v9343
      %v9474 = vadd.f32 %v9218, %v9343
      %v9475 = vadd.f32 %v9219, %v9348
      %v9476 = vadd.f32 %v9220, %v9348
      %v9477 = vadd.f32 %v9221, %v9353
      %v9478 = vadd.f32 %v9222, %v9353
      %v9479 = vadd.f32 %v9223, %v9358
      %v9480 = vadd.f32 %v9224, %v9358
      %v9481 = vadd.f32 %v9225, %v9363
      %v9482 = vadd.f32 %v9226, %v9363
      %v9483 = vadd.f32 %v9227, %v9368
      %v9484 = vadd.f32 %v9228, %v9368
      %v9485 = vadd.f32 %v9229, %v9373
      %v9486 = vadd.f32 %v9230, %v9373
      %v9487 = vadd.f32 %v9231, %v9378
      %v9488 = vadd.f32 %v9232, %v9378
      %v9489 = vadd.f32 %v9233, %v9383
      %v9490 = vadd.f32 %v9234, %v9383
      %v9491 = vadd.f32 %v9235, %v9388
      %v9492 = vadd.f32 %v9236, %v9388
      %v9493 = vadd.f32 %v9237, %v9393
      %v9494 = vadd.f32 %v9238, %v9393
      %v9495 = vadd.f32 %v9239, %v9398
      %v9496 = vadd.f32 %v9240, %v9398
      %v9497 = vadd.f32 %v9241, %v9403
      %v9498 = vadd.f32 %v9242, %v9403
      %v9499 = vadd.f32 %v9243, %v9408
      %v9500 = vadd.f32 %v9244, %v9408
      %v9501 = vadd.f32 %v9245, %v9413
      %v9502 = vadd.f32 %v9246, %v9413
      %v9503 = vadd.f32 %v9247, %v9418
      %v9504 = vadd.f32 %v9248, %v9418
      %v9505 = vadd.f32 %v9249, %v9423
      %v9506 = vadd.f32 %v9250, %v9423
      %v9507 = vadd.f32 %v9251, %v9428
      %v9508 = vadd.f32 %v9252, %v9428
      %v9509 = vadd.f32 %v9253, %v9433
      %v9510 = vadd.f32 %v9254, %v9433
      %v9511 = vadd.f32 %v9255, %v9438
      %v9512 = vadd.f32 %v9256, %v9438
      %v9513 = vadd.f32 %v9257, %v9443
      %v9514 = vadd.f32 %v9258, %v9443
      %v9515 = vadd.f32 %v9259, %v9448
      %v9516 = vadd.f32 %v9260, %v9448
      %v9517 = vadd.f32 %v9261, %v9453
      %v9518 = vadd.f32 %v9262, %v9453
      %v9519 = vmax.f32 %v9455, 0.0
      %v9520 = vmax.f32 %v9456, 0.0
      %v9521 = vmax.f32 %v9457, 0.0
      %v9522 = vmax.f32 %v9458, 0.0
      %v9523 = vmax.f32 %v9459, 0.0
      %v9524 = vmax.f32 %v9460, 0.0
      %v9525 = vmax.f32 %v9461, 0.0
      %v9526 = vmax.f32 %v9462, 0.0
      %v9527 = vmax.f32 %v9463, 0.0
      %v9528 = vmax.f32 %v9464, 0.0
      %v9529 = vmax.f32 %v9465, 0.0
      %v9530 = vmax.f32 %v9466, 0.0
      %v9531 = vmax.f32 %v9467, 0.0
      %v9532 = vmax.f32 %v9468, 0.0
      %v9533 = vmax.f32 %v9469, 0.0
      %v9534 = vmax.f32 %v9470, 0.0
      %v9535 = vmax.f32 %v9471, 0.0
      %v9536 = vmax.f32 %v9472, 0.0
      %v9537 = vmax.f32 %v9473, 0.0
      %v9538 = vmax.f32 %v9474, 0.0
      %v9539 = vmax.f32 %v9475, 0.0
      %v9540 = vmax.f32 %v9476, 0.0
      %v9541 = vmax.f32 %v9477, 0.0
      %v9542 = vmax.f32 %v9478, 0.0
      %v9543 = vmax.f32 %v9479, 0.0
      %v9544 = vmax.f32 %v9480, 0.0
      %v9545 = vmax.f32 %v9481, 0.0
      %v9546 = vmax.f32 %v9482, 0.0
      %v9547 = vmax.f32 %v9483, 0.0
      %v9548 = vmax.f32 %v9484, 0.0
      %v9549 = vmax.f32 %v9485, 0.0
      %v9550 = vmax.f32 %v9486, 0.0
      %v9551 = vmax.f32 %v9487, 0.0
      %v9552 = vmax.f32 %v9488, 0.0
      %v9553 = vmax.f32 %v9489, 0.0
      %v9554 = vmax.f32 %v9490, 0.0
      %v9555 = vmax.f32 %v9491, 0.0
      %v9556 = vmax.f32 %v9492, 0.0
      %v9557 = vmax.f32 %v9493, 0.0
      %v9558 = vmax.f32 %v9494, 0.0
      %v9559 = vmax.f32 %v9495, 0.0
      %v9560 = vmax.f32 %v9496, 0.0
      %v9561 = vmax.f32 %v9497, 0.0
      %v9562 = vmax.f32 %v9498, 0.0
      %v9563 = vmax.f32 %v9499, 0.0
      %v9564 = vmax.f32 %v9500, 0.0
      %v9565 = vmax.f32 %v9501, 0.0
      %v9566 = vmax.f32 %v9502, 0.0
      %v9567 = vmax.f32 %v9503, 0.0
      %v9568 = vmax.f32 %v9504, 0.0
      %v9569 = vmax.f32 %v9505, 0.0
      %v9570 = vmax.f32 %v9506, 0.0
      %v9571 = vmax.f32 %v9507, 0.0
      %v9572 = vmax.f32 %v9508, 0.0
      %v9573 = vmax.f32 %v9509, 0.0
      %v9574 = vmax.f32 %v9510, 0.0
      %v9575 = vmax.f32 %v9511, 0.0
      %v9576 = vmax.f32 %v9512, 0.0
      %v9577 = vmax.f32 %v9513, 0.0
      %v9578 = vmax.f32 %v9514, 0.0
      %v9579 = vmax.f32 %v9515, 0.0
      %v9580 = vmax.f32 %v9516, 0.0
      %v9581 = vmax.f32 %v9517, 0.0
      %v9582 = vmax.f32 %v9518, 0.0
      %9583 = vst [vmem:[%s467 + $0x180] sm:$0xff] %v9519
      %9584 = vst [vmem:[%s467 + $0x188] sm:$0xff] %v9520
      %9585 = vst [vmem:[%s467 + $0x190] sm:$0xff] %v9521
      %9586 = vst [vmem:[%s467 + $0x198] sm:$0xff] %v9522
      %9587 = vst [vmem:[%s467 + $0x1a0] sm:$0xff] %v9523
      %9588 = vst [vmem:[%s467 + $0x1a8] sm:$0xff] %v9524
      %9589 = vst [vmem:[%s467 + $0x1b0] sm:$0xff] %v9525
      %9590 = vst [vmem:[%s467 + $0x1b8] sm:$0xff] %v9526
      %9591 = vst [vmem:[%s467 + $0x1c0] sm:$0xff] %v9527
      %9592 = vst [vmem:[%s467 + $0x1c8] sm:$0xff] %v9528
      %9593 = vst [vmem:[%s467 + $0x1d0] sm:$0xff] %v9529
      %9594 = vst [vmem:[%s467 + $0x1d8] sm:$0xff] %v9530
      %9595 = vst [vmem:[%s467 + $0x1e0] sm:$0xff] %v9531
      %9596 = vst [vmem:[%s467 + $0x1e8] sm:$0xff] %v9532
      %9597 = vst [vmem:[%s467 + $0x1f0] sm:$0xff] %v9533
      %9598 = vst [vmem:[%s467 + $0x1f8] sm:$0xff] %v9534
      %9599 = vst [vmem:[%s467 + $0x200] sm:$0xff] %v9535
      %9600 = vst [vmem:[%s467 + $0x208] sm:$0xff] %v9536
      %9601 = vst [vmem:[%s467 + $0x210] sm:$0xff] %v9537
      %9602 = vst [vmem:[%s467 + $0x218] sm:$0xff] %v9538
      %9603 = vst [vmem:[%s467 + $0x220] sm:$0xff] %v9539
      %9604 = vst [vmem:[%s467 + $0x228] sm:$0xff] %v9540
      %9605 = vst [vmem:[%s467 + $0x230] sm:$0xff] %v9541
      %9606 = vst [vmem:[%s467 + $0x238] sm:$0xff] %v9542
      %9607 = vst [vmem:[%s467 + $0x240] sm:$0xff] %v9543
      %9608 = vst [vmem:[%s467 + $0x248] sm:$0xff] %v9544
      %9609 = vst [vmem:[%s467 + $0x250] sm:$0xff] %v9545
      %9610 = vst [vmem:[%s467 + $0x258] sm:$0xff] %v9546
      %9611 = vst [vmem:[%s467 + $0x260] sm:$0xff] %v9547
      %9612 = vst [vmem:[%s467 + $0x268] sm:$0xff] %v9548
      %9613 = vst [vmem:[%s467 + $0x270] sm:$0xff] %v9549
      %9614 = vst [vmem:[%s467 + $0x278] sm:$0xff] %v9550
      %9615 = vst [vmem:[%s467 + $0x280] sm:$0xff] %v9551
      %9616 = vst [vmem:[%s467 + $0x288] sm:$0xff] %v9552
      %9617 = vst [vmem:[%s467 + $0x290] sm:$0xff] %v9553
      %9618 = vst [vmem:[%s467 + $0x298] sm:$0xff] %v9554
      %9619 = vst [vmem:[%s467 + $0x2a0] sm:$0xff] %v9555
      %9620 = vst [vmem:[%s467 + $0x2a8] sm:$0xff] %v9556
      %9621 = vst [vmem:[%s467 + $0x2b0] sm:$0xff] %v9557
      %9622 = vst [vmem:[%s467 + $0x2b8] sm:$0xff] %v9558
      %9623 = vst [vmem:[%s467 + $0x2c0] sm:$0xff] %v9559
      %9624 = vst [vmem:[%s467 + $0x2c8] sm:$0xff] %v9560
      %9625 = vst [vmem:[%s467 + $0x2d0] sm:$0xff] %v9561
      %9626 = vst [vmem:[%s467 + $0x2d8] sm:$0xff] %v9562
      %9627 = vst [vmem:[%s467 + $0x2e0] sm:$0xff] %v9563
      %9628 = vst [vmem:[%s467 + $0x2e8] sm:$0xff] %v9564
      %9629 = vst [vmem:[%s467 + $0x2f0] sm:$0xff] %v9565
      %9630 = vst [vmem:[%s467 + $0x2f8] sm:$0xff] %v9566
      %9631 = vst [vmem:[%s467 + $0x300] sm:$0xff] %v9567
      %9632 = vst [vmem:[%s467 + $0x308] sm:$0xff] %v9568
      %9633 = vst [vmem:[%s467 + $0x310] sm:$0xff] %v9569
      %9634 = vst [vmem:[%s467 + $0x318] sm:$0xff] %v9570
      %9635 = vst [vmem:[%s467 + $0x320] sm:$0xff] %v9571
      %9636 = vst [vmem:[%s467 + $0x328] sm:$0xff] %v9572
      %9637 = vst [vmem:[%s467 + $0x330] sm:$0xff] %v9573
      %9638 = vst [vmem:[%s467 + $0x338] sm:$0xff] %v9574
      %9639 = vst [vmem:[%s467 + $0x340] sm:$0xff] %v9575
      %9640 = vst [vmem:[%s467 + $0x348] sm:$0xff] %v9576
      %9641 = vst [vmem:[%s467 + $0x350] sm:$0xff] %v9577
      %9642 = vst [vmem:[%s467 + $0x358] sm:$0xff] %v9578
      %9643 = vst [vmem:[%s467 + $0x360] sm:$0xff] %v9579
      %9644 = vst [vmem:[%s467 + $0x368] sm:$0xff] %v9580
      %9645 = vst [vmem:[%s467 + $0x370] sm:$0xff] %v9581
      %9646 = vst [vmem:[%s467 + $0x378] sm:$0xff] %v9582
      %vm9647 = vcmp.gt.f32.partialorder %v652, 0.5
      %vm9648 = vcmp.gt.f32.partialorder %v653, 0.5
      %9709 = vrot.lane.b32.xlu0 %v592, 1
      %v9710 = vpop.permute.xlu0 %9709
      %9711 = vrot.lane.b32.xlu0 %v593, 1
      %v9712 = vpop.permute.xlu0 %9711
      %9713 = vrot.lane.b32.xlu0 %v594, 1
      %v9714 = vpop.permute.xlu0 %9713
      %9715 = vrot.lane.b32.xlu0 %v595, 1
      %v9716 = vpop.permute.xlu0 %9715
      %9717 = vrot.lane.b32.xlu0 %v596, 1
      %v9718 = vpop.permute.xlu0 %9717
      %9719 = vrot.lane.b32.xlu0 %v597, 1
      %v9720 = vpop.permute.xlu0 %9719
      %9721 = vrot.lane.b32.xlu0 %v598, 1
      %v9722 = vpop.permute.xlu0 %9721
      %9723 = vrot.lane.b32.xlu0 %v599, 1
      %v9724 = vpop.permute.xlu0 %9723
      %9725 = vrot.lane.b32.xlu0 %v600, 1
      %v9726 = vpop.permute.xlu0 %9725
      %9727 = vrot.lane.b32.xlu0 %v601, 1
      %v9728 = vpop.permute.xlu0 %9727
      %9729 = vrot.lane.b32.xlu0 %v602, 1
      %v9730 = vpop.permute.xlu0 %9729
      %9731 = vrot.lane.b32.xlu0 %v603, 1
      %v9732 = vpop.permute.xlu0 %9731
      %9733 = vrot.lane.b32.xlu0 %v604, 1
      %v9734 = vpop.permute.xlu0 %9733
      %9735 = vrot.lane.b32.xlu0 %v605, 1
      %v9736 = vpop.permute.xlu0 %9735
      %9737 = vrot.lane.b32.xlu0 %v606, 1
      %v9738 = vpop.permute.xlu0 %9737
      %9739 = vrot.lane.b32.xlu0 %v607, 1
      %v9740 = vpop.permute.xlu0 %9739
      %9741 = vrot.lane.b32.xlu0 %v608, 1
      %v9742 = vpop.permute.xlu0 %9741
      %9743 = vrot.lane.b32.xlu0 %v609, 1
      %v9744 = vpop.permute.xlu0 %9743
      %9745 = vrot.lane.b32.xlu0 %v610, 1
      %v9746 = vpop.permute.xlu0 %9745
      %9747 = vrot.lane.b32.xlu0 %v611, 1
      %v9748 = vpop.permute.xlu0 %9747
      %9749 = vrot.lane.b32.xlu0 %v612, 1
      %v9750 = vpop.permute.xlu0 %9749
      %9751 = vrot.lane.b32.xlu0 %v613, 1
      %v9752 = vpop.permute.xlu0 %9751
      %9753 = vrot.lane.b32.xlu0 %v614, 1
      %v9754 = vpop.permute.xlu0 %9753
      %9755 = vrot.lane.b32.xlu0 %v615, 1
      %v9756 = vpop.permute.xlu0 %9755
      %9757 = vrot.lane.b32.xlu0 %v616, 1
      %v9758 = vpop.permute.xlu0 %9757
      %9759 = vrot.lane.b32.xlu0 %v617, 1
      %v9760 = vpop.permute.xlu0 %9759
      %9761 = vrot.lane.b32.xlu0 %v618, 1
      %v9762 = vpop.permute.xlu0 %9761
      %9763 = vrot.lane.b32.xlu0 %v619, 1
      %v9764 = vpop.permute.xlu0 %9763
      %9765 = vrot.lane.b32.xlu0 %v620, 1
      %v9766 = vpop.permute.xlu0 %9765
      %9767 = vrot.lane.b32.xlu0 %v621, 1
      %v9768 = vpop.permute.xlu0 %9767
      %9769 = vrot.lane.b32.xlu0 %v622, 1
      %v9770 = vpop.permute.xlu0 %9769
      %9771 = vrot.lane.b32.xlu0 %v623, 1
      %v9772 = vpop.permute.xlu0 %9771
      %9773 = vrot.lane.b32.xlu0 %v624, 1
      %v9774 = vpop.permute.xlu0 %9773
      %9775 = vrot.lane.b32.xlu0 %v625, 1
      %v9776 = vpop.permute.xlu0 %9775
      %9777 = vrot.lane.b32.xlu0 %v626, 1
      %v9778 = vpop.permute.xlu0 %9777
      %9779 = vrot.lane.b32.xlu0 %v627, 1
      %v9780 = vpop.permute.xlu0 %9779
      %9781 = vrot.lane.b32.xlu0 %v628, 1
      %v9782 = vpop.permute.xlu0 %9781
      %9783 = vrot.lane.b32.xlu0 %v629, 1
      %v9784 = vpop.permute.xlu0 %9783
      %9785 = vrot.lane.b32.xlu0 %v630, 1
      %v9786 = vpop.permute.xlu0 %9785
      %9787 = vrot.lane.b32.xlu0 %v631, 1
      %v9788 = vpop.permute.xlu0 %9787
      %9789 = vrot.lane.b32.xlu0 %v632, 1
      %v9790 = vpop.permute.xlu0 %9789
      %9791 = vrot.lane.b32.xlu0 %v633, 1
      %v9792 = vpop.permute.xlu0 %9791
      %9793 = vrot.lane.b32.xlu0 %v634, 1
      %v9794 = vpop.permute.xlu0 %9793
      %9795 = vrot.lane.b32.xlu0 %v635, 1
      %v9796 = vpop.permute.xlu0 %9795
      %9797 = vrot.lane.b32.xlu0 %v636, 1
      %v9798 = vpop.permute.xlu0 %9797
      %9799 = vrot.lane.b32.xlu0 %v637, 1
      %v9800 = vpop.permute.xlu0 %9799
      %9801 = vrot.lane.b32.xlu0 %v638, 1
      %v9802 = vpop.permute.xlu0 %9801
      %9803 = vrot.lane.b32.xlu0 %v639, 1
      %v9804 = vpop.permute.xlu0 %9803
      %9805 = vrot.lane.b32.xlu0 %v640, 1
      %v9806 = vpop.permute.xlu0 %9805
      %9807 = vrot.lane.b32.xlu0 %v641, 1
      %v9808 = vpop.permute.xlu0 %9807
      %9809 = vrot.lane.b32.xlu0 %v642, 1
      %v9810 = vpop.permute.xlu0 %9809
      %9811 = vrot.lane.b32.xlu0 %v643, 1
      %v9812 = vpop.permute.xlu0 %9811
      %9813 = vrot.lane.b32.xlu0 %v644, 1
      %v9814 = vpop.permute.xlu0 %9813
      %9815 = vrot.lane.b32.xlu0 %v645, 1
      %v9816 = vpop.permute.xlu0 %9815
      %9817 = vrot.lane.b32.xlu0 %v646, 1
      %v9818 = vpop.permute.xlu0 %9817
      %9819 = vrot.lane.b32.xlu0 %v647, 1
      %v9820 = vpop.permute.xlu0 %9819
      %9821 = vrot.lane.b32.xlu0 %v648, 1
      %v9822 = vpop.permute.xlu0 %9821
      %9823 = vrot.lane.b32.xlu0 %v649, 1
      %v9824 = vpop.permute.xlu0 %9823
      %9825 = vrot.lane.b32.xlu0 %v650, 1
      %v9826 = vpop.permute.xlu0 %9825
      %9827 = vrot.lane.b32.xlu0 %v651, 1
      %v9828 = vpop.permute.xlu0 %9827
      %v9829 = vsel %vm3823, %v9710, %v9712
      %v9830 = vsel %vm3823, %v9714, %v9716
      %v9831 = vsel %vm3823, %v9718, %v9720
      %v9832 = vsel %vm3823, %v9722, %v9724
      %v9833 = vsel %vm3823, %v9726, %v9728
      %v9834 = vsel %vm3823, %v9730, %v9732
      %v9835 = vsel %vm3823, %v9734, %v9736
      %v9836 = vsel %vm3823, %v9738, %v9740
      %v9837 = vsel %vm3823, %v9742, %v9744
      %v9838 = vsel %vm3823, %v9746, %v9748
      %v9839 = vsel %vm3823, %v9750, %v9752
      %v9840 = vsel %vm3823, %v9754, %v9756
      %v9841 = vsel %vm3823, %v9758, %v9760
      %v9842 = vsel %vm3823, %v9762, %v9764
      %v9843 = vsel %vm3823, %v9766, %v9768
      %v9844 = vsel %vm3823, %v9770, %v9772
      %v9845 = vsel %vm3823, %v9774, %v9776
      %v9846 = vsel %vm3823, %v9778, %v9780
      %v9847 = vsel %vm3823, %v9782, %v9784
      %v9848 = vsel %vm3823, %v9786, %v9788
      %v9849 = vsel %vm3823, %v9790, %v9792
      %v9850 = vsel %vm3823, %v9794, %v9796
      %v9851 = vsel %vm3823, %v9798, %v9800
      %v9852 = vsel %vm3823, %v9802, %v9804
      %v9853 = vsel %vm3823, %v9806, %v9808
      %v9854 = vsel %vm3823, %v9810, %v9812
      %v9855 = vsel %vm3823, %v9814, %v9816
      %v9856 = vsel %vm3823, %v9818, %v9820
      %v9857 = vsel %vm3823, %v9822, %v9824
      %v9858 = vsel %vm3823, %v9826, %v9828
      %v9890 = vsel %vm3838, 0, %v9710
      %v9893 = vsel %vm3838, 0, %v9714
      %v9896 = vsel %vm3838, 0, %v9718
      %v9899 = vsel %vm3838, 0, %v9722
      %v9902 = vsel %vm3838, 0, %v9726
      %v9905 = vsel %vm3838, 0, %v9730
      %v9908 = vsel %vm3838, 0, %v9734
      %v9911 = vsel %vm3838, 0, %v9738
      %v9914 = vsel %vm3838, 0, %v9742
      %v9917 = vsel %vm3838, 0, %v9746
      %v9920 = vsel %vm3838, 0, %v9750
      %v9923 = vsel %vm3838, 0, %v9754
      %v9926 = vsel %vm3838, 0, %v9758
      %v9929 = vsel %vm3838, 0, %v9762
      %v9932 = vsel %vm3838, 0, %v9766
      %v9935 = vsel %vm3838, 0, %v9770
      %v9938 = vsel %vm3838, 0, %v9774
      %v9941 = vsel %vm3838, 0, %v9778
      %v9944 = vsel %vm3838, 0, %v9782
      %v9947 = vsel %vm3838, 0, %v9786
      %v9950 = vsel %vm3838, 0, %v9790
      %v9953 = vsel %vm3838, 0, %v9794
      %v9956 = vsel %vm3838, 0, %v9798
      %v9959 = vsel %vm3838, 0, %v9802
      %v9962 = vsel %vm3838, 0, %v9806
      %v9965 = vsel %vm3838, 0, %v9810
      %v9968 = vsel %vm3838, 0, %v9814
      %v9971 = vsel %vm3838, 0, %v9818
      %v9974 = vsel %vm3838, 0, %v9822
      %v9977 = vsel %vm3838, 0, %v9826
      %v9979 = vsel %vm9647, 1, 0
      %v9980 = vsel %vm9648, 1, 0
      %v9981 = vlaneseq
      %v9982 = vshrl.u32 %v9981, 7
      %v9983 = vsub.s32 0, %v9982
      %v9984 = vrot.slane %v9979, %v9983
      %v9985 = vlaneseq
      %v9986 = vshrl.u32 %v9985, 7
      %v9987 = vsub.s32 0, %v9986
      %v9988 = vrot.slane %v9980, %v9987
      %vm9989 = vcmp.eq.s32.totalorder %v9984, 1
      %vm9990 = vcmp.eq.s32.totalorder %v9988, 1
      %vm9991 = vmpackc.low %vm9990, %vm9989
      %v9992 = vsel %vm9991, 65537, 0
      %v9993 = vlaneseq
      %v9994 = vshrl.u32 %v9993, 7
      %v9995 = vsub.s32 0, %v9994
      %v9996 = vrot.slane %v9992, %v9995
      %v9997 = vlaneseq
      %v9998 = vshrl.u32 %v9997, 7
      %v9999 = vsub.s32 4, %v9998
      %v10000 = vrot.slane %v9992, %v9999
      %vm10001 = vcmp.ne.s16.totalorder %v9996, 0
      %vm10002 = vcmp.ne.s16.totalorder %v10000, 0
      %v10003 = vsel %vm10001, %v9890, 4286644096
      %v10004 = vsel %vm10002, %v9829, 4286644096
      %v10005 = vsel %vm10001, %v9893, 4286644096
      %v10006 = vsel %vm10002, %v9830, 4286644096
      %v10007 = vsel %vm10001, %v9896, 4286644096
      %v10008 = vsel %vm10002, %v9831, 4286644096
      %v10009 = vsel %vm10001, %v9899, 4286644096
      %v10010 = vsel %vm10002, %v9832, 4286644096
      %v10011 = vsel %vm10001, %v9902, 4286644096
      %v10012 = vsel %vm10002, %v9833, 4286644096
      %v10013 = vsel %vm10001, %v9905, 4286644096
      %v10014 = vsel %vm10002, %v9834, 4286644096
      %v10015 = vsel %vm10001, %v9908, 4286644096
      %v10016 = vsel %vm10002, %v9835, 4286644096
      %v10017 = vsel %vm10001, %v9911, 4286644096
      %v10018 = vsel %vm10002, %v9836, 4286644096
      %v10019 = vsel %vm10001, %v9914, 4286644096
      %v10020 = vsel %vm10002, %v9837, 4286644096
      %v10021 = vsel %vm10001, %v9917, 4286644096
      %v10022 = vsel %vm10002, %v9838, 4286644096
      %v10023 = vsel %vm10001, %v9920, 4286644096
      %v10024 = vsel %vm10002, %v9839, 4286644096
      %v10025 = vsel %vm10001, %v9923, 4286644096
      %v10026 = vsel %vm10002, %v9840, 4286644096
      %v10027 = vsel %vm10001, %v9926, 4286644096
      %v10028 = vsel %vm10002, %v9841, 4286644096
      %v10029 = vsel %vm10001, %v9929, 4286644096
      %v10030 = vsel %vm10002, %v9842, 4286644096
      %v10031 = vsel %vm10001, %v9932, 4286644096
      %v10032 = vsel %vm10002, %v9843, 4286644096
      %v10033 = vsel %vm10001, %v9935, 4286644096
      %v10034 = vsel %vm10002, %v9844, 4286644096
      %v10035 = vsel %vm10001, %v9938, 4286644096
      %v10036 = vsel %vm10002, %v9845, 4286644096
      %v10037 = vsel %vm10001, %v9941, 4286644096
      %v10038 = vsel %vm10002, %v9846, 4286644096
      %v10039 = vsel %vm10001, %v9944, 4286644096
      %v10040 = vsel %vm10002, %v9847, 4286644096
      %v10041 = vsel %vm10001, %v9947, 4286644096
      %v10042 = vsel %vm10002, %v9848, 4286644096
      %v10043 = vsel %vm10001, %v9950, 4286644096
      %v10044 = vsel %vm10002, %v9849, 4286644096
      %v10045 = vsel %vm10001, %v9953, 4286644096
      %v10046 = vsel %vm10002, %v9850, 4286644096
      %v10047 = vsel %vm10001, %v9956, 4286644096
      %v10048 = vsel %vm10002, %v9851, 4286644096
      %v10049 = vsel %vm10001, %v9959, 4286644096
      %v10050 = vsel %vm10002, %v9852, 4286644096
      %v10051 = vsel %vm10001, %v9962, 4286644096
      %v10052 = vsel %vm10002, %v9853, 4286644096
      %v10053 = vsel %vm10001, %v9965, 4286644096
      %v10054 = vsel %vm10002, %v9854, 4286644096
      %v10055 = vsel %vm10001, %v9968, 4286644096
      %v10056 = vsel %vm10002, %v9855, 4286644096
      %v10057 = vsel %vm10001, %v9971, 4286644096
      %v10058 = vsel %vm10002, %v9856, 4286644096
      %v10059 = vsel %vm10001, %v9974, 4286644096
      %v10060 = vsel %vm10002, %v9857, 4286644096
      %v10061 = vsel %vm10001, %v9977, 4286644096
      %v10062 = vsel %vm10002, %v9858, 4286644096
      %10063 = vrot.lane.b32.xlu0 %v592, 127
      %v10064 = vpop.permute.xlu0 %10063
      %10065 = vrot.lane.b32.xlu0 %v593, 127
      %v10066 = vpop.permute.xlu0 %10065
      %10067 = vrot.lane.b32.xlu0 %v594, 127
      %v10068 = vpop.permute.xlu0 %10067
      %10069 = vrot.lane.b32.xlu0 %v595, 127
      %v10070 = vpop.permute.xlu0 %10069
      %10071 = vrot.lane.b32.xlu0 %v596, 127
      %v10072 = vpop.permute.xlu0 %10071
      %10073 = vrot.lane.b32.xlu0 %v597, 127
      %v10074 = vpop.permute.xlu0 %10073
      %10075 = vrot.lane.b32.xlu0 %v598, 127
      %v10076 = vpop.permute.xlu0 %10075
      %10077 = vrot.lane.b32.xlu0 %v599, 127
      %v10078 = vpop.permute.xlu0 %10077
      %10079 = vrot.lane.b32.xlu0 %v600, 127
      %v10080 = vpop.permute.xlu0 %10079
      %10081 = vrot.lane.b32.xlu0 %v601, 127
      %v10082 = vpop.permute.xlu0 %10081
      %10083 = vrot.lane.b32.xlu0 %v602, 127
      %v10084 = vpop.permute.xlu0 %10083
      %10085 = vrot.lane.b32.xlu0 %v603, 127
      %v10086 = vpop.permute.xlu0 %10085
      %10087 = vrot.lane.b32.xlu0 %v604, 127
      %v10088 = vpop.permute.xlu0 %10087
      %10089 = vrot.lane.b32.xlu0 %v605, 127
      %v10090 = vpop.permute.xlu0 %10089
      %10091 = vrot.lane.b32.xlu0 %v606, 127
      %v10092 = vpop.permute.xlu0 %10091
      %10093 = vrot.lane.b32.xlu0 %v607, 127
      %v10094 = vpop.permute.xlu0 %10093
      %10095 = vrot.lane.b32.xlu0 %v608, 127
      %v10096 = vpop.permute.xlu0 %10095
      %10097 = vrot.lane.b32.xlu0 %v609, 127
      %v10098 = vpop.permute.xlu0 %10097
      %10099 = vrot.lane.b32.xlu0 %v610, 127
      %v10100 = vpop.permute.xlu0 %10099
      %10101 = vrot.lane.b32.xlu0 %v611, 127
      %v10102 = vpop.permute.xlu0 %10101
      %10103 = vrot.lane.b32.xlu0 %v612, 127
      %v10104 = vpop.permute.xlu0 %10103
      %10105 = vrot.lane.b32.xlu0 %v613, 127
      %v10106 = vpop.permute.xlu0 %10105
      %10107 = vrot.lane.b32.xlu0 %v614, 127
      %v10108 = vpop.permute.xlu0 %10107
      %10109 = vrot.lane.b32.xlu0 %v615, 127
      %v10110 = vpop.permute.xlu0 %10109
      %10111 = vrot.lane.b32.xlu0 %v616, 127
      %v10112 = vpop.permute.xlu0 %10111
      %10113 = vrot.lane.b32.xlu0 %v617, 127
      %v10114 = vpop.permute.xlu0 %10113
      %10115 = vrot.lane.b32.xlu0 %v618, 127
      %v10116 = vpop.permute.xlu0 %10115
      %10117 = vrot.lane.b32.xlu0 %v619, 127
      %v10118 = vpop.permute.xlu0 %10117
      %10119 = vrot.lane.b32.xlu0 %v620, 127
      %v10120 = vpop.permute.xlu0 %10119
      %10121 = vrot.lane.b32.xlu0 %v621, 127
      %v10122 = vpop.permute.xlu0 %10121
      %10123 = vrot.lane.b32.xlu0 %v622, 127
      %v10124 = vpop.permute.xlu0 %10123
      %10125 = vrot.lane.b32.xlu0 %v623, 127
      %v10126 = vpop.permute.xlu0 %10125
      %10127 = vrot.lane.b32.xlu0 %v624, 127
      %v10128 = vpop.permute.xlu0 %10127
      %10129 = vrot.lane.b32.xlu0 %v625, 127
      %v10130 = vpop.permute.xlu0 %10129
      %10131 = vrot.lane.b32.xlu0 %v626, 127
      %v10132 = vpop.permute.xlu0 %10131
      %10133 = vrot.lane.b32.xlu0 %v627, 127
      %v10134 = vpop.permute.xlu0 %10133
      %10135 = vrot.lane.b32.xlu0 %v628, 127
      %v10136 = vpop.permute.xlu0 %10135
      %10137 = vrot.lane.b32.xlu0 %v629, 127
      %v10138 = vpop.permute.xlu0 %10137
      %10139 = vrot.lane.b32.xlu0 %v630, 127
      %v10140 = vpop.permute.xlu0 %10139
      %10141 = vrot.lane.b32.xlu0 %v631, 127
      %v10142 = vpop.permute.xlu0 %10141
      %10143 = vrot.lane.b32.xlu0 %v632, 127
      %v10144 = vpop.permute.xlu0 %10143
      %10145 = vrot.lane.b32.xlu0 %v633, 127
      %v10146 = vpop.permute.xlu0 %10145
      %10147 = vrot.lane.b32.xlu0 %v634, 127
      %v10148 = vpop.permute.xlu0 %10147
      %10149 = vrot.lane.b32.xlu0 %v635, 127
      %v10150 = vpop.permute.xlu0 %10149
      %10151 = vrot.lane.b32.xlu0 %v636, 127
      %v10152 = vpop.permute.xlu0 %10151
      %10153 = vrot.lane.b32.xlu0 %v637, 127
      %v10154 = vpop.permute.xlu0 %10153
      %10155 = vrot.lane.b32.xlu0 %v638, 127
      %v10156 = vpop.permute.xlu0 %10155
      %10157 = vrot.lane.b32.xlu0 %v639, 127
      %v10158 = vpop.permute.xlu0 %10157
      %10159 = vrot.lane.b32.xlu0 %v640, 127
      %v10160 = vpop.permute.xlu0 %10159
      %10161 = vrot.lane.b32.xlu0 %v641, 127
      %v10162 = vpop.permute.xlu0 %10161
      %10163 = vrot.lane.b32.xlu0 %v642, 127
      %v10164 = vpop.permute.xlu0 %10163
      %10165 = vrot.lane.b32.xlu0 %v643, 127
      %v10166 = vpop.permute.xlu0 %10165
      %10167 = vrot.lane.b32.xlu0 %v644, 127
      %v10168 = vpop.permute.xlu0 %10167
      %10169 = vrot.lane.b32.xlu0 %v645, 127
      %v10170 = vpop.permute.xlu0 %10169
      %10171 = vrot.lane.b32.xlu0 %v646, 127
      %v10172 = vpop.permute.xlu0 %10171
      %10173 = vrot.lane.b32.xlu0 %v647, 127
      %v10174 = vpop.permute.xlu0 %10173
      %10175 = vrot.lane.b32.xlu0 %v648, 127
      %v10176 = vpop.permute.xlu0 %10175
      %10177 = vrot.lane.b32.xlu0 %v649, 127
      %v10178 = vpop.permute.xlu0 %10177
      %10179 = vrot.lane.b32.xlu0 %v650, 127
      %v10180 = vpop.permute.xlu0 %10179
      %10181 = vrot.lane.b32.xlu0 %v651, 127
      %v10182 = vpop.permute.xlu0 %10181
      %v10183 = vsel %vm4792, %v10064, %v10066
      %v10184 = vsel %vm4792, %v10068, %v10070
      %v10185 = vsel %vm4792, %v10072, %v10074
      %v10186 = vsel %vm4792, %v10076, %v10078
      %v10187 = vsel %vm4792, %v10080, %v10082
      %v10188 = vsel %vm4792, %v10084, %v10086
      %v10189 = vsel %vm4792, %v10088, %v10090
      %v10190 = vsel %vm4792, %v10092, %v10094
      %v10191 = vsel %vm4792, %v10096, %v10098
      %v10192 = vsel %vm4792, %v10100, %v10102
      %v10193 = vsel %vm4792, %v10104, %v10106
      %v10194 = vsel %vm4792, %v10108, %v10110
      %v10195 = vsel %vm4792, %v10112, %v10114
      %v10196 = vsel %vm4792, %v10116, %v10118
      %v10197 = vsel %vm4792, %v10120, %v10122
      %v10198 = vsel %vm4792, %v10124, %v10126
      %v10199 = vsel %vm4792, %v10128, %v10130
      %v10200 = vsel %vm4792, %v10132, %v10134
      %v10201 = vsel %vm4792, %v10136, %v10138
      %v10202 = vsel %vm4792, %v10140, %v10142
      %v10203 = vsel %vm4792, %v10144, %v10146
      %v10204 = vsel %vm4792, %v10148, %v10150
      %v10205 = vsel %vm4792, %v10152, %v10154
      %v10206 = vsel %vm4792, %v10156, %v10158
      %v10207 = vsel %vm4792, %v10160, %v10162
      %v10208 = vsel %vm4792, %v10164, %v10166
      %v10209 = vsel %vm4792, %v10168, %v10170
      %v10210 = vsel %vm4792, %v10172, %v10174
      %v10211 = vsel %vm4792, %v10176, %v10178
      %v10212 = vsel %vm4792, %v10180, %v10182
      %v10244 = vsel %vm4807, %v10066, 0
      %v10247 = vsel %vm4807, %v10070, 0
      %v10250 = vsel %vm4807, %v10074, 0
      %v10253 = vsel %vm4807, %v10078, 0
      %v10256 = vsel %vm4807, %v10082, 0
      %v10259 = vsel %vm4807, %v10086, 0
      %v10262 = vsel %vm4807, %v10090, 0
      %v10265 = vsel %vm4807, %v10094, 0
      %v10268 = vsel %vm4807, %v10098, 0
      %v10271 = vsel %vm4807, %v10102, 0
      %v10274 = vsel %vm4807, %v10106, 0
      %v10277 = vsel %vm4807, %v10110, 0
      %v10280 = vsel %vm4807, %v10114, 0
      %v10283 = vsel %vm4807, %v10118, 0
      %v10286 = vsel %vm4807, %v10122, 0
      %v10289 = vsel %vm4807, %v10126, 0
      %v10292 = vsel %vm4807, %v10130, 0
      %v10295 = vsel %vm4807, %v10134, 0
      %v10298 = vsel %vm4807, %v10138, 0
      %v10301 = vsel %vm4807, %v10142, 0
      %v10304 = vsel %vm4807, %v10146, 0
      %v10307 = vsel %vm4807, %v10150, 0
      %v10310 = vsel %vm4807, %v10154, 0
      %v10313 = vsel %vm4807, %v10158, 0
      %v10316 = vsel %vm4807, %v10162, 0
      %v10319 = vsel %vm4807, %v10166, 0
      %v10322 = vsel %vm4807, %v10170, 0
      %v10325 = vsel %vm4807, %v10174, 0
      %v10328 = vsel %vm4807, %v10178, 0
      %v10331 = vsel %vm4807, %v10182, 0
      %v10333 = vlaneseq
      %v10334 = vshrl.u32 %v10333, 7
      %v10335 = vsub.s32 1, %v10334
      %v10336 = vrot.slane %v9979, %v10335
      %v10337 = vlaneseq
      %v10338 = vshrl.u32 %v10337, 7
      %v10339 = vsub.s32 1, %v10338
      %v10340 = vrot.slane %v9980, %v10339
      %vm10341 = vcmp.eq.s32.totalorder %v10336, 1
      %vm10342 = vcmp.eq.s32.totalorder %v10340, 1
      %vm10343 = vmpackc.low %vm10342, %vm10341
      %v10344 = vsel %vm10343, 65537, 0
      %v10345 = vlaneseq
      %v10346 = vshrl.u32 %v10345, 7
      %v10347 = vsub.s32 0, %v10346
      %v10348 = vrot.slane %v10344, %v10347
      %v10349 = vlaneseq
      %v10350 = vshrl.u32 %v10349, 7
      %v10351 = vsub.s32 4, %v10350
      %v10352 = vrot.slane %v10344, %v10351
      %vm10353 = vcmp.ne.s16.totalorder %v10348, 0
      %vm10354 = vcmp.ne.s16.totalorder %v10352, 0
      %v10355 = vsel %vm10353, %v10183, 4286644096
      %v10356 = vsel %vm10354, %v10244, 4286644096
      %v10357 = vsel %vm10353, %v10184, 4286644096
      %v10358 = vsel %vm10354, %v10247, 4286644096
      %v10359 = vsel %vm10353, %v10185, 4286644096
      %v10360 = vsel %vm10354, %v10250, 4286644096
      %v10361 = vsel %vm10353, %v10186, 4286644096
      %v10362 = vsel %vm10354, %v10253, 4286644096
      %v10363 = vsel %vm10353, %v10187, 4286644096
      %v10364 = vsel %vm10354, %v10256, 4286644096
      %v10365 = vsel %vm10353, %v10188, 4286644096
      %v10366 = vsel %vm10354, %v10259, 4286644096
      %v10367 = vsel %vm10353, %v10189, 4286644096
      %v10368 = vsel %vm10354, %v10262, 4286644096
      %v10369 = vsel %vm10353, %v10190, 4286644096
      %v10370 = vsel %vm10354, %v10265, 4286644096
      %v10371 = vsel %vm10353, %v10191, 4286644096
      %v10372 = vsel %vm10354, %v10268, 4286644096
      %v10373 = vsel %vm10353, %v10192, 4286644096
      %v10374 = vsel %vm10354, %v10271, 4286644096
      %v10375 = vsel %vm10353, %v10193, 4286644096
      %v10376 = vsel %vm10354, %v10274, 4286644096
      %v10377 = vsel %vm10353, %v10194, 4286644096
      %v10378 = vsel %vm10354, %v10277, 4286644096
      %v10379 = vsel %vm10353, %v10195, 4286644096
      %v10380 = vsel %vm10354, %v10280, 4286644096
      %v10381 = vsel %vm10353, %v10196, 4286644096
      %v10382 = vsel %vm10354, %v10283, 4286644096
      %v10383 = vsel %vm10353, %v10197, 4286644096
      %v10384 = vsel %vm10354, %v10286, 4286644096
      %v10385 = vsel %vm10353, %v10198, 4286644096
      %v10386 = vsel %vm10354, %v10289, 4286644096
      %v10387 = vsel %vm10353, %v10199, 4286644096
      %v10388 = vsel %vm10354, %v10292, 4286644096
      %v10389 = vsel %vm10353, %v10200, 4286644096
      %v10390 = vsel %vm10354, %v10295, 4286644096
      %v10391 = vsel %vm10353, %v10201, 4286644096
      %v10392 = vsel %vm10354, %v10298, 4286644096
      %v10393 = vsel %vm10353, %v10202, 4286644096
      %v10394 = vsel %vm10354, %v10301, 4286644096
      %v10395 = vsel %vm10353, %v10203, 4286644096
      %v10396 = vsel %vm10354, %v10304, 4286644096
      %v10397 = vsel %vm10353, %v10204, 4286644096
      %v10398 = vsel %vm10354, %v10307, 4286644096
      %v10399 = vsel %vm10353, %v10205, 4286644096
      %v10400 = vsel %vm10354, %v10310, 4286644096
      %v10401 = vsel %vm10353, %v10206, 4286644096
      %v10402 = vsel %vm10354, %v10313, 4286644096
      %v10403 = vsel %vm10353, %v10207, 4286644096
      %v10404 = vsel %vm10354, %v10316, 4286644096
      %v10405 = vsel %vm10353, %v10208, 4286644096
      %v10406 = vsel %vm10354, %v10319, 4286644096
      %v10407 = vsel %vm10353, %v10209, 4286644096
      %v10408 = vsel %vm10354, %v10322, 4286644096
      %v10409 = vsel %vm10353, %v10210, 4286644096
      %v10410 = vsel %vm10354, %v10325, 4286644096
      %v10411 = vsel %vm10353, %v10211, 4286644096
      %v10412 = vsel %vm10354, %v10328, 4286644096
      %v10413 = vsel %vm10353, %v10212, 4286644096
      %v10414 = vsel %vm10354, %v10331, 4286644096
      %v10415 = vmax.bf16 %v10003, %v10355
      %v10416 = vmax.bf16 %v10004, %v10356
      %v10417 = vmax.bf16 %v10005, %v10357
      %v10418 = vmax.bf16 %v10006, %v10358
      %v10419 = vmax.bf16 %v10007, %v10359
      %v10420 = vmax.bf16 %v10008, %v10360
      %v10421 = vmax.bf16 %v10009, %v10361
      %v10422 = vmax.bf16 %v10010, %v10362
      %v10423 = vmax.bf16 %v10011, %v10363
      %v10424 = vmax.bf16 %v10012, %v10364
      %v10425 = vmax.bf16 %v10013, %v10365
      %v10426 = vmax.bf16 %v10014, %v10366
      %v10427 = vmax.bf16 %v10015, %v10367
      %v10428 = vmax.bf16 %v10016, %v10368
      %v10429 = vmax.bf16 %v10017, %v10369
      %v10430 = vmax.bf16 %v10018, %v10370
      %v10431 = vmax.bf16 %v10019, %v10371
      %v10432 = vmax.bf16 %v10020, %v10372
      %v10433 = vmax.bf16 %v10021, %v10373
      %v10434 = vmax.bf16 %v10022, %v10374
      %v10435 = vmax.bf16 %v10023, %v10375
      %v10436 = vmax.bf16 %v10024, %v10376
      %v10437 = vmax.bf16 %v10025, %v10377
      %v10438 = vmax.bf16 %v10026, %v10378
      %v10439 = vmax.bf16 %v10027, %v10379
      %v10440 = vmax.bf16 %v10028, %v10380
      %v10441 = vmax.bf16 %v10029, %v10381
      %v10442 = vmax.bf16 %v10030, %v10382
      %v10443 = vmax.bf16 %v10031, %v10383
      %v10444 = vmax.bf16 %v10032, %v10384
      %v10445 = vmax.bf16 %v10033, %v10385
      %v10446 = vmax.bf16 %v10034, %v10386
      %v10447 = vmax.bf16 %v10035, %v10387
      %v10448 = vmax.bf16 %v10036, %v10388
      %v10449 = vmax.bf16 %v10037, %v10389
      %v10450 = vmax.bf16 %v10038, %v10390
      %v10451 = vmax.bf16 %v10039, %v10391
      %v10452 = vmax.bf16 %v10040, %v10392
      %v10453 = vmax.bf16 %v10041, %v10393
      %v10454 = vmax.bf16 %v10042, %v10394
      %v10455 = vmax.bf16 %v10043, %v10395
      %v10456 = vmax.bf16 %v10044, %v10396
      %v10457 = vmax.bf16 %v10045, %v10397
      %v10458 = vmax.bf16 %v10046, %v10398
      %v10459 = vmax.bf16 %v10047, %v10399
      %v10460 = vmax.bf16 %v10048, %v10400
      %v10461 = vmax.bf16 %v10049, %v10401
      %v10462 = vmax.bf16 %v10050, %v10402
      %v10463 = vmax.bf16 %v10051, %v10403
      %v10464 = vmax.bf16 %v10052, %v10404
      %v10465 = vmax.bf16 %v10053, %v10405
      %v10466 = vmax.bf16 %v10054, %v10406
      %v10467 = vmax.bf16 %v10055, %v10407
      %v10468 = vmax.bf16 %v10056, %v10408
      %v10469 = vmax.bf16 %v10057, %v10409
      %v10470 = vmax.bf16 %v10058, %v10410
      %v10471 = vmax.bf16 %v10059, %v10411
      %v10472 = vmax.bf16 %v10060, %v10412
      %v10473 = vmax.bf16 %v10061, %v10413
      %v10474 = vmax.bf16 %v10062, %v10414
      %v10475 = vmax.bf16 %v592, %v10415
      %v10476 = vmax.bf16 %v593, %v10416
      %v10477 = vmax.bf16 %v594, %v10417
      %v10478 = vmax.bf16 %v595, %v10418
      %v10479 = vmax.bf16 %v596, %v10419
      %v10480 = vmax.bf16 %v597, %v10420
      %v10481 = vmax.bf16 %v598, %v10421
      %v10482 = vmax.bf16 %v599, %v10422
      %v10483 = vmax.bf16 %v600, %v10423
      %v10484 = vmax.bf16 %v601, %v10424
      %v10485 = vmax.bf16 %v602, %v10425
      %v10486 = vmax.bf16 %v603, %v10426
      %v10487 = vmax.bf16 %v604, %v10427
      %v10488 = vmax.bf16 %v605, %v10428
      %v10489 = vmax.bf16 %v606, %v10429
      %v10490 = vmax.bf16 %v607, %v10430
      %v10491 = vmax.bf16 %v608, %v10431
      %v10492 = vmax.bf16 %v609, %v10432
      %v10493 = vmax.bf16 %v610, %v10433
      %v10494 = vmax.bf16 %v611, %v10434
      %v10495 = vmax.bf16 %v612, %v10435
      %v10496 = vmax.bf16 %v613, %v10436
      %v10497 = vmax.bf16 %v614, %v10437
      %v10498 = vmax.bf16 %v615, %v10438
      %v10499 = vmax.bf16 %v616, %v10439
      %v10500 = vmax.bf16 %v617, %v10440
      %v10501 = vmax.bf16 %v618, %v10441
      %v10502 = vmax.bf16 %v619, %v10442
      %v10503 = vmax.bf16 %v620, %v10443
      %v10504 = vmax.bf16 %v621, %v10444
      %v10505 = vmax.bf16 %v622, %v10445
      %v10506 = vmax.bf16 %v623, %v10446
      %v10507 = vmax.bf16 %v624, %v10447
      %v10508 = vmax.bf16 %v625, %v10448
      %v10509 = vmax.bf16 %v626, %v10449
      %v10510 = vmax.bf16 %v627, %v10450
      %v10511 = vmax.bf16 %v628, %v10451
      %v10512 = vmax.bf16 %v629, %v10452
      %v10513 = vmax.bf16 %v630, %v10453
      %v10514 = vmax.bf16 %v631, %v10454
      %v10515 = vmax.bf16 %v632, %v10455
      %v10516 = vmax.bf16 %v633, %v10456
      %v10517 = vmax.bf16 %v634, %v10457
      %v10518 = vmax.bf16 %v635, %v10458
      %v10519 = vmax.bf16 %v636, %v10459
      %v10520 = vmax.bf16 %v637, %v10460
      %v10521 = vmax.bf16 %v638, %v10461
      %v10522 = vmax.bf16 %v639, %v10462
      %v10523 = vmax.bf16 %v640, %v10463
      %v10524 = vmax.bf16 %v641, %v10464
      %v10525 = vmax.bf16 %v642, %v10465
      %v10526 = vmax.bf16 %v643, %v10466
      %v10527 = vmax.bf16 %v644, %v10467
      %v10528 = vmax.bf16 %v645, %v10468
      %v10529 = vmax.bf16 %v646, %v10469
      %v10530 = vmax.bf16 %v647, %v10470
      %v10531 = vmax.bf16 %v648, %v10471
      %v10532 = vmax.bf16 %v649, %v10472
      %v10533 = vmax.bf16 %v650, %v10473
      %v10534 = vmax.bf16 %v651, %v10474
      %10595 = vrot.lane.b32.xlu0 %v10475, 8
      %v10596 = vpop.permute.xlu0 %10595
      %10597 = vrot.lane.b32.xlu0 %v10476, 8
      %v10598 = vpop.permute.xlu0 %10597
      %10599 = vrot.lane.b32.xlu0 %v10477, 8
      %v10600 = vpop.permute.xlu0 %10599
      %10601 = vrot.lane.b32.xlu0 %v10478, 8
      %v10602 = vpop.permute.xlu0 %10601
      %10603 = vrot.lane.b32.xlu0 %v10479, 8
      %v10604 = vpop.permute.xlu0 %10603
      %10605 = vrot.lane.b32.xlu0 %v10480, 8
      %v10606 = vpop.permute.xlu0 %10605
      %10607 = vrot.lane.b32.xlu0 %v10481, 8
      %v10608 = vpop.permute.xlu0 %10607
      %10609 = vrot.lane.b32.xlu0 %v10482, 8
      %v10610 = vpop.permute.xlu0 %10609
      %10611 = vrot.lane.b32.xlu0 %v10483, 8
      %v10612 = vpop.permute.xlu0 %10611
      %10613 = vrot.lane.b32.xlu0 %v10484, 8
      %v10614 = vpop.permute.xlu0 %10613
      %10615 = vrot.lane.b32.xlu0 %v10485, 8
      %v10616 = vpop.permute.xlu0 %10615
      %10617 = vrot.lane.b32.xlu0 %v10486, 8
      %v10618 = vpop.permute.xlu0 %10617
      %10619 = vrot.lane.b32.xlu0 %v10487, 8
      %v10620 = vpop.permute.xlu0 %10619
      %10621 = vrot.lane.b32.xlu0 %v10488, 8
      %v10622 = vpop.permute.xlu0 %10621
      %10623 = vrot.lane.b32.xlu0 %v10489, 8
      %v10624 = vpop.permute.xlu0 %10623
      %10625 = vrot.lane.b32.xlu0 %v10490, 8
      %v10626 = vpop.permute.xlu0 %10625
      %10627 = vrot.lane.b32.xlu0 %v10491, 8
      %v10628 = vpop.permute.xlu0 %10627
      %10629 = vrot.lane.b32.xlu0 %v10492, 8
      %v10630 = vpop.permute.xlu0 %10629
      %10631 = vrot.lane.b32.xlu0 %v10493, 8
      %v10632 = vpop.permute.xlu0 %10631
      %10633 = vrot.lane.b32.xlu0 %v10494, 8
      %v10634 = vpop.permute.xlu0 %10633
      %10635 = vrot.lane.b32.xlu0 %v10495, 8
      %v10636 = vpop.permute.xlu0 %10635
      %10637 = vrot.lane.b32.xlu0 %v10496, 8
      %v10638 = vpop.permute.xlu0 %10637
      %10639 = vrot.lane.b32.xlu0 %v10497, 8
      %v10640 = vpop.permute.xlu0 %10639
      %10641 = vrot.lane.b32.xlu0 %v10498, 8
      %v10642 = vpop.permute.xlu0 %10641
      %10643 = vrot.lane.b32.xlu0 %v10499, 8
      %v10644 = vpop.permute.xlu0 %10643
      %10645 = vrot.lane.b32.xlu0 %v10500, 8
      %v10646 = vpop.permute.xlu0 %10645
      %10647 = vrot.lane.b32.xlu0 %v10501, 8
      %v10648 = vpop.permute.xlu0 %10647
      %10649 = vrot.lane.b32.xlu0 %v10502, 8
      %v10650 = vpop.permute.xlu0 %10649
      %10651 = vrot.lane.b32.xlu0 %v10503, 8
      %v10652 = vpop.permute.xlu0 %10651
      %10653 = vrot.lane.b32.xlu0 %v10504, 8
      %v10654 = vpop.permute.xlu0 %10653
      %10655 = vrot.lane.b32.xlu0 %v10505, 8
      %v10656 = vpop.permute.xlu0 %10655
      %10657 = vrot.lane.b32.xlu0 %v10506, 8
      %v10658 = vpop.permute.xlu0 %10657
      %10659 = vrot.lane.b32.xlu0 %v10507, 8
      %v10660 = vpop.permute.xlu0 %10659
      %10661 = vrot.lane.b32.xlu0 %v10508, 8
      %v10662 = vpop.permute.xlu0 %10661
      %10663 = vrot.lane.b32.xlu0 %v10509, 8
      %v10664 = vpop.permute.xlu0 %10663
      %10665 = vrot.lane.b32.xlu0 %v10510, 8
      %v10666 = vpop.permute.xlu0 %10665
      %10667 = vrot.lane.b32.xlu0 %v10511, 8
      %v10668 = vpop.permute.xlu0 %10667
      %10669 = vrot.lane.b32.xlu0 %v10512, 8
      %v10670 = vpop.permute.xlu0 %10669
      %10671 = vrot.lane.b32.xlu0 %v10513, 8
      %v10672 = vpop.permute.xlu0 %10671
      %10673 = vrot.lane.b32.xlu0 %v10514, 8
      %v10674 = vpop.permute.xlu0 %10673
      %10675 = vrot.lane.b32.xlu0 %v10515, 8
      %v10676 = vpop.permute.xlu0 %10675
      %10677 = vrot.lane.b32.xlu0 %v10516, 8
      %v10678 = vpop.permute.xlu0 %10677
      %10679 = vrot.lane.b32.xlu0 %v10517, 8
      %v10680 = vpop.permute.xlu0 %10679
      %10681 = vrot.lane.b32.xlu0 %v10518, 8
      %v10682 = vpop.permute.xlu0 %10681
      %10683 = vrot.lane.b32.xlu0 %v10519, 8
      %v10684 = vpop.permute.xlu0 %10683
      %10685 = vrot.lane.b32.xlu0 %v10520, 8
      %v10686 = vpop.permute.xlu0 %10685
      %10687 = vrot.lane.b32.xlu0 %v10521, 8
      %v10688 = vpop.permute.xlu0 %10687
      %10689 = vrot.lane.b32.xlu0 %v10522, 8
      %v10690 = vpop.permute.xlu0 %10689
      %10691 = vrot.lane.b32.xlu0 %v10523, 8
      %v10692 = vpop.permute.xlu0 %10691
      %10693 = vrot.lane.b32.xlu0 %v10524, 8
      %v10694 = vpop.permute.xlu0 %10693
      %10695 = vrot.lane.b32.xlu0 %v10525, 8
      %v10696 = vpop.permute.xlu0 %10695
      %10697 = vrot.lane.b32.xlu0 %v10526, 8
      %v10698 = vpop.permute.xlu0 %10697
      %10699 = vrot.lane.b32.xlu0 %v10527, 8
      %v10700 = vpop.permute.xlu0 %10699
      %10701 = vrot.lane.b32.xlu0 %v10528, 8
      %v10702 = vpop.permute.xlu0 %10701
      %10703 = vrot.lane.b32.xlu0 %v10529, 8
      %v10704 = vpop.permute.xlu0 %10703
      %10705 = vrot.lane.b32.xlu0 %v10530, 8
      %v10706 = vpop.permute.xlu0 %10705
      %10707 = vrot.lane.b32.xlu0 %v10531, 8
      %v10708 = vpop.permute.xlu0 %10707
      %10709 = vrot.lane.b32.xlu0 %v10532, 8
      %v10710 = vpop.permute.xlu0 %10709
      %10711 = vrot.lane.b32.xlu0 %v10533, 8
      %v10712 = vpop.permute.xlu0 %10711
      %10713 = vrot.lane.b32.xlu0 %v10534, 8
      %v10714 = vpop.permute.xlu0 %10713
      %v10715 = vsel %vm2527, %v10596, %v10598
      %v10716 = vsel %vm2527, %v10600, %v10602
      %v10717 = vsel %vm2527, %v10604, %v10606
      %v10718 = vsel %vm2527, %v10608, %v10610
      %v10719 = vsel %vm2527, %v10612, %v10614
      %v10720 = vsel %vm2527, %v10616, %v10618
      %v10721 = vsel %vm2527, %v10620, %v10622
      %v10722 = vsel %vm2527, %v10624, %v10626
      %v10723 = vsel %vm2527, %v10628, %v10630
      %v10724 = vsel %vm2527, %v10632, %v10634
      %v10725 = vsel %vm2527, %v10636, %v10638
      %v10726 = vsel %vm2527, %v10640, %v10642
      %v10727 = vsel %vm2527, %v10644, %v10646
      %v10728 = vsel %vm2527, %v10648, %v10650
      %v10729 = vsel %vm2527, %v10652, %v10654
      %v10730 = vsel %vm2527, %v10656, %v10658
      %v10731 = vsel %vm2527, %v10660, %v10662
      %v10732 = vsel %vm2527, %v10664, %v10666
      %v10733 = vsel %vm2527, %v10668, %v10670
      %v10734 = vsel %vm2527, %v10672, %v10674
      %v10735 = vsel %vm2527, %v10676, %v10678
      %v10736 = vsel %vm2527, %v10680, %v10682
      %v10737 = vsel %vm2527, %v10684, %v10686
      %v10738 = vsel %vm2527, %v10688, %v10690
      %v10739 = vsel %vm2527, %v10692, %v10694
      %v10740 = vsel %vm2527, %v10696, %v10698
      %v10741 = vsel %vm2527, %v10700, %v10702
      %v10742 = vsel %vm2527, %v10704, %v10706
      %v10743 = vsel %vm2527, %v10708, %v10710
      %v10744 = vsel %vm2527, %v10712, %v10714
      %v10776 = vsel %vm2542, 0, %v10596
      %v10779 = vsel %vm2542, 0, %v10600
      %v10782 = vsel %vm2542, 0, %v10604
      %v10785 = vsel %vm2542, 0, %v10608
      %v10788 = vsel %vm2542, 0, %v10612
      %v10791 = vsel %vm2542, 0, %v10616
      %v10794 = vsel %vm2542, 0, %v10620
      %v10797 = vsel %vm2542, 0, %v10624
      %v10800 = vsel %vm2542, 0, %v10628
      %v10803 = vsel %vm2542, 0, %v10632
      %v10806 = vsel %vm2542, 0, %v10636
      %v10809 = vsel %vm2542, 0, %v10640
      %v10812 = vsel %vm2542, 0, %v10644
      %v10815 = vsel %vm2542, 0, %v10648
      %v10818 = vsel %vm2542, 0, %v10652
      %v10821 = vsel %vm2542, 0, %v10656
      %v10824 = vsel %vm2542, 0, %v10660
      %v10827 = vsel %vm2542, 0, %v10664
      %v10830 = vsel %vm2542, 0, %v10668
      %v10833 = vsel %vm2542, 0, %v10672
      %v10836 = vsel %vm2542, 0, %v10676
      %v10839 = vsel %vm2542, 0, %v10680
      %v10842 = vsel %vm2542, 0, %v10684
      %v10845 = vsel %vm2542, 0, %v10688
      %v10848 = vsel %vm2542, 0, %v10692
      %v10851 = vsel %vm2542, 0, %v10696
      %v10854 = vsel %vm2542, 0, %v10700
      %v10857 = vsel %vm2542, 0, %v10704
      %v10860 = vsel %vm2542, 0, %v10708
      %v10863 = vsel %vm2542, 0, %v10712
      %v10865 = vlaneseq
      %v10866 = vshrl.u32 %v10865, 7
      %v10867 = vsub.s32 2, %v10866
      %v10868 = vrot.slane %v9979, %v10867
      %v10869 = vlaneseq
      %v10870 = vshrl.u32 %v10869, 7
      %v10871 = vsub.s32 2, %v10870
      %v10872 = vrot.slane %v9980, %v10871
      %vm10873 = vcmp.eq.s32.totalorder %v10868, 1
      %vm10874 = vcmp.eq.s32.totalorder %v10872, 1
      %vm10875 = vmpackc.low %vm10874, %vm10873
      %v10876 = vsel %vm10875, 65537, 0
      %v10877 = vlaneseq
      %v10878 = vshrl.u32 %v10877, 7
      %v10879 = vsub.s32 0, %v10878
      %v10880 = vrot.slane %v10876, %v10879
      %v10881 = vlaneseq
      %v10882 = vshrl.u32 %v10881, 7
      %v10883 = vsub.s32 4, %v10882
      %v10884 = vrot.slane %v10876, %v10883
      %vm10885 = vcmp.ne.s16.totalorder %v10880, 0
      %vm10886 = vcmp.ne.s16.totalorder %v10884, 0
      %v10887 = vsel %vm10885, %v10776, 4286644096
      %v10888 = vsel %vm10886, %v10715, 4286644096
      %v10889 = vsel %vm10885, %v10779, 4286644096
      %v10890 = vsel %vm10886, %v10716, 4286644096
      %v10891 = vsel %vm10885, %v10782, 4286644096
      %v10892 = vsel %vm10886, %v10717, 4286644096
      %v10893 = vsel %vm10885, %v10785, 4286644096
      %v10894 = vsel %vm10886, %v10718, 4286644096
      %v10895 = vsel %vm10885, %v10788, 4286644096
      %v10896 = vsel %vm10886, %v10719, 4286644096
      %v10897 = vsel %vm10885, %v10791, 4286644096
      %v10898 = vsel %vm10886, %v10720, 4286644096
      %v10899 = vsel %vm10885, %v10794, 4286644096
      %v10900 = vsel %vm10886, %v10721, 4286644096
      %v10901 = vsel %vm10885, %v10797, 4286644096
      %v10902 = vsel %vm10886, %v10722, 4286644096
      %v10903 = vsel %vm10885, %v10800, 4286644096
      %v10904 = vsel %vm10886, %v10723, 4286644096
      %v10905 = vsel %vm10885, %v10803, 4286644096
      %v10906 = vsel %vm10886, %v10724, 4286644096
      %v10907 = vsel %vm10885, %v10806, 4286644096
      %v10908 = vsel %vm10886, %v10725, 4286644096
      %v10909 = vsel %vm10885, %v10809, 4286644096
      %v10910 = vsel %vm10886, %v10726, 4286644096
      %v10911 = vsel %vm10885, %v10812, 4286644096
      %v10912 = vsel %vm10886, %v10727, 4286644096
      %v10913 = vsel %vm10885, %v10815, 4286644096
      %v10914 = vsel %vm10886, %v10728, 4286644096
      %v10915 = vsel %vm10885, %v10818, 4286644096
      %v10916 = vsel %vm10886, %v10729, 4286644096
      %v10917 = vsel %vm10885, %v10821, 4286644096
      %v10918 = vsel %vm10886, %v10730, 4286644096
      %v10919 = vsel %vm10885, %v10824, 4286644096
      %v10920 = vsel %vm10886, %v10731, 4286644096
      %v10921 = vsel %vm10885, %v10827, 4286644096
      %v10922 = vsel %vm10886, %v10732, 4286644096
      %v10923 = vsel %vm10885, %v10830, 4286644096
      %v10924 = vsel %vm10886, %v10733, 4286644096
      %v10925 = vsel %vm10885, %v10833, 4286644096
      %v10926 = vsel %vm10886, %v10734, 4286644096
      %v10927 = vsel %vm10885, %v10836, 4286644096
      %v10928 = vsel %vm10886, %v10735, 4286644096
      %v10929 = vsel %vm10885, %v10839, 4286644096
      %v10930 = vsel %vm10886, %v10736, 4286644096
      %v10931 = vsel %vm10885, %v10842, 4286644096
      %v10932 = vsel %vm10886, %v10737, 4286644096
      %v10933 = vsel %vm10885, %v10845, 4286644096
      %v10934 = vsel %vm10886, %v10738, 4286644096
      %v10935 = vsel %vm10885, %v10848, 4286644096
      %v10936 = vsel %vm10886, %v10739, 4286644096
      %v10937 = vsel %vm10885, %v10851, 4286644096
      %v10938 = vsel %vm10886, %v10740, 4286644096
      %v10939 = vsel %vm10885, %v10854, 4286644096
      %v10940 = vsel %vm10886, %v10741, 4286644096
      %v10941 = vsel %vm10885, %v10857, 4286644096
      %v10942 = vsel %vm10886, %v10742, 4286644096
      %v10943 = vsel %vm10885, %v10860, 4286644096
      %v10944 = vsel %vm10886, %v10743, 4286644096
      %v10945 = vsel %vm10885, %v10863, 4286644096
      %v10946 = vsel %vm10886, %v10744, 4286644096
      %10947 = vrot.lane.b32.xlu0 %v10475, 120
      %v10948 = vpop.permute.xlu0 %10947
      %10949 = vrot.lane.b32.xlu0 %v10476, 120
      %v10950 = vpop.permute.xlu0 %10949
      %10951 = vrot.lane.b32.xlu0 %v10477, 120
      %v10952 = vpop.permute.xlu0 %10951
      %10953 = vrot.lane.b32.xlu0 %v10478, 120
      %v10954 = vpop.permute.xlu0 %10953
      %10955 = vrot.lane.b32.xlu0 %v10479, 120
      %v10956 = vpop.permute.xlu0 %10955
      %10957 = vrot.lane.b32.xlu0 %v10480, 120
      %v10958 = vpop.permute.xlu0 %10957
      %10959 = vrot.lane.b32.xlu0 %v10481, 120
      %v10960 = vpop.permute.xlu0 %10959
      %10961 = vrot.lane.b32.xlu0 %v10482, 120
      %v10962 = vpop.permute.xlu0 %10961
      %10963 = vrot.lane.b32.xlu0 %v10483, 120
      %v10964 = vpop.permute.xlu0 %10963
      %10965 = vrot.lane.b32.xlu0 %v10484, 120
      %v10966 = vpop.permute.xlu0 %10965
      %10967 = vrot.lane.b32.xlu0 %v10485, 120
      %v10968 = vpop.permute.xlu0 %10967
      %10969 = vrot.lane.b32.xlu0 %v10486, 120
      %v10970 = vpop.permute.xlu0 %10969
      %10971 = vrot.lane.b32.xlu0 %v10487, 120
      %v10972 = vpop.permute.xlu0 %10971
      %10973 = vrot.lane.b32.xlu0 %v10488, 120
      %v10974 = vpop.permute.xlu0 %10973
      %10975 = vrot.lane.b32.xlu0 %v10489, 120
      %v10976 = vpop.permute.xlu0 %10975
      %10977 = vrot.lane.b32.xlu0 %v10490, 120
      %v10978 = vpop.permute.xlu0 %10977
      %10979 = vrot.lane.b32.xlu0 %v10491, 120
      %v10980 = vpop.permute.xlu0 %10979
      %10981 = vrot.lane.b32.xlu0 %v10492, 120
      %v10982 = vpop.permute.xlu0 %10981
      %10983 = vrot.lane.b32.xlu0 %v10493, 120
      %v10984 = vpop.permute.xlu0 %10983
      %10985 = vrot.lane.b32.xlu0 %v10494, 120
      %v10986 = vpop.permute.xlu0 %10985
      %10987 = vrot.lane.b32.xlu0 %v10495, 120
      %v10988 = vpop.permute.xlu0 %10987
      %10989 = vrot.lane.b32.xlu0 %v10496, 120
      %v10990 = vpop.permute.xlu0 %10989
      %10991 = vrot.lane.b32.xlu0 %v10497, 120
      %v10992 = vpop.permute.xlu0 %10991
      %10993 = vrot.lane.b32.xlu0 %v10498, 120
      %v10994 = vpop.permute.xlu0 %10993
      %10995 = vrot.lane.b32.xlu0 %v10499, 120
      %v10996 = vpop.permute.xlu0 %10995
      %10997 = vrot.lane.b32.xlu0 %v10500, 120
      %v10998 = vpop.permute.xlu0 %10997
      %10999 = vrot.lane.b32.xlu0 %v10501, 120
      %v11000 = vpop.permute.xlu0 %10999
      %11001 = vrot.lane.b32.xlu0 %v10502, 120
      %v11002 = vpop.permute.xlu0 %11001
      %11003 = vrot.lane.b32.xlu0 %v10503, 120
      %v11004 = vpop.permute.xlu0 %11003
      %11005 = vrot.lane.b32.xlu0 %v10504, 120
      %v11006 = vpop.permute.xlu0 %11005
      %11007 = vrot.lane.b32.xlu0 %v10505, 120
      %v11008 = vpop.permute.xlu0 %11007
      %11009 = vrot.lane.b32.xlu0 %v10506, 120
      %v11010 = vpop.permute.xlu0 %11009
      %11011 = vrot.lane.b32.xlu0 %v10507, 120
      %v11012 = vpop.permute.xlu0 %11011
      %11013 = vrot.lane.b32.xlu0 %v10508, 120
      %v11014 = vpop.permute.xlu0 %11013
      %11015 = vrot.lane.b32.xlu0 %v10509, 120
      %v11016 = vpop.permute.xlu0 %11015
      %11017 = vrot.lane.b32.xlu0 %v10510, 120
      %v11018 = vpop.permute.xlu0 %11017
      %11019 = vrot.lane.b32.xlu0 %v10511, 120
      %v11020 = vpop.permute.xlu0 %11019
      %11021 = vrot.lane.b32.xlu0 %v10512, 120
      %v11022 = vpop.permute.xlu0 %11021
      %11023 = vrot.lane.b32.xlu0 %v10513, 120
      %v11024 = vpop.permute.xlu0 %11023
      %11025 = vrot.lane.b32.xlu0 %v10514, 120
      %v11026 = vpop.permute.xlu0 %11025
      %11027 = vrot.lane.b32.xlu0 %v10515, 120
      %v11028 = vpop.permute.xlu0 %11027
      %11029 = vrot.lane.b32.xlu0 %v10516, 120
      %v11030 = vpop.permute.xlu0 %11029
      %11031 = vrot.lane.b32.xlu0 %v10517, 120
      %v11032 = vpop.permute.xlu0 %11031
      %11033 = vrot.lane.b32.xlu0 %v10518, 120
      %v11034 = vpop.permute.xlu0 %11033
      %11035 = vrot.lane.b32.xlu0 %v10519, 120
      %v11036 = vpop.permute.xlu0 %11035
      %11037 = vrot.lane.b32.xlu0 %v10520, 120
      %v11038 = vpop.permute.xlu0 %11037
      %11039 = vrot.lane.b32.xlu0 %v10521, 120
      %v11040 = vpop.permute.xlu0 %11039
      %11041 = vrot.lane.b32.xlu0 %v10522, 120
      %v11042 = vpop.permute.xlu0 %11041
      %11043 = vrot.lane.b32.xlu0 %v10523, 120
      %v11044 = vpop.permute.xlu0 %11043
      %11045 = vrot.lane.b32.xlu0 %v10524, 120
      %v11046 = vpop.permute.xlu0 %11045
      %11047 = vrot.lane.b32.xlu0 %v10525, 120
      %v11048 = vpop.permute.xlu0 %11047
      %11049 = vrot.lane.b32.xlu0 %v10526, 120
      %v11050 = vpop.permute.xlu0 %11049
      %11051 = vrot.lane.b32.xlu0 %v10527, 120
      %v11052 = vpop.permute.xlu0 %11051
      %11053 = vrot.lane.b32.xlu0 %v10528, 120
      %v11054 = vpop.permute.xlu0 %11053
      %11055 = vrot.lane.b32.xlu0 %v10529, 120
      %v11056 = vpop.permute.xlu0 %11055
      %11057 = vrot.lane.b32.xlu0 %v10530, 120
      %v11058 = vpop.permute.xlu0 %11057
      %11059 = vrot.lane.b32.xlu0 %v10531, 120
      %v11060 = vpop.permute.xlu0 %11059
      %11061 = vrot.lane.b32.xlu0 %v10532, 120
      %v11062 = vpop.permute.xlu0 %11061
      %11063 = vrot.lane.b32.xlu0 %v10533, 120
      %v11064 = vpop.permute.xlu0 %11063
      %11065 = vrot.lane.b32.xlu0 %v10534, 120
      %v11066 = vpop.permute.xlu0 %11065
      %v11067 = vsel %vm5824, %v10948, %v10950
      %v11068 = vsel %vm5824, %v10952, %v10954
      %v11069 = vsel %vm5824, %v10956, %v10958
      %v11070 = vsel %vm5824, %v10960, %v10962
      %v11071 = vsel %vm5824, %v10964, %v10966
      %v11072 = vsel %vm5824, %v10968, %v10970
      %v11073 = vsel %vm5824, %v10972, %v10974
      %v11074 = vsel %vm5824, %v10976, %v10978
      %v11075 = vsel %vm5824, %v10980, %v10982
      %v11076 = vsel %vm5824, %v10984, %v10986
      %v11077 = vsel %vm5824, %v10988, %v10990
      %v11078 = vsel %vm5824, %v10992, %v10994
      %v11079 = vsel %vm5824, %v10996, %v10998
      %v11080 = vsel %vm5824, %v11000, %v11002
      %v11081 = vsel %vm5824, %v11004, %v11006
      %v11082 = vsel %vm5824, %v11008, %v11010
      %v11083 = vsel %vm5824, %v11012, %v11014
      %v11084 = vsel %vm5824, %v11016, %v11018
      %v11085 = vsel %vm5824, %v11020, %v11022
      %v11086 = vsel %vm5824, %v11024, %v11026
      %v11087 = vsel %vm5824, %v11028, %v11030
      %v11088 = vsel %vm5824, %v11032, %v11034
      %v11089 = vsel %vm5824, %v11036, %v11038
      %v11090 = vsel %vm5824, %v11040, %v11042
      %v11091 = vsel %vm5824, %v11044, %v11046
      %v11092 = vsel %vm5824, %v11048, %v11050
      %v11093 = vsel %vm5824, %v11052, %v11054
      %v11094 = vsel %vm5824, %v11056, %v11058
      %v11095 = vsel %vm5824, %v11060, %v11062
      %v11096 = vsel %vm5824, %v11064, %v11066
      %v11128 = vsel %vm5839, %v10950, 0
      %v11131 = vsel %vm5839, %v10954, 0
      %v11134 = vsel %vm5839, %v10958, 0
      %v11137 = vsel %vm5839, %v10962, 0
      %v11140 = vsel %vm5839, %v10966, 0
      %v11143 = vsel %vm5839, %v10970, 0
      %v11146 = vsel %vm5839, %v10974, 0
      %v11149 = vsel %vm5839, %v10978, 0
      %v11152 = vsel %vm5839, %v10982, 0
      %v11155 = vsel %vm5839, %v10986, 0
      %v11158 = vsel %vm5839, %v10990, 0
      %v11161 = vsel %vm5839, %v10994, 0
      %v11164 = vsel %vm5839, %v10998, 0
      %v11167 = vsel %vm5839, %v11002, 0
      %v11170 = vsel %vm5839, %v11006, 0
      %v11173 = vsel %vm5839, %v11010, 0
      %v11176 = vsel %vm5839, %v11014, 0
      %v11179 = vsel %vm5839, %v11018, 0
      %v11182 = vsel %vm5839, %v11022, 0
      %v11185 = vsel %vm5839, %v11026, 0
      %v11188 = vsel %vm5839, %v11030, 0
      %v11191 = vsel %vm5839, %v11034, 0
      %v11194 = vsel %vm5839, %v11038, 0
      %v11197 = vsel %vm5839, %v11042, 0
      %v11200 = vsel %vm5839, %v11046, 0
      %v11203 = vsel %vm5839, %v11050, 0
      %v11206 = vsel %vm5839, %v11054, 0
      %v11209 = vsel %vm5839, %v11058, 0
      %v11212 = vsel %vm5839, %v11062, 0
      %v11215 = vsel %vm5839, %v11066, 0
      %v11217 = vlaneseq
      %v11218 = vshrl.u32 %v11217, 7
      %v11219 = vsub.s32 3, %v11218
      %v11220 = vrot.slane %v9979, %v11219
      %v11221 = vlaneseq
      %v11222 = vshrl.u32 %v11221, 7
      %v11223 = vsub.s32 3, %v11222
      %v11224 = vrot.slane %v9980, %v11223
      %vm11225 = vcmp.eq.s32.totalorder %v11220, 1
      %vm11226 = vcmp.eq.s32.totalorder %v11224, 1
      %vm11227 = vmpackc.low %vm11226, %vm11225
      %v11228 = vsel %vm11227, 65537, 0
      %v11229 = vlaneseq
      %v11230 = vshrl.u32 %v11229, 7
      %v11231 = vsub.s32 0, %v11230
      %v11232 = vrot.slane %v11228, %v11231
      %v11233 = vlaneseq
      %v11234 = vshrl.u32 %v11233, 7
      %v11235 = vsub.s32 4, %v11234
      %v11236 = vrot.slane %v11228, %v11235
      %vm11237 = vcmp.ne.s16.totalorder %v11232, 0
      %vm11238 = vcmp.ne.s16.totalorder %v11236, 0
      %v11239 = vsel %vm11237, %v11067, 4286644096
      %v11240 = vsel %vm11238, %v11128, 4286644096
      %v11241 = vsel %vm11237, %v11068, 4286644096
      %v11242 = vsel %vm11238, %v11131, 4286644096
      %v11243 = vsel %vm11237, %v11069, 4286644096
      %v11244 = vsel %vm11238, %v11134, 4286644096
      %v11245 = vsel %vm11237, %v11070, 4286644096
      %v11246 = vsel %vm11238, %v11137, 4286644096
      %v11247 = vsel %vm11237, %v11071, 4286644096
      %v11248 = vsel %vm11238, %v11140, 4286644096
      %v11249 = vsel %vm11237, %v11072, 4286644096
      %v11250 = vsel %vm11238, %v11143, 4286644096
      %v11251 = vsel %vm11237, %v11073, 4286644096
      %v11252 = vsel %vm11238, %v11146, 4286644096
      %v11253 = vsel %vm11237, %v11074, 4286644096
      %v11254 = vsel %vm11238, %v11149, 4286644096
      %v11255 = vsel %vm11237, %v11075, 4286644096
      %v11256 = vsel %vm11238, %v11152, 4286644096
      %v11257 = vsel %vm11237, %v11076, 4286644096
      %v11258 = vsel %vm11238, %v11155, 4286644096
      %v11259 = vsel %vm11237, %v11077, 4286644096
      %v11260 = vsel %vm11238, %v11158, 4286644096
      %v11261 = vsel %vm11237, %v11078, 4286644096
      %v11262 = vsel %vm11238, %v11161, 4286644096
      %v11263 = vsel %vm11237, %v11079, 4286644096
      %v11264 = vsel %vm11238, %v11164, 4286644096
      %v11265 = vsel %vm11237, %v11080, 4286644096
      %v11266 = vsel %vm11238, %v11167, 4286644096
      %v11267 = vsel %vm11237, %v11081, 4286644096
      %v11268 = vsel %vm11238, %v11170, 4286644096
      %v11269 = vsel %vm11237, %v11082, 4286644096
      %v11270 = vsel %vm11238, %v11173, 4286644096
      %v11271 = vsel %vm11237, %v11083, 4286644096
      %v11272 = vsel %vm11238, %v11176, 4286644096
      %v11273 = vsel %vm11237, %v11084, 4286644096
      %v11274 = vsel %vm11238, %v11179, 4286644096
      %v11275 = vsel %vm11237, %v11085, 4286644096
      %v11276 = vsel %vm11238, %v11182, 4286644096
      %v11277 = vsel %vm11237, %v11086, 4286644096
      %v11278 = vsel %vm11238, %v11185, 4286644096
      %v11279 = vsel %vm11237, %v11087, 4286644096
      %v11280 = vsel %vm11238, %v11188, 4286644096
      %v11281 = vsel %vm11237, %v11088, 4286644096
      %v11282 = vsel %vm11238, %v11191, 4286644096
      %v11283 = vsel %vm11237, %v11089, 4286644096
      %v11284 = vsel %vm11238, %v11194, 4286644096
      %v11285 = vsel %vm11237, %v11090, 4286644096
      %v11286 = vsel %vm11238, %v11197, 4286644096
      %v11287 = vsel %vm11237, %v11091, 4286644096
      %v11288 = vsel %vm11238, %v11200, 4286644096
      %v11289 = vsel %vm11237, %v11092, 4286644096
      %v11290 = vsel %vm11238, %v11203, 4286644096
      %v11291 = vsel %vm11237, %v11093, 4286644096
      %v11292 = vsel %vm11238, %v11206, 4286644096
      %v11293 = vsel %vm11237, %v11094, 4286644096
      %v11294 = vsel %vm11238, %v11209, 4286644096
      %v11295 = vsel %vm11237, %v11095, 4286644096
      %v11296 = vsel %vm11238, %v11212, 4286644096
      %v11297 = vsel %vm11237, %v11096, 4286644096
      %v11298 = vsel %vm11238, %v11215, 4286644096
      %v11299 = vmax.bf16 %v10887, %v11239
      %v11300 = vmax.bf16 %v10888, %v11240
      %v11301 = vmax.bf16 %v10889, %v11241
      %v11302 = vmax.bf16 %v10890, %v11242
      %v11303 = vmax.bf16 %v10891, %v11243
      %v11304 = vmax.bf16 %v10892, %v11244
      %v11305 = vmax.bf16 %v10893, %v11245
      %v11306 = vmax.bf16 %v10894, %v11246
      %v11307 = vmax.bf16 %v10895, %v11247
      %v11308 = vmax.bf16 %v10896, %v11248
      %v11309 = vmax.bf16 %v10897, %v11249
      %v11310 = vmax.bf16 %v10898, %v11250
      %v11311 = vmax.bf16 %v10899, %v11251
      %v11312 = vmax.bf16 %v10900, %v11252
      %v11313 = vmax.bf16 %v10901, %v11253
      %v11314 = vmax.bf16 %v10902, %v11254
      %v11315 = vmax.bf16 %v10903, %v11255
      %v11316 = vmax.bf16 %v10904, %v11256
      %v11317 = vmax.bf16 %v10905, %v11257
      %v11318 = vmax.bf16 %v10906, %v11258
      %v11319 = vmax.bf16 %v10907, %v11259
      %v11320 = vmax.bf16 %v10908, %v11260
      %v11321 = vmax.bf16 %v10909, %v11261
      %v11322 = vmax.bf16 %v10910, %v11262
      %v11323 = vmax.bf16 %v10911, %v11263
      %v11324 = vmax.bf16 %v10912, %v11264
      %v11325 = vmax.bf16 %v10913, %v11265
      %v11326 = vmax.bf16 %v10914, %v11266
      %v11327 = vmax.bf16 %v10915, %v11267
      %v11328 = vmax.bf16 %v10916, %v11268
      %v11329 = vmax.bf16 %v10917, %v11269
      %v11330 = vmax.bf16 %v10918, %v11270
      %v11331 = vmax.bf16 %v10919, %v11271
      %v11332 = vmax.bf16 %v10920, %v11272
      %v11333 = vmax.bf16 %v10921, %v11273
      %v11334 = vmax.bf16 %v10922, %v11274
      %v11335 = vmax.bf16 %v10923, %v11275
      %v11336 = vmax.bf16 %v10924, %v11276
      %v11337 = vmax.bf16 %v10925, %v11277
      %v11338 = vmax.bf16 %v10926, %v11278
      %v11339 = vmax.bf16 %v10927, %v11279
      %v11340 = vmax.bf16 %v10928, %v11280
      %v11341 = vmax.bf16 %v10929, %v11281
      %v11342 = vmax.bf16 %v10930, %v11282
      %v11343 = vmax.bf16 %v10931, %v11283
      %v11344 = vmax.bf16 %v10932, %v11284
      %v11345 = vmax.bf16 %v10933, %v11285
      %v11346 = vmax.bf16 %v10934, %v11286
      %v11347 = vmax.bf16 %v10935, %v11287
      %v11348 = vmax.bf16 %v10936, %v11288
      %v11349 = vmax.bf16 %v10937, %v11289
      %v11350 = vmax.bf16 %v10938, %v11290
      %v11351 = vmax.bf16 %v10939, %v11291
      %v11352 = vmax.bf16 %v10940, %v11292
      %v11353 = vmax.bf16 %v10941, %v11293
      %v11354 = vmax.bf16 %v10942, %v11294
      %v11355 = vmax.bf16 %v10943, %v11295
      %v11356 = vmax.bf16 %v10944, %v11296
      %v11357 = vmax.bf16 %v10945, %v11297
      %v11358 = vmax.bf16 %v10946, %v11298
      %v11359 = vmax.bf16 %v10475, %v11299
      %v11360 = vmax.bf16 %v10476, %v11300
      %v11361 = vmax.bf16 %v10477, %v11301
      %v11362 = vmax.bf16 %v10478, %v11302
      %v11363 = vmax.bf16 %v10479, %v11303
      %v11364 = vmax.bf16 %v10480, %v11304
      %v11365 = vmax.bf16 %v10481, %v11305
      %v11366 = vmax.bf16 %v10482, %v11306
      %v11367 = vmax.bf16 %v10483, %v11307
      %v11368 = vmax.bf16 %v10484, %v11308
      %v11369 = vmax.bf16 %v10485, %v11309
      %v11370 = vmax.bf16 %v10486, %v11310
      %v11371 = vmax.bf16 %v10487, %v11311
      %v11372 = vmax.bf16 %v10488, %v11312
      %v11373 = vmax.bf16 %v10489, %v11313
      %v11374 = vmax.bf16 %v10490, %v11314
      %v11375 = vmax.bf16 %v10491, %v11315
      %v11376 = vmax.bf16 %v10492, %v11316
      %v11377 = vmax.bf16 %v10493, %v11317
      %v11378 = vmax.bf16 %v10494, %v11318
      %v11379 = vmax.bf16 %v10495, %v11319
      %v11380 = vmax.bf16 %v10496, %v11320
      %v11381 = vmax.bf16 %v10497, %v11321
      %v11382 = vmax.bf16 %v10498, %v11322
      %v11383 = vmax.bf16 %v10499, %v11323
      %v11384 = vmax.bf16 %v10500, %v11324
      %v11385 = vmax.bf16 %v10501, %v11325
      %v11386 = vmax.bf16 %v10502, %v11326
      %v11387 = vmax.bf16 %v10503, %v11327
      %v11388 = vmax.bf16 %v10504, %v11328
      %v11389 = vmax.bf16 %v10505, %v11329
      %v11390 = vmax.bf16 %v10506, %v11330
      %v11391 = vmax.bf16 %v10507, %v11331
      %v11392 = vmax.bf16 %v10508, %v11332
      %v11393 = vmax.bf16 %v10509, %v11333
      %v11394 = vmax.bf16 %v10510, %v11334
      %v11395 = vmax.bf16 %v10511, %v11335
      %v11396 = vmax.bf16 %v10512, %v11336
      %v11397 = vmax.bf16 %v10513, %v11337
      %v11398 = vmax.bf16 %v10514, %v11338
      %v11399 = vmax.bf16 %v10515, %v11339
      %v11400 = vmax.bf16 %v10516, %v11340
      %v11401 = vmax.bf16 %v10517, %v11341
      %v11402 = vmax.bf16 %v10518, %v11342
      %v11403 = vmax.bf16 %v10519, %v11343
      %v11404 = vmax.bf16 %v10520, %v11344
      %v11405 = vmax.bf16 %v10521, %v11345
      %v11406 = vmax.bf16 %v10522, %v11346
      %v11407 = vmax.bf16 %v10523, %v11347
      %v11408 = vmax.bf16 %v10524, %v11348
      %v11409 = vmax.bf16 %v10525, %v11349
      %v11410 = vmax.bf16 %v10526, %v11350
      %v11411 = vmax.bf16 %v10527, %v11351
      %v11412 = vmax.bf16 %v10528, %v11352
      %v11413 = vmax.bf16 %v10529, %v11353
      %v11414 = vmax.bf16 %v10530, %v11354
      %v11415 = vmax.bf16 %v10531, %v11355
      %v11416 = vmax.bf16 %v10532, %v11356
      %v11417 = vmax.bf16 %v10533, %v11357
      %v11418 = vmax.bf16 %v10534, %v11358
      %11479 = vrot.lane.b32.xlu0 %v11359, 64
      %v11480 = vpop.permute.xlu0 %11479
      %11481 = vrot.lane.b32.xlu0 %v11360, 64
      %v11482 = vpop.permute.xlu0 %11481
      %11483 = vrot.lane.b32.xlu0 %v11361, 64
      %v11484 = vpop.permute.xlu0 %11483
      %11485 = vrot.lane.b32.xlu0 %v11362, 64
      %v11486 = vpop.permute.xlu0 %11485
      %11487 = vrot.lane.b32.xlu0 %v11363, 64
      %v11488 = vpop.permute.xlu0 %11487
      %11489 = vrot.lane.b32.xlu0 %v11364, 64
      %v11490 = vpop.permute.xlu0 %11489
      %11491 = vrot.lane.b32.xlu0 %v11365, 64
      %v11492 = vpop.permute.xlu0 %11491
      %11493 = vrot.lane.b32.xlu0 %v11366, 64
      %v11494 = vpop.permute.xlu0 %11493
      %11495 = vrot.lane.b32.xlu0 %v11367, 64
      %v11496 = vpop.permute.xlu0 %11495
      %11497 = vrot.lane.b32.xlu0 %v11368, 64
      %v11498 = vpop.permute.xlu0 %11497
      %11499 = vrot.lane.b32.xlu0 %v11369, 64
      %v11500 = vpop.permute.xlu0 %11499
      %11501 = vrot.lane.b32.xlu0 %v11370, 64
      %v11502 = vpop.permute.xlu0 %11501
      %11503 = vrot.lane.b32.xlu0 %v11371, 64
      %v11504 = vpop.permute.xlu0 %11503
      %11505 = vrot.lane.b32.xlu0 %v11372, 64
      %v11506 = vpop.permute.xlu0 %11505
      %11507 = vrot.lane.b32.xlu0 %v11373, 64
      %v11508 = vpop.permute.xlu0 %11507
      %11509 = vrot.lane.b32.xlu0 %v11374, 64
      %v11510 = vpop.permute.xlu0 %11509
      %11511 = vrot.lane.b32.xlu0 %v11375, 64
      %v11512 = vpop.permute.xlu0 %11511
      %11513 = vrot.lane.b32.xlu0 %v11376, 64
      %v11514 = vpop.permute.xlu0 %11513
      %11515 = vrot.lane.b32.xlu0 %v11377, 64
      %v11516 = vpop.permute.xlu0 %11515
      %11517 = vrot.lane.b32.xlu0 %v11378, 64
      %v11518 = vpop.permute.xlu0 %11517
      %11519 = vrot.lane.b32.xlu0 %v11379, 64
      %v11520 = vpop.permute.xlu0 %11519
      %11521 = vrot.lane.b32.xlu0 %v11380, 64
      %v11522 = vpop.permute.xlu0 %11521
      %11523 = vrot.lane.b32.xlu0 %v11381, 64
      %v11524 = vpop.permute.xlu0 %11523
      %11525 = vrot.lane.b32.xlu0 %v11382, 64
      %v11526 = vpop.permute.xlu0 %11525
      %11527 = vrot.lane.b32.xlu0 %v11383, 64
      %v11528 = vpop.permute.xlu0 %11527
      %11529 = vrot.lane.b32.xlu0 %v11384, 64
      %v11530 = vpop.permute.xlu0 %11529
      %11531 = vrot.lane.b32.xlu0 %v11385, 64
      %v11532 = vpop.permute.xlu0 %11531
      %11533 = vrot.lane.b32.xlu0 %v11386, 64
      %v11534 = vpop.permute.xlu0 %11533
      %11535 = vrot.lane.b32.xlu0 %v11387, 64
      %v11536 = vpop.permute.xlu0 %11535
      %11537 = vrot.lane.b32.xlu0 %v11388, 64
      %v11538 = vpop.permute.xlu0 %11537
      %11539 = vrot.lane.b32.xlu0 %v11389, 64
      %v11540 = vpop.permute.xlu0 %11539
      %11541 = vrot.lane.b32.xlu0 %v11390, 64
      %v11542 = vpop.permute.xlu0 %11541
      %11543 = vrot.lane.b32.xlu0 %v11391, 64
      %v11544 = vpop.permute.xlu0 %11543
      %11545 = vrot.lane.b32.xlu0 %v11392, 64
      %v11546 = vpop.permute.xlu0 %11545
      %11547 = vrot.lane.b32.xlu0 %v11393, 64
      %v11548 = vpop.permute.xlu0 %11547
      %11549 = vrot.lane.b32.xlu0 %v11394, 64
      %v11550 = vpop.permute.xlu0 %11549
      %11551 = vrot.lane.b32.xlu0 %v11395, 64
      %v11552 = vpop.permute.xlu0 %11551
      %11553 = vrot.lane.b32.xlu0 %v11396, 64
      %v11554 = vpop.permute.xlu0 %11553
      %11555 = vrot.lane.b32.xlu0 %v11397, 64
      %v11556 = vpop.permute.xlu0 %11555
      %11557 = vrot.lane.b32.xlu0 %v11398, 64
      %v11558 = vpop.permute.xlu0 %11557
      %11559 = vrot.lane.b32.xlu0 %v11399, 64
      %v11560 = vpop.permute.xlu0 %11559
      %11561 = vrot.lane.b32.xlu0 %v11400, 64
      %v11562 = vpop.permute.xlu0 %11561
      %11563 = vrot.lane.b32.xlu0 %v11401, 64
      %v11564 = vpop.permute.xlu0 %11563
      %11565 = vrot.lane.b32.xlu0 %v11402, 64
      %v11566 = vpop.permute.xlu0 %11565
      %11567 = vrot.lane.b32.xlu0 %v11403, 64
      %v11568 = vpop.permute.xlu0 %11567
      %11569 = vrot.lane.b32.xlu0 %v11404, 64
      %v11570 = vpop.permute.xlu0 %11569
      %11571 = vrot.lane.b32.xlu0 %v11405, 64
      %v11572 = vpop.permute.xlu0 %11571
      %11573 = vrot.lane.b32.xlu0 %v11406, 64
      %v11574 = vpop.permute.xlu0 %11573
      %11575 = vrot.lane.b32.xlu0 %v11407, 64
      %v11576 = vpop.permute.xlu0 %11575
      %11577 = vrot.lane.b32.xlu0 %v11408, 64
      %v11578 = vpop.permute.xlu0 %11577
      %11579 = vrot.lane.b32.xlu0 %v11409, 64
      %v11580 = vpop.permute.xlu0 %11579
      %11581 = vrot.lane.b32.xlu0 %v11410, 64
      %v11582 = vpop.permute.xlu0 %11581
      %11583 = vrot.lane.b32.xlu0 %v11411, 64
      %v11584 = vpop.permute.xlu0 %11583
      %11585 = vrot.lane.b32.xlu0 %v11412, 64
      %v11586 = vpop.permute.xlu0 %11585
      %11587 = vrot.lane.b32.xlu0 %v11413, 64
      %v11588 = vpop.permute.xlu0 %11587
      %11589 = vrot.lane.b32.xlu0 %v11414, 64
      %v11590 = vpop.permute.xlu0 %11589
      %11591 = vrot.lane.b32.xlu0 %v11415, 64
      %v11592 = vpop.permute.xlu0 %11591
      %11593 = vrot.lane.b32.xlu0 %v11416, 64
      %v11594 = vpop.permute.xlu0 %11593
      %11595 = vrot.lane.b32.xlu0 %v11417, 64
      %v11596 = vpop.permute.xlu0 %11595
      %11597 = vrot.lane.b32.xlu0 %v11418, 64
      %v11598 = vpop.permute.xlu0 %11597
      %v11599 = vsel %vm7524, %v11480, %v11482
      %v11600 = vsel %vm7524, %v11484, %v11486
      %v11601 = vsel %vm7524, %v11488, %v11490
      %v11602 = vsel %vm7524, %v11492, %v11494
      %v11603 = vsel %vm7524, %v11496, %v11498
      %v11604 = vsel %vm7524, %v11500, %v11502
      %v11605 = vsel %vm7524, %v11504, %v11506
      %v11606 = vsel %vm7524, %v11508, %v11510
      %v11607 = vsel %vm7524, %v11512, %v11514
      %v11608 = vsel %vm7524, %v11516, %v11518
      %v11609 = vsel %vm7524, %v11520, %v11522
      %v11610 = vsel %vm7524, %v11524, %v11526
      %v11611 = vsel %vm7524, %v11528, %v11530
      %v11612 = vsel %vm7524, %v11532, %v11534
      %v11613 = vsel %vm7524, %v11536, %v11538
      %v11614 = vsel %vm7524, %v11540, %v11542
      %v11615 = vsel %vm7524, %v11544, %v11546
      %v11616 = vsel %vm7524, %v11548, %v11550
      %v11617 = vsel %vm7524, %v11552, %v11554
      %v11618 = vsel %vm7524, %v11556, %v11558
      %v11619 = vsel %vm7524, %v11560, %v11562
      %v11620 = vsel %vm7524, %v11564, %v11566
      %v11621 = vsel %vm7524, %v11568, %v11570
      %v11622 = vsel %vm7524, %v11572, %v11574
      %v11623 = vsel %vm7524, %v11576, %v11578
      %v11624 = vsel %vm7524, %v11580, %v11582
      %v11625 = vsel %vm7524, %v11584, %v11586
      %v11626 = vsel %vm7524, %v11588, %v11590
      %v11627 = vsel %vm7524, %v11592, %v11594
      %v11628 = vsel %vm7524, %v11596, %v11598
      %v11660 = vsel %vm7557, 0, %v11480
      %v11663 = vsel %vm7557, 0, %v11484
      %v11666 = vsel %vm7557, 0, %v11488
      %v11669 = vsel %vm7557, 0, %v11492
      %v11672 = vsel %vm7557, 0, %v11496
      %v11675 = vsel %vm7557, 0, %v11500
      %v11678 = vsel %vm7557, 0, %v11504
      %v11681 = vsel %vm7557, 0, %v11508
      %v11684 = vsel %vm7557, 0, %v11512
      %v11687 = vsel %vm7557, 0, %v11516
      %v11690 = vsel %vm7557, 0, %v11520
      %v11693 = vsel %vm7557, 0, %v11524
      %v11696 = vsel %vm7557, 0, %v11528
      %v11699 = vsel %vm7557, 0, %v11532
      %v11702 = vsel %vm7557, 0, %v11536
      %v11705 = vsel %vm7557, 0, %v11540
      %v11708 = vsel %vm7557, 0, %v11544
      %v11711 = vsel %vm7557, 0, %v11548
      %v11714 = vsel %vm7557, 0, %v11552
      %v11717 = vsel %vm7557, 0, %v11556
      %v11720 = vsel %vm7557, 0, %v11560
      %v11723 = vsel %vm7557, 0, %v11564
      %v11726 = vsel %vm7557, 0, %v11568
      %v11729 = vsel %vm7557, 0, %v11572
      %v11732 = vsel %vm7557, 0, %v11576
      %v11735 = vsel %vm7557, 0, %v11580
      %v11738 = vsel %vm7557, 0, %v11584
      %v11741 = vsel %vm7557, 0, %v11588
      %v11744 = vsel %vm7557, 0, %v11592
      %v11747 = vsel %vm7557, 0, %v11596
      %v11749 = vlaneseq
      %v11750 = vshrl.u32 %v11749, 7
      %v11751 = vsub.s32 4, %v11750
      %v11752 = vrot.slane %v9979, %v11751
      %v11753 = vlaneseq
      %v11754 = vshrl.u32 %v11753, 7
      %v11755 = vsub.s32 4, %v11754
      %v11756 = vrot.slane %v9980, %v11755
      %vm11757 = vcmp.eq.s32.totalorder %v11752, 1
      %vm11758 = vcmp.eq.s32.totalorder %v11756, 1
      %vm11759 = vmpackc.low %vm11758, %vm11757
      %v11760 = vsel %vm11759, 65537, 0
      %v11761 = vlaneseq
      %v11762 = vshrl.u32 %v11761, 7
      %v11763 = vsub.s32 0, %v11762
      %v11764 = vrot.slane %v11760, %v11763
      %v11765 = vlaneseq
      %v11766 = vshrl.u32 %v11765, 7
      %v11767 = vsub.s32 4, %v11766
      %v11768 = vrot.slane %v11760, %v11767
      %vm11769 = vcmp.ne.s16.totalorder %v11764, 0
      %vm11770 = vcmp.ne.s16.totalorder %v11768, 0
      %v11771 = vsel %vm11769, %v11660, 4286644096
      %v11772 = vsel %vm11770, %v11599, 4286644096
      %v11773 = vsel %vm11769, %v11663, 4286644096
      %v11774 = vsel %vm11770, %v11600, 4286644096
      %v11775 = vsel %vm11769, %v11666, 4286644096
      %v11776 = vsel %vm11770, %v11601, 4286644096
      %v11777 = vsel %vm11769, %v11669, 4286644096
      %v11778 = vsel %vm11770, %v11602, 4286644096
      %v11779 = vsel %vm11769, %v11672, 4286644096
      %v11780 = vsel %vm11770, %v11603, 4286644096
      %v11781 = vsel %vm11769, %v11675, 4286644096
      %v11782 = vsel %vm11770, %v11604, 4286644096
      %v11783 = vsel %vm11769, %v11678, 4286644096
      %v11784 = vsel %vm11770, %v11605, 4286644096
      %v11785 = vsel %vm11769, %v11681, 4286644096
      %v11786 = vsel %vm11770, %v11606, 4286644096
      %v11787 = vsel %vm11769, %v11684, 4286644096
      %v11788 = vsel %vm11770, %v11607, 4286644096
      %v11789 = vsel %vm11769, %v11687, 4286644096
      %v11790 = vsel %vm11770, %v11608, 4286644096
      %v11791 = vsel %vm11769, %v11690, 4286644096
      %v11792 = vsel %vm11770, %v11609, 4286644096
      %v11793 = vsel %vm11769, %v11693, 4286644096
      %v11794 = vsel %vm11770, %v11610, 4286644096
      %v11795 = vsel %vm11769, %v11696, 4286644096
      %v11796 = vsel %vm11770, %v11611, 4286644096
      %v11797 = vsel %vm11769, %v11699, 4286644096
      %v11798 = vsel %vm11770, %v11612, 4286644096
      %v11799 = vsel %vm11769, %v11702, 4286644096
      %v11800 = vsel %vm11770, %v11613, 4286644096
      %v11801 = vsel %vm11769, %v11705, 4286644096
      %v11802 = vsel %vm11770, %v11614, 4286644096
      %v11803 = vsel %vm11769, %v11708, 4286644096
      %v11804 = vsel %vm11770, %v11615, 4286644096
      %v11805 = vsel %vm11769, %v11711, 4286644096
      %v11806 = vsel %vm11770, %v11616, 4286644096
      %v11807 = vsel %vm11769, %v11714, 4286644096
      %v11808 = vsel %vm11770, %v11617, 4286644096
      %v11809 = vsel %vm11769, %v11717, 4286644096
      %v11810 = vsel %vm11770, %v11618, 4286644096
      %v11811 = vsel %vm11769, %v11720, 4286644096
      %v11812 = vsel %vm11770, %v11619, 4286644096
      %v11813 = vsel %vm11769, %v11723, 4286644096
      %v11814 = vsel %vm11770, %v11620, 4286644096
      %v11815 = vsel %vm11769, %v11726, 4286644096
      %v11816 = vsel %vm11770, %v11621, 4286644096
      %v11817 = vsel %vm11769, %v11729, 4286644096
      %v11818 = vsel %vm11770, %v11622, 4286644096
      %v11819 = vsel %vm11769, %v11732, 4286644096
      %v11820 = vsel %vm11770, %v11623, 4286644096
      %v11821 = vsel %vm11769, %v11735, 4286644096
      %v11822 = vsel %vm11770, %v11624, 4286644096
      %v11823 = vsel %vm11769, %v11738, 4286644096
      %v11824 = vsel %vm11770, %v11625, 4286644096
      %v11825 = vsel %vm11769, %v11741, 4286644096
      %v11826 = vsel %vm11770, %v11626, 4286644096
      %v11827 = vsel %vm11769, %v11744, 4286644096
      %v11828 = vsel %vm11770, %v11627, 4286644096
      %v11829 = vsel %vm11769, %v11747, 4286644096
      %v11830 = vsel %vm11770, %v11628, 4286644096
      %v11832 = vsel %vm7557, %v11482, 0
      %v11835 = vsel %vm7557, %v11486, 0
      %v11838 = vsel %vm7557, %v11490, 0
      %v11841 = vsel %vm7557, %v11494, 0
      %v11844 = vsel %vm7557, %v11498, 0
      %v11847 = vsel %vm7557, %v11502, 0
      %v11850 = vsel %vm7557, %v11506, 0
      %v11853 = vsel %vm7557, %v11510, 0
      %v11856 = vsel %vm7557, %v11514, 0
      %v11859 = vsel %vm7557, %v11518, 0
      %v11862 = vsel %vm7557, %v11522, 0
      %v11865 = vsel %vm7557, %v11526, 0
      %v11868 = vsel %vm7557, %v11530, 0
      %v11871 = vsel %vm7557, %v11534, 0
      %v11874 = vsel %vm7557, %v11538, 0
      %v11877 = vsel %vm7557, %v11542, 0
      %v11880 = vsel %vm7557, %v11546, 0
      %v11883 = vsel %vm7557, %v11550, 0
      %v11886 = vsel %vm7557, %v11554, 0
      %v11889 = vsel %vm7557, %v11558, 0
      %v11892 = vsel %vm7557, %v11562, 0
      %v11895 = vsel %vm7557, %v11566, 0
      %v11898 = vsel %vm7557, %v11570, 0
      %v11901 = vsel %vm7557, %v11574, 0
      %v11904 = vsel %vm7557, %v11578, 0
      %v11907 = vsel %vm7557, %v11582, 0
      %v11910 = vsel %vm7557, %v11586, 0
      %v11913 = vsel %vm7557, %v11590, 0
      %v11916 = vsel %vm7557, %v11594, 0
      %v11919 = vsel %vm7557, %v11598, 0
      %v11921 = vlaneseq
      %v11922 = vshrl.u32 %v11921, 7
      %v11923 = vsub.s32 5, %v11922
      %v11924 = vrot.slane %v9979, %v11923
      %v11925 = vlaneseq
      %v11926 = vshrl.u32 %v11925, 7
      %v11927 = vsub.s32 5, %v11926
      %v11928 = vrot.slane %v9980, %v11927
      %vm11929 = vcmp.eq.s32.totalorder %v11924, 1
      %vm11930 = vcmp.eq.s32.totalorder %v11928, 1
      %vm11931 = vmpackc.low %vm11930, %vm11929
      %v11932 = vsel %vm11931, 65537, 0
      %v11933 = vlaneseq
      %v11934 = vshrl.u32 %v11933, 7
      %v11935 = vsub.s32 0, %v11934
      %v11936 = vrot.slane %v11932, %v11935
      %v11937 = vlaneseq
      %v11938 = vshrl.u32 %v11937, 7
      %v11939 = vsub.s32 4, %v11938
      %v11940 = vrot.slane %v11932, %v11939
      %vm11941 = vcmp.ne.s16.totalorder %v11936, 0
      %vm11942 = vcmp.ne.s16.totalorder %v11940, 0
      %v11943 = vsel %vm11941, %v11599, 4286644096
      %v11944 = vsel %vm11942, %v11832, 4286644096
      %v11945 = vsel %vm11941, %v11600, 4286644096
      %v11946 = vsel %vm11942, %v11835, 4286644096
      %v11947 = vsel %vm11941, %v11601, 4286644096
      %v11948 = vsel %vm11942, %v11838, 4286644096
      %v11949 = vsel %vm11941, %v11602, 4286644096
      %v11950 = vsel %vm11942, %v11841, 4286644096
      %v11951 = vsel %vm11941, %v11603, 4286644096
      %v11952 = vsel %vm11942, %v11844, 4286644096
      %v11953 = vsel %vm11941, %v11604, 4286644096
      %v11954 = vsel %vm11942, %v11847, 4286644096
      %v11955 = vsel %vm11941, %v11605, 4286644096
      %v11956 = vsel %vm11942, %v11850, 4286644096
      %v11957 = vsel %vm11941, %v11606, 4286644096
      %v11958 = vsel %vm11942, %v11853, 4286644096
      %v11959 = vsel %vm11941, %v11607, 4286644096
      %v11960 = vsel %vm11942, %v11856, 4286644096
      %v11961 = vsel %vm11941, %v11608, 4286644096
      %v11962 = vsel %vm11942, %v11859, 4286644096
      %v11963 = vsel %vm11941, %v11609, 4286644096
      %v11964 = vsel %vm11942, %v11862, 4286644096
      %v11965 = vsel %vm11941, %v11610, 4286644096
      %v11966 = vsel %vm11942, %v11865, 4286644096
      %v11967 = vsel %vm11941, %v11611, 4286644096
      %v11968 = vsel %vm11942, %v11868, 4286644096
      %v11969 = vsel %vm11941, %v11612, 4286644096
      %v11970 = vsel %vm11942, %v11871, 4286644096
      %v11971 = vsel %vm11941, %v11613, 4286644096
      %v11972 = vsel %vm11942, %v11874, 4286644096
      %v11973 = vsel %vm11941, %v11614, 4286644096
      %v11974 = vsel %vm11942, %v11877, 4286644096
      %v11975 = vsel %vm11941, %v11615, 4286644096
      %v11976 = vsel %vm11942, %v11880, 4286644096
      %v11977 = vsel %vm11941, %v11616, 4286644096
      %v11978 = vsel %vm11942, %v11883, 4286644096
      %v11979 = vsel %vm11941, %v11617, 4286644096
      %v11980 = vsel %vm11942, %v11886, 4286644096
      %v11981 = vsel %vm11941, %v11618, 4286644096
      %v11982 = vsel %vm11942, %v11889, 4286644096
      %v11983 = vsel %vm11941, %v11619, 4286644096
      %v11984 = vsel %vm11942, %v11892, 4286644096
      %v11985 = vsel %vm11941, %v11620, 4286644096
      %v11986 = vsel %vm11942, %v11895, 4286644096
      %v11987 = vsel %vm11941, %v11621, 4286644096
      %v11988 = vsel %vm11942, %v11898, 4286644096
      %v11989 = vsel %vm11941, %v11622, 4286644096
      %v11990 = vsel %vm11942, %v11901, 4286644096
      %v11991 = vsel %vm11941, %v11623, 4286644096
      %v11992 = vsel %vm11942, %v11904, 4286644096
      %v11993 = vsel %vm11941, %v11624, 4286644096
      %v11994 = vsel %vm11942, %v11907, 4286644096
      %v11995 = vsel %vm11941, %v11625, 4286644096
      %v11996 = vsel %vm11942, %v11910, 4286644096
      %v11997 = vsel %vm11941, %v11626, 4286644096
      %v11998 = vsel %vm11942, %v11913, 4286644096
      %v11999 = vsel %vm11941, %v11627, 4286644096
      %v12000 = vsel %vm11942, %v11916, 4286644096
      %v12001 = vsel %vm11941, %v11628, 4286644096
      %v12002 = vsel %vm11942, %v11919, 4286644096
      %v12003 = vmax.bf16 %v11771, %v11943
      %v12004 = vmax.bf16 %v11772, %v11944
      %v12005 = vmax.bf16 %v11773, %v11945
      %v12006 = vmax.bf16 %v11774, %v11946
      %v12007 = vmax.bf16 %v11775, %v11947
      %v12008 = vmax.bf16 %v11776, %v11948
      %v12009 = vmax.bf16 %v11777, %v11949
      %v12010 = vmax.bf16 %v11778, %v11950
      %v12011 = vmax.bf16 %v11779, %v11951
      %v12012 = vmax.bf16 %v11780, %v11952
      %v12013 = vmax.bf16 %v11781, %v11953
      %v12014 = vmax.bf16 %v11782, %v11954
      %v12015 = vmax.bf16 %v11783, %v11955
      %v12016 = vmax.bf16 %v11784, %v11956
      %v12017 = vmax.bf16 %v11785, %v11957
      %v12018 = vmax.bf16 %v11786, %v11958
      %v12019 = vmax.bf16 %v11787, %v11959
      %v12020 = vmax.bf16 %v11788, %v11960
      %v12021 = vmax.bf16 %v11789, %v11961
      %v12022 = vmax.bf16 %v11790, %v11962
      %v12023 = vmax.bf16 %v11791, %v11963
      %v12024 = vmax.bf16 %v11792, %v11964
      %v12025 = vmax.bf16 %v11793, %v11965
      %v12026 = vmax.bf16 %v11794, %v11966
      %v12027 = vmax.bf16 %v11795, %v11967
      %v12028 = vmax.bf16 %v11796, %v11968
      %v12029 = vmax.bf16 %v11797, %v11969
      %v12030 = vmax.bf16 %v11798, %v11970
      %v12031 = vmax.bf16 %v11799, %v11971
      %v12032 = vmax.bf16 %v11800, %v11972
      %v12033 = vmax.bf16 %v11801, %v11973
      %v12034 = vmax.bf16 %v11802, %v11974
      %v12035 = vmax.bf16 %v11803, %v11975
      %v12036 = vmax.bf16 %v11804, %v11976
      %v12037 = vmax.bf16 %v11805, %v11977
      %v12038 = vmax.bf16 %v11806, %v11978
      %v12039 = vmax.bf16 %v11807, %v11979
      %v12040 = vmax.bf16 %v11808, %v11980
      %v12041 = vmax.bf16 %v11809, %v11981
      %v12042 = vmax.bf16 %v11810, %v11982
      %v12043 = vmax.bf16 %v11811, %v11983
      %v12044 = vmax.bf16 %v11812, %v11984
      %v12045 = vmax.bf16 %v11813, %v11985
      %v12046 = vmax.bf16 %v11814, %v11986
      %v12047 = vmax.bf16 %v11815, %v11987
      %v12048 = vmax.bf16 %v11816, %v11988
      %v12049 = vmax.bf16 %v11817, %v11989
      %v12050 = vmax.bf16 %v11818, %v11990
      %v12051 = vmax.bf16 %v11819, %v11991
      %v12052 = vmax.bf16 %v11820, %v11992
      %v12053 = vmax.bf16 %v11821, %v11993
      %v12054 = vmax.bf16 %v11822, %v11994
      %v12055 = vmax.bf16 %v11823, %v11995
      %v12056 = vmax.bf16 %v11824, %v11996
      %v12057 = vmax.bf16 %v11825, %v11997
      %v12058 = vmax.bf16 %v11826, %v11998
      %v12059 = vmax.bf16 %v11827, %v11999
      %v12060 = vmax.bf16 %v11828, %v12000
      %v12061 = vmax.bf16 %v11829, %v12001
      %v12062 = vmax.bf16 %v11830, %v12002
      %v12063 = vmax.bf16 %v11359, %v12003
      %v12064 = vmax.bf16 %v11360, %v12004
      %v12065 = vmax.bf16 %v11361, %v12005
      %v12066 = vmax.bf16 %v11362, %v12006
      %v12067 = vmax.bf16 %v11363, %v12007
      %v12068 = vmax.bf16 %v11364, %v12008
      %v12069 = vmax.bf16 %v11365, %v12009
      %v12070 = vmax.bf16 %v11366, %v12010
      %v12071 = vmax.bf16 %v11367, %v12011
      %v12072 = vmax.bf16 %v11368, %v12012
      %v12073 = vmax.bf16 %v11369, %v12013
      %v12074 = vmax.bf16 %v11370, %v12014
      %v12075 = vmax.bf16 %v11371, %v12015
      %v12076 = vmax.bf16 %v11372, %v12016
      %v12077 = vmax.bf16 %v11373, %v12017
      %v12078 = vmax.bf16 %v11374, %v12018
      %v12079 = vmax.bf16 %v11375, %v12019
      %v12080 = vmax.bf16 %v11376, %v12020
      %v12081 = vmax.bf16 %v11377, %v12021
      %v12082 = vmax.bf16 %v11378, %v12022
      %v12083 = vmax.bf16 %v11379, %v12023
      %v12084 = vmax.bf16 %v11380, %v12024
      %v12085 = vmax.bf16 %v11381, %v12025
      %v12086 = vmax.bf16 %v11382, %v12026
      %v12087 = vmax.bf16 %v11383, %v12027
      %v12088 = vmax.bf16 %v11384, %v12028
      %v12089 = vmax.bf16 %v11385, %v12029
      %v12090 = vmax.bf16 %v11386, %v12030
      %v12091 = vmax.bf16 %v11387, %v12031
      %v12092 = vmax.bf16 %v11388, %v12032
      %v12093 = vmax.bf16 %v11389, %v12033
      %v12094 = vmax.bf16 %v11390, %v12034
      %v12095 = vmax.bf16 %v11391, %v12035
      %v12096 = vmax.bf16 %v11392, %v12036
      %v12097 = vmax.bf16 %v11393, %v12037
      %v12098 = vmax.bf16 %v11394, %v12038
      %v12099 = vmax.bf16 %v11395, %v12039
      %v12100 = vmax.bf16 %v11396, %v12040
      %v12101 = vmax.bf16 %v11397, %v12041
      %v12102 = vmax.bf16 %v11398, %v12042
      %v12103 = vmax.bf16 %v11399, %v12043
      %v12104 = vmax.bf16 %v11400, %v12044
      %v12105 = vmax.bf16 %v11401, %v12045
      %v12106 = vmax.bf16 %v11402, %v12046
      %v12107 = vmax.bf16 %v11403, %v12047
      %v12108 = vmax.bf16 %v11404, %v12048
      %v12109 = vmax.bf16 %v11405, %v12049
      %v12110 = vmax.bf16 %v11406, %v12050
      %v12111 = vmax.bf16 %v11407, %v12051
      %v12112 = vmax.bf16 %v11408, %v12052
      %v12113 = vmax.bf16 %v11409, %v12053
      %v12114 = vmax.bf16 %v11410, %v12054
      %v12115 = vmax.bf16 %v11411, %v12055
      %v12116 = vmax.bf16 %v11412, %v12056
      %v12117 = vmax.bf16 %v11413, %v12057
      %v12118 = vmax.bf16 %v11414, %v12058
      %v12119 = vmax.bf16 %v11415, %v12059
      %v12120 = vmax.bf16 %v11416, %v12060
      %v12121 = vmax.bf16 %v11417, %v12061
      %v12122 = vmax.bf16 %v11418, %v12062
      %v12123 = vld [vmem:[%s11] sm:$0xff]
      %v12124 = vld [vmem:[%s11 + $0x8] sm:$0xff]
      %v12125 = vld [vmem:[%s11 + $0x10] sm:$0xff]
      %v12126 = vld [vmem:[%s11 + $0x18] sm:$0xff]
      %v12127 = vld [vmem:[%s11 + $0x20] sm:$0xff]
      %v12128 = vld [vmem:[%s11 + $0x28] sm:$0xff]
      %v12129 = vld [vmem:[%s11 + $0x30] sm:$0xff]
      %v12130 = vld [vmem:[%s11 + $0x38] sm:$0xff]
      %v12131 = vld [vmem:[%s11 + $0x40] sm:$0xff]
      %v12132 = vld [vmem:[%s11 + $0x48] sm:$0xff]
      %v12133 = vld [vmem:[%s11 + $0x50] sm:$0xff]
      %v12134 = vld [vmem:[%s11 + $0x58] sm:$0xff]
      %v12135 = vld [vmem:[%s11 + $0x60] sm:$0xff]
      %v12136 = vld [vmem:[%s11 + $0x68] sm:$0xff]
      %v12137 = vld [vmem:[%s11 + $0x70] sm:$0xff]
      %v12138 = vld [vmem:[%s11 + $0x78] sm:$0xff]
      %v12155 = vunpack.c.l.b16 %v12123
      %v12156 = vunpack.c.h.b16 %v12123
      %v12157 = vunpack.c.l.b16 %v12124
      %v12158 = vunpack.c.h.b16 %v12124
      %v12159 = vunpack.c.l.b16 %v12125
      %v12160 = vunpack.c.h.b16 %v12125
      %v12161 = vunpack.c.l.b16 %v12126
      %v12162 = vunpack.c.h.b16 %v12126
      %v12163 = vunpack.c.l.b16 %v12127
      %v12164 = vunpack.c.h.b16 %v12127
      %v12165 = vunpack.c.l.b16 %v12128
      %v12166 = vunpack.c.h.b16 %v12128
      %v12167 = vunpack.c.l.b16 %v12129
      %v12168 = vunpack.c.h.b16 %v12129
      %v12169 = vunpack.c.l.b16 %v12130
      %v12170 = vunpack.c.h.b16 %v12130
      %v12171 = vunpack.c.l.b16 %v12131
      %v12172 = vunpack.c.h.b16 %v12131
      %v12173 = vunpack.c.l.b16 %v12132
      %v12174 = vunpack.c.h.b16 %v12132
      %v12175 = vunpack.c.l.b16 %v12133
      %v12176 = vunpack.c.h.b16 %v12133
      %v12177 = vunpack.c.l.b16 %v12134
      %v12178 = vunpack.c.h.b16 %v12134
      %v12179 = vunpack.c.l.b16 %v12135
      %v12180 = vunpack.c.h.b16 %v12135
      %v12181 = vunpack.c.l.b16 %v12136
      %v12182 = vunpack.c.h.b16 %v12136
      %v12183 = vunpack.c.l.b16 %v12137
      %v12184 = vunpack.c.h.b16 %v12137
      %v12185 = vunpack.c.l.b16 %v12138
      %v12186 = vunpack.c.h.b16 %v12138
      %v12187 = vpack.c.b16 %v12159, %v12155
      %v12188 = vpack.c.b16 %v12160, %v12156
      %v12189 = vpack.c.b16 %v12161, %v12157
      %v12190 = vpack.c.b16 %v12162, %v12158
      %v12191 = vpack.c.b16 %v12167, %v12163
      %v12192 = vpack.c.b16 %v12168, %v12164
      %v12193 = vpack.c.b16 %v12169, %v12165
      %v12194 = vpack.c.b16 %v12170, %v12166
      %v12195 = vpack.c.b16 %v12175, %v12171
      %v12196 = vpack.c.b16 %v12176, %v12172
      %v12197 = vpack.c.b16 %v12177, %v12173
      %v12198 = vpack.c.b16 %v12178, %v12174
      %v12199 = vpack.c.b16 %v12183, %v12179
      %v12200 = vpack.c.b16 %v12184, %v12180
      %v12201 = vpack.c.b16 %v12185, %v12181
      %v12202 = vpack.c.b16 %v12186, %v12182
      %v12216 = vsel %vm1091, %v12190, 0
      %v12219 = vsel %vm1091, %v12194, 0
      %v12222 = vsel %vm1091, %v12198, 0
      %v12225 = vsel %vm1091, %v12202, 0
      %12227 = vmatprep.subr.bf16.mxu0 %v12078
      %12228 = vmatpush1.bf16.msra.mxu0 %v12077
      %12229 = vmatprep.subr.bf16.mxu0 %v12076
      %12230 = vmatpush1.bf16.msra.mxu0 %v12075
      %12231 = vmatprep.subr.bf16.mxu0 %v12074
      %12232 = vmatpush1.bf16.msra.mxu0 %v12073
      %12233 = vmatprep.subr.bf16.mxu0 %v12072
      %12234 = vmatpush1.bf16.msra.mxu0 %v12071
      %12235 = vmatprep.subr.bf16.mxu0 %v12070
      %12236 = vmatpush1.bf16.msra.mxu0 %v12069
      %12237 = vmatprep.subr.bf16.mxu0 %v12068
      %12238 = vmatpush1.bf16.msra.mxu0 %v12067
      %12239 = vmatprep.subr.bf16.mxu0 %v12066
      %12240 = vmatpush1.bf16.msra.mxu0 %v12065
      %12241 = vmatprep.subr.bf16.mxu0 %v12064
      %12242 = vmatpush1.bf16.msra.mxu0 %v12063
      %12243 = vmatprep.subr.bf16.mxu0 %v12094
      %12244 = vmatpush2.bf16.msra.mxu0 %v12093
      %12245 = vmatprep.subr.bf16.mxu0 %v12092
      %12246 = vmatpush2.bf16.msra.mxu0 %v12091
      %12247 = vmatprep.subr.bf16.mxu0 %v12090
      %12248 = vmatpush2.bf16.msra.mxu0 %v12089
      %12249 = vmatprep.subr.bf16.mxu0 %v12088
      %12250 = vmatpush2.bf16.msra.mxu0 %v12087
      %12251 = vmatprep.subr.bf16.mxu0 %v12086
      %12252 = vmatpush2.bf16.msra.mxu0 %v12085
      %12253 = vmatprep.subr.bf16.mxu0 %v12084
      %12254 = vmatpush2.bf16.msra.mxu0 %v12083
      %12255 = vmatprep.subr.bf16.mxu0 %v12082
      %12256 = vmatpush2.bf16.msra.mxu0 %v12081
      %12257 = vmatprep.subr.bf16.mxu0 %v12080
      %12258 = vmatpush2.bf16.msra.mxu0 %v12079
      %12259 = vmatprep.mubr.bf16.mxu0 %v12188
      %12260 = vmatmul.mubr.bf16.gmra.mxu0 %v12187
      %v12261 = vpop.f32.mrf.mxu0
      %v12262 = vadd.f32 0.0, %v12261
      %v12263 = vpop.f32.mrf.mxu0
      %v12264 = vadd.f32 0.0, %v12263
      %v12265 = vpop.f32.mrf.mxu0
      %v12266 = vadd.f32 0.0, %v12265
      %v12267 = vpop.f32.mrf.mxu0
      %v12268 = vadd.f32 0.0, %v12267
      %12269 = vmatprep.mubr.bf16.mxu0 %v12192
      %12270 = vmatmul.mubr.bf16.gmra.mxu0 %v12191
      %v12271 = vpop.f32.mrf.mxu0
      %v12272 = vadd.f32 0.0, %v12271
      %v12273 = vpop.f32.mrf.mxu0
      %v12274 = vadd.f32 0.0, %v12273
      %v12275 = vpop.f32.mrf.mxu0
      %v12276 = vadd.f32 0.0, %v12275
      %v12277 = vpop.f32.mrf.mxu0
      %v12278 = vadd.f32 0.0, %v12277
      %12279 = vmatprep.mubr.bf16.mxu0 %v12196
      %12280 = vmatmul.mubr.bf16.gmra.mxu0 %v12195
      %v12281 = vpop.f32.mrf.mxu0
      %v12282 = vadd.f32 0.0, %v12281
      %v12283 = vpop.f32.mrf.mxu0
      %v12284 = vadd.f32 0.0, %v12283
      %v12285 = vpop.f32.mrf.mxu0
      %v12286 = vadd.f32 0.0, %v12285
      %v12287 = vpop.f32.mrf.mxu0
      %v12288 = vadd.f32 0.0, %v12287
      %12289 = vmatprep.mubr.bf16.mxu0 %v12200
      %12290 = vmatmul.mubr.bf16.gmra.mxu0 %v12199
      %v12291 = vpop.f32.mrf.mxu0
      %v12292 = vadd.f32 0.0, %v12291
      %v12293 = vpop.f32.mrf.mxu0
      %v12294 = vadd.f32 0.0, %v12293
      %v12295 = vpop.f32.mrf.mxu0
      %v12296 = vadd.f32 0.0, %v12295
      %v12297 = vpop.f32.mrf.mxu0
      %v12298 = vadd.f32 0.0, %v12297
      %12299 = vdwg.mxu0
      %12300 = vmatprep.subr.bf16.mxu0 %v12110
      %12301 = vmatpush1.bf16.msra.mxu0 %v12109
      %12302 = vmatprep.subr.bf16.mxu0 %v12108
      %12303 = vmatpush1.bf16.msra.mxu0 %v12107
      %12304 = vmatprep.subr.bf16.mxu0 %v12106
      %12305 = vmatpush1.bf16.msra.mxu0 %v12105
      %12306 = vmatprep.subr.bf16.mxu0 %v12104
      %12307 = vmatpush1.bf16.msra.mxu0 %v12103
      %12308 = vmatprep.subr.bf16.mxu0 %v12102
      %12309 = vmatpush1.bf16.msra.mxu0 %v12101
      %12310 = vmatprep.subr.bf16.mxu0 %v12100
      %12311 = vmatpush1.bf16.msra.mxu0 %v12099
      %12312 = vmatprep.subr.bf16.mxu0 %v12098
      %12313 = vmatpush1.bf16.msra.mxu0 %v12097
      %12314 = vmatprep.subr.bf16.mxu0 %v12096
      %12315 = vmatpush1.bf16.msra.mxu0 %v12095
      %12316 = vmatprep.subr.bf16.mxu0 0
      %12317 = vmatpush2.bf16.msra.mxu0 0
      %12318 = vmatprep.subr.bf16.mxu0 0
      %12319 = vmatpush2.bf16.msra.mxu0 0
      %12320 = vmatprep.subr.bf16.mxu0 %v12122
      %12321 = vmatpush2.bf16.msra.mxu0 %v12121
      %12322 = vmatprep.subr.bf16.mxu0 %v12120
      %12323 = vmatpush2.bf16.msra.mxu0 %v12119
      %12324 = vmatprep.subr.bf16.mxu0 %v12118
      %12325 = vmatpush2.bf16.msra.mxu0 %v12117
      %12326 = vmatprep.subr.bf16.mxu0 %v12116
      %12327 = vmatpush2.bf16.msra.mxu0 %v12115
      %12328 = vmatprep.subr.bf16.mxu0 %v12114
      %12329 = vmatpush2.bf16.msra.mxu0 %v12113
      %12330 = vmatprep.subr.bf16.mxu0 %v12112
      %12331 = vmatpush2.bf16.msra.mxu0 %v12111
      %12332 = vmatprep.mubr.bf16.mxu0 %v12216
      %12333 = vmatmul.mubr.bf16.gmra.mxu0 %v12189
      %v12334 = vpop.f32.mrf.mxu0
      %v12335 = vadd.f32 %v12262, %v12334
      %v12336 = vpop.f32.mrf.mxu0
      %v12337 = vadd.f32 %v12264, %v12336
      %v12338 = vpop.f32.mrf.mxu0
      %v12339 = vadd.f32 %v12266, %v12338
      %v12340 = vpop.f32.mrf.mxu0
      %v12341 = vadd.f32 %v12268, %v12340
      %12342 = vmatprep.mubr.bf16.mxu0 %v12219
      %12343 = vmatmul.mubr.bf16.gmra.mxu0 %v12193
      %v12344 = vpop.f32.mrf.mxu0
      %v12345 = vadd.f32 %v12272, %v12344
      %v12346 = vpop.f32.mrf.mxu0
      %v12347 = vadd.f32 %v12274, %v12346
      %v12348 = vpop.f32.mrf.mxu0
      %v12349 = vadd.f32 %v12276, %v12348
      %v12350 = vpop.f32.mrf.mxu0
      %v12351 = vadd.f32 %v12278, %v12350
      %12352 = vmatprep.mubr.bf16.mxu0 %v12222
      %12353 = vmatmul.mubr.bf16.gmra.mxu0 %v12197
      %v12354 = vpop.f32.mrf.mxu0
      %v12355 = vadd.f32 %v12282, %v12354
      %v12356 = vpop.f32.mrf.mxu0
      %v12357 = vadd.f32 %v12284, %v12356
      %v12358 = vpop.f32.mrf.mxu0
      %v12359 = vadd.f32 %v12286, %v12358
      %v12360 = vpop.f32.mrf.mxu0
      %v12361 = vadd.f32 %v12288, %v12360
      %12362 = vmatprep.mubr.bf16.mxu0 %v12225
      %12363 = vmatmul.mubr.bf16.gmra.mxu0 %v12201
      %v12364 = vpop.f32.mrf.mxu0
      %v12365 = vadd.f32 %v12292, %v12364
      %v12366 = vpop.f32.mrf.mxu0
      %v12367 = vadd.f32 %v12294, %v12366
      %v12368 = vpop.f32.mrf.mxu0
      %v12369 = vadd.f32 %v12296, %v12368
      %v12370 = vpop.f32.mrf.mxu0
      %v12371 = vadd.f32 %v12298, %v12370
      %12372 = vdwg.mxu0
      %v12373 = vld [vmem:[%s12] sm:$0xff]
      %v12374 = vld [vmem:[%s12 + $0x8] sm:$0xff]
      %v12375 = vld [vmem:[%s12 + $0x10] sm:$0xff]
      %v12376 = vld [vmem:[%s12 + $0x18] sm:$0xff]
      %v12377 = vld [vmem:[%s12 + $0x20] sm:$0xff]
      %v12378 = vld [vmem:[%s12 + $0x28] sm:$0xff]
      %v12379 = vld [vmem:[%s12 + $0x30] sm:$0xff]
      %v12380 = vld [vmem:[%s12 + $0x38] sm:$0xff]
      %12382 = vset.pattern.permute.xlu0 0
      %12383 = vperm.xlu0 %12382, %v12373
      %v12384 = vpop.permute.xlu0 %12383
      %12387 = vset.pattern.permute.xlu0 0
      %12388 = vperm.xlu0 %12387, %v12374
      %v12389 = vpop.permute.xlu0 %12388
      %12392 = vset.pattern.permute.xlu0 0
      %12393 = vperm.xlu0 %12392, %v12375
      %v12394 = vpop.permute.xlu0 %12393
      %12397 = vset.pattern.permute.xlu0 0
      %12398 = vperm.xlu0 %12397, %v12376
      %v12399 = vpop.permute.xlu0 %12398
      %12402 = vset.pattern.permute.xlu0 0
      %12403 = vperm.xlu0 %12402, %v12377
      %v12404 = vpop.permute.xlu0 %12403
      %12407 = vset.pattern.permute.xlu0 0
      %12408 = vperm.xlu0 %12407, %v12378
      %v12409 = vpop.permute.xlu0 %12408
      %12412 = vset.pattern.permute.xlu0 0
      %12413 = vperm.xlu0 %12412, %v12379
      %v12414 = vpop.permute.xlu0 %12413
      %12417 = vset.pattern.permute.xlu0 0
      %12418 = vperm.xlu0 %12417, %v12380
      %v12419 = vpop.permute.xlu0 %12418
      %v12421 = vmul.f32 %v12335, %v12384
      %v12422 = vmul.f32 %v12337, %v12384
      %v12423 = vmul.f32 %v12339, %v12389
      %v12424 = vmul.f32 %v12341, %v12389
      %v12425 = vmul.f32 %v12345, %v12394
      %v12426 = vmul.f32 %v12347, %v12394
      %v12427 = vmul.f32 %v12349, %v12399
      %v12428 = vmul.f32 %v12351, %v12399
      %v12429 = vmul.f32 %v12355, %v12404
      %v12430 = vmul.f32 %v12357, %v12404
      %v12431 = vmul.f32 %v12359, %v12409
      %v12432 = vmul.f32 %v12361, %v12409
      %v12433 = vmul.f32 %v12365, %v12414
      %v12434 = vmul.f32 %v12367, %v12414
      %v12435 = vmul.f32 %v12369, %v12419
      %v12436 = vmul.f32 %v12371, %v12419
      %v12437 = vld [vmem:[%s13] sm:$0xff]
      %v12438 = vld [vmem:[%s13 + $0x8] sm:$0xff]
      %v12439 = vld [vmem:[%s13 + $0x10] sm:$0xff]
      %v12440 = vld [vmem:[%s13 + $0x18] sm:$0xff]
      %v12441 = vld [vmem:[%s13 + $0x20] sm:$0xff]
      %v12442 = vld [vmem:[%s13 + $0x28] sm:$0xff]
      %v12443 = vld [vmem:[%s13 + $0x30] sm:$0xff]
      %v12444 = vld [vmem:[%s13 + $0x38] sm:$0xff]
      %12446 = vset.pattern.permute.xlu0 0
      %12447 = vperm.xlu0 %12446, %v12437
      %v12448 = vpop.permute.xlu0 %12447
      %12451 = vset.pattern.permute.xlu0 0
      %12452 = vperm.xlu0 %12451, %v12438
      %v12453 = vpop.permute.xlu0 %12452
      %12456 = vset.pattern.permute.xlu0 0
      %12457 = vperm.xlu0 %12456, %v12439
      %v12458 = vpop.permute.xlu0 %12457
      %12461 = vset.pattern.permute.xlu0 0
      %12462 = vperm.xlu0 %12461, %v12440
      %v12463 = vpop.permute.xlu0 %12462
      %12466 = vset.pattern.permute.xlu0 0
      %12467 = vperm.xlu0 %12466, %v12441
      %v12468 = vpop.permute.xlu0 %12467
      %12471 = vset.pattern.permute.xlu0 0
      %12472 = vperm.xlu0 %12471, %v12442
      %v12473 = vpop.permute.xlu0 %12472
      %12476 = vset.pattern.permute.xlu0 0
      %12477 = vperm.xlu0 %12476, %v12443
      %v12478 = vpop.permute.xlu0 %12477
      %12481 = vset.pattern.permute.xlu0 0
      %12482 = vperm.xlu0 %12481, %v12444
      %v12483 = vpop.permute.xlu0 %12482
      %v12485 = vadd.f32 %v12421, %v12448
      %v12486 = vadd.f32 %v12422, %v12448
      %v12487 = vadd.f32 %v12423, %v12453
      %v12488 = vadd.f32 %v12424, %v12453
      %v12489 = vadd.f32 %v12425, %v12458
      %v12490 = vadd.f32 %v12426, %v12458
      %v12491 = vadd.f32 %v12427, %v12463
      %v12492 = vadd.f32 %v12428, %v12463
      %v12493 = vadd.f32 %v12429, %v12468
      %v12494 = vadd.f32 %v12430, %v12468
      %v12495 = vadd.f32 %v12431, %v12473
      %v12496 = vadd.f32 %v12432, %v12473
      %v12497 = vadd.f32 %v12433, %v12478
      %v12498 = vadd.f32 %v12434, %v12478
      %v12499 = vadd.f32 %v12435, %v12483
      %v12500 = vadd.f32 %v12436, %v12483
      %v12501 = vmax.f32 %v12485, 0.0
      %v12502 = vmax.f32 %v12486, 0.0
      %v12503 = vmax.f32 %v12487, 0.0
      %v12504 = vmax.f32 %v12488, 0.0
      %v12505 = vmax.f32 %v12489, 0.0
      %v12506 = vmax.f32 %v12490, 0.0
      %v12507 = vmax.f32 %v12491, 0.0
      %v12508 = vmax.f32 %v12492, 0.0
      %v12509 = vmax.f32 %v12493, 0.0
      %v12510 = vmax.f32 %v12494, 0.0
      %v12511 = vmax.f32 %v12495, 0.0
      %v12512 = vmax.f32 %v12496, 0.0
      %v12513 = vmax.f32 %v12497, 0.0
      %v12514 = vmax.f32 %v12498, 0.0
      %v12515 = vmax.f32 %v12499, 0.0
      %v12516 = vmax.f32 %v12500, 0.0
      %12517 = vst [vmem:[%s467 + $0x380] sm:$0xff] %v12501
      %12518 = vst [vmem:[%s467 + $0x388] sm:$0xff] %v12502
      %12519 = vst [vmem:[%s467 + $0x390] sm:$0xff] %v12503
      %12520 = vst [vmem:[%s467 + $0x398] sm:$0xff] %v12504
      %12521 = vst [vmem:[%s467 + $0x3a0] sm:$0xff] %v12505
      %12522 = vst [vmem:[%s467 + $0x3a8] sm:$0xff] %v12506
      %12523 = vst [vmem:[%s467 + $0x3b0] sm:$0xff] %v12507
      %12524 = vst [vmem:[%s467 + $0x3b8] sm:$0xff] %v12508
      %12525 = vst [vmem:[%s467 + $0x3c0] sm:$0xff] %v12509
      %12526 = vst [vmem:[%s467 + $0x3c8] sm:$0xff] %v12510
      %12527 = vst [vmem:[%s467 + $0x3d0] sm:$0xff] %v12511
      %12528 = vst [vmem:[%s467 + $0x3d8] sm:$0xff] %v12512
      %12529 = vst [vmem:[%s467 + $0x3e0] sm:$0xff] %v12513
      %12530 = vst [vmem:[%s467 + $0x3e8] sm:$0xff] %v12514
      %12531 = vst [vmem:[%s467 + $0x3f0] sm:$0xff] %v12515
      %12532 = vst [vmem:[%s467 + $0x3f8] sm:$0xff] %v12516
      %p12533 = scmp.lt.s32.totalorder %s25, 1
      %s12534 = scalar_select %p12533, %s25, 1
      %s12535 = smul.addr %s12534, 128
      %s12536 = smul.addr %s12535, 8
      %s12537 = scalar_lea.vmem %s14, %s12536
      // Predicated region
      $region77: #{mixed_4b_forward.1} parent=75 // pred_check
        %p12538 = pneg %p342
      $region78: #{mixed_4b_forward.1} parent=75 // pred_check_branch
        %12540 = sbr.rel (%p12538) target = $region80
      $region79: #{mixed_4b_forward.1} parent=75 // pred_region
        _
      $region80: #{mixed_4b_forward.1} parent=75 // pred_fallthru
        _
    $region76: #{mixed_4b_forward.1} parent=5 // pred_fallthru
      _
    %p12541 = scmp.le.s32.totalorder 2, %s20
    // Predicated region
    $region81: #{mixed_4b_forward.1} parent=5 // pred_check
      %p12542 = pneg %p12541
    $region82: #{mixed_4b_forward.1} parent=5 // pred_check_branch
      %12544 = sbr.rel (%p12542) target = $region84
    $region83: #{mixed_4b_forward.1} parent=5 // pred_region
      %s12545 = ssub.s32 %s20, 2
      // Predicated region
      $region85: #{mixed_4b_forward.1} parent=83 // pred_check
        %p12546 = pneg %p348
      $region86: #{mixed_4b_forward.1} parent=83 // pred_check_branch
        %12548 = sbr.rel (%p12546) target = $region88
      $region87: #{mixed_4b_forward.1} parent=83 // pred_region
        %p12549 = scmp.lt.s32.totalorder %s26, 1
        %s12550 = scalar_select %p12549, %s26, 1
        %s12551 = smul.addr %s12550, 128
        %s12552 = smul.addr %s12551, 8
        %s12553 = scalar_lea.vmem %s14, %s12552
      $region88: #{mixed_4b_forward.1} parent=83 // pred_fallthru
        _
    $region84: #{mixed_4b_forward.1} parent=5 // pred_fallthru
      _
  $region6: #{mixed_4b_forward.1} parent=0 // loop_footer
    %s24 = sadd.s32 1, %s20
  $region7: #{mixed_4b_forward.1} parent=0 // loop_footer_branch
    %19 = sbr.rel target = $region3
  $region8: #{mixed_4b_forward.1} parent=0 // loop_exit
    _

</llo_original>
